<compile_context>
chip_gen: v7x
topology: tpu7x:2x2x1
jax: 0.10.0
libtpu: 0.0.40
codegen_flags: <defaults>
</compile_context>

<pallas_src>
import functools

import jax
import jax.numpy as jnp
from jax.experimental import pallas as pl
from jax.experimental.pallas import tpu as pltpu

EPS = 1e-5  # PyTorch BatchNorm2d default eps
CFG_VGG8 = [64, 'M', 128, 'M', 256, 'M', 512, 'M', 512, 512, 'M']

_VMEM_LIMIT = 32 * 1024 * 1024


def _round_up(x, m):
    return -(-x // m) * m


# ----------------------------------------------------------------------------
# Fused conv3x3 + BatchNorm(train) + ReLU kernel
#   grid = (Cout // tn  [parallel],  9 taps  [arbitrary reduction])
#   a_ref:     (M, Cin)   bf16 (tap-shifted im2col slice)
#   w_ref:     (Cin, tn)  bf16
#   gamma/beta:(1, tn)    f32
#   o_ref:     (M, tn)    bf16
#   acc_ref:   (M, tn)    f32 scratch accumulator
# ----------------------------------------------------------------------------
def _conv_bn_relu_kernel(a_ref, w_ref, gamma_ref, beta_ref, o_ref, acc_ref):
    t = pl.program_id(1)

    @pl.when(t == 0)
    def _():
        acc_ref[...] = jnp.zeros_like(acc_ref)

    acc_ref[...] += jnp.dot(a_ref[...], w_ref[...],
                            preferred_element_type=jnp.float32)

    @pl.when(t == pl.num_programs(1) - 1)
    def _():
        # Training-mode BatchNorm over rows (= N*H*W), centered two-pass form
        # so variance can never go negative.
        x = acc_ref[...]
        inv_m = 1.0 / x.shape[0]
        mean = jnp.sum(x, axis=0, keepdims=True) * inv_m
        xc = x - mean
        var = jnp.sum(xc * xc, axis=0, keepdims=True) * inv_m
        y = xc * jax.lax.rsqrt(var + EPS)
        y = y * gamma_ref[...] + beta_ref[...]
        o_ref[...] = jnp.maximum(y, 0.0).astype(o_ref.dtype)


def _im2col_taps(x_nhwc):
    """(N,H,W,C) -> (9, N*H*W, C): the 9 shifted views of the zero-padded input."""
    # TODO(synk): this still materializes 9x activation bytes in HBM via XLA;
    # a halo'd NHWC block DMA inside the kernel would remove the blow-up.
    N, H, W, C = x_nhwc.shape
    xp = jnp.pad(x_nhwc, ((0, 0), (1, 1), (1, 1), (0, 0)))
    taps = jnp.stack(
        [xp[:, dy:dy + H, dx:dx + W, :] for dy in range(3) for dx in range(3)],
        axis=0,
    )
    return taps.reshape(9, N * H * W, C)


def conv3x3_bn_relu(x_nhwc, w9, gamma, beta, tn_max=256):
    """3x3 conv (pad=1, stride=1) + BatchNorm2d(train) + ReLU, fused.

    x_nhwc: (N,H,W,Cin) bf16;  w9: (9,Cin,Cout) bf16;  gamma/beta: (1,Cout) f32.
    """
    N, H, W, Cin = x_nhwc.shape
    Cout = w9.shape[-1]
    M = N * H * W

    taps = _im2col_taps(x_nhwc)                                # (9, M, Cin)
    if Cin < 8:  # first layer: widen the tiny contraction dim a bit
        pad = 8 - Cin
        taps = jnp.pad(taps, ((0, 0), (0, 0), (0, pad)))
        w9 = jnp.pad(w9, ((0, 0), (0, pad), (0, 0)))
        Cin = 8

    tn = min(tn_max, Cout)
    grid = (Cout // tn, 9)

    # TODO(synk): M (rows) is a single block; at large batch/resolution an M grid
    # axis with per-channel sum/sumsq BN accumulation would be needed.
    y = pl.pallas_call(
        _conv_bn_relu_kernel,
        out_shape=jax.ShapeDtypeStruct((M, Cout), jnp.bfloat16),
        grid=grid,
        in_specs=[
            pl.BlockSpec((None, M, Cin), lambda n, t: (t, 0, 0)),
            pl.BlockSpec((None, Cin, tn), lambda n, t: (t, 0, n)),
            pl.BlockSpec((1, tn), lambda n, t: (0, n)),
            pl.BlockSpec((1, tn), lambda n, t: (0, n)),
        ],
        out_specs=pl.BlockSpec((M, tn), lambda n, t: (0, n)),
        scratch_shapes=[pltpu.VMEM((M, tn), jnp.float32)],
        compiler_params=pltpu.CompilerParams(
            dimension_semantics=("parallel", "arbitrary"),
            vmem_limit_bytes=_VMEM_LIMIT,
        ),
    )(taps, w9, gamma, beta)
    return y.reshape(N, H, W, Cout)


def maxpool2x2(x_nhwc):
    # TODO(synk): 2x2 max-pool kept as XLA reshape+max glue (trivial bandwidth).
    N, H, W, C = x_nhwc.shape
    return jnp.max(x_nhwc.reshape(N, H // 2, 2, W // 2, 2, C), axis=(2, 4))


# ----------------------------------------------------------------------------
# Fused heads kernel: one launch for cont, disc and z = h(relu(cont)).
#   flat: (M, 512) f32
#   wcd:  (512, Ncd) f32  [cont | disc | zero-pad], lane-dense Ncd (mult of 128)
#   wh:   (cont, Nz) f32  [h | zero-pad]
# ----------------------------------------------------------------------------
def _heads_kernel(flat_ref, wcd_ref, bcd_ref, wh_ref, bh_ref, cd_ref, z_ref, *,
                  cont_dim):
    flat = flat_ref[...]
    cd = jnp.dot(flat, wcd_ref[...], preferred_element_type=jnp.float32)
    cd = cd + bcd_ref[...]
    cd_ref[...] = cd
    cont = cd[:, :cont_dim]
    z = jnp.dot(jnp.maximum(cont, 0.0), wh_ref[...],
                preferred_element_type=jnp.float32)
    z_ref[...] = z + bh_ref[...]


def heads_forward(flat, head_params, cont_dim):
    wcd, bcd, wh, bh = head_params
    M, D = flat.shape
    Ncd = wcd.shape[1]
    Nz = wh.shape[1]
    cd, z = pl.pallas_call(
        functools.partial(_heads_kernel, cont_dim=cont_dim),
        out_shape=(jax.ShapeDtypeStruct((M, Ncd), jnp.float32),
                   jax.ShapeDtypeStruct((M, Nz), jnp.float32)),
        grid=(1,),
        in_specs=[
            pl.BlockSpec((M, D), lambda i: (0, 0)),
            pl.BlockSpec((D, Ncd), lambda i: (0, 0)),
            pl.BlockSpec((1, Ncd), lambda i: (0, 0)),
            pl.BlockSpec((cont_dim, Nz), lambda i: (0, 0)),
            pl.BlockSpec((1, Nz), lambda i: (0, 0)),
        ],
        out_specs=(pl.BlockSpec((M, Ncd), lambda i: (0, 0)),
                   pl.BlockSpec((M, Nz), lambda i: (0, 0))),
        compiler_params=pltpu.CompilerParams(vmem_limit_bytes=_VMEM_LIMIT),
    )(flat, wcd, bcd, wh, bh)
    return cd, z


# ----------------------------------------------------------------------------
# Parameter initialization (matches GuidingNet._initialize_weights semantics)
# ----------------------------------------------------------------------------
def init_params(key, output_k=None):
    if output_k is None:
        output_k = {'cont': 128, 'disc': 10}
    cont_k, disc_k = output_k['cont'], output_k['disc']
    h_k = cont_k // 3

    params = {'features': [], 'dims': {'cont': cont_k, 'disc': disc_k, 'h': h_k}}
    in_ch = 3
    for v in CFG_VGG8:
        if v == 'M':
            params['features'].append(('M', None))
        else:
            key, wk = jax.random.split(key)
            fan_out = v * 3 * 3
            std = (2.0 / fan_out) ** 0.5  # kaiming_normal, fan_out, relu
            w = std * jax.random.normal(wk, (3, 3, in_ch, v), jnp.float32)
            w9 = w.reshape(9, in_ch, v).astype(jnp.bfloat16)
            # Conv bias dropped: zero-init and cancelled by training-mode BN.
            gamma = jnp.ones((1, v), jnp.float32)   # BN weight = 1
            beta = jnp.zeros((1, v), jnp.float32)   # BN bias = 0
            params['features'].append(('C', (w9, gamma, beta)))
            in_ch = v

    # Heads: cont (512->cont_k), disc (512->disc_k), h (cont_k->h_k), N(0, 0.01).
    key, k_cont, k_disc, k_h = jax.random.split(key, 4)
    w_cont = 0.01 * jax.random.normal(k_cont, (512, cont_k), jnp.float32)
    w_disc = 0.01 * jax.random.normal(k_disc, (512, disc_k), jnp.float32)
    w_h = 0.01 * jax.random.normal(k_h, (cont_k, h_k), jnp.float32)

    n_cd = _round_up(cont_k + disc_k, 128)
    n_z = _round_up(h_k, 128)
    wcd = jnp.zeros((512, n_cd), jnp.float32)
    wcd = wcd.at[:, :cont_k].set(w_cont)
    wcd = wcd.at[:, cont_k:cont_k + disc_k].set(w_disc)
    bcd = jnp.zeros((1, n_cd), jnp.float32)          # Linear bias = 0
    wh = jnp.zeros((cont_k, n_z), jnp.float32).at[:, :h_k].set(w_h)
    bh = jnp.zeros((1, n_z), jnp.float32)
    params['heads'] = (wcd, bcd, wh, bh)
    return params


# ----------------------------------------------------------------------------
# Forward pass (GuidingNet.forward)
# ----------------------------------------------------------------------------
def guiding_net_forward(params, x_nchw, sty=False):
    x = jnp.transpose(x_nchw, (0, 2, 3, 1)).astype(jnp.bfloat16)  # NCHW -> NHWC
    for kind, p in params['features']:
        if kind == 'M':
            x = maxpool2x2(x)
        else:
            w9, gamma, beta = p
            x = conv3x3_bn_relu(x, w9, gamma, beta)

    # adaptive_avg_pool2d(.,(1,1)) + flatten -> (N, 512)
    flat = jnp.mean(x.astype(jnp.float32), axis=(1, 2))

    dims = params['dims']
    cd, z = heads_forward(flat, params['heads'], dims['cont'])
    cont = cd[:, :dims['cont']]
    if sty:
        return cont
    disc = cd[:, dims['cont']:dims['cont'] + dims['disc']]
    cont_z = z[:, :dims['h']]
    return {'cont': cont, 'disc': disc, 'z': cont_z}


# ----------------------------------------------------------------------------
if __name__ == "__main__":
    key = jax.random.PRNGKey(0)
    pkey, xkey = jax.random.split(key)
    params = init_params(pkey)

    # Small input: batch=2, 3 channels, 32x32 spatial (5 maxpools -> 1x1).
    x = jax.random.normal(xkey, (2, 3, 32, 32), jnp.float32)

    out = guiding_net_forward(params, x)
    out = jax.block_until_ready(out)

    assert out['cont'].shape == (2, 128)
    assert out['disc'].shape == (2, 10)
    assert out['z'].shape == (2, 42)
    assert all(bool(jnp.all(jnp.isfinite(v))) for v in out.values())
    print("KERNEL_OK")
</pallas_src>

<mosaic_0001>
module attributes {stable_mosaic.version = 11 : i64} {
  func.func @_conv_bn_relu_kernel(%arg0: i32, %arg1: i32, %arg2: memref<1x2048x8xbf16, #tpu.memory_space<vmem>>, %arg3: memref<1x8x64xbf16, #tpu.memory_space<vmem>>, %arg4: memref<1x64xf32, #tpu.memory_space<vmem>>, %arg5: memref<1x64xf32, #tpu.memory_space<vmem>>, %arg6: memref<2048x64xbf16, #tpu.memory_space<vmem>>, %arg7: memref<2048x64xf32, #tpu.memory_space<vmem>>) attributes {dimension_semantics = [#tpu.dimension_semantics<parallel>, #tpu.dimension_semantics<arbitrary>], iteration_bounds = array<i64: 1, 9>, scalar_prefetch = 0 : i64, scratch_operands = 1 : i64, tpu.core_type = #tpu.core_type<tc>, window_params = [{transform_indices = @transform_0, window_bounds = array<i64: 1, 2048, 8>}, {transform_indices = @transform_1, window_bounds = array<i64: 1, 8, 64>}, {transform_indices = @transform_2, window_bounds = array<i64: 1, 64>}, {transform_indices = @transform_3, window_bounds = array<i64: 1, 64>}, {transform_indices = @transform_4, window_bounds = array<i64: 2048, 64>}]} {
    %c0_i32 = arith.constant 0 : i32
    %0 = arith.cmpi eq, %arg1, %c0_i32 : i32
    %1 = arith.extui %0 : i1 to i32
    %c0_i32_0 = arith.constant 0 : i32
    %2 = arith.cmpi ne, %1, %c0_i32_0 : i32
    scf.if %2 {
      %cst_11 = arith.constant 0.000000e+00 : f32
      %14 = vector.broadcast %cst_11 : f32 to vector<2048x64xf32>
      %c0_12 = arith.constant 0 : index
      %c0_13 = arith.constant 0 : index
      %15 = vector.load %arg7[%c0_12, %c0_13] : memref<2048x64xf32, #tpu.memory_space<vmem>>, vector<2048x64xf32>
      tpu.vector_store %arg7[%c0_12, %c0_13], %14 {strides = array<i32>} : memref<2048x64xf32, #tpu.memory_space<vmem>>, vector<2048x64xf32>,
    } else {
    }
    %c0 = arith.constant 0 : index
    %c0_1 = arith.constant 0 : index
    %3 = vector.load %arg7[%c0, %c0_1] : memref<2048x64xf32, #tpu.memory_space<vmem>>, vector<2048x64xf32>
    %c0_2 = arith.constant 0 : index
    %c0_3 = arith.constant 0 : index
    %c0_4 = arith.constant 0 : index
    %4 = vector.load %arg2[%c0_2, %c0_3, %c0_4] : memref<1x2048x8xbf16, #tpu.memory_space<vmem>>, vector<1x2048x8xbf16>
    %5 = vector.shape_cast %4 : vector<1x2048x8xbf16> to vector<2048x8xbf16>
    %c0_5 = arith.constant 0 : index
    %c0_6 = arith.constant 0 : index
    %c0_7 = arith.constant 0 : index
    %6 = vector.load %arg3[%c0_5, %c0_6, %c0_7] : memref<1x8x64xbf16, #tpu.memory_space<vmem>>, vector<1x8x64xbf16>
    %7 = vector.shape_cast %6 : vector<1x8x64xbf16> to vector<8x64xbf16>
    %cst = arith.constant dense<0.000000e+00> : vector<2048x64xf32>
    %8 = tpu.matmul %5, %7, %cst {dimension_numbers = #tpu.dot_dimension_numbers<[1], [0], [0], [1], [0, 0, 1, 1], [], []>} : vector<2048x8xbf16>, vector<8x64xbf16>, vector<2048x64xf32> -> vector<2048x64xf32>
    %9 = arith.addf %3, %8 : vector<2048x64xf32>
    %c0_8 = arith.constant 0 : index
    %c0_9 = arith.constant 0 : index
    %10 = vector.load %arg7[%c0_8, %c0_9] : memref<2048x64xf32, #tpu.memory_space<vmem>>, vector<2048x64xf32>
    tpu.vector_store %arg7[%c0_8, %c0_9], %9 {strides = array<i32>} : memref<2048x64xf32, #tpu.memory_space<vmem>>, vector<2048x64xf32>,
    %c8_i32 = arith.constant 8 : i32
    %11 = arith.cmpi eq, %arg1, %c8_i32 : i32
    %12 = arith.extui %11 : i1 to i32
    %c0_i32_10 = arith.constant 0 : i32
    %13 = arith.cmpi ne, %12, %c0_i32_10 : i32
    scf.if %13 {
      %c0_11 = arith.constant 0 : index
      %c0_12 = arith.constant 0 : index
      %14 = vector.load %arg7[%c0_11, %c0_12] : memref<2048x64xf32, #tpu.memory_space<vmem>>, vector<2048x64xf32>
      %cst_13 = arith.constant dense<0.000000e+00> : vector<64xf32>
      %15 = vector.multi_reduction <add>, %14, %cst_13 [0] : vector<2048x64xf32> to vector<64xf32>
      %16 = vector.shape_cast %15 : vector<64xf32> to vector<1x64xf32>
      %cst_14 = arith.constant 4.8828125E-4 : f32
      %17 = vector.broadcast %cst_14 : f32 to vector<1x64xf32>
      %18 = arith.mulf %16, %17 : vector<1x64xf32>
      %19 = vector.broadcast %18 : vector<1x64xf32> to vector<2048x64xf32>
      %20 = arith.subf %14, %19 : vector<2048x64xf32>
      %21 = arith.mulf %20, %20 : vector<2048x64xf32>
      %cst_15 = arith.constant dense<0.000000e+00> : vector<64xf32>
      %22 = vector.multi_reduction <add>, %21, %cst_15 [0] : vector<2048x64xf32> to vector<64xf32>
      %23 = vector.shape_cast %22 : vector<64xf32> to vector<1x64xf32>
      %cst_16 = arith.constant 4.8828125E-4 : f32
      %24 = vector.broadcast %cst_16 : f32 to vector<1x64xf32>
      %25 = arith.mulf %23, %24 : vector<1x64xf32>
      %cst_17 = arith.constant 9.99999974E-6 : f32
      %26 = vector.broadcast %cst_17 : f32 to vector<1x64xf32>
      %27 = arith.addf %25, %26 : vector<1x64xf32>
      %28 = math.rsqrt %27 : vector<1x64xf32>
      %29 = vector.broadcast %28 : vector<1x64xf32> to vector<2048x64xf32>
      %30 = arith.mulf %20, %29 : vector<2048x64xf32>
      %c0_18 = arith.constant 0 : index
      %c0_19 = arith.constant 0 : index
      %31 = vector.load %arg4[%c0_18, %c0_19] : memref<1x64xf32, #tpu.memory_space<vmem>>, vector<1x64xf32>
      %32 = vector.broadcast %31 : vector<1x64xf32> to vector<2048x64xf32>
      %33 = arith.mulf %30, %32 : vector<2048x64xf32>
      %c0_20 = arith.constant 0 : index
      %c0_21 = arith.constant 0 : index
      %34 = vector.load %arg5[%c0_20, %c0_21] : memref<1x64xf32, #tpu.memory_space<vmem>>, vector<1x64xf32>
      %35 = vector.broadcast %34 : vector<1x64xf32> to vector<2048x64xf32>
      %36 = arith.addf %33, %35 : vector<2048x64xf32>
      %cst_22 = arith.constant 0.000000e+00 : f32
      %37 = vector.broadcast %cst_22 : f32 to vector<2048x64xf32>
      %38 = arith.maximumf %36, %37 : vector<2048x64xf32>
      %39 = arith.truncf %38 : vector<2048x64xf32> to vector<2048x64xbf16>
      %c0_23 = arith.constant 0 : index
      %c0_24 = arith.constant 0 : index
      %40 = vector.load %arg6[%c0_23, %c0_24] : memref<2048x64xbf16, #tpu.memory_space<vmem>>, vector<2048x64xbf16>
      tpu.vector_store %arg6[%c0_23, %c0_24], %39 {strides = array<i32>} : memref<2048x64xbf16, #tpu.memory_space<vmem>>, vector<2048x64xbf16>,
    } else {
    }
    return
  }
  func.func @transform_0(%arg0: i32, %arg1: i32) -> (i32, i32, i32) {
    %c0_i32 = arith.constant 0 : i32
    %c0_i32_0 = arith.constant 0 : i32
    %c0_i32_1 = arith.constant 0 : i32
    return %arg1, %c0_i32, %c0_i32_0 : i32, i32, i32
  }
  func.func @transform_1(%arg0: i32, %arg1: i32) -> (i32, i32, i32) {
    %c0_i32 = arith.constant 0 : i32
    %c0_i32_0 = arith.constant 0 : i32
    return %arg1, %c0_i32, %arg0 : i32, i32, i32
  }
  func.func @transform_2(%arg0: i32, %arg1: i32) -> (i32, i32) {
    %c0_i32 = arith.constant 0 : i32
    %c0_i32_0 = arith.constant 0 : i32
    return %c0_i32, %arg0 : i32, i32
  }
  func.func @transform_3(%arg0: i32, %arg1: i32) -> (i32, i32) {
    %c0_i32 = arith.constant 0 : i32
    %c0_i32_0 = arith.constant 0 : i32
    return %c0_i32, %arg0 : i32, i32
  }
  func.func @transform_4(%arg0: i32, %arg1: i32) -> (i32, i32) {
    %c0_i32 = arith.constant 0 : i32
    %c0_i32_0 = arith.constant 0 : i32
    return %c0_i32, %arg0 : i32, i32
  }
}

</mosaic_0001>

<llo_original>
// kernel: tpu_custom_call.1
$region0: #{tpu_custom_call.1}
  #allocation0 [shape = 'u32[]', space=smem, size = 0x4, offset = 0x4, fixed_abs, tag = 'smem constant byte address 0x4 - core index']
  #allocation1 [shape = 'u32[144,128]{1,0:T(1,128)}', space=vmem, size = 0x12000, scoped, tag = 'internal scratch']
  #allocation2 [shape = 'f32[2048,64]{1,0:T(8,128)}', space=vmem, size = 0x100000, scoped, tag = 'scratch operand']
  %s0 = inlined_call_operand.vmem [shape: bf16[9,2048,8], index: 0, kind: input, shape index: {}]
  %s1 = inlined_call_operand.vmem [shape: bf16[9,8,64], index: 1, kind: input, shape index: {}]
  %s2 = inlined_call_operand.vmem [shape: f32[1,64], index: 2, kind: input, shape index: {}]
  %s3 = inlined_call_operand.vmem [shape: f32[1,64], index: 3, kind: input, shape index: {}]
  %s4 = inlined_call_operand.vmem [shape: bf16[2048,64], index: 4, kind: output, shape index: {}]
  %s5 = sld [smem:[#allocation0]]
  $region57: #{tpu_custom_call.1} parent=0
    _
  %s7 = ssub.s32 1, %s5
  %s8 = scalar_select 0, %s7, %s5
  loop: start=0, step=1, limit=11
  $region2: #{tpu_custom_call.1} parent=0 // loop_pre_header
    _
  $region3: #{tpu_custom_call.1} parent=0 // loop_header
    %s10 = sphi 0, %s14
    %p11 = scmp.ge.s32.totalorder %s10, 11
    %s17 = sphi 0, %s29
    %s18 = sphi 0, %s25
    %s19 = sphi 0, %s17
    %s20 = sphi 0, %s18
    %s21 = sphi 0, %s19
    %s22 = sphi 0, %s20
    %s32 = sphi 0, %s34
    %s35 = sphi 0, %s32
    %s36 = sphi 0, %s35
    %s52 = sphi 0, %s36
    %s60 = sphi 0, %s62
    %s63 = sphi 0, %s60
    %s64 = sphi 0, %s63
    %s80 = sphi 0, %s64
    %s86 = sphi 0, %s88
    %s89 = sphi 0, %s86
    %s90 = sphi 0, %s89
    %s106 = sphi 0, %s90
    %s112 = sphi 0, %s114
    %s115 = sphi 0, %s112
    %s116 = sphi 0, %s115
    %s132 = sphi 0, %s116
    %s138 = sphi 0, %s140
    %s141 = sphi 0, %s138
    %s142 = sphi 0, %s141
    %s158 = sphi 0, %s142
  $region4: #{tpu_custom_call.1} parent=0 // loop_header_branch
    %13 = sbr.rel (%p11) target = $region8
  $region5: #{tpu_custom_call.1} parent=0 // loop_body
    %s15 = ssub.s32 %s10, 1
    %s16 = ssub.s32 %s10, 2
    %s23 = sadd.s32 1, %s18
    %p24 = scmp.ge.s32.totalorder %s23, 9
    %s25 = scalar_select %p24, 0, %s23
    %s26 = sadd.s32 1, %s17
    %s27 = scalar_select %p24, %s26, %s17
    %p28 = scmp.ge.s32.totalorder %s27, 1
    %s29 = scalar_select %p28, 0, %s27
    %s30 = ssub.s32 %s18, %s25
    %p31 = scmp.eq.s32.totalorder %s30, 0
    %s33 = sadd.s32 %s32, 1
    %s34 = scalar_select %p31, %s32, %s33
    %p37 = pneg %p31
    %p38 = scmp.eq.s32.totalorder %s10, 8
    %p39 = por %p37, %p38
    %p40 = scmp.ne.s32.totalorder %s32, %s35
    %p41 = scmp.eq.s32.totalorder %s10, 0
    %p42 = por %p40, %p41
    %p43 = scmp.ne.s32.totalorder %s32, %s35
    %p44 = scmp.eq.s32.totalorder %s15, 8
    %p45 = por %p43, %p44
    %p46 = scmp.ne.s32.totalorder %s35, %s36
    %p47 = scmp.eq.s32.totalorder %s15, 0
    %p48 = por %p46, %p47
    %p49 = scmp.ne.s32.totalorder %s35, %s36
    %p50 = scmp.eq.s32.totalorder %s16, 8
    %p51 = por %p49, %p50
    %p53 = scmp.ne.s32.totalorder %s36, %s52
    %p54 = scmp.eq.s32.totalorder %s16, 0
    %p55 = por %p53, %p54
    %s56 = ssub.s32 %s18, %s25
    %s57 = ssub.s32 %s17, %s29
    %s58 = sor.u32 %s56, %s57
    %p59 = scmp.eq.s32.totalorder %s58, 0
    %s61 = sadd.s32 %s60, 1
    %s62 = scalar_select %p59, %s60, %s61
    %p65 = pneg %p59
    %p66 = scmp.eq.s32.totalorder %s10, 8
    %p67 = por %p65, %p66
    %p68 = scmp.ne.s32.totalorder %s60, %s63
    %p69 = scmp.eq.s32.totalorder %s10, 0
    %p70 = por %p68, %p69
    %p71 = scmp.ne.s32.totalorder %s60, %s63
    %p72 = scmp.eq.s32.totalorder %s15, 8
    %p73 = por %p71, %p72
    %p74 = scmp.ne.s32.totalorder %s63, %s64
    %p75 = scmp.eq.s32.totalorder %s15, 0
    %p76 = por %p74, %p75
    %p77 = scmp.ne.s32.totalorder %s63, %s64
    %p78 = scmp.eq.s32.totalorder %s16, 8
    %p79 = por %p77, %p78
    %p81 = scmp.ne.s32.totalorder %s64, %s80
    %p82 = scmp.eq.s32.totalorder %s16, 0
    %p83 = por %p81, %p82
    %s84 = ssub.s32 %s17, %s29
    %p85 = scmp.eq.s32.totalorder %s84, 0
    %s87 = sadd.s32 %s86, 1
    %s88 = scalar_select %p85, %s86, %s87
    %p91 = pneg %p85
    %p92 = scmp.eq.s32.totalorder %s10, 8
    %p93 = por %p91, %p92
    %p94 = scmp.ne.s32.totalorder %s86, %s89
    %p95 = scmp.eq.s32.totalorder %s10, 0
    %p96 = por %p94, %p95
    %p97 = scmp.ne.s32.totalorder %s86, %s89
    %p98 = scmp.eq.s32.totalorder %s15, 8
    %p99 = por %p97, %p98
    %p100 = scmp.ne.s32.totalorder %s89, %s90
    %p101 = scmp.eq.s32.totalorder %s15, 0
    %p102 = por %p100, %p101
    %p103 = scmp.ne.s32.totalorder %s89, %s90
    %p104 = scmp.eq.s32.totalorder %s16, 8
    %p105 = por %p103, %p104
    %p107 = scmp.ne.s32.totalorder %s90, %s106
    %p108 = scmp.eq.s32.totalorder %s16, 0
    %p109 = por %p107, %p108
    %s110 = ssub.s32 %s17, %s29
    %p111 = scmp.eq.s32.totalorder %s110, 0
    %s113 = sadd.s32 %s112, 1
    %s114 = scalar_select %p111, %s112, %s113
    %p117 = pneg %p111
    %p118 = scmp.eq.s32.totalorder %s10, 8
    %p119 = por %p117, %p118
    %p120 = scmp.ne.s32.totalorder %s112, %s115
    %p121 = scmp.eq.s32.totalorder %s10, 0
    %p122 = por %p120, %p121
    %p123 = scmp.ne.s32.totalorder %s112, %s115
    %p124 = scmp.eq.s32.totalorder %s15, 8
    %p125 = por %p123, %p124
    %p126 = scmp.ne.s32.totalorder %s115, %s116
    %p127 = scmp.eq.s32.totalorder %s15, 0
    %p128 = por %p126, %p127
    %p129 = scmp.ne.s32.totalorder %s115, %s116
    %p130 = scmp.eq.s32.totalorder %s16, 8
    %p131 = por %p129, %p130
    %p133 = scmp.ne.s32.totalorder %s116, %s132
    %p134 = scmp.eq.s32.totalorder %s16, 0
    %p135 = por %p133, %p134
    %s136 = ssub.s32 %s17, %s29
    %p137 = scmp.eq.s32.totalorder %s136, 0
    %s139 = sadd.s32 %s138, 1
    %s140 = scalar_select %p137, %s138, %s139
    %p143 = pneg %p137
    %p144 = scmp.eq.s32.totalorder %s10, 8
    %p145 = por %p143, %p144
    %p146 = scmp.ne.s32.totalorder %s138, %s141
    %p147 = scmp.eq.s32.totalorder %s10, 0
    %p148 = por %p146, %p147
    %p149 = scmp.ne.s32.totalorder %s138, %s141
    %p150 = scmp.eq.s32.totalorder %s15, 8
    %p151 = por %p149, %p150
    %p152 = scmp.ne.s32.totalorder %s141, %s142
    %p153 = scmp.eq.s32.totalorder %s15, 0
    %p154 = por %p152, %p153
    %p155 = scmp.ne.s32.totalorder %s141, %s142
    %p156 = scmp.eq.s32.totalorder %s16, 8
    %p157 = por %p155, %p156
    %p159 = scmp.ne.s32.totalorder %s142, %s158
    %p160 = scmp.eq.s32.totalorder %s16, 0
    %p161 = por %p159, %p160
    %p162 = scmp.le.s32.totalorder 1, %s10
    %p163 = scmp.lt.s32.totalorder %s10, 10
    %p164 = pnand %p162, %p163
    %p165 = pneg %p164
    // Predicated region
    $region9: #{tpu_custom_call.1} parent=5 // pred_check
      _
    $region10: #{tpu_custom_call.1} parent=5 // pred_check_branch
      %167 = sbr.rel (%p164) target = $region12
    $region11: #{tpu_custom_call.1} parent=5 // pred_region
      %s168 = ssub.s32 %s10, 1
      // Predicated region
      $region13: #{tpu_custom_call.1} parent=11 // pred_check
        %p169 = pneg %p102
      $region14: #{tpu_custom_call.1} parent=11 // pred_check_branch
        %171 = sbr.rel (%p169) target = $region16
      $region15: #{tpu_custom_call.1} parent=11 // pred_region
        %p172 = scmp.lt.s32.totalorder %s19, 0
        %s173 = scalar_select %p172, %s19, 0
        %s174 = scalar_lea.vmem %s2, %s173
      $region16: #{tpu_custom_call.1} parent=11 // pred_fallthru
        _
      // Predicated region
      $region17: #{tpu_custom_call.1} parent=11 // pred_check
        %p175 = pneg %p128
      $region18: #{tpu_custom_call.1} parent=11 // pred_check_branch
        %177 = sbr.rel (%p175) target = $region20
      $region19: #{tpu_custom_call.1} parent=11 // pred_region
        %p178 = scmp.lt.s32.totalorder %s19, 0
        %s179 = scalar_select %p178, %s19, 0
        %s180 = scalar_lea.vmem %s3, %s179
      $region20: #{tpu_custom_call.1} parent=11 // pred_fallthru
        _
    $region12: #{tpu_custom_call.1} parent=5 // pred_fallthru
      _
    %p181 = scmp.lt.s32.totalorder %s10, 9
    // Predicated region
    $region21: #{tpu_custom_call.1} parent=5 // pred_check
      %p182 = pneg %p181
    $region22: #{tpu_custom_call.1} parent=5 // pred_check_branch
      %184 = sbr.rel (%p182) target = $region24
    $region23: #{tpu_custom_call.1} parent=5 // pred_region
      // Predicated region
      $region25: #{tpu_custom_call.1} parent=23 // pred_check
        %p185 = pneg %p42
      $region26: #{tpu_custom_call.1} parent=23 // pred_check_branch
        %187 = sbr.rel (%p185) target = $region28
      $region27: #{tpu_custom_call.1} parent=23 // pred_region
        %p188 = scmp.lt.s32.totalorder %s18, 8
        %s189 = scalar_select %p188, %s18, 8
        %s190 = smul.addr %s189, 256
        %s191 = smul.addr %s190, 4
        %s192 = scalar_lea.vmem %s0, %s191
      $region28: #{tpu_custom_call.1} parent=23 // pred_fallthru
        _
      // Predicated region
      $region29: #{tpu_custom_call.1} parent=23 // pred_check
        %p193 = pneg %p70
      $region30: #{tpu_custom_call.1} parent=23 // pred_check_branch
        %195 = sbr.rel (%p193) target = $region32
      $region31: #{tpu_custom_call.1} parent=23 // pred_region
        %p196 = scmp.lt.s32.totalorder %s18, 8
        %s197 = scalar_select %p196, %s18, 8
        %p198 = scmp.lt.s32.totalorder %s17, 0
        %s199 = scalar_select %p198, %s17, 0
        %s200 = sadd.s32 %s199, %s197
        %s201 = smul.addr %s200, 4
        %s202 = scalar_lea.vmem %s1, %s201
      $region32: #{tpu_custom_call.1} parent=23 // pred_fallthru
        _
    $region24: #{tpu_custom_call.1} parent=5 // pred_fallthru
      _
    %p203 = scmp.le.s32.totalorder 1, %s10
    %p204 = scmp.lt.s32.totalorder %s10, 10
    %p205 = pnand %p203, %p204
    %p206 = pneg %p205
    // Predicated region
    $region33: #{tpu_custom_call.1} parent=5 // pred_check
      _
    $region34: #{tpu_custom_call.1} parent=5 // pred_check_branch
      %208 = sbr.rel (%p205) target = $region36
    $region35: #{tpu_custom_call.1} parent=5 // pred_region
      %s209 = ssub.s32 %s10, 1
      %p210 = scmp.lt.s32.totalorder %s20, 8
      %s211 = scalar_select %p210, %s20, 8
      %s212 = smul.addr %s211, 256
      %s213 = smul.addr %s212, 4
      %s214 = scalar_lea.vmem %s0, %s213
      %p215 = pneg %p48
      %p216 = pneg %p45
      %p217 = scmp.lt.s32.totalorder %s20, 8
      %s218 = scalar_select %p217, %s20, 8
      %p219 = scmp.lt.s32.totalorder %s19, 0
      %s220 = scalar_select %p219, %s19, 0
      %s221 = sadd.s32 %s220, %s218
      %s222 = smul.addr %s221, 4
      %s223 = scalar_lea.vmem %s1, %s222
      %p224 = pneg %p76
      %p225 = pneg %p73
      %p226 = scmp.lt.s32.totalorder %s19, 0
      %s227 = scalar_select %p226, %s19, 0
      %s228 = scalar_lea.vmem %s2, %s227
      %p229 = pneg %p102
      %p230 = pneg %p99
      %p231 = scmp.lt.s32.totalorder %s19, 0
      %s232 = scalar_select %p231, %s19, 0
      %s233 = scalar_lea.vmem %s3, %s232
      %p234 = pneg %p128
      %p235 = pneg %p125
      %p236 = pneg %p154
      %p237 = pneg %p151
      %p238 = scmp.lt.s32.totalorder %s19, 0
      %s239 = scalar_select %p238, %s19, 0
      %s240 = smul.addr %s239, 4
      %s241 = scalar_lea.vmem %s4, %s240
      %p242 = scmp.lt.s32.totalorder %s20, 8
      %s243 = scalar_select %p242, %s20, 8
      %s244 = smul.addr %s243, 256
      %s245 = smul.addr %s244, 4
      %s246 = scalar_lea.vmem %s0, %s245
      %p247 = scmp.lt.s32.totalorder %s20, 8
      %s248 = scalar_select %p247, %s20, 8
      %p249 = scmp.lt.s32.totalorder %s19, 0
      %s250 = scalar_select %p249, %s19, 0
      %s251 = sadd.s32 %s250, %s248
      %s252 = smul.addr %s251, 4
      %s253 = scalar_lea.vmem %s1, %s252
      %p254 = scmp.lt.s32.totalorder %s19, 0
      %s255 = scalar_select %p254, %s19, 0
      %s256 = scalar_lea.vmem %s2, %s255
      %p257 = scmp.lt.s32.totalorder %s19, 0
      %s258 = scalar_select %p257, %s19, 0
      %s259 = scalar_lea.vmem %s3, %s258
      %p260 = scmp.lt.s32.totalorder %s19, 0
      %s261 = scalar_select %p260, %s19, 0
      %s262 = smul.addr %s261, 4
      %s263 = scalar_lea.vmem %s4, %s262
      %p265 = scmp.eq.s32.totalorder %s20, 0
      // Predicated region
      $region37: #{tpu_custom_call.1} parent=35 // pred_check
        %p266 = pneg %p265
      $region38: #{tpu_custom_call.1} parent=35 // pred_check_branch
        %268 = sbr.rel (%p266) target = $region40
      $region39: #{tpu_custom_call.1} parent=35 // pred_region
        %vm269 = vcmask 523264
        %270 = vst.msk [vmem:[#allocation2] sm:$0xff] %vm269, 0.0
        %271 = vst.msk [vmem:[#allocation2 + $0x8] sm:$0xff] %vm269, 0.0
        %272 = vst.msk [vmem:[#allocation2 + $0x10] sm:$0xff] %vm269, 0.0
        %273 = vst.msk [vmem:[#allocation2 + $0x18] sm:$0xff] %vm269, 0.0
        %274 = vst.msk [vmem:[#allocation2 + $0x20] sm:$0xff] %vm269, 0.0
        %275 = vst.msk [vmem:[#allocation2 + $0x28] sm:$0xff] %vm269, 0.0
        %276 = vst.msk [vmem:[#allocation2 + $0x30] sm:$0xff] %vm269, 0.0
        %277 = vst.msk [vmem:[#allocation2 + $0x38] sm:$0xff] %vm269, 0.0
        %278 = vst.msk [vmem:[#allocation2 + $0x40] sm:$0xff] %vm269, 0.0
        %279 = vst.msk [vmem:[#allocation2 + $0x48] sm:$0xff] %vm269, 0.0
        %280 = vst.msk [vmem:[#allocation2 + $0x50] sm:$0xff] %vm269, 0.0
        %281 = vst.msk [vmem:[#allocation2 + $0x58] sm:$0xff] %vm269, 0.0
        %282 = vst.msk [vmem:[#allocation2 + $0x60] sm:$0xff] %vm269, 0.0
        %283 = vst.msk [vmem:[#allocation2 + $0x68] sm:$0xff] %vm269, 0.0
        %284 = vst.msk [vmem:[#allocation2 + $0x70] sm:$0xff] %vm269, 0.0
        %285 = vst.msk [vmem:[#allocation2 + $0x78] sm:$0xff] %vm269, 0.0
        %286 = vst.msk [vmem:[#allocation2 + $0x80] sm:$0xff] %vm269, 0.0
        %287 = vst.msk [vmem:[#allocation2 + $0x88] sm:$0xff] %vm269, 0.0
        %288 = vst.msk [vmem:[#allocation2 + $0x90] sm:$0xff] %vm269, 0.0
        %289 = vst.msk [vmem:[#allocation2 + $0x98] sm:$0xff] %vm269, 0.0
        %290 = vst.msk [vmem:[#allocation2 + $0xa0] sm:$0xff] %vm269, 0.0
        %291 = vst.msk [vmem:[#allocation2 + $0xa8] sm:$0xff] %vm269, 0.0
        %292 = vst.msk [vmem:[#allocation2 + $0xb0] sm:$0xff] %vm269, 0.0
        %293 = vst.msk [vmem:[#allocation2 + $0xb8] sm:$0xff] %vm269, 0.0
        %294 = vst.msk [vmem:[#allocation2 + $0xc0] sm:$0xff] %vm269, 0.0
        %295 = vst.msk [vmem:[#allocation2 + $0xc8] sm:$0xff] %vm269, 0.0
        %296 = vst.msk [vmem:[#allocation2 + $0xd0] sm:$0xff] %vm269, 0.0
        %297 = vst.msk [vmem:[#allocation2 + $0xd8] sm:$0xff] %vm269, 0.0
        %298 = vst.msk [vmem:[#allocation2 + $0xe0] sm:$0xff] %vm269, 0.0
        %299 = vst.msk [vmem:[#allocation2 + $0xe8] sm:$0xff] %vm269, 0.0
        %300 = vst.msk [vmem:[#allocation2 + $0xf0] sm:$0xff] %vm269, 0.0
        %301 = vst.msk [vmem:[#allocation2 + $0xf8] sm:$0xff] %vm269, 0.0
        %302 = vst.msk [vmem:[#allocation2 + $0x100] sm:$0xff] %vm269, 0.0
        %303 = vst.msk [vmem:[#allocation2 + $0x108] sm:$0xff] %vm269, 0.0
        %304 = vst.msk [vmem:[#allocation2 + $0x110] sm:$0xff] %vm269, 0.0
        %305 = vst.msk [vmem:[#allocation2 + $0x118] sm:$0xff] %vm269, 0.0
        %306 = vst.msk [vmem:[#allocation2 + $0x120] sm:$0xff] %vm269, 0.0
        %307 = vst.msk [vmem:[#allocation2 + $0x128] sm:$0xff] %vm269, 0.0
        %308 = vst.msk [vmem:[#allocation2 + $0x130] sm:$0xff] %vm269, 0.0
        %309 = vst.msk [vmem:[#allocation2 + $0x138] sm:$0xff] %vm269, 0.0
        %310 = vst.msk [vmem:[#allocation2 + $0x140] sm:$0xff] %vm269, 0.0
        %311 = vst.msk [vmem:[#allocation2 + $0x148] sm:$0xff] %vm269, 0.0
        %312 = vst.msk [vmem:[#allocation2 + $0x150] sm:$0xff] %vm269, 0.0
        %313 = vst.msk [vmem:[#allocation2 + $0x158] sm:$0xff] %vm269, 0.0
        %314 = vst.msk [vmem:[#allocation2 + $0x160] sm:$0xff] %vm269, 0.0
        %315 = vst.msk [vmem:[#allocation2 + $0x168] sm:$0xff] %vm269, 0.0
        %316 = vst.msk [vmem:[#allocation2 + $0x170] sm:$0xff] %vm269, 0.0
        %317 = vst.msk [vmem:[#allocation2 + $0x178] sm:$0xff] %vm269, 0.0
        %318 = vst.msk [vmem:[#allocation2 + $0x180] sm:$0xff] %vm269, 0.0
        %319 = vst.msk [vmem:[#allocation2 + $0x188] sm:$0xff] %vm269, 0.0
        %320 = vst.msk [vmem:[#allocation2 + $0x190] sm:$0xff] %vm269, 0.0
        %321 = vst.msk [vmem:[#allocation2 + $0x198] sm:$0xff] %vm269, 0.0
        %322 = vst.msk [vmem:[#allocation2 + $0x1a0] sm:$0xff] %vm269, 0.0
        %323 = vst.msk [vmem:[#allocation2 + $0x1a8] sm:$0xff] %vm269, 0.0
        %324 = vst.msk [vmem:[#allocation2 + $0x1b0] sm:$0xff] %vm269, 0.0
        %325 = vst.msk [vmem:[#allocation2 + $0x1b8] sm:$0xff] %vm269, 0.0
        %326 = vst.msk [vmem:[#allocation2 + $0x1c0] sm:$0xff] %vm269, 0.0
        %327 = vst.msk [vmem:[#allocation2 + $0x1c8] sm:$0xff] %vm269, 0.0
        %328 = vst.msk [vmem:[#allocation2 + $0x1d0] sm:$0xff] %vm269, 0.0
        %329 = vst.msk [vmem:[#allocation2 + $0x1d8] sm:$0xff] %vm269, 0.0
        %330 = vst.msk [vmem:[#allocation2 + $0x1e0] sm:$0xff] %vm269, 0.0
        %331 = vst.msk [vmem:[#allocation2 + $0x1e8] sm:$0xff] %vm269, 0.0
        %332 = vst.msk [vmem:[#allocation2 + $0x1f0] sm:$0xff] %vm269, 0.0
        %333 = vst.msk [vmem:[#allocation2 + $0x1f8] sm:$0xff] %vm269, 0.0
        %334 = vst.msk [vmem:[#allocation2 + $0x200] sm:$0xff] %vm269, 0.0
        %335 = vst.msk [vmem:[#allocation2 + $0x208] sm:$0xff] %vm269, 0.0
        %336 = vst.msk [vmem:[#allocation2 + $0x210] sm:$0xff] %vm269, 0.0
        %337 = vst.msk [vmem:[#allocation2 + $0x218] sm:$0xff] %vm269, 0.0
        %338 = vst.msk [vmem:[#allocation2 + $0x220] sm:$0xff] %vm269, 0.0
        %339 = vst.msk [vmem:[#allocation2 + $0x228] sm:$0xff] %vm269, 0.0
        %340 = vst.msk [vmem:[#allocation2 + $0x230] sm:$0xff] %vm269, 0.0
        %341 = vst.msk [vmem:[#allocation2 + $0x238] sm:$0xff] %vm269, 0.0
        %342 = vst.msk [vmem:[#allocation2 + $0x240] sm:$0xff] %vm269, 0.0
        %343 = vst.msk [vmem:[#allocation2 + $0x248] sm:$0xff] %vm269, 0.0
        %344 = vst.msk [vmem:[#allocation2 + $0x250] sm:$0xff] %vm269, 0.0
        %345 = vst.msk [vmem:[#allocation2 + $0x258] sm:$0xff] %vm269, 0.0
        %346 = vst.msk [vmem:[#allocation2 + $0x260] sm:$0xff] %vm269, 0.0
        %347 = vst.msk [vmem:[#allocation2 + $0x268] sm:$0xff] %vm269, 0.0
        %348 = vst.msk [vmem:[#allocation2 + $0x270] sm:$0xff] %vm269, 0.0
        %349 = vst.msk [vmem:[#allocation2 + $0x278] sm:$0xff] %vm269, 0.0
        %350 = vst.msk [vmem:[#allocation2 + $0x280] sm:$0xff] %vm269, 0.0
        %351 = vst.msk [vmem:[#allocation2 + $0x288] sm:$0xff] %vm269, 0.0
        %352 = vst.msk [vmem:[#allocation2 + $0x290] sm:$0xff] %vm269, 0.0
        %353 = vst.msk [vmem:[#allocation2 + $0x298] sm:$0xff] %vm269, 0.0
        %354 = vst.msk [vmem:[#allocation2 + $0x2a0] sm:$0xff] %vm269, 0.0
        %355 = vst.msk [vmem:[#allocation2 + $0x2a8] sm:$0xff] %vm269, 0.0
        %356 = vst.msk [vmem:[#allocation2 + $0x2b0] sm:$0xff] %vm269, 0.0
        %357 = vst.msk [vmem:[#allocation2 + $0x2b8] sm:$0xff] %vm269, 0.0
        %358 = vst.msk [vmem:[#allocation2 + $0x2c0] sm:$0xff] %vm269, 0.0
        %359 = vst.msk [vmem:[#allocation2 + $0x2c8] sm:$0xff] %vm269, 0.0
        %360 = vst.msk [vmem:[#allocation2 + $0x2d0] sm:$0xff] %vm269, 0.0
        %361 = vst.msk [vmem:[#allocation2 + $0x2d8] sm:$0xff] %vm269, 0.0
        %362 = vst.msk [vmem:[#allocation2 + $0x2e0] sm:$0xff] %vm269, 0.0
        %363 = vst.msk [vmem:[#allocation2 + $0x2e8] sm:$0xff] %vm269, 0.0
        %364 = vst.msk [vmem:[#allocation2 + $0x2f0] sm:$0xff] %vm269, 0.0
        %365 = vst.msk [vmem:[#allocation2 + $0x2f8] sm:$0xff] %vm269, 0.0
        %366 = vst.msk [vmem:[#allocation2 + $0x300] sm:$0xff] %vm269, 0.0
        %367 = vst.msk [vmem:[#allocation2 + $0x308] sm:$0xff] %vm269, 0.0
        %368 = vst.msk [vmem:[#allocation2 + $0x310] sm:$0xff] %vm269, 0.0
        %369 = vst.msk [vmem:[#allocation2 + $0x318] sm:$0xff] %vm269, 0.0
        %370 = vst.msk [vmem:[#allocation2 + $0x320] sm:$0xff] %vm269, 0.0
        %371 = vst.msk [vmem:[#allocation2 + $0x328] sm:$0xff] %vm269, 0.0
        %372 = vst.msk [vmem:[#allocation2 + $0x330] sm:$0xff] %vm269, 0.0
        %373 = vst.msk [vmem:[#allocation2 + $0x338] sm:$0xff] %vm269, 0.0
        %374 = vst.msk [vmem:[#allocation2 + $0x340] sm:$0xff] %vm269, 0.0
        %375 = vst.msk [vmem:[#allocation2 + $0x348] sm:$0xff] %vm269, 0.0
        %376 = vst.msk [vmem:[#allocation2 + $0x350] sm:$0xff] %vm269, 0.0
        %377 = vst.msk [vmem:[#allocation2 + $0x358] sm:$0xff] %vm269, 0.0
        %378 = vst.msk [vmem:[#allocation2 + $0x360] sm:$0xff] %vm269, 0.0
        %379 = vst.msk [vmem:[#allocation2 + $0x368] sm:$0xff] %vm269, 0.0
        %380 = vst.msk [vmem:[#allocation2 + $0x370] sm:$0xff] %vm269, 0.0
        %381 = vst.msk [vmem:[#allocation2 + $0x378] sm:$0xff] %vm269, 0.0
        %382 = vst.msk [vmem:[#allocation2 + $0x380] sm:$0xff] %vm269, 0.0
        %383 = vst.msk [vmem:[#allocation2 + $0x388] sm:$0xff] %vm269, 0.0
        %384 = vst.msk [vmem:[#allocation2 + $0x390] sm:$0xff] %vm269, 0.0
        %385 = vst.msk [vmem:[#allocation2 + $0x398] sm:$0xff] %vm269, 0.0
        %386 = vst.msk [vmem:[#allocation2 + $0x3a0] sm:$0xff] %vm269, 0.0
        %387 = vst.msk [vmem:[#allocation2 + $0x3a8] sm:$0xff] %vm269, 0.0
        %388 = vst.msk [vmem:[#allocation2 + $0x3b0] sm:$0xff] %vm269, 0.0
        %389 = vst.msk [vmem:[#allocation2 + $0x3b8] sm:$0xff] %vm269, 0.0
        %390 = vst.msk [vmem:[#allocation2 + $0x3c0] sm:$0xff] %vm269, 0.0
        %391 = vst.msk [vmem:[#allocation2 + $0x3c8] sm:$0xff] %vm269, 0.0
        %392 = vst.msk [vmem:[#allocation2 + $0x3d0] sm:$0xff] %vm269, 0.0
        %393 = vst.msk [vmem:[#allocation2 + $0x3d8] sm:$0xff] %vm269, 0.0
        %394 = vst.msk [vmem:[#allocation2 + $0x3e0] sm:$0xff] %vm269, 0.0
        %395 = vst.msk [vmem:[#allocation2 + $0x3e8] sm:$0xff] %vm269, 0.0
        %396 = vst.msk [vmem:[#allocation2 + $0x3f0] sm:$0xff] %vm269, 0.0
        %397 = vst.msk [vmem:[#allocation2 + $0x3f8] sm:$0xff] %vm269, 0.0
        %398 = vst.msk [vmem:[#allocation2 + $0x400] sm:$0xff] %vm269, 0.0
        %399 = vst.msk [vmem:[#allocation2 + $0x408] sm:$0xff] %vm269, 0.0
        %400 = vst.msk [vmem:[#allocation2 + $0x410] sm:$0xff] %vm269, 0.0
        %401 = vst.msk [vmem:[#allocation2 + $0x418] sm:$0xff] %vm269, 0.0
        %402 = vst.msk [vmem:[#allocation2 + $0x420] sm:$0xff] %vm269, 0.0
        %403 = vst.msk [vmem:[#allocation2 + $0x428] sm:$0xff] %vm269, 0.0
        %404 = vst.msk [vmem:[#allocation2 + $0x430] sm:$0xff] %vm269, 0.0
        %405 = vst.msk [vmem:[#allocation2 + $0x438] sm:$0xff] %vm269, 0.0
        %406 = vst.msk [vmem:[#allocation2 + $0x440] sm:$0xff] %vm269, 0.0
        %407 = vst.msk [vmem:[#allocation2 + $0x448] sm:$0xff] %vm269, 0.0
        %408 = vst.msk [vmem:[#allocation2 + $0x450] sm:$0xff] %vm269, 0.0
        %409 = vst.msk [vmem:[#allocation2 + $0x458] sm:$0xff] %vm269, 0.0
        %410 = vst.msk [vmem:[#allocation2 + $0x460] sm:$0xff] %vm269, 0.0
        %411 = vst.msk [vmem:[#allocation2 + $0x468] sm:$0xff] %vm269, 0.0
        %412 = vst.msk [vmem:[#allocation2 + $0x470] sm:$0xff] %vm269, 0.0
        %413 = vst.msk [vmem:[#allocation2 + $0x478] sm:$0xff] %vm269, 0.0
        %414 = vst.msk [vmem:[#allocation2 + $0x480] sm:$0xff] %vm269, 0.0
        %415 = vst.msk [vmem:[#allocation2 + $0x488] sm:$0xff] %vm269, 0.0
        %416 = vst.msk [vmem:[#allocation2 + $0x490] sm:$0xff] %vm269, 0.0
        %417 = vst.msk [vmem:[#allocation2 + $0x498] sm:$0xff] %vm269, 0.0
        %418 = vst.msk [vmem:[#allocation2 + $0x4a0] sm:$0xff] %vm269, 0.0
        %419 = vst.msk [vmem:[#allocation2 + $0x4a8] sm:$0xff] %vm269, 0.0
        %420 = vst.msk [vmem:[#allocation2 + $0x4b0] sm:$0xff] %vm269, 0.0
        %421 = vst.msk [vmem:[#allocation2 + $0x4b8] sm:$0xff] %vm269, 0.0
        %422 = vst.msk [vmem:[#allocation2 + $0x4c0] sm:$0xff] %vm269, 0.0
        %423 = vst.msk [vmem:[#allocation2 + $0x4c8] sm:$0xff] %vm269, 0.0
        %424 = vst.msk [vmem:[#allocation2 + $0x4d0] sm:$0xff] %vm269, 0.0
        %425 = vst.msk [vmem:[#allocation2 + $0x4d8] sm:$0xff] %vm269, 0.0
        %426 = vst.msk [vmem:[#allocation2 + $0x4e0] sm:$0xff] %vm269, 0.0
        %427 = vst.msk [vmem:[#allocation2 + $0x4e8] sm:$0xff] %vm269, 0.0
        %428 = vst.msk [vmem:[#allocation2 + $0x4f0] sm:$0xff] %vm269, 0.0
        %429 = vst.msk [vmem:[#allocation2 + $0x4f8] sm:$0xff] %vm269, 0.0
        %430 = vst.msk [vmem:[#allocation2 + $0x500] sm:$0xff] %vm269, 0.0
        %431 = vst.msk [vmem:[#allocation2 + $0x508] sm:$0xff] %vm269, 0.0
        %432 = vst.msk [vmem:[#allocation2 + $0x510] sm:$0xff] %vm269, 0.0
        %433 = vst.msk [vmem:[#allocation2 + $0x518] sm:$0xff] %vm269, 0.0
        %434 = vst.msk [vmem:[#allocation2 + $0x520] sm:$0xff] %vm269, 0.0
        %435 = vst.msk [vmem:[#allocation2 + $0x528] sm:$0xff] %vm269, 0.0
        %436 = vst.msk [vmem:[#allocation2 + $0x530] sm:$0xff] %vm269, 0.0
        %437 = vst.msk [vmem:[#allocation2 + $0x538] sm:$0xff] %vm269, 0.0
        %438 = vst.msk [vmem:[#allocation2 + $0x540] sm:$0xff] %vm269, 0.0
        %439 = vst.msk [vmem:[#allocation2 + $0x548] sm:$0xff] %vm269, 0.0
        %440 = vst.msk [vmem:[#allocation2 + $0x550] sm:$0xff] %vm269, 0.0
        %441 = vst.msk [vmem:[#allocation2 + $0x558] sm:$0xff] %vm269, 0.0
        %442 = vst.msk [vmem:[#allocation2 + $0x560] sm:$0xff] %vm269, 0.0
        %443 = vst.msk [vmem:[#allocation2 + $0x568] sm:$0xff] %vm269, 0.0
        %444 = vst.msk [vmem:[#allocation2 + $0x570] sm:$0xff] %vm269, 0.0
        %445 = vst.msk [vmem:[#allocation2 + $0x578] sm:$0xff] %vm269, 0.0
        %446 = vst.msk [vmem:[#allocation2 + $0x580] sm:$0xff] %vm269, 0.0
        %447 = vst.msk [vmem:[#allocation2 + $0x588] sm:$0xff] %vm269, 0.0
        %448 = vst.msk [vmem:[#allocation2 + $0x590] sm:$0xff] %vm269, 0.0
        %449 = vst.msk [vmem:[#allocation2 + $0x598] sm:$0xff] %vm269, 0.0
        %450 = vst.msk [vmem:[#allocation2 + $0x5a0] sm:$0xff] %vm269, 0.0
        %451 = vst.msk [vmem:[#allocation2 + $0x5a8] sm:$0xff] %vm269, 0.0
        %452 = vst.msk [vmem:[#allocation2 + $0x5b0] sm:$0xff] %vm269, 0.0
        %453 = vst.msk [vmem:[#allocation2 + $0x5b8] sm:$0xff] %vm269, 0.0
        %454 = vst.msk [vmem:[#allocation2 + $0x5c0] sm:$0xff] %vm269, 0.0
        %455 = vst.msk [vmem:[#allocation2 + $0x5c8] sm:$0xff] %vm269, 0.0
        %456 = vst.msk [vmem:[#allocation2 + $0x5d0] sm:$0xff] %vm269, 0.0
        %457 = vst.msk [vmem:[#allocation2 + $0x5d8] sm:$0xff] %vm269, 0.0
        %458 = vst.msk [vmem:[#allocation2 + $0x5e0] sm:$0xff] %vm269, 0.0
        %459 = vst.msk [vmem:[#allocation2 + $0x5e8] sm:$0xff] %vm269, 0.0
        %460 = vst.msk [vmem:[#allocation2 + $0x5f0] sm:$0xff] %vm269, 0.0
        %461 = vst.msk [vmem:[#allocation2 + $0x5f8] sm:$0xff] %vm269, 0.0
        %462 = vst.msk [vmem:[#allocation2 + $0x600] sm:$0xff] %vm269, 0.0
        %463 = vst.msk [vmem:[#allocation2 + $0x608] sm:$0xff] %vm269, 0.0
        %464 = vst.msk [vmem:[#allocation2 + $0x610] sm:$0xff] %vm269, 0.0
        %465 = vst.msk [vmem:[#allocation2 + $0x618] sm:$0xff] %vm269, 0.0
        %466 = vst.msk [vmem:[#allocation2 + $0x620] sm:$0xff] %vm269, 0.0
        %467 = vst.msk [vmem:[#allocation2 + $0x628] sm:$0xff] %vm269, 0.0
        %468 = vst.msk [vmem:[#allocation2 + $0x630] sm:$0xff] %vm269, 0.0
        %469 = vst.msk [vmem:[#allocation2 + $0x638] sm:$0xff] %vm269, 0.0
        %470 = vst.msk [vmem:[#allocation2 + $0x640] sm:$0xff] %vm269, 0.0
        %471 = vst.msk [vmem:[#allocation2 + $0x648] sm:$0xff] %vm269, 0.0
        %472 = vst.msk [vmem:[#allocation2 + $0x650] sm:$0xff] %vm269, 0.0
        %473 = vst.msk [vmem:[#allocation2 + $0x658] sm:$0xff] %vm269, 0.0
        %474 = vst.msk [vmem:[#allocation2 + $0x660] sm:$0xff] %vm269, 0.0
        %475 = vst.msk [vmem:[#allocation2 + $0x668] sm:$0xff] %vm269, 0.0
        %476 = vst.msk [vmem:[#allocation2 + $0x670] sm:$0xff] %vm269, 0.0
        %477 = vst.msk [vmem:[#allocation2 + $0x678] sm:$0xff] %vm269, 0.0
        %478 = vst.msk [vmem:[#allocation2 + $0x680] sm:$0xff] %vm269, 0.0
        %479 = vst.msk [vmem:[#allocation2 + $0x688] sm:$0xff] %vm269, 0.0
        %480 = vst.msk [vmem:[#allocation2 + $0x690] sm:$0xff] %vm269, 0.0
        %481 = vst.msk [vmem:[#allocation2 + $0x698] sm:$0xff] %vm269, 0.0
        %482 = vst.msk [vmem:[#allocation2 + $0x6a0] sm:$0xff] %vm269, 0.0
        %483 = vst.msk [vmem:[#allocation2 + $0x6a8] sm:$0xff] %vm269, 0.0
        %484 = vst.msk [vmem:[#allocation2 + $0x6b0] sm:$0xff] %vm269, 0.0
        %485 = vst.msk [vmem:[#allocation2 + $0x6b8] sm:$0xff] %vm269, 0.0
        %486 = vst.msk [vmem:[#allocation2 + $0x6c0] sm:$0xff] %vm269, 0.0
        %487 = vst.msk [vmem:[#allocation2 + $0x6c8] sm:$0xff] %vm269, 0.0
        %488 = vst.msk [vmem:[#allocation2 + $0x6d0] sm:$0xff] %vm269, 0.0
        %489 = vst.msk [vmem:[#allocation2 + $0x6d8] sm:$0xff] %vm269, 0.0
        %490 = vst.msk [vmem:[#allocation2 + $0x6e0] sm:$0xff] %vm269, 0.0
        %491 = vst.msk [vmem:[#allocation2 + $0x6e8] sm:$0xff] %vm269, 0.0
        %492 = vst.msk [vmem:[#allocation2 + $0x6f0] sm:$0xff] %vm269, 0.0
        %493 = vst.msk [vmem:[#allocation2 + $0x6f8] sm:$0xff] %vm269, 0.0
        %494 = vst.msk [vmem:[#allocation2 + $0x700] sm:$0xff] %vm269, 0.0
        %495 = vst.msk [vmem:[#allocation2 + $0x708] sm:$0xff] %vm269, 0.0
        %496 = vst.msk [vmem:[#allocation2 + $0x710] sm:$0xff] %vm269, 0.0
        %497 = vst.msk [vmem:[#allocation2 + $0x718] sm:$0xff] %vm269, 0.0
        %498 = vst.msk [vmem:[#allocation2 + $0x720] sm:$0xff] %vm269, 0.0
        %499 = vst.msk [vmem:[#allocation2 + $0x728] sm:$0xff] %vm269, 0.0
        %500 = vst.msk [vmem:[#allocation2 + $0x730] sm:$0xff] %vm269, 0.0
        %501 = vst.msk [vmem:[#allocation2 + $0x738] sm:$0xff] %vm269, 0.0
        %502 = vst.msk [vmem:[#allocation2 + $0x740] sm:$0xff] %vm269, 0.0
        %503 = vst.msk [vmem:[#allocation2 + $0x748] sm:$0xff] %vm269, 0.0
        %504 = vst.msk [vmem:[#allocation2 + $0x750] sm:$0xff] %vm269, 0.0
        %505 = vst.msk [vmem:[#allocation2 + $0x758] sm:$0xff] %vm269, 0.0
        %506 = vst.msk [vmem:[#allocation2 + $0x760] sm:$0xff] %vm269, 0.0
        %507 = vst.msk [vmem:[#allocation2 + $0x768] sm:$0xff] %vm269, 0.0
        %508 = vst.msk [vmem:[#allocation2 + $0x770] sm:$0xff] %vm269, 0.0
        %509 = vst.msk [vmem:[#allocation2 + $0x778] sm:$0xff] %vm269, 0.0
        %510 = vst.msk [vmem:[#allocation2 + $0x780] sm:$0xff] %vm269, 0.0
        %511 = vst.msk [vmem:[#allocation2 + $0x788] sm:$0xff] %vm269, 0.0
        %512 = vst.msk [vmem:[#allocation2 + $0x790] sm:$0xff] %vm269, 0.0
        %513 = vst.msk [vmem:[#allocation2 + $0x798] sm:$0xff] %vm269, 0.0
        %514 = vst.msk [vmem:[#allocation2 + $0x7a0] sm:$0xff] %vm269, 0.0
        %515 = vst.msk [vmem:[#allocation2 + $0x7a8] sm:$0xff] %vm269, 0.0
        %516 = vst.msk [vmem:[#allocation2 + $0x7b0] sm:$0xff] %vm269, 0.0
        %517 = vst.msk [vmem:[#allocation2 + $0x7b8] sm:$0xff] %vm269, 0.0
        %518 = vst.msk [vmem:[#allocation2 + $0x7c0] sm:$0xff] %vm269, 0.0
        %519 = vst.msk [vmem:[#allocation2 + $0x7c8] sm:$0xff] %vm269, 0.0
        %520 = vst.msk [vmem:[#allocation2 + $0x7d0] sm:$0xff] %vm269, 0.0
        %521 = vst.msk [vmem:[#allocation2 + $0x7d8] sm:$0xff] %vm269, 0.0
        %522 = vst.msk [vmem:[#allocation2 + $0x7e0] sm:$0xff] %vm269, 0.0
        %523 = vst.msk [vmem:[#allocation2 + $0x7e8] sm:$0xff] %vm269, 0.0
        %524 = vst.msk [vmem:[#allocation2 + $0x7f0] sm:$0xff] %vm269, 0.0
        %525 = vst.msk [vmem:[#allocation2 + $0x7f8] sm:$0xff] %vm269, 0.0
      $region40: #{tpu_custom_call.1} parent=35 // pred_fallthru
        _
      %v526 = vld [vmem:[#allocation2] sm:$0xff]
      %v527 = vld [vmem:[#allocation2 + $0x8] sm:$0xff]
      %v528 = vld [vmem:[#allocation2 + $0x10] sm:$0xff]
      %v529 = vld [vmem:[#allocation2 + $0x18] sm:$0xff]
      %v530 = vld [vmem:[#allocation2 + $0x20] sm:$0xff]
      %v531 = vld [vmem:[#allocation2 + $0x28] sm:$0xff]
      %v532 = vld [vmem:[#allocation2 + $0x30] sm:$0xff]
      %v533 = vld [vmem:[#allocation2 + $0x38] sm:$0xff]
      %v534 = vld [vmem:[#allocation2 + $0x40] sm:$0xff]
      %v535 = vld [vmem:[#allocation2 + $0x48] sm:$0xff]
      %v536 = vld [vmem:[#allocation2 + $0x50] sm:$0xff]
      %v537 = vld [vmem:[#allocation2 + $0x58] sm:$0xff]
      %v538 = vld [vmem:[#allocation2 + $0x60] sm:$0xff]
      %v539 = vld [vmem:[#allocation2 + $0x68] sm:$0xff]
      %v540 = vld [vmem:[#allocation2 + $0x70] sm:$0xff]
      %v541 = vld [vmem:[#allocation2 + $0x78] sm:$0xff]
      %v542 = vld [vmem:[#allocation2 + $0x80] sm:$0xff]
      %v543 = vld [vmem:[#allocation2 + $0x88] sm:$0xff]
      %v544 = vld [vmem:[#allocation2 + $0x90] sm:$0xff]
      %v545 = vld [vmem:[#allocation2 + $0x98] sm:$0xff]
      %v546 = vld [vmem:[#allocation2 + $0xa0] sm:$0xff]
      %v547 = vld [vmem:[#allocation2 + $0xa8] sm:$0xff]
      %v548 = vld [vmem:[#allocation2 + $0xb0] sm:$0xff]
      %v549 = vld [vmem:[#allocation2 + $0xb8] sm:$0xff]
      %v550 = vld [vmem:[#allocation2 + $0xc0] sm:$0xff]
      %v551 = vld [vmem:[#allocation2 + $0xc8] sm:$0xff]
      %v552 = vld [vmem:[#allocation2 + $0xd0] sm:$0xff]
      %v553 = vld [vmem:[#allocation2 + $0xd8] sm:$0xff]
      %v554 = vld [vmem:[#allocation2 + $0xe0] sm:$0xff]
      %v555 = vld [vmem:[#allocation2 + $0xe8] sm:$0xff]
      %v556 = vld [vmem:[#allocation2 + $0xf0] sm:$0xff]
      %v557 = vld [vmem:[#allocation2 + $0xf8] sm:$0xff]
      %v558 = vld [vmem:[#allocation2 + $0x100] sm:$0xff]
      %v559 = vld [vmem:[#allocation2 + $0x108] sm:$0xff]
      %v560 = vld [vmem:[#allocation2 + $0x110] sm:$0xff]
      %v561 = vld [vmem:[#allocation2 + $0x118] sm:$0xff]
      %v562 = vld [vmem:[#allocation2 + $0x120] sm:$0xff]
      %v563 = vld [vmem:[#allocation2 + $0x128] sm:$0xff]
      %v564 = vld [vmem:[#allocation2 + $0x130] sm:$0xff]
      %v565 = vld [vmem:[#allocation2 + $0x138] sm:$0xff]
      %v566 = vld [vmem:[#allocation2 + $0x140] sm:$0xff]
      %v567 = vld [vmem:[#allocation2 + $0x148] sm:$0xff]
      %v568 = vld [vmem:[#allocation2 + $0x150] sm:$0xff]
      %v569 = vld [vmem:[#allocation2 + $0x158] sm:$0xff]
      %v570 = vld [vmem:[#allocation2 + $0x160] sm:$0xff]
      %v571 = vld [vmem:[#allocation2 + $0x168] sm:$0xff]
      %v572 = vld [vmem:[#allocation2 + $0x170] sm:$0xff]
      %v573 = vld [vmem:[#allocation2 + $0x178] sm:$0xff]
      %v574 = vld [vmem:[#allocation2 + $0x180] sm:$0xff]
      %v575 = vld [vmem:[#allocation2 + $0x188] sm:$0xff]
      %v576 = vld [vmem:[#allocation2 + $0x190] sm:$0xff]
      %v577 = vld [vmem:[#allocation2 + $0x198] sm:$0xff]
      %v578 = vld [vmem:[#allocation2 + $0x1a0] sm:$0xff]
      %v579 = vld [vmem:[#allocation2 + $0x1a8] sm:$0xff]
      %v580 = vld [vmem:[#allocation2 + $0x1b0] sm:$0xff]
      %v581 = vld [vmem:[#allocation2 + $0x1b8] sm:$0xff]
      %v582 = vld [vmem:[#allocation2 + $0x1c0] sm:$0xff]
      %v583 = vld [vmem:[#allocation2 + $0x1c8] sm:$0xff]
      %v584 = vld [vmem:[#allocation2 + $0x1d0] sm:$0xff]
      %v585 = vld [vmem:[#allocation2 + $0x1d8] sm:$0xff]
      %v586 = vld [vmem:[#allocation2 + $0x1e0] sm:$0xff]
      %v587 = vld [vmem:[#allocation2 + $0x1e8] sm:$0xff]
      %v588 = vld [vmem:[#allocation2 + $0x1f0] sm:$0xff]
      %v589 = vld [vmem:[#allocation2 + $0x1f8] sm:$0xff]
      %v590 = vld [vmem:[#allocation2 + $0x200] sm:$0xff]
      %v591 = vld [vmem:[#allocation2 + $0x208] sm:$0xff]
      %v592 = vld [vmem:[#allocation2 + $0x210] sm:$0xff]
      %v593 = vld [vmem:[#allocation2 + $0x218] sm:$0xff]
      %v594 = vld [vmem:[#allocation2 + $0x220] sm:$0xff]
      %v595 = vld [vmem:[#allocation2 + $0x228] sm:$0xff]
      %v596 = vld [vmem:[#allocation2 + $0x230] sm:$0xff]
      %v597 = vld [vmem:[#allocation2 + $0x238] sm:$0xff]
      %v598 = vld [vmem:[#allocation2 + $0x240] sm:$0xff]
      %v599 = vld [vmem:[#allocation2 + $0x248] sm:$0xff]
      %v600 = vld [vmem:[#allocation2 + $0x250] sm:$0xff]
      %v601 = vld [vmem:[#allocation2 + $0x258] sm:$0xff]
      %v602 = vld [vmem:[#allocation2 + $0x260] sm:$0xff]
      %v603 = vld [vmem:[#allocation2 + $0x268] sm:$0xff]
      %v604 = vld [vmem:[#allocation2 + $0x270] sm:$0xff]
      %v605 = vld [vmem:[#allocation2 + $0x278] sm:$0xff]
      %v606 = vld [vmem:[#allocation2 + $0x280] sm:$0xff]
      %v607 = vld [vmem:[#allocation2 + $0x288] sm:$0xff]
      %v608 = vld [vmem:[#allocation2 + $0x290] sm:$0xff]
      %v609 = vld [vmem:[#allocation2 + $0x298] sm:$0xff]
      %v610 = vld [vmem:[#allocation2 + $0x2a0] sm:$0xff]
      %v611 = vld [vmem:[#allocation2 + $0x2a8] sm:$0xff]
      %v612 = vld [vmem:[#allocation2 + $0x2b0] sm:$0xff]
      %v613 = vld [vmem:[#allocation2 + $0x2b8] sm:$0xff]
      %v614 = vld [vmem:[#allocation2 + $0x2c0] sm:$0xff]
      %v615 = vld [vmem:[#allocation2 + $0x2c8] sm:$0xff]
      %v616 = vld [vmem:[#allocation2 + $0x2d0] sm:$0xff]
      %v617 = vld [vmem:[#allocation2 + $0x2d8] sm:$0xff]
      %v618 = vld [vmem:[#allocation2 + $0x2e0] sm:$0xff]
      %v619 = vld [vmem:[#allocation2 + $0x2e8] sm:$0xff]
      %v620 = vld [vmem:[#allocation2 + $0x2f0] sm:$0xff]
      %v621 = vld [vmem:[#allocation2 + $0x2f8] sm:$0xff]
      %v622 = vld [vmem:[#allocation2 + $0x300] sm:$0xff]
      %v623 = vld [vmem:[#allocation2 + $0x308] sm:$0xff]
      %v624 = vld [vmem:[#allocation2 + $0x310] sm:$0xff]
      %v625 = vld [vmem:[#allocation2 + $0x318] sm:$0xff]
      %v626 = vld [vmem:[#allocation2 + $0x320] sm:$0xff]
      %v627 = vld [vmem:[#allocation2 + $0x328] sm:$0xff]
      %v628 = vld [vmem:[#allocation2 + $0x330] sm:$0xff]
      %v629 = vld [vmem:[#allocation2 + $0x338] sm:$0xff]
      %v630 = vld [vmem:[#allocation2 + $0x340] sm:$0xff]
      %v631 = vld [vmem:[#allocation2 + $0x348] sm:$0xff]
      %v632 = vld [vmem:[#allocation2 + $0x350] sm:$0xff]
      %v633 = vld [vmem:[#allocation2 + $0x358] sm:$0xff]
      %v634 = vld [vmem:[#allocation2 + $0x360] sm:$0xff]
      %v635 = vld [vmem:[#allocation2 + $0x368] sm:$0xff]
      %v636 = vld [vmem:[#allocation2 + $0x370] sm:$0xff]
      %v637 = vld [vmem:[#allocation2 + $0x378] sm:$0xff]
      %v638 = vld [vmem:[#allocation2 + $0x380] sm:$0xff]
      %v639 = vld [vmem:[#allocation2 + $0x388] sm:$0xff]
      %v640 = vld [vmem:[#allocation2 + $0x390] sm:$0xff]
      %v641 = vld [vmem:[#allocation2 + $0x398] sm:$0xff]
      %v642 = vld [vmem:[#allocation2 + $0x3a0] sm:$0xff]
      %v643 = vld [vmem:[#allocation2 + $0x3a8] sm:$0xff]
      %v644 = vld [vmem:[#allocation2 + $0x3b0] sm:$0xff]
      %v645 = vld [vmem:[#allocation2 + $0x3b8] sm:$0xff]
      %v646 = vld [vmem:[#allocation2 + $0x3c0] sm:$0xff]
      %v647 = vld [vmem:[#allocation2 + $0x3c8] sm:$0xff]
      %v648 = vld [vmem:[#allocation2 + $0x3d0] sm:$0xff]
      %v649 = vld [vmem:[#allocation2 + $0x3d8] sm:$0xff]
      %v650 = vld [vmem:[#allocation2 + $0x3e0] sm:$0xff]
      %v651 = vld [vmem:[#allocation2 + $0x3e8] sm:$0xff]
      %v652 = vld [vmem:[#allocation2 + $0x3f0] sm:$0xff]
      %v653 = vld [vmem:[#allocation2 + $0x3f8] sm:$0xff]
      %v654 = vld [vmem:[#allocation2 + $0x400] sm:$0xff]
      %v655 = vld [vmem:[#allocation2 + $0x408] sm:$0xff]
      %v656 = vld [vmem:[#allocation2 + $0x410] sm:$0xff]
      %v657 = vld [vmem:[#allocation2 + $0x418] sm:$0xff]
      %v658 = vld [vmem:[#allocation2 + $0x420] sm:$0xff]
      %v659 = vld [vmem:[#allocation2 + $0x428] sm:$0xff]
      %v660 = vld [vmem:[#allocation2 + $0x430] sm:$0xff]
      %v661 = vld [vmem:[#allocation2 + $0x438] sm:$0xff]
      %v662 = vld [vmem:[#allocation2 + $0x440] sm:$0xff]
      %v663 = vld [vmem:[#allocation2 + $0x448] sm:$0xff]
      %v664 = vld [vmem:[#allocation2 + $0x450] sm:$0xff]
      %v665 = vld [vmem:[#allocation2 + $0x458] sm:$0xff]
      %v666 = vld [vmem:[#allocation2 + $0x460] sm:$0xff]
      %v667 = vld [vmem:[#allocation2 + $0x468] sm:$0xff]
      %v668 = vld [vmem:[#allocation2 + $0x470] sm:$0xff]
      %v669 = vld [vmem:[#allocation2 + $0x478] sm:$0xff]
      %v670 = vld [vmem:[#allocation2 + $0x480] sm:$0xff]
      %v671 = vld [vmem:[#allocation2 + $0x488] sm:$0xff]
      %v672 = vld [vmem:[#allocation2 + $0x490] sm:$0xff]
      %v673 = vld [vmem:[#allocation2 + $0x498] sm:$0xff]
      %v674 = vld [vmem:[#allocation2 + $0x4a0] sm:$0xff]
      %v675 = vld [vmem:[#allocation2 + $0x4a8] sm:$0xff]
      %v676 = vld [vmem:[#allocation2 + $0x4b0] sm:$0xff]
      %v677 = vld [vmem:[#allocation2 + $0x4b8] sm:$0xff]
      %v678 = vld [vmem:[#allocation2 + $0x4c0] sm:$0xff]
      %v679 = vld [vmem:[#allocation2 + $0x4c8] sm:$0xff]
      %v680 = vld [vmem:[#allocation2 + $0x4d0] sm:$0xff]
      %v681 = vld [vmem:[#allocation2 + $0x4d8] sm:$0xff]
      %v682 = vld [vmem:[#allocation2 + $0x4e0] sm:$0xff]
      %v683 = vld [vmem:[#allocation2 + $0x4e8] sm:$0xff]
      %v684 = vld [vmem:[#allocation2 + $0x4f0] sm:$0xff]
      %v685 = vld [vmem:[#allocation2 + $0x4f8] sm:$0xff]
      %v686 = vld [vmem:[#allocation2 + $0x500] sm:$0xff]
      %v687 = vld [vmem:[#allocation2 + $0x508] sm:$0xff]
      %v688 = vld [vmem:[#allocation2 + $0x510] sm:$0xff]
      %v689 = vld [vmem:[#allocation2 + $0x518] sm:$0xff]
      %v690 = vld [vmem:[#allocation2 + $0x520] sm:$0xff]
      %v691 = vld [vmem:[#allocation2 + $0x528] sm:$0xff]
      %v692 = vld [vmem:[#allocation2 + $0x530] sm:$0xff]
      %v693 = vld [vmem:[#allocation2 + $0x538] sm:$0xff]
      %v694 = vld [vmem:[#allocation2 + $0x540] sm:$0xff]
      %v695 = vld [vmem:[#allocation2 + $0x548] sm:$0xff]
      %v696 = vld [vmem:[#allocation2 + $0x550] sm:$0xff]
      %v697 = vld [vmem:[#allocation2 + $0x558] sm:$0xff]
      %v698 = vld [vmem:[#allocation2 + $0x560] sm:$0xff]
      %v699 = vld [vmem:[#allocation2 + $0x568] sm:$0xff]
      %v700 = vld [vmem:[#allocation2 + $0x570] sm:$0xff]
      %v701 = vld [vmem:[#allocation2 + $0x578] sm:$0xff]
      %v702 = vld [vmem:[#allocation2 + $0x580] sm:$0xff]
      %v703 = vld [vmem:[#allocation2 + $0x588] sm:$0xff]
      %v704 = vld [vmem:[#allocation2 + $0x590] sm:$0xff]
      %v705 = vld [vmem:[#allocation2 + $0x598] sm:$0xff]
      %v706 = vld [vmem:[#allocation2 + $0x5a0] sm:$0xff]
      %v707 = vld [vmem:[#allocation2 + $0x5a8] sm:$0xff]
      %v708 = vld [vmem:[#allocation2 + $0x5b0] sm:$0xff]
      %v709 = vld [vmem:[#allocation2 + $0x5b8] sm:$0xff]
      %v710 = vld [vmem:[#allocation2 + $0x5c0] sm:$0xff]
      %v711 = vld [vmem:[#allocation2 + $0x5c8] sm:$0xff]
      %v712 = vld [vmem:[#allocation2 + $0x5d0] sm:$0xff]
      %v713 = vld [vmem:[#allocation2 + $0x5d8] sm:$0xff]
      %v714 = vld [vmem:[#allocation2 + $0x5e0] sm:$0xff]
      %v715 = vld [vmem:[#allocation2 + $0x5e8] sm:$0xff]
      %v716 = vld [vmem:[#allocation2 + $0x5f0] sm:$0xff]
      %v717 = vld [vmem:[#allocation2 + $0x5f8] sm:$0xff]
      %v718 = vld [vmem:[#allocation2 + $0x600] sm:$0xff]
      %v719 = vld [vmem:[#allocation2 + $0x608] sm:$0xff]
      %v720 = vld [vmem:[#allocation2 + $0x610] sm:$0xff]
      %v721 = vld [vmem:[#allocation2 + $0x618] sm:$0xff]
      %v722 = vld [vmem:[#allocation2 + $0x620] sm:$0xff]
      %v723 = vld [vmem:[#allocation2 + $0x628] sm:$0xff]
      %v724 = vld [vmem:[#allocation2 + $0x630] sm:$0xff]
      %v725 = vld [vmem:[#allocation2 + $0x638] sm:$0xff]
      %v726 = vld [vmem:[#allocation2 + $0x640] sm:$0xff]
      %v727 = vld [vmem:[#allocation2 + $0x648] sm:$0xff]
      %v728 = vld [vmem:[#allocation2 + $0x650] sm:$0xff]
      %v729 = vld [vmem:[#allocation2 + $0x658] sm:$0xff]
      %v730 = vld [vmem:[#allocation2 + $0x660] sm:$0xff]
      %v731 = vld [vmem:[#allocation2 + $0x668] sm:$0xff]
      %v732 = vld [vmem:[#allocation2 + $0x670] sm:$0xff]
      %v733 = vld [vmem:[#allocation2 + $0x678] sm:$0xff]
      %v734 = vld [vmem:[#allocation2 + $0x680] sm:$0xff]
      %v735 = vld [vmem:[#allocation2 + $0x688] sm:$0xff]
      %v736 = vld [vmem:[#allocation2 + $0x690] sm:$0xff]
      %v737 = vld [vmem:[#allocation2 + $0x698] sm:$0xff]
      %v738 = vld [vmem:[#allocation2 + $0x6a0] sm:$0xff]
      %v739 = vld [vmem:[#allocation2 + $0x6a8] sm:$0xff]
      %v740 = vld [vmem:[#allocation2 + $0x6b0] sm:$0xff]
      %v741 = vld [vmem:[#allocation2 + $0x6b8] sm:$0xff]
      %v742 = vld [vmem:[#allocation2 + $0x6c0] sm:$0xff]
      %v743 = vld [vmem:[#allocation2 + $0x6c8] sm:$0xff]
      %v744 = vld [vmem:[#allocation2 + $0x6d0] sm:$0xff]
      %v745 = vld [vmem:[#allocation2 + $0x6d8] sm:$0xff]
      %v746 = vld [vmem:[#allocation2 + $0x6e0] sm:$0xff]
      %v747 = vld [vmem:[#allocation2 + $0x6e8] sm:$0xff]
      %v748 = vld [vmem:[#allocation2 + $0x6f0] sm:$0xff]
      %v749 = vld [vmem:[#allocation2 + $0x6f8] sm:$0xff]
      %v750 = vld [vmem:[#allocation2 + $0x700] sm:$0xff]
      %v751 = vld [vmem:[#allocation2 + $0x708] sm:$0xff]
      %v752 = vld [vmem:[#allocation2 + $0x710] sm:$0xff]
      %v753 = vld [vmem:[#allocation2 + $0x718] sm:$0xff]
      %v754 = vld [vmem:[#allocation2 + $0x720] sm:$0xff]
      %v755 = vld [vmem:[#allocation2 + $0x728] sm:$0xff]
      %v756 = vld [vmem:[#allocation2 + $0x730] sm:$0xff]
      %v757 = vld [vmem:[#allocation2 + $0x738] sm:$0xff]
      %v758 = vld [vmem:[#allocation2 + $0x740] sm:$0xff]
      %v759 = vld [vmem:[#allocation2 + $0x748] sm:$0xff]
      %v760 = vld [vmem:[#allocation2 + $0x750] sm:$0xff]
      %v761 = vld [vmem:[#allocation2 + $0x758] sm:$0xff]
      %v762 = vld [vmem:[#allocation2 + $0x760] sm:$0xff]
      %v763 = vld [vmem:[#allocation2 + $0x768] sm:$0xff]
      %v764 = vld [vmem:[#allocation2 + $0x770] sm:$0xff]
      %v765 = vld [vmem:[#allocation2 + $0x778] sm:$0xff]
      %v766 = vld [vmem:[#allocation2 + $0x780] sm:$0xff]
      %v767 = vld [vmem:[#allocation2 + $0x788] sm:$0xff]
      %v768 = vld [vmem:[#allocation2 + $0x790] sm:$0xff]
      %v769 = vld [vmem:[#allocation2 + $0x798] sm:$0xff]
      %v770 = vld [vmem:[#allocation2 + $0x7a0] sm:$0xff]
      %v771 = vld [vmem:[#allocation2 + $0x7a8] sm:$0xff]
      %v772 = vld [vmem:[#allocation2 + $0x7b0] sm:$0xff]
      %v773 = vld [vmem:[#allocation2 + $0x7b8] sm:$0xff]
      %v774 = vld [vmem:[#allocation2 + $0x7c0] sm:$0xff]
      %v775 = vld [vmem:[#allocation2 + $0x7c8] sm:$0xff]
      %v776 = vld [vmem:[#allocation2 + $0x7d0] sm:$0xff]
      %v777 = vld [vmem:[#allocation2 + $0x7d8] sm:$0xff]
      %v778 = vld [vmem:[#allocation2 + $0x7e0] sm:$0xff]
      %v779 = vld [vmem:[#allocation2 + $0x7e8] sm:$0xff]
      %v780 = vld [vmem:[#allocation2 + $0x7f0] sm:$0xff]
      %v781 = vld [vmem:[#allocation2 + $0x7f8] sm:$0xff]
      %v782 = vld [vmem:[%s246] sm:$0xf]
      %v783 = vld [vmem:[%s246 + $0x4] sm:$0xf]
      %v784 = vld [vmem:[%s246 + $0x8] sm:$0xf]
      %v785 = vld [vmem:[%s246 + $0xc] sm:$0xf]
      %v786 = vld [vmem:[%s246 + $0x10] sm:$0xf]
      %v787 = vld [vmem:[%s246 + $0x14] sm:$0xf]
      %v788 = vld [vmem:[%s246 + $0x18] sm:$0xf]
      %v789 = vld [vmem:[%s246 + $0x1c] sm:$0xf]
      %v790 = vld [vmem:[%s246 + $0x20] sm:$0xf]
      %v791 = vld [vmem:[%s246 + $0x24] sm:$0xf]
      %v792 = vld [vmem:[%s246 + $0x28] sm:$0xf]
      %v793 = vld [vmem:[%s246 + $0x2c] sm:$0xf]
      %v794 = vld [vmem:[%s246 + $0x30] sm:$0xf]
      %v795 = vld [vmem:[%s246 + $0x34] sm:$0xf]
      %v796 = vld [vmem:[%s246 + $0x38] sm:$0xf]
      %v797 = vld [vmem:[%s246 + $0x3c] sm:$0xf]
      %v798 = vld [vmem:[%s246 + $0x40] sm:$0xf]
      %v799 = vld [vmem:[%s246 + $0x44] sm:$0xf]
      %v800 = vld [vmem:[%s246 + $0x48] sm:$0xf]
      %v801 = vld [vmem:[%s246 + $0x4c] sm:$0xf]
      %v802 = vld [vmem:[%s246 + $0x50] sm:$0xf]
      %v803 = vld [vmem:[%s246 + $0x54] sm:$0xf]
      %v804 = vld [vmem:[%s246 + $0x58] sm:$0xf]
      %v805 = vld [vmem:[%s246 + $0x5c] sm:$0xf]
      %v806 = vld [vmem:[%s246 + $0x60] sm:$0xf]
      %v807 = vld [vmem:[%s246 + $0x64] sm:$0xf]
      %v808 = vld [vmem:[%s246 + $0x68] sm:$0xf]
      %v809 = vld [vmem:[%s246 + $0x6c] sm:$0xf]
      %v810 = vld [vmem:[%s246 + $0x70] sm:$0xf]
      %v811 = vld [vmem:[%s246 + $0x74] sm:$0xf]
      %v812 = vld [vmem:[%s246 + $0x78] sm:$0xf]
      %v813 = vld [vmem:[%s246 + $0x7c] sm:$0xf]
      %v814 = vld [vmem:[%s246 + $0x80] sm:$0xf]
      %v815 = vld [vmem:[%s246 + $0x84] sm:$0xf]
      %v816 = vld [vmem:[%s246 + $0x88] sm:$0xf]
      %v817 = vld [vmem:[%s246 + $0x8c] sm:$0xf]
      %v818 = vld [vmem:[%s246 + $0x90] sm:$0xf]
      %v819 = vld [vmem:[%s246 + $0x94] sm:$0xf]
      %v820 = vld [vmem:[%s246 + $0x98] sm:$0xf]
      %v821 = vld [vmem:[%s246 + $0x9c] sm:$0xf]
      %v822 = vld [vmem:[%s246 + $0xa0] sm:$0xf]
      %v823 = vld [vmem:[%s246 + $0xa4] sm:$0xf]
      %v824 = vld [vmem:[%s246 + $0xa8] sm:$0xf]
      %v825 = vld [vmem:[%s246 + $0xac] sm:$0xf]
      %v826 = vld [vmem:[%s246 + $0xb0] sm:$0xf]
      %v827 = vld [vmem:[%s246 + $0xb4] sm:$0xf]
      %v828 = vld [vmem:[%s246 + $0xb8] sm:$0xf]
      %v829 = vld [vmem:[%s246 + $0xbc] sm:$0xf]
      %v830 = vld [vmem:[%s246 + $0xc0] sm:$0xf]
      %v831 = vld [vmem:[%s246 + $0xc4] sm:$0xf]
      %v832 = vld [vmem:[%s246 + $0xc8] sm:$0xf]
      %v833 = vld [vmem:[%s246 + $0xcc] sm:$0xf]
      %v834 = vld [vmem:[%s246 + $0xd0] sm:$0xf]
      %v835 = vld [vmem:[%s246 + $0xd4] sm:$0xf]
      %v836 = vld [vmem:[%s246 + $0xd8] sm:$0xf]
      %v837 = vld [vmem:[%s246 + $0xdc] sm:$0xf]
      %v838 = vld [vmem:[%s246 + $0xe0] sm:$0xf]
      %v839 = vld [vmem:[%s246 + $0xe4] sm:$0xf]
      %v840 = vld [vmem:[%s246 + $0xe8] sm:$0xf]
      %v841 = vld [vmem:[%s246 + $0xec] sm:$0xf]
      %v842 = vld [vmem:[%s246 + $0xf0] sm:$0xf]
      %v843 = vld [vmem:[%s246 + $0xf4] sm:$0xf]
      %v844 = vld [vmem:[%s246 + $0xf8] sm:$0xf]
      %v845 = vld [vmem:[%s246 + $0xfc] sm:$0xf]
      %v846 = vld [vmem:[%s246 + $0x100] sm:$0xf]
      %v847 = vld [vmem:[%s246 + $0x104] sm:$0xf]
      %v848 = vld [vmem:[%s246 + $0x108] sm:$0xf]
      %v849 = vld [vmem:[%s246 + $0x10c] sm:$0xf]
      %v850 = vld [vmem:[%s246 + $0x110] sm:$0xf]
      %v851 = vld [vmem:[%s246 + $0x114] sm:$0xf]
      %v852 = vld [vmem:[%s246 + $0x118] sm:$0xf]
      %v853 = vld [vmem:[%s246 + $0x11c] sm:$0xf]
      %v854 = vld [vmem:[%s246 + $0x120] sm:$0xf]
      %v855 = vld [vmem:[%s246 + $0x124] sm:$0xf]
      %v856 = vld [vmem:[%s246 + $0x128] sm:$0xf]
      %v857 = vld [vmem:[%s246 + $0x12c] sm:$0xf]
      %v858 = vld [vmem:[%s246 + $0x130] sm:$0xf]
      %v859 = vld [vmem:[%s246 + $0x134] sm:$0xf]
      %v860 = vld [vmem:[%s246 + $0x138] sm:$0xf]
      %v861 = vld [vmem:[%s246 + $0x13c] sm:$0xf]
      %v862 = vld [vmem:[%s246 + $0x140] sm:$0xf]
      %v863 = vld [vmem:[%s246 + $0x144] sm:$0xf]
      %v864 = vld [vmem:[%s246 + $0x148] sm:$0xf]
      %v865 = vld [vmem:[%s246 + $0x14c] sm:$0xf]
      %v866 = vld [vmem:[%s246 + $0x150] sm:$0xf]
      %v867 = vld [vmem:[%s246 + $0x154] sm:$0xf]
      %v868 = vld [vmem:[%s246 + $0x158] sm:$0xf]
      %v869 = vld [vmem:[%s246 + $0x15c] sm:$0xf]
      %v870 = vld [vmem:[%s246 + $0x160] sm:$0xf]
      %v871 = vld [vmem:[%s246 + $0x164] sm:$0xf]
      %v872 = vld [vmem:[%s246 + $0x168] sm:$0xf]
      %v873 = vld [vmem:[%s246 + $0x16c] sm:$0xf]
      %v874 = vld [vmem:[%s246 + $0x170] sm:$0xf]
      %v875 = vld [vmem:[%s246 + $0x174] sm:$0xf]
      %v876 = vld [vmem:[%s246 + $0x178] sm:$0xf]
      %v877 = vld [vmem:[%s246 + $0x17c] sm:$0xf]
      %v878 = vld [vmem:[%s246 + $0x180] sm:$0xf]
      %v879 = vld [vmem:[%s246 + $0x184] sm:$0xf]
      %v880 = vld [vmem:[%s246 + $0x188] sm:$0xf]
      %v881 = vld [vmem:[%s246 + $0x18c] sm:$0xf]
      %v882 = vld [vmem:[%s246 + $0x190] sm:$0xf]
      %v883 = vld [vmem:[%s246 + $0x194] sm:$0xf]
      %v884 = vld [vmem:[%s246 + $0x198] sm:$0xf]
      %v885 = vld [vmem:[%s246 + $0x19c] sm:$0xf]
      %v886 = vld [vmem:[%s246 + $0x1a0] sm:$0xf]
      %v887 = vld [vmem:[%s246 + $0x1a4] sm:$0xf]
      %v888 = vld [vmem:[%s246 + $0x1a8] sm:$0xf]
      %v889 = vld [vmem:[%s246 + $0x1ac] sm:$0xf]
      %v890 = vld [vmem:[%s246 + $0x1b0] sm:$0xf]
      %v891 = vld [vmem:[%s246 + $0x1b4] sm:$0xf]
      %v892 = vld [vmem:[%s246 + $0x1b8] sm:$0xf]
      %v893 = vld [vmem:[%s246 + $0x1bc] sm:$0xf]
      %v894 = vld [vmem:[%s246 + $0x1c0] sm:$0xf]
      %v895 = vld [vmem:[%s246 + $0x1c4] sm:$0xf]
      %v896 = vld [vmem:[%s246 + $0x1c8] sm:$0xf]
      %v897 = vld [vmem:[%s246 + $0x1cc] sm:$0xf]
      %v898 = vld [vmem:[%s246 + $0x1d0] sm:$0xf]
      %v899 = vld [vmem:[%s246 + $0x1d4] sm:$0xf]
      %v900 = vld [vmem:[%s246 + $0x1d8] sm:$0xf]
      %v901 = vld [vmem:[%s246 + $0x1dc] sm:$0xf]
      %v902 = vld [vmem:[%s246 + $0x1e0] sm:$0xf]
      %v903 = vld [vmem:[%s246 + $0x1e4] sm:$0xf]
      %v904 = vld [vmem:[%s246 + $0x1e8] sm:$0xf]
      %v905 = vld [vmem:[%s246 + $0x1ec] sm:$0xf]
      %v906 = vld [vmem:[%s246 + $0x1f0] sm:$0xf]
      %v907 = vld [vmem:[%s246 + $0x1f4] sm:$0xf]
      %v908 = vld [vmem:[%s246 + $0x1f8] sm:$0xf]
      %v909 = vld [vmem:[%s246 + $0x1fc] sm:$0xf]
      %v910 = vld [vmem:[%s246 + $0x200] sm:$0xf]
      %v911 = vld [vmem:[%s246 + $0x204] sm:$0xf]
      %v912 = vld [vmem:[%s246 + $0x208] sm:$0xf]
      %v913 = vld [vmem:[%s246 + $0x20c] sm:$0xf]
      %v914 = vld [vmem:[%s246 + $0x210] sm:$0xf]
      %v915 = vld [vmem:[%s246 + $0x214] sm:$0xf]
      %v916 = vld [vmem:[%s246 + $0x218] sm:$0xf]
      %v917 = vld [vmem:[%s246 + $0x21c] sm:$0xf]
      %v918 = vld [vmem:[%s246 + $0x220] sm:$0xf]
      %v919 = vld [vmem:[%s246 + $0x224] sm:$0xf]
      %v920 = vld [vmem:[%s246 + $0x228] sm:$0xf]
      %v921 = vld [vmem:[%s246 + $0x22c] sm:$0xf]
      %v922 = vld [vmem:[%s246 + $0x230] sm:$0xf]
      %v923 = vld [vmem:[%s246 + $0x234] sm:$0xf]
      %v924 = vld [vmem:[%s246 + $0x238] sm:$0xf]
      %v925 = vld [vmem:[%s246 + $0x23c] sm:$0xf]
      %v926 = vld [vmem:[%s246 + $0x240] sm:$0xf]
      %v927 = vld [vmem:[%s246 + $0x244] sm:$0xf]
      %v928 = vld [vmem:[%s246 + $0x248] sm:$0xf]
      %v929 = vld [vmem:[%s246 + $0x24c] sm:$0xf]
      %v930 = vld [vmem:[%s246 + $0x250] sm:$0xf]
      %v931 = vld [vmem:[%s246 + $0x254] sm:$0xf]
      %v932 = vld [vmem:[%s246 + $0x258] sm:$0xf]
      %v933 = vld [vmem:[%s246 + $0x25c] sm:$0xf]
      %v934 = vld [vmem:[%s246 + $0x260] sm:$0xf]
      %v935 = vld [vmem:[%s246 + $0x264] sm:$0xf]
      %v936 = vld [vmem:[%s246 + $0x268] sm:$0xf]
      %v937 = vld [vmem:[%s246 + $0x26c] sm:$0xf]
      %v938 = vld [vmem:[%s246 + $0x270] sm:$0xf]
      %v939 = vld [vmem:[%s246 + $0x274] sm:$0xf]
      %v940 = vld [vmem:[%s246 + $0x278] sm:$0xf]
      %v941 = vld [vmem:[%s246 + $0x27c] sm:$0xf]
      %v942 = vld [vmem:[%s246 + $0x280] sm:$0xf]
      %v943 = vld [vmem:[%s246 + $0x284] sm:$0xf]
      %v944 = vld [vmem:[%s246 + $0x288] sm:$0xf]
      %v945 = vld [vmem:[%s246 + $0x28c] sm:$0xf]
      %v946 = vld [vmem:[%s246 + $0x290] sm:$0xf]
      %v947 = vld [vmem:[%s246 + $0x294] sm:$0xf]
      %v948 = vld [vmem:[%s246 + $0x298] sm:$0xf]
      %v949 = vld [vmem:[%s246 + $0x29c] sm:$0xf]
      %v950 = vld [vmem:[%s246 + $0x2a0] sm:$0xf]
      %v951 = vld [vmem:[%s246 + $0x2a4] sm:$0xf]
      %v952 = vld [vmem:[%s246 + $0x2a8] sm:$0xf]
      %v953 = vld [vmem:[%s246 + $0x2ac] sm:$0xf]
      %v954 = vld [vmem:[%s246 + $0x2b0] sm:$0xf]
      %v955 = vld [vmem:[%s246 + $0x2b4] sm:$0xf]
      %v956 = vld [vmem:[%s246 + $0x2b8] sm:$0xf]
      %v957 = vld [vmem:[%s246 + $0x2bc] sm:$0xf]
      %v958 = vld [vmem:[%s246 + $0x2c0] sm:$0xf]
      %v959 = vld [vmem:[%s246 + $0x2c4] sm:$0xf]
      %v960 = vld [vmem:[%s246 + $0x2c8] sm:$0xf]
      %v961 = vld [vmem:[%s246 + $0x2cc] sm:$0xf]
      %v962 = vld [vmem:[%s246 + $0x2d0] sm:$0xf]
      %v963 = vld [vmem:[%s246 + $0x2d4] sm:$0xf]
      %v964 = vld [vmem:[%s246 + $0x2d8] sm:$0xf]
      %v965 = vld [vmem:[%s246 + $0x2dc] sm:$0xf]
      %v966 = vld [vmem:[%s246 + $0x2e0] sm:$0xf]
      %v967 = vld [vmem:[%s246 + $0x2e4] sm:$0xf]
      %v968 = vld [vmem:[%s246 + $0x2e8] sm:$0xf]
      %v969 = vld [vmem:[%s246 + $0x2ec] sm:$0xf]
      %v970 = vld [vmem:[%s246 + $0x2f0] sm:$0xf]
      %v971 = vld [vmem:[%s246 + $0x2f4] sm:$0xf]
      %v972 = vld [vmem:[%s246 + $0x2f8] sm:$0xf]
      %v973 = vld [vmem:[%s246 + $0x2fc] sm:$0xf]
      %v974 = vld [vmem:[%s246 + $0x300] sm:$0xf]
      %v975 = vld [vmem:[%s246 + $0x304] sm:$0xf]
      %v976 = vld [vmem:[%s246 + $0x308] sm:$0xf]
      %v977 = vld [vmem:[%s246 + $0x30c] sm:$0xf]
      %v978 = vld [vmem:[%s246 + $0x310] sm:$0xf]
      %v979 = vld [vmem:[%s246 + $0x314] sm:$0xf]
      %v980 = vld [vmem:[%s246 + $0x318] sm:$0xf]
      %v981 = vld [vmem:[%s246 + $0x31c] sm:$0xf]
      %v982 = vld [vmem:[%s246 + $0x320] sm:$0xf]
      %v983 = vld [vmem:[%s246 + $0x324] sm:$0xf]
      %v984 = vld [vmem:[%s246 + $0x328] sm:$0xf]
      %v985 = vld [vmem:[%s246 + $0x32c] sm:$0xf]
      %v986 = vld [vmem:[%s246 + $0x330] sm:$0xf]
      %v987 = vld [vmem:[%s246 + $0x334] sm:$0xf]
      %v988 = vld [vmem:[%s246 + $0x338] sm:$0xf]
      %v989 = vld [vmem:[%s246 + $0x33c] sm:$0xf]
      %v990 = vld [vmem:[%s246 + $0x340] sm:$0xf]
      %v991 = vld [vmem:[%s246 + $0x344] sm:$0xf]
      %v992 = vld [vmem:[%s246 + $0x348] sm:$0xf]
      %v993 = vld [vmem:[%s246 + $0x34c] sm:$0xf]
      %v994 = vld [vmem:[%s246 + $0x350] sm:$0xf]
      %v995 = vld [vmem:[%s246 + $0x354] sm:$0xf]
      %v996 = vld [vmem:[%s246 + $0x358] sm:$0xf]
      %v997 = vld [vmem:[%s246 + $0x35c] sm:$0xf]
      %v998 = vld [vmem:[%s246 + $0x360] sm:$0xf]
      %v999 = vld [vmem:[%s246 + $0x364] sm:$0xf]
      %v1000 = vld [vmem:[%s246 + $0x368] sm:$0xf]
      %v1001 = vld [vmem:[%s246 + $0x36c] sm:$0xf]
      %v1002 = vld [vmem:[%s246 + $0x370] sm:$0xf]
      %v1003 = vld [vmem:[%s246 + $0x374] sm:$0xf]
      %v1004 = vld [vmem:[%s246 + $0x378] sm:$0xf]
      %v1005 = vld [vmem:[%s246 + $0x37c] sm:$0xf]
      %v1006 = vld [vmem:[%s246 + $0x380] sm:$0xf]
      %v1007 = vld [vmem:[%s246 + $0x384] sm:$0xf]
      %v1008 = vld [vmem:[%s246 + $0x388] sm:$0xf]
      %v1009 = vld [vmem:[%s246 + $0x38c] sm:$0xf]
      %v1010 = vld [vmem:[%s246 + $0x390] sm:$0xf]
      %v1011 = vld [vmem:[%s246 + $0x394] sm:$0xf]
      %v1012 = vld [vmem:[%s246 + $0x398] sm:$0xf]
      %v1013 = vld [vmem:[%s246 + $0x39c] sm:$0xf]
      %v1014 = vld [vmem:[%s246 + $0x3a0] sm:$0xf]
      %v1015 = vld [vmem:[%s246 + $0x3a4] sm:$0xf]
      %v1016 = vld [vmem:[%s246 + $0x3a8] sm:$0xf]
      %v1017 = vld [vmem:[%s246 + $0x3ac] sm:$0xf]
      %v1018 = vld [vmem:[%s246 + $0x3b0] sm:$0xf]
      %v1019 = vld [vmem:[%s246 + $0x3b4] sm:$0xf]
      %v1020 = vld [vmem:[%s246 + $0x3b8] sm:$0xf]
      %v1021 = vld [vmem:[%s246 + $0x3bc] sm:$0xf]
      %v1022 = vld [vmem:[%s246 + $0x3c0] sm:$0xf]
      %v1023 = vld [vmem:[%s246 + $0x3c4] sm:$0xf]
      %v1024 = vld [vmem:[%s246 + $0x3c8] sm:$0xf]
      %v1025 = vld [vmem:[%s246 + $0x3cc] sm:$0xf]
      %v1026 = vld [vmem:[%s246 + $0x3d0] sm:$0xf]
      %v1027 = vld [vmem:[%s246 + $0x3d4] sm:$0xf]
      %v1028 = vld [vmem:[%s246 + $0x3d8] sm:$0xf]
      %v1029 = vld [vmem:[%s246 + $0x3dc] sm:$0xf]
      %v1030 = vld [vmem:[%s246 + $0x3e0] sm:$0xf]
      %v1031 = vld [vmem:[%s246 + $0x3e4] sm:$0xf]
      %v1032 = vld [vmem:[%s246 + $0x3e8] sm:$0xf]
      %v1033 = vld [vmem:[%s246 + $0x3ec] sm:$0xf]
      %v1034 = vld [vmem:[%s246 + $0x3f0] sm:$0xf]
      %v1035 = vld [vmem:[%s246 + $0x3f4] sm:$0xf]
      %v1036 = vld [vmem:[%s246 + $0x3f8] sm:$0xf]
      %v1037 = vld [vmem:[%s246 + $0x3fc] sm:$0xf]
      %v1038 = vld [vmem:[%s253] sm:$0xf]
      %v1295 = vunpack.c.l.b16 %v782
      %v1296 = vunpack.c.l.b16 %v783
      %v1297 = vunpack.c.l.b16 %v784
      %v1298 = vunpack.c.l.b16 %v785
      %v1299 = vunpack.c.l.b16 %v786
      %v1300 = vunpack.c.l.b16 %v787
      %v1301 = vunpack.c.l.b16 %v788
      %v1302 = vunpack.c.l.b16 %v789
      %v1303 = vunpack.c.l.b16 %v790
      %v1304 = vunpack.c.l.b16 %v791
      %v1305 = vunpack.c.l.b16 %v792
      %v1306 = vunpack.c.l.b16 %v793
      %v1307 = vunpack.c.l.b16 %v794
      %v1308 = vunpack.c.l.b16 %v795
      %v1309 = vunpack.c.l.b16 %v796
      %v1310 = vunpack.c.l.b16 %v797
      %v1311 = vunpack.c.l.b16 %v798
      %v1312 = vunpack.c.l.b16 %v799
      %v1313 = vunpack.c.l.b16 %v800
      %v1314 = vunpack.c.l.b16 %v801
      %v1315 = vunpack.c.l.b16 %v802
      %v1316 = vunpack.c.l.b16 %v803
      %v1317 = vunpack.c.l.b16 %v804
      %v1318 = vunpack.c.l.b16 %v805
      %v1319 = vunpack.c.l.b16 %v806
      %v1320 = vunpack.c.l.b16 %v807
      %v1321 = vunpack.c.l.b16 %v808
      %v1322 = vunpack.c.l.b16 %v809
      %v1323 = vunpack.c.l.b16 %v810
      %v1324 = vunpack.c.l.b16 %v811
      %v1325 = vunpack.c.l.b16 %v812
      %v1326 = vunpack.c.l.b16 %v813
      %v1327 = vunpack.c.l.b16 %v814
      %v1328 = vunpack.c.l.b16 %v815
      %v1329 = vunpack.c.l.b16 %v816
      %v1330 = vunpack.c.l.b16 %v817
      %v1331 = vunpack.c.l.b16 %v818
      %v1332 = vunpack.c.l.b16 %v819
      %v1333 = vunpack.c.l.b16 %v820
      %v1334 = vunpack.c.l.b16 %v821
      %v1335 = vunpack.c.l.b16 %v822
      %v1336 = vunpack.c.l.b16 %v823
      %v1337 = vunpack.c.l.b16 %v824
      %v1338 = vunpack.c.l.b16 %v825
      %v1339 = vunpack.c.l.b16 %v826
      %v1340 = vunpack.c.l.b16 %v827
      %v1341 = vunpack.c.l.b16 %v828
      %v1342 = vunpack.c.l.b16 %v829
      %v1343 = vunpack.c.l.b16 %v830
      %v1344 = vunpack.c.l.b16 %v831
      %v1345 = vunpack.c.l.b16 %v832
      %v1346 = vunpack.c.l.b16 %v833
      %v1347 = vunpack.c.l.b16 %v834
      %v1348 = vunpack.c.l.b16 %v835
      %v1349 = vunpack.c.l.b16 %v836
      %v1350 = vunpack.c.l.b16 %v837
      %v1351 = vunpack.c.l.b16 %v838
      %v1352 = vunpack.c.l.b16 %v839
      %v1353 = vunpack.c.l.b16 %v840
      %v1354 = vunpack.c.l.b16 %v841
      %v1355 = vunpack.c.l.b16 %v842
      %v1356 = vunpack.c.l.b16 %v843
      %v1357 = vunpack.c.l.b16 %v844
      %v1358 = vunpack.c.l.b16 %v845
      %v1359 = vunpack.c.l.b16 %v846
      %v1360 = vunpack.c.l.b16 %v847
      %v1361 = vunpack.c.l.b16 %v848
      %v1362 = vunpack.c.l.b16 %v849
      %v1363 = vunpack.c.l.b16 %v850
      %v1364 = vunpack.c.l.b16 %v851
      %v1365 = vunpack.c.l.b16 %v852
      %v1366 = vunpack.c.l.b16 %v853
      %v1367 = vunpack.c.l.b16 %v854
      %v1368 = vunpack.c.l.b16 %v855
      %v1369 = vunpack.c.l.b16 %v856
      %v1370 = vunpack.c.l.b16 %v857
      %v1371 = vunpack.c.l.b16 %v858
      %v1372 = vunpack.c.l.b16 %v859
      %v1373 = vunpack.c.l.b16 %v860
      %v1374 = vunpack.c.l.b16 %v861
      %v1375 = vunpack.c.l.b16 %v862
      %v1376 = vunpack.c.l.b16 %v863
      %v1377 = vunpack.c.l.b16 %v864
      %v1378 = vunpack.c.l.b16 %v865
      %v1379 = vunpack.c.l.b16 %v866
      %v1380 = vunpack.c.l.b16 %v867
      %v1381 = vunpack.c.l.b16 %v868
      %v1382 = vunpack.c.l.b16 %v869
      %v1383 = vunpack.c.l.b16 %v870
      %v1384 = vunpack.c.l.b16 %v871
      %v1385 = vunpack.c.l.b16 %v872
      %v1386 = vunpack.c.l.b16 %v873
      %v1387 = vunpack.c.l.b16 %v874
      %v1388 = vunpack.c.l.b16 %v875
      %v1389 = vunpack.c.l.b16 %v876
      %v1390 = vunpack.c.l.b16 %v877
      %v1391 = vunpack.c.l.b16 %v878
      %v1392 = vunpack.c.l.b16 %v879
      %v1393 = vunpack.c.l.b16 %v880
      %v1394 = vunpack.c.l.b16 %v881
      %v1395 = vunpack.c.l.b16 %v882
      %v1396 = vunpack.c.l.b16 %v883
      %v1397 = vunpack.c.l.b16 %v884
      %v1398 = vunpack.c.l.b16 %v885
      %v1399 = vunpack.c.l.b16 %v886
      %v1400 = vunpack.c.l.b16 %v887
      %v1401 = vunpack.c.l.b16 %v888
      %v1402 = vunpack.c.l.b16 %v889
      %v1403 = vunpack.c.l.b16 %v890
      %v1404 = vunpack.c.l.b16 %v891
      %v1405 = vunpack.c.l.b16 %v892
      %v1406 = vunpack.c.l.b16 %v893
      %v1407 = vunpack.c.l.b16 %v894
      %v1408 = vunpack.c.l.b16 %v895
      %v1409 = vunpack.c.l.b16 %v896
      %v1410 = vunpack.c.l.b16 %v897
      %v1411 = vunpack.c.l.b16 %v898
      %v1412 = vunpack.c.l.b16 %v899
      %v1413 = vunpack.c.l.b16 %v900
      %v1414 = vunpack.c.l.b16 %v901
      %v1415 = vunpack.c.l.b16 %v902
      %v1416 = vunpack.c.l.b16 %v903
      %v1417 = vunpack.c.l.b16 %v904
      %v1418 = vunpack.c.l.b16 %v905
      %v1419 = vunpack.c.l.b16 %v906
      %v1420 = vunpack.c.l.b16 %v907
      %v1421 = vunpack.c.l.b16 %v908
      %v1422 = vunpack.c.l.b16 %v909
      %v1423 = vunpack.c.l.b16 %v910
      %v1424 = vunpack.c.l.b16 %v911
      %v1425 = vunpack.c.l.b16 %v912
      %v1426 = vunpack.c.l.b16 %v913
      %v1427 = vunpack.c.l.b16 %v914
      %v1428 = vunpack.c.l.b16 %v915
      %v1429 = vunpack.c.l.b16 %v916
      %v1430 = vunpack.c.l.b16 %v917
      %v1431 = vunpack.c.l.b16 %v918
      %v1432 = vunpack.c.l.b16 %v919
      %v1433 = vunpack.c.l.b16 %v920
      %v1434 = vunpack.c.l.b16 %v921
      %v1435 = vunpack.c.l.b16 %v922
      %v1436 = vunpack.c.l.b16 %v923
      %v1437 = vunpack.c.l.b16 %v924
      %v1438 = vunpack.c.l.b16 %v925
      %v1439 = vunpack.c.l.b16 %v926
      %v1440 = vunpack.c.l.b16 %v927
      %v1441 = vunpack.c.l.b16 %v928
      %v1442 = vunpack.c.l.b16 %v929
      %v1443 = vunpack.c.l.b16 %v930
      %v1444 = vunpack.c.l.b16 %v931
      %v1445 = vunpack.c.l.b16 %v932
      %v1446 = vunpack.c.l.b16 %v933
      %v1447 = vunpack.c.l.b16 %v934
      %v1448 = vunpack.c.l.b16 %v935
      %v1449 = vunpack.c.l.b16 %v936
      %v1450 = vunpack.c.l.b16 %v937
      %v1451 = vunpack.c.l.b16 %v938
      %v1452 = vunpack.c.l.b16 %v939
      %v1453 = vunpack.c.l.b16 %v940
      %v1454 = vunpack.c.l.b16 %v941
      %v1455 = vunpack.c.l.b16 %v942
      %v1456 = vunpack.c.l.b16 %v943
      %v1457 = vunpack.c.l.b16 %v944
      %v1458 = vunpack.c.l.b16 %v945
      %v1459 = vunpack.c.l.b16 %v946
      %v1460 = vunpack.c.l.b16 %v947
      %v1461 = vunpack.c.l.b16 %v948
      %v1462 = vunpack.c.l.b16 %v949
      %v1463 = vunpack.c.l.b16 %v950
      %v1464 = vunpack.c.l.b16 %v951
      %v1465 = vunpack.c.l.b16 %v952
      %v1466 = vunpack.c.l.b16 %v953
      %v1467 = vunpack.c.l.b16 %v954
      %v1468 = vunpack.c.l.b16 %v955
      %v1469 = vunpack.c.l.b16 %v956
      %v1470 = vunpack.c.l.b16 %v957
      %v1471 = vunpack.c.l.b16 %v958
      %v1472 = vunpack.c.l.b16 %v959
      %v1473 = vunpack.c.l.b16 %v960
      %v1474 = vunpack.c.l.b16 %v961
      %v1475 = vunpack.c.l.b16 %v962
      %v1476 = vunpack.c.l.b16 %v963
      %v1477 = vunpack.c.l.b16 %v964
      %v1478 = vunpack.c.l.b16 %v965
      %v1479 = vunpack.c.l.b16 %v966
      %v1480 = vunpack.c.l.b16 %v967
      %v1481 = vunpack.c.l.b16 %v968
      %v1482 = vunpack.c.l.b16 %v969
      %v1483 = vunpack.c.l.b16 %v970
      %v1484 = vunpack.c.l.b16 %v971
      %v1485 = vunpack.c.l.b16 %v972
      %v1486 = vunpack.c.l.b16 %v973
      %v1487 = vunpack.c.l.b16 %v974
      %v1488 = vunpack.c.l.b16 %v975
      %v1489 = vunpack.c.l.b16 %v976
      %v1490 = vunpack.c.l.b16 %v977
      %v1491 = vunpack.c.l.b16 %v978
      %v1492 = vunpack.c.l.b16 %v979
      %v1493 = vunpack.c.l.b16 %v980
      %v1494 = vunpack.c.l.b16 %v981
      %v1495 = vunpack.c.l.b16 %v982
      %v1496 = vunpack.c.l.b16 %v983
      %v1497 = vunpack.c.l.b16 %v984
      %v1498 = vunpack.c.l.b16 %v985
      %v1499 = vunpack.c.l.b16 %v986
      %v1500 = vunpack.c.l.b16 %v987
      %v1501 = vunpack.c.l.b16 %v988
      %v1502 = vunpack.c.l.b16 %v989
      %v1503 = vunpack.c.l.b16 %v990
      %v1504 = vunpack.c.l.b16 %v991
      %v1505 = vunpack.c.l.b16 %v992
      %v1506 = vunpack.c.l.b16 %v993
      %v1507 = vunpack.c.l.b16 %v994
      %v1508 = vunpack.c.l.b16 %v995
      %v1509 = vunpack.c.l.b16 %v996
      %v1510 = vunpack.c.l.b16 %v997
      %v1511 = vunpack.c.l.b16 %v998
      %v1512 = vunpack.c.l.b16 %v999
      %v1513 = vunpack.c.l.b16 %v1000
      %v1514 = vunpack.c.l.b16 %v1001
      %v1515 = vunpack.c.l.b16 %v1002
      %v1516 = vunpack.c.l.b16 %v1003
      %v1517 = vunpack.c.l.b16 %v1004
      %v1518 = vunpack.c.l.b16 %v1005
      %v1519 = vunpack.c.l.b16 %v1006
      %v1520 = vunpack.c.l.b16 %v1007
      %v1521 = vunpack.c.l.b16 %v1008
      %v1522 = vunpack.c.l.b16 %v1009
      %v1523 = vunpack.c.l.b16 %v1010
      %v1524 = vunpack.c.l.b16 %v1011
      %v1525 = vunpack.c.l.b16 %v1012
      %v1526 = vunpack.c.l.b16 %v1013
      %v1527 = vunpack.c.l.b16 %v1014
      %v1528 = vunpack.c.l.b16 %v1015
      %v1529 = vunpack.c.l.b16 %v1016
      %v1530 = vunpack.c.l.b16 %v1017
      %v1531 = vunpack.c.l.b16 %v1018
      %v1532 = vunpack.c.l.b16 %v1019
      %v1533 = vunpack.c.l.b16 %v1020
      %v1534 = vunpack.c.l.b16 %v1021
      %v1535 = vunpack.c.l.b16 %v1022
      %v1536 = vunpack.c.l.b16 %v1023
      %v1537 = vunpack.c.l.b16 %v1024
      %v1538 = vunpack.c.l.b16 %v1025
      %v1539 = vunpack.c.l.b16 %v1026
      %v1540 = vunpack.c.l.b16 %v1027
      %v1541 = vunpack.c.l.b16 %v1028
      %v1542 = vunpack.c.l.b16 %v1029
      %v1543 = vunpack.c.l.b16 %v1030
      %v1544 = vunpack.c.l.b16 %v1031
      %v1545 = vunpack.c.l.b16 %v1032
      %v1546 = vunpack.c.l.b16 %v1033
      %v1547 = vunpack.c.l.b16 %v1034
      %v1548 = vunpack.c.l.b16 %v1035
      %v1549 = vunpack.c.l.b16 %v1036
      %v1550 = vunpack.c.l.b16 %v1037
      %v1551 = vpack.c.b16 %v1296, %v1295
      %v1552 = vpack.c.b16 %v1298, %v1297
      %v1553 = vpack.c.b16 %v1300, %v1299
      %v1554 = vpack.c.b16 %v1302, %v1301
      %v1555 = vpack.c.b16 %v1304, %v1303
      %v1556 = vpack.c.b16 %v1306, %v1305
      %v1557 = vpack.c.b16 %v1308, %v1307
      %v1558 = vpack.c.b16 %v1310, %v1309
      %v1559 = vpack.c.b16 %v1312, %v1311
      %v1560 = vpack.c.b16 %v1314, %v1313
      %v1561 = vpack.c.b16 %v1316, %v1315
      %v1562 = vpack.c.b16 %v1318, %v1317
      %v1563 = vpack.c.b16 %v1320, %v1319
      %v1564 = vpack.c.b16 %v1322, %v1321
      %v1565 = vpack.c.b16 %v1324, %v1323
      %v1566 = vpack.c.b16 %v1326, %v1325
      %v1567 = vpack.c.b16 %v1328, %v1327
      %v1568 = vpack.c.b16 %v1330, %v1329
      %v1569 = vpack.c.b16 %v1332, %v1331
      %v1570 = vpack.c.b16 %v1334, %v1333
      %v1571 = vpack.c.b16 %v1336, %v1335
      %v1572 = vpack.c.b16 %v1338, %v1337
      %v1573 = vpack.c.b16 %v1340, %v1339
      %v1574 = vpack.c.b16 %v1342, %v1341
      %v1575 = vpack.c.b16 %v1344, %v1343
      %v1576 = vpack.c.b16 %v1346, %v1345
      %v1577 = vpack.c.b16 %v1348, %v1347
      %v1578 = vpack.c.b16 %v1350, %v1349
      %v1579 = vpack.c.b16 %v1352, %v1351
      %v1580 = vpack.c.b16 %v1354, %v1353
      %v1581 = vpack.c.b16 %v1356, %v1355
      %v1582 = vpack.c.b16 %v1358, %v1357
      %v1583 = vpack.c.b16 %v1360, %v1359
      %v1584 = vpack.c.b16 %v1362, %v1361
      %v1585 = vpack.c.b16 %v1364, %v1363
      %v1586 = vpack.c.b16 %v1366, %v1365
      %v1587 = vpack.c.b16 %v1368, %v1367
      %v1588 = vpack.c.b16 %v1370, %v1369
      %v1589 = vpack.c.b16 %v1372, %v1371
      %v1590 = vpack.c.b16 %v1374, %v1373
      %v1591 = vpack.c.b16 %v1376, %v1375
      %v1592 = vpack.c.b16 %v1378, %v1377
      %v1593 = vpack.c.b16 %v1380, %v1379
      %v1594 = vpack.c.b16 %v1382, %v1381
      %v1595 = vpack.c.b16 %v1384, %v1383
      %v1596 = vpack.c.b16 %v1386, %v1385
      %v1597 = vpack.c.b16 %v1388, %v1387
      %v1598 = vpack.c.b16 %v1390, %v1389
      %v1599 = vpack.c.b16 %v1392, %v1391
      %v1600 = vpack.c.b16 %v1394, %v1393
      %v1601 = vpack.c.b16 %v1396, %v1395
      %v1602 = vpack.c.b16 %v1398, %v1397
      %v1603 = vpack.c.b16 %v1400, %v1399
      %v1604 = vpack.c.b16 %v1402, %v1401
      %v1605 = vpack.c.b16 %v1404, %v1403
      %v1606 = vpack.c.b16 %v1406, %v1405
      %v1607 = vpack.c.b16 %v1408, %v1407
      %v1608 = vpack.c.b16 %v1410, %v1409
      %v1609 = vpack.c.b16 %v1412, %v1411
      %v1610 = vpack.c.b16 %v1414, %v1413
      %v1611 = vpack.c.b16 %v1416, %v1415
      %v1612 = vpack.c.b16 %v1418, %v1417
      %v1613 = vpack.c.b16 %v1420, %v1419
      %v1614 = vpack.c.b16 %v1422, %v1421
      %v1615 = vpack.c.b16 %v1424, %v1423
      %v1616 = vpack.c.b16 %v1426, %v1425
      %v1617 = vpack.c.b16 %v1428, %v1427
      %v1618 = vpack.c.b16 %v1430, %v1429
      %v1619 = vpack.c.b16 %v1432, %v1431
      %v1620 = vpack.c.b16 %v1434, %v1433
      %v1621 = vpack.c.b16 %v1436, %v1435
      %v1622 = vpack.c.b16 %v1438, %v1437
      %v1623 = vpack.c.b16 %v1440, %v1439
      %v1624 = vpack.c.b16 %v1442, %v1441
      %v1625 = vpack.c.b16 %v1444, %v1443
      %v1626 = vpack.c.b16 %v1446, %v1445
      %v1627 = vpack.c.b16 %v1448, %v1447
      %v1628 = vpack.c.b16 %v1450, %v1449
      %v1629 = vpack.c.b16 %v1452, %v1451
      %v1630 = vpack.c.b16 %v1454, %v1453
      %v1631 = vpack.c.b16 %v1456, %v1455
      %v1632 = vpack.c.b16 %v1458, %v1457
      %v1633 = vpack.c.b16 %v1460, %v1459
      %v1634 = vpack.c.b16 %v1462, %v1461
      %v1635 = vpack.c.b16 %v1464, %v1463
      %v1636 = vpack.c.b16 %v1466, %v1465
      %v1637 = vpack.c.b16 %v1468, %v1467
      %v1638 = vpack.c.b16 %v1470, %v1469
      %v1639 = vpack.c.b16 %v1472, %v1471
      %v1640 = vpack.c.b16 %v1474, %v1473
      %v1641 = vpack.c.b16 %v1476, %v1475
      %v1642 = vpack.c.b16 %v1478, %v1477
      %v1643 = vpack.c.b16 %v1480, %v1479
      %v1644 = vpack.c.b16 %v1482, %v1481
      %v1645 = vpack.c.b16 %v1484, %v1483
      %v1646 = vpack.c.b16 %v1486, %v1485
      %v1647 = vpack.c.b16 %v1488, %v1487
      %v1648 = vpack.c.b16 %v1490, %v1489
      %v1649 = vpack.c.b16 %v1492, %v1491
      %v1650 = vpack.c.b16 %v1494, %v1493
      %v1651 = vpack.c.b16 %v1496, %v1495
      %v1652 = vpack.c.b16 %v1498, %v1497
      %v1653 = vpack.c.b16 %v1500, %v1499
      %v1654 = vpack.c.b16 %v1502, %v1501
      %v1655 = vpack.c.b16 %v1504, %v1503
      %v1656 = vpack.c.b16 %v1506, %v1505
      %v1657 = vpack.c.b16 %v1508, %v1507
      %v1658 = vpack.c.b16 %v1510, %v1509
      %v1659 = vpack.c.b16 %v1512, %v1511
      %v1660 = vpack.c.b16 %v1514, %v1513
      %v1661 = vpack.c.b16 %v1516, %v1515
      %v1662 = vpack.c.b16 %v1518, %v1517
      %v1663 = vpack.c.b16 %v1520, %v1519
      %v1664 = vpack.c.b16 %v1522, %v1521
      %v1665 = vpack.c.b16 %v1524, %v1523
      %v1666 = vpack.c.b16 %v1526, %v1525
      %v1667 = vpack.c.b16 %v1528, %v1527
      %v1668 = vpack.c.b16 %v1530, %v1529
      %v1669 = vpack.c.b16 %v1532, %v1531
      %v1670 = vpack.c.b16 %v1534, %v1533
      %v1671 = vpack.c.b16 %v1536, %v1535
      %v1672 = vpack.c.b16 %v1538, %v1537
      %v1673 = vpack.c.b16 %v1540, %v1539
      %v1674 = vpack.c.b16 %v1542, %v1541
      %v1675 = vpack.c.b16 %v1544, %v1543
      %v1676 = vpack.c.b16 %v1546, %v1545
      %v1677 = vpack.c.b16 %v1548, %v1547
      %v1678 = vpack.c.b16 %v1550, %v1549
      %vm1679 = vcmask 64512
      %v1681 = vsel %vm1679, %v1551, 0
      %v1684 = vsel %vm1679, %v1552, 0
      %v1687 = vsel %vm1679, %v1553, 0
      %v1690 = vsel %vm1679, %v1554, 0
      %v1693 = vsel %vm1679, %v1555, 0
      %v1696 = vsel %vm1679, %v1556, 0
      %v1699 = vsel %vm1679, %v1557, 0
      %v1702 = vsel %vm1679, %v1558, 0
      %v1705 = vsel %vm1679, %v1559, 0
      %v1708 = vsel %vm1679, %v1560, 0
      %v1711 = vsel %vm1679, %v1561, 0
      %v1714 = vsel %vm1679, %v1562, 0
      %v1717 = vsel %vm1679, %v1563, 0
      %v1720 = vsel %vm1679, %v1564, 0
      %v1723 = vsel %vm1679, %v1565, 0
      %v1726 = vsel %vm1679, %v1566, 0
      %v1729 = vsel %vm1679, %v1567, 0
      %v1732 = vsel %vm1679, %v1568, 0
      %v1735 = vsel %vm1679, %v1569, 0
      %v1738 = vsel %vm1679, %v1570, 0
      %v1741 = vsel %vm1679, %v1571, 0
      %v1744 = vsel %vm1679, %v1572, 0
      %v1747 = vsel %vm1679, %v1573, 0
      %v1750 = vsel %vm1679, %v1574, 0
      %v1753 = vsel %vm1679, %v1575, 0
      %v1756 = vsel %vm1679, %v1576, 0
      %v1759 = vsel %vm1679, %v1577, 0
      %v1762 = vsel %vm1679, %v1578, 0
      %v1765 = vsel %vm1679, %v1579, 0
      %v1768 = vsel %vm1679, %v1580, 0
      %v1771 = vsel %vm1679, %v1581, 0
      %v1774 = vsel %vm1679, %v1582, 0
      %v1777 = vsel %vm1679, %v1583, 0
      %v1780 = vsel %vm1679, %v1584, 0
      %v1783 = vsel %vm1679, %v1585, 0
      %v1786 = vsel %vm1679, %v1586, 0
      %v1789 = vsel %vm1679, %v1587, 0
      %v1792 = vsel %vm1679, %v1588, 0
      %v1795 = vsel %vm1679, %v1589, 0
      %v1798 = vsel %vm1679, %v1590, 0
      %v1801 = vsel %vm1679, %v1591, 0
      %v1804 = vsel %vm1679, %v1592, 0
      %v1807 = vsel %vm1679, %v1593, 0
      %v1810 = vsel %vm1679, %v1594, 0
      %v1813 = vsel %vm1679, %v1595, 0
      %v1816 = vsel %vm1679, %v1596, 0
      %v1819 = vsel %vm1679, %v1597, 0
      %v1822 = vsel %vm1679, %v1598, 0
      %v1825 = vsel %vm1679, %v1599, 0
      %v1828 = vsel %vm1679, %v1600, 0
      %v1831 = vsel %vm1679, %v1601, 0
      %v1834 = vsel %vm1679, %v1602, 0
      %v1837 = vsel %vm1679, %v1603, 0
      %v1840 = vsel %vm1679, %v1604, 0
      %v1843 = vsel %vm1679, %v1605, 0
      %v1846 = vsel %vm1679, %v1606, 0
      %v1849 = vsel %vm1679, %v1607, 0
      %v1852 = vsel %vm1679, %v1608, 0
      %v1855 = vsel %vm1679, %v1609, 0
      %v1858 = vsel %vm1679, %v1610, 0
      %v1861 = vsel %vm1679, %v1611, 0
      %v1864 = vsel %vm1679, %v1612, 0
      %v1867 = vsel %vm1679, %v1613, 0
      %v1870 = vsel %vm1679, %v1614, 0
      %v1873 = vsel %vm1679, %v1615, 0
      %v1876 = vsel %vm1679, %v1616, 0
      %v1879 = vsel %vm1679, %v1617, 0
      %v1882 = vsel %vm1679, %v1618, 0
      %v1885 = vsel %vm1679, %v1619, 0
      %v1888 = vsel %vm1679, %v1620, 0
      %v1891 = vsel %vm1679, %v1621, 0
      %v1894 = vsel %vm1679, %v1622, 0
      %v1897 = vsel %vm1679, %v1623, 0
      %v1900 = vsel %vm1679, %v1624, 0
      %v1903 = vsel %vm1679, %v1625, 0
      %v1906 = vsel %vm1679, %v1626, 0
      %v1909 = vsel %vm1679, %v1627, 0
      %v1912 = vsel %vm1679, %v1628, 0
      %v1915 = vsel %vm1679, %v1629, 0
      %v1918 = vsel %vm1679, %v1630, 0
      %v1921 = vsel %vm1679, %v1631, 0
      %v1924 = vsel %vm1679, %v1632, 0
      %v1927 = vsel %vm1679, %v1633, 0
      %v1930 = vsel %vm1679, %v1634, 0
      %v1933 = vsel %vm1679, %v1635, 0
      %v1936 = vsel %vm1679, %v1636, 0
      %v1939 = vsel %vm1679, %v1637, 0
      %v1942 = vsel %vm1679, %v1638, 0
      %v1945 = vsel %vm1679, %v1639, 0
      %v1948 = vsel %vm1679, %v1640, 0
      %v1951 = vsel %vm1679, %v1641, 0
      %v1954 = vsel %vm1679, %v1642, 0
      %v1957 = vsel %vm1679, %v1643, 0
      %v1960 = vsel %vm1679, %v1644, 0
      %v1963 = vsel %vm1679, %v1645, 0
      %v1966 = vsel %vm1679, %v1646, 0
      %v1969 = vsel %vm1679, %v1647, 0
      %v1972 = vsel %vm1679, %v1648, 0
      %v1975 = vsel %vm1679, %v1649, 0
      %v1978 = vsel %vm1679, %v1650, 0
      %v1981 = vsel %vm1679, %v1651, 0
      %v1984 = vsel %vm1679, %v1652, 0
      %v1987 = vsel %vm1679, %v1653, 0
      %v1990 = vsel %vm1679, %v1654, 0
      %v1993 = vsel %vm1679, %v1655, 0
      %v1996 = vsel %vm1679, %v1656, 0
      %v1999 = vsel %vm1679, %v1657, 0
      %v2002 = vsel %vm1679, %v1658, 0
      %v2005 = vsel %vm1679, %v1659, 0
      %v2008 = vsel %vm1679, %v1660, 0
      %v2011 = vsel %vm1679, %v1661, 0
      %v2014 = vsel %vm1679, %v1662, 0
      %v2017 = vsel %vm1679, %v1663, 0
      %v2020 = vsel %vm1679, %v1664, 0
      %v2023 = vsel %vm1679, %v1665, 0
      %v2026 = vsel %vm1679, %v1666, 0
      %v2029 = vsel %vm1679, %v1667, 0
      %v2032 = vsel %vm1679, %v1668, 0
      %v2035 = vsel %vm1679, %v1669, 0
      %v2038 = vsel %vm1679, %v1670, 0
      %v2041 = vsel %vm1679, %v1671, 0
      %v2044 = vsel %vm1679, %v1672, 0
      %v2047 = vsel %vm1679, %v1673, 0
      %v2050 = vsel %vm1679, %v1674, 0
      %v2053 = vsel %vm1679, %v1675, 0
      %v2056 = vsel %vm1679, %v1676, 0
      %v2059 = vsel %vm1679, %v1677, 0
      %v2062 = vsel %vm1679, %v1678, 0
      %vm2064 = vcmask 1043456
      %v2066 = vsel %vm2064, %v1038, 0
      %2068 = vmatprep.subr.bf16.mxu0 0
      %2069 = vmatpush1.bf16.msra.mxu0 %v2066
      %2070 = vmatprep.subr.bf16.mxu0 0
      %2071 = vmatpush1.bf16.msra.mxu0 0
      %2072 = vmatprep.subr.bf16.mxu0 0
      %2073 = vmatpush1.bf16.msra.mxu0 0
      %2074 = vmatprep.subr.bf16.mxu0 0
      %2075 = vmatpush1.bf16.msra.mxu0 0
      %2076 = vmatprep.subr.bf16.mxu0 0
      %2077 = vmatpush1.bf16.msra.mxu0 0
      %2078 = vmatprep.subr.bf16.mxu0 0
      %2079 = vmatpush1.bf16.msra.mxu0 0
      %2080 = vmatprep.subr.bf16.mxu0 0
      %2081 = vmatpush1.bf16.msra.mxu0 0
      %2082 = vmatprep.subr.bf16.mxu0 0
      %2083 = vmatpush1.bf16.msra.mxu0 0
      %2084 = vmatprep.subr.bf16.mxu0 0
      %2085 = vmatpush1.bf16.msra.mxu0 0
      %2086 = vmatprep.subr.bf16.mxu0 0
      %2087 = vmatpush1.bf16.msra.mxu0 0
      %2088 = vmatprep.subr.bf16.mxu0 0
      %2089 = vmatpush1.bf16.msra.mxu0 0
      %2090 = vmatprep.subr.bf16.mxu0 0
      %2091 = vmatpush1.bf16.msra.mxu0 0
      %2092 = vmatprep.subr.bf16.mxu0 0
      %2093 = vmatpush1.bf16.msra.mxu0 0
      %2094 = vmatprep.subr.bf16.mxu0 0
      %2095 = vmatpush1.bf16.msra.mxu0 0
      %2096 = vmatprep.subr.bf16.mxu0 0
      %2097 = vmatpush1.bf16.msra.mxu0 0
      %2098 = vmatprep.subr.bf16.mxu0 0
      %2099 = vmatpush1.bf16.msra.mxu0 0
      %2100 = vmatprep.mubr.bf16.mxu0 0
      %2101 = vmatmul.mubr.bf16.gmra.mrb[0].mxu0 %v1681
      %v2102 = vpop.f32.mrb[0].mxu0
      %v2103 = vadd.f32 0.0, %v2102
      %v2104 = vpop.f32.mrb[0].mxu0
      %v2105 = vpop.f32.mrb[0].mxu0
      %v2106 = vadd.f32 0.0, %v2105
      %v2107 = vpop.f32.mrb[0].mxu0
      %2108 = vmatprep.mubr.bf16.mxu0 0
      %2109 = vmatmul.mubr.bf16.gmra.mrb[0].mxu0 %v1684
      %v2110 = vpop.f32.mrb[0].mxu0
      %v2111 = vadd.f32 0.0, %v2110
      %v2112 = vpop.f32.mrb[0].mxu0
      %v2113 = vpop.f32.mrb[0].mxu0
      %v2114 = vadd.f32 0.0, %v2113
      %v2115 = vpop.f32.mrb[0].mxu0
      %2116 = vmatprep.mubr.bf16.mxu0 0
      %2117 = vmatmul.mubr.bf16.gmra.mrb[0].mxu0 %v1687
      %v2118 = vpop.f32.mrb[0].mxu0
      %v2119 = vadd.f32 0.0, %v2118
      %v2120 = vpop.f32.mrb[0].mxu0
      %v2121 = vpop.f32.mrb[0].mxu0
      %v2122 = vadd.f32 0.0, %v2121
      %v2123 = vpop.f32.mrb[0].mxu0
      %2124 = vmatprep.mubr.bf16.mxu0 0
      %2125 = vmatmul.mubr.bf16.gmra.mrb[0].mxu0 %v1690
      %v2126 = vpop.f32.mrb[0].mxu0
      %v2127 = vadd.f32 0.0, %v2126
      %v2128 = vpop.f32.mrb[0].mxu0
      %v2129 = vpop.f32.mrb[0].mxu0
      %v2130 = vadd.f32 0.0, %v2129
      %v2131 = vpop.f32.mrb[0].mxu0
      %2132 = vmatprep.mubr.bf16.mxu0 0
      %2133 = vmatmul.mubr.bf16.gmra.mrb[0].mxu0 %v1693
      %v2134 = vpop.f32.mrb[0].mxu0
      %v2135 = vadd.f32 0.0, %v2134
      %v2136 = vpop.f32.mrb[0].mxu0
      %v2137 = vpop.f32.mrb[0].mxu0
      %v2138 = vadd.f32 0.0, %v2137
      %v2139 = vpop.f32.mrb[0].mxu0
      %2140 = vmatprep.mubr.bf16.mxu0 0
      %2141 = vmatmul.mubr.bf16.gmra.mrb[0].mxu0 %v1696
      %v2142 = vpop.f32.mrb[0].mxu0
      %v2143 = vadd.f32 0.0, %v2142
      %v2144 = vpop.f32.mrb[0].mxu0
      %v2145 = vpop.f32.mrb[0].mxu0
      %v2146 = vadd.f32 0.0, %v2145
      %v2147 = vpop.f32.mrb[0].mxu0
      %2148 = vmatprep.mubr.bf16.mxu0 0
      %2149 = vmatmul.mubr.bf16.gmra.mrb[0].mxu0 %v1699
      %v2150 = vpop.f32.mrb[0].mxu0
      %v2151 = vadd.f32 0.0, %v2150
      %v2152 = vpop.f32.mrb[0].mxu0
      %v2153 = vpop.f32.mrb[0].mxu0
      %v2154 = vadd.f32 0.0, %v2153
      %v2155 = vpop.f32.mrb[0].mxu0
      %2156 = vmatprep.mubr.bf16.mxu0 0
      %2157 = vmatmul.mubr.bf16.gmra.mrb[0].mxu0 %v1702
      %v2158 = vpop.f32.mrb[0].mxu0
      %v2159 = vadd.f32 0.0, %v2158
      %v2160 = vpop.f32.mrb[0].mxu0
      %v2161 = vpop.f32.mrb[0].mxu0
      %v2162 = vadd.f32 0.0, %v2161
      %v2163 = vpop.f32.mrb[0].mxu0
      %2164 = vmatprep.mubr.bf16.mxu0 0
      %2165 = vmatmul.mubr.bf16.gmra.mrb[0].mxu0 %v1705
      %v2166 = vpop.f32.mrb[0].mxu0
      %v2167 = vadd.f32 0.0, %v2166
      %v2168 = vpop.f32.mrb[0].mxu0
      %v2169 = vpop.f32.mrb[0].mxu0
      %v2170 = vadd.f32 0.0, %v2169
      %v2171 = vpop.f32.mrb[0].mxu0
      %2172 = vmatprep.mubr.bf16.mxu0 0
      %2173 = vmatmul.mubr.bf16.gmra.mrb[0].mxu0 %v1708
      %v2174 = vpop.f32.mrb[0].mxu0
      %v2175 = vadd.f32 0.0, %v2174
      %v2176 = vpop.f32.mrb[0].mxu0
      %v2177 = vpop.f32.mrb[0].mxu0
      %v2178 = vadd.f32 0.0, %v2177
      %v2179 = vpop.f32.mrb[0].mxu0
      %2180 = vmatprep.mubr.bf16.mxu0 0
      %2181 = vmatmul.mubr.bf16.gmra.mrb[0].mxu0 %v1711
      %v2182 = vpop.f32.mrb[0].mxu0
      %v2183 = vadd.f32 0.0, %v2182
      %v2184 = vpop.f32.mrb[0].mxu0
      %v2185 = vpop.f32.mrb[0].mxu0
      %v2186 = vadd.f32 0.0, %v2185
      %v2187 = vpop.f32.mrb[0].mxu0
      %2188 = vmatprep.mubr.bf16.mxu0 0
      %2189 = vmatmul.mubr.bf16.gmra.mrb[0].mxu0 %v1714
      %v2190 = vpop.f32.mrb[0].mxu0
      %v2191 = vadd.f32 0.0, %v2190
      %v2192 = vpop.f32.mrb[0].mxu0
      %v2193 = vpop.f32.mrb[0].mxu0
      %v2194 = vadd.f32 0.0, %v2193
      %v2195 = vpop.f32.mrb[0].mxu0
      %2196 = vmatprep.mubr.bf16.mxu0 0
      %2197 = vmatmul.mubr.bf16.gmra.mrb[0].mxu0 %v1717
      %v2198 = vpop.f32.mrb[0].mxu0
      %v2199 = vadd.f32 0.0, %v2198
      %v2200 = vpop.f32.mrb[0].mxu0
      %v2201 = vpop.f32.mrb[0].mxu0
      %v2202 = vadd.f32 0.0, %v2201
      %v2203 = vpop.f32.mrb[0].mxu0
      %2204 = vmatprep.mubr.bf16.mxu0 0
      %2205 = vmatmul.mubr.bf16.gmra.mrb[0].mxu0 %v1720
      %v2206 = vpop.f32.mrb[0].mxu0
      %v2207 = vadd.f32 0.0, %v2206
      %v2208 = vpop.f32.mrb[0].mxu0
      %v2209 = vpop.f32.mrb[0].mxu0
      %v2210 = vadd.f32 0.0, %v2209
      %v2211 = vpop.f32.mrb[0].mxu0
      %2212 = vmatprep.mubr.bf16.mxu0 0
      %2213 = vmatmul.mubr.bf16.gmra.mrb[0].mxu0 %v1723
      %v2214 = vpop.f32.mrb[0].mxu0
      %v2215 = vadd.f32 0.0, %v2214
      %v2216 = vpop.f32.mrb[0].mxu0
      %v2217 = vpop.f32.mrb[0].mxu0
      %v2218 = vadd.f32 0.0, %v2217
      %v2219 = vpop.f32.mrb[0].mxu0
      %2220 = vmatprep.mubr.bf16.mxu0 0
      %2221 = vmatmul.mubr.bf16.gmra.mrb[0].mxu0 %v1726
      %v2222 = vpop.f32.mrb[0].mxu0
      %v2223 = vadd.f32 0.0, %v2222
      %v2224 = vpop.f32.mrb[0].mxu0
      %v2225 = vpop.f32.mrb[0].mxu0
      %v2226 = vadd.f32 0.0, %v2225
      %v2227 = vpop.f32.mrb[0].mxu0
      %2228 = vmatprep.mubr.bf16.mxu0 0
      %2229 = vmatmul.mubr.bf16.gmra.mrb[0].mxu0 %v1729
      %v2230 = vpop.f32.mrb[0].mxu0
      %v2231 = vadd.f32 0.0, %v2230
      %v2232 = vpop.f32.mrb[0].mxu0
      %v2233 = vpop.f32.mrb[0].mxu0
      %v2234 = vadd.f32 0.0, %v2233
      %v2235 = vpop.f32.mrb[0].mxu0
      %2236 = vmatprep.mubr.bf16.mxu0 0
      %2237 = vmatmul.mubr.bf16.gmra.mrb[0].mxu0 %v1732
      %v2238 = vpop.f32.mrb[0].mxu0
      %v2239 = vadd.f32 0.0, %v2238
      %v2240 = vpop.f32.mrb[0].mxu0
      %v2241 = vpop.f32.mrb[0].mxu0
      %v2242 = vadd.f32 0.0, %v2241
      %v2243 = vpop.f32.mrb[0].mxu0
      %2244 = vmatprep.mubr.bf16.mxu0 0
      %2245 = vmatmul.mubr.bf16.gmra.mrb[0].mxu0 %v1735
      %v2246 = vpop.f32.mrb[0].mxu0
      %v2247 = vadd.f32 0.0, %v2246
      %v2248 = vpop.f32.mrb[0].mxu0
      %v2249 = vpop.f32.mrb[0].mxu0
      %v2250 = vadd.f32 0.0, %v2249
      %v2251 = vpop.f32.mrb[0].mxu0
      %2252 = vmatprep.mubr.bf16.mxu0 0
      %2253 = vmatmul.mubr.bf16.gmra.mrb[0].mxu0 %v1738
      %v2254 = vpop.f32.mrb[0].mxu0
      %v2255 = vadd.f32 0.0, %v2254
      %v2256 = vpop.f32.mrb[0].mxu0
      %v2257 = vpop.f32.mrb[0].mxu0
      %v2258 = vadd.f32 0.0, %v2257
      %v2259 = vpop.f32.mrb[0].mxu0
      %2260 = vmatprep.mubr.bf16.mxu0 0
      %2261 = vmatmul.mubr.bf16.gmra.mrb[0].mxu0 %v1741
      %v2262 = vpop.f32.mrb[0].mxu0
      %v2263 = vadd.f32 0.0, %v2262
      %v2264 = vpop.f32.mrb[0].mxu0
      %v2265 = vpop.f32.mrb[0].mxu0
      %v2266 = vadd.f32 0.0, %v2265
      %v2267 = vpop.f32.mrb[0].mxu0
      %2268 = vmatprep.mubr.bf16.mxu0 0
      %2269 = vmatmul.mubr.bf16.gmra.mrb[0].mxu0 %v1744
      %v2270 = vpop.f32.mrb[0].mxu0
      %v2271 = vadd.f32 0.0, %v2270
      %v2272 = vpop.f32.mrb[0].mxu0
      %v2273 = vpop.f32.mrb[0].mxu0
      %v2274 = vadd.f32 0.0, %v2273
      %v2275 = vpop.f32.mrb[0].mxu0
      %2276 = vmatprep.mubr.bf16.mxu0 0
      %2277 = vmatmul.mubr.bf16.gmra.mrb[0].mxu0 %v1747
      %v2278 = vpop.f32.mrb[0].mxu0
      %v2279 = vadd.f32 0.0, %v2278
      %v2280 = vpop.f32.mrb[0].mxu0
      %v2281 = vpop.f32.mrb[0].mxu0
      %v2282 = vadd.f32 0.0, %v2281
      %v2283 = vpop.f32.mrb[0].mxu0
      %2284 = vmatprep.mubr.bf16.mxu0 0
      %2285 = vmatmul.mubr.bf16.gmra.mrb[0].mxu0 %v1750
      %v2286 = vpop.f32.mrb[0].mxu0
      %v2287 = vadd.f32 0.0, %v2286
      %v2288 = vpop.f32.mrb[0].mxu0
      %v2289 = vpop.f32.mrb[0].mxu0
      %v2290 = vadd.f32 0.0, %v2289
      %v2291 = vpop.f32.mrb[0].mxu0
      %2292 = vmatprep.mubr.bf16.mxu0 0
      %2293 = vmatmul.mubr.bf16.gmra.mrb[0].mxu0 %v1753
      %v2294 = vpop.f32.mrb[0].mxu0
      %v2295 = vadd.f32 0.0, %v2294
      %v2296 = vpop.f32.mrb[0].mxu0
      %v2297 = vpop.f32.mrb[0].mxu0
      %v2298 = vadd.f32 0.0, %v2297
      %v2299 = vpop.f32.mrb[0].mxu0
      %2300 = vmatprep.mubr.bf16.mxu0 0
      %2301 = vmatmul.mubr.bf16.gmra.mrb[0].mxu0 %v1756
      %v2302 = vpop.f32.mrb[0].mxu0
      %v2303 = vadd.f32 0.0, %v2302
      %v2304 = vpop.f32.mrb[0].mxu0
      %v2305 = vpop.f32.mrb[0].mxu0
      %v2306 = vadd.f32 0.0, %v2305
      %v2307 = vpop.f32.mrb[0].mxu0
      %2308 = vmatprep.mubr.bf16.mxu0 0
      %2309 = vmatmul.mubr.bf16.gmra.mrb[0].mxu0 %v1759
      %v2310 = vpop.f32.mrb[0].mxu0
      %v2311 = vadd.f32 0.0, %v2310
      %v2312 = vpop.f32.mrb[0].mxu0
      %v2313 = vpop.f32.mrb[0].mxu0
      %v2314 = vadd.f32 0.0, %v2313
      %v2315 = vpop.f32.mrb[0].mxu0
      %2316 = vmatprep.mubr.bf16.mxu0 0
      %2317 = vmatmul.mubr.bf16.gmra.mrb[0].mxu0 %v1762
      %v2318 = vpop.f32.mrb[0].mxu0
      %v2319 = vadd.f32 0.0, %v2318
      %v2320 = vpop.f32.mrb[0].mxu0
      %v2321 = vpop.f32.mrb[0].mxu0
      %v2322 = vadd.f32 0.0, %v2321
      %v2323 = vpop.f32.mrb[0].mxu0
      %2324 = vmatprep.mubr.bf16.mxu0 0
      %2325 = vmatmul.mubr.bf16.gmra.mrb[0].mxu0 %v1765
      %v2326 = vpop.f32.mrb[0].mxu0
      %v2327 = vadd.f32 0.0, %v2326
      %v2328 = vpop.f32.mrb[0].mxu0
      %v2329 = vpop.f32.mrb[0].mxu0
      %v2330 = vadd.f32 0.0, %v2329
      %v2331 = vpop.f32.mrb[0].mxu0
      %2332 = vmatprep.mubr.bf16.mxu0 0
      %2333 = vmatmul.mubr.bf16.gmra.mrb[0].mxu0 %v1768
      %v2334 = vpop.f32.mrb[0].mxu0
      %v2335 = vadd.f32 0.0, %v2334
      %v2336 = vpop.f32.mrb[0].mxu0
      %v2337 = vpop.f32.mrb[0].mxu0
      %v2338 = vadd.f32 0.0, %v2337
      %v2339 = vpop.f32.mrb[0].mxu0
      %2340 = vmatprep.mubr.bf16.mxu0 0
      %2341 = vmatmul.mubr.bf16.gmra.mrb[0].mxu0 %v1771
      %v2342 = vpop.f32.mrb[0].mxu0
      %v2343 = vadd.f32 0.0, %v2342
      %v2344 = vpop.f32.mrb[0].mxu0
      %v2345 = vpop.f32.mrb[0].mxu0
      %v2346 = vadd.f32 0.0, %v2345
      %v2347 = vpop.f32.mrb[0].mxu0
      %2348 = vmatprep.mubr.bf16.mxu0 0
      %2349 = vmatmul.mubr.bf16.gmra.mrb[0].mxu0 %v1774
      %v2350 = vpop.f32.mrb[0].mxu0
      %v2351 = vadd.f32 0.0, %v2350
      %v2352 = vpop.f32.mrb[0].mxu0
      %v2353 = vpop.f32.mrb[0].mxu0
      %v2354 = vadd.f32 0.0, %v2353
      %v2355 = vpop.f32.mrb[0].mxu0
      %2356 = vmatprep.mubr.bf16.mxu0 0
      %2357 = vmatmul.mubr.bf16.gmra.mrb[0].mxu0 %v1777
      %v2358 = vpop.f32.mrb[0].mxu0
      %v2359 = vadd.f32 0.0, %v2358
      %v2360 = vpop.f32.mrb[0].mxu0
      %v2361 = vpop.f32.mrb[0].mxu0
      %v2362 = vadd.f32 0.0, %v2361
      %v2363 = vpop.f32.mrb[0].mxu0
      %2364 = vmatprep.mubr.bf16.mxu0 0
      %2365 = vmatmul.mubr.bf16.gmra.mrb[0].mxu0 %v1780
      %v2366 = vpop.f32.mrb[0].mxu0
      %v2367 = vadd.f32 0.0, %v2366
      %v2368 = vpop.f32.mrb[0].mxu0
      %v2369 = vpop.f32.mrb[0].mxu0
      %v2370 = vadd.f32 0.0, %v2369
      %v2371 = vpop.f32.mrb[0].mxu0
      %2372 = vmatprep.mubr.bf16.mxu0 0
      %2373 = vmatmul.mubr.bf16.gmra.mrb[0].mxu0 %v1783
      %v2374 = vpop.f32.mrb[0].mxu0
      %v2375 = vadd.f32 0.0, %v2374
      %v2376 = vpop.f32.mrb[0].mxu0
      %v2377 = vpop.f32.mrb[0].mxu0
      %v2378 = vadd.f32 0.0, %v2377
      %v2379 = vpop.f32.mrb[0].mxu0
      %2380 = vmatprep.mubr.bf16.mxu0 0
      %2381 = vmatmul.mubr.bf16.gmra.mrb[0].mxu0 %v1786
      %v2382 = vpop.f32.mrb[0].mxu0
      %v2383 = vadd.f32 0.0, %v2382
      %v2384 = vpop.f32.mrb[0].mxu0
      %v2385 = vpop.f32.mrb[0].mxu0
      %v2386 = vadd.f32 0.0, %v2385
      %v2387 = vpop.f32.mrb[0].mxu0
      %2388 = vmatprep.mubr.bf16.mxu0 0
      %2389 = vmatmul.mubr.bf16.gmra.mrb[0].mxu0 %v1789
      %v2390 = vpop.f32.mrb[0].mxu0
      %v2391 = vadd.f32 0.0, %v2390
      %v2392 = vpop.f32.mrb[0].mxu0
      %v2393 = vpop.f32.mrb[0].mxu0
      %v2394 = vadd.f32 0.0, %v2393
      %v2395 = vpop.f32.mrb[0].mxu0
      %2396 = vmatprep.mubr.bf16.mxu0 0
      %2397 = vmatmul.mubr.bf16.gmra.mrb[0].mxu0 %v1792
      %v2398 = vpop.f32.mrb[0].mxu0
      %v2399 = vadd.f32 0.0, %v2398
      %v2400 = vpop.f32.mrb[0].mxu0
      %v2401 = vpop.f32.mrb[0].mxu0
      %v2402 = vadd.f32 0.0, %v2401
      %v2403 = vpop.f32.mrb[0].mxu0
      %2404 = vmatprep.mubr.bf16.mxu0 0
      %2405 = vmatmul.mubr.bf16.gmra.mrb[0].mxu0 %v1795
      %v2406 = vpop.f32.mrb[0].mxu0
      %v2407 = vadd.f32 0.0, %v2406
      %v2408 = vpop.f32.mrb[0].mxu0
      %v2409 = vpop.f32.mrb[0].mxu0
      %v2410 = vadd.f32 0.0, %v2409
      %v2411 = vpop.f32.mrb[0].mxu0
      %2412 = vmatprep.mubr.bf16.mxu0 0
      %2413 = vmatmul.mubr.bf16.gmra.mrb[0].mxu0 %v1798
      %v2414 = vpop.f32.mrb[0].mxu0
      %v2415 = vadd.f32 0.0, %v2414
      %v2416 = vpop.f32.mrb[0].mxu0
      %v2417 = vpop.f32.mrb[0].mxu0
      %v2418 = vadd.f32 0.0, %v2417
      %v2419 = vpop.f32.mrb[0].mxu0
      %2420 = vmatprep.mubr.bf16.mxu0 0
      %2421 = vmatmul.mubr.bf16.gmra.mrb[0].mxu0 %v1801
      %v2422 = vpop.f32.mrb[0].mxu0
      %v2423 = vadd.f32 0.0, %v2422
      %v2424 = vpop.f32.mrb[0].mxu0
      %v2425 = vpop.f32.mrb[0].mxu0
      %v2426 = vadd.f32 0.0, %v2425
      %v2427 = vpop.f32.mrb[0].mxu0
      %2428 = vmatprep.mubr.bf16.mxu0 0
      %2429 = vmatmul.mubr.bf16.gmra.mrb[0].mxu0 %v1804
      %v2430 = vpop.f32.mrb[0].mxu0
      %v2431 = vadd.f32 0.0, %v2430
      %v2432 = vpop.f32.mrb[0].mxu0
      %v2433 = vpop.f32.mrb[0].mxu0
      %v2434 = vadd.f32 0.0, %v2433
      %v2435 = vpop.f32.mrb[0].mxu0
      %2436 = vmatprep.mubr.bf16.mxu0 0
      %2437 = vmatmul.mubr.bf16.gmra.mrb[0].mxu0 %v1807
      %v2438 = vpop.f32.mrb[0].mxu0
      %v2439 = vadd.f32 0.0, %v2438
      %v2440 = vpop.f32.mrb[0].mxu0
      %v2441 = vpop.f32.mrb[0].mxu0
      %v2442 = vadd.f32 0.0, %v2441
      %v2443 = vpop.f32.mrb[0].mxu0
      %2444 = vmatprep.mubr.bf16.mxu0 0
      %2445 = vmatmul.mubr.bf16.gmra.mrb[0].mxu0 %v1810
      %v2446 = vpop.f32.mrb[0].mxu0
      %v2447 = vadd.f32 0.0, %v2446
      %v2448 = vpop.f32.mrb[0].mxu0
      %v2449 = vpop.f32.mrb[0].mxu0
      %v2450 = vadd.f32 0.0, %v2449
      %v2451 = vpop.f32.mrb[0].mxu0
      %2452 = vmatprep.mubr.bf16.mxu0 0
      %2453 = vmatmul.mubr.bf16.gmra.mrb[0].mxu0 %v1813
      %v2454 = vpop.f32.mrb[0].mxu0
      %v2455 = vadd.f32 0.0, %v2454
      %v2456 = vpop.f32.mrb[0].mxu0
      %v2457 = vpop.f32.mrb[0].mxu0
      %v2458 = vadd.f32 0.0, %v2457
      %v2459 = vpop.f32.mrb[0].mxu0
      %2460 = vmatprep.mubr.bf16.mxu0 0
      %2461 = vmatmul.mubr.bf16.gmra.mrb[0].mxu0 %v1816
      %v2462 = vpop.f32.mrb[0].mxu0
      %v2463 = vadd.f32 0.0, %v2462
      %v2464 = vpop.f32.mrb[0].mxu0
      %v2465 = vpop.f32.mrb[0].mxu0
      %v2466 = vadd.f32 0.0, %v2465
      %v2467 = vpop.f32.mrb[0].mxu0
      %2468 = vmatprep.mubr.bf16.mxu0 0
      %2469 = vmatmul.mubr.bf16.gmra.mrb[0].mxu0 %v1819
      %v2470 = vpop.f32.mrb[0].mxu0
      %v2471 = vadd.f32 0.0, %v2470
      %v2472 = vpop.f32.mrb[0].mxu0
      %v2473 = vpop.f32.mrb[0].mxu0
      %v2474 = vadd.f32 0.0, %v2473
      %v2475 = vpop.f32.mrb[0].mxu0
      %2476 = vmatprep.mubr.bf16.mxu0 0
      %2477 = vmatmul.mubr.bf16.gmra.mrb[0].mxu0 %v1822
      %v2478 = vpop.f32.mrb[0].mxu0
      %v2479 = vadd.f32 0.0, %v2478
      %v2480 = vpop.f32.mrb[0].mxu0
      %v2481 = vpop.f32.mrb[0].mxu0
      %v2482 = vadd.f32 0.0, %v2481
      %v2483 = vpop.f32.mrb[0].mxu0
      %2484 = vmatprep.mubr.bf16.mxu0 0
      %2485 = vmatmul.mubr.bf16.gmra.mrb[0].mxu0 %v1825
      %v2486 = vpop.f32.mrb[0].mxu0
      %v2487 = vadd.f32 0.0, %v2486
      %v2488 = vpop.f32.mrb[0].mxu0
      %v2489 = vpop.f32.mrb[0].mxu0
      %v2490 = vadd.f32 0.0, %v2489
      %v2491 = vpop.f32.mrb[0].mxu0
      %2492 = vmatprep.mubr.bf16.mxu0 0
      %2493 = vmatmul.mubr.bf16.gmra.mrb[0].mxu0 %v1828
      %v2494 = vpop.f32.mrb[0].mxu0
      %v2495 = vadd.f32 0.0, %v2494
      %v2496 = vpop.f32.mrb[0].mxu0
      %v2497 = vpop.f32.mrb[0].mxu0
      %v2498 = vadd.f32 0.0, %v2497
      %v2499 = vpop.f32.mrb[0].mxu0
      %2500 = vmatprep.mubr.bf16.mxu0 0
      %2501 = vmatmul.mubr.bf16.gmra.mrb[0].mxu0 %v1831
      %v2502 = vpop.f32.mrb[0].mxu0
      %v2503 = vadd.f32 0.0, %v2502
      %v2504 = vpop.f32.mrb[0].mxu0
      %v2505 = vpop.f32.mrb[0].mxu0
      %v2506 = vadd.f32 0.0, %v2505
      %v2507 = vpop.f32.mrb[0].mxu0
      %2508 = vmatprep.mubr.bf16.mxu0 0
      %2509 = vmatmul.mubr.bf16.gmra.mrb[0].mxu0 %v1834
      %v2510 = vpop.f32.mrb[0].mxu0
      %v2511 = vadd.f32 0.0, %v2510
      %v2512 = vpop.f32.mrb[0].mxu0
      %v2513 = vpop.f32.mrb[0].mxu0
      %v2514 = vadd.f32 0.0, %v2513
      %v2515 = vpop.f32.mrb[0].mxu0
      %2516 = vmatprep.mubr.bf16.mxu0 0
      %2517 = vmatmul.mubr.bf16.gmra.mrb[0].mxu0 %v1837
      %v2518 = vpop.f32.mrb[0].mxu0
      %v2519 = vadd.f32 0.0, %v2518
      %v2520 = vpop.f32.mrb[0].mxu0
      %v2521 = vpop.f32.mrb[0].mxu0
      %v2522 = vadd.f32 0.0, %v2521
      %v2523 = vpop.f32.mrb[0].mxu0
      %2524 = vmatprep.mubr.bf16.mxu0 0
      %2525 = vmatmul.mubr.bf16.gmra.mrb[0].mxu0 %v1840
      %v2526 = vpop.f32.mrb[0].mxu0
      %v2527 = vadd.f32 0.0, %v2526
      %v2528 = vpop.f32.mrb[0].mxu0
      %v2529 = vpop.f32.mrb[0].mxu0
      %v2530 = vadd.f32 0.0, %v2529
      %v2531 = vpop.f32.mrb[0].mxu0
      %2532 = vmatprep.mubr.bf16.mxu0 0
      %2533 = vmatmul.mubr.bf16.gmra.mrb[0].mxu0 %v1843
      %v2534 = vpop.f32.mrb[0].mxu0
      %v2535 = vadd.f32 0.0, %v2534
      %v2536 = vpop.f32.mrb[0].mxu0
      %v2537 = vpop.f32.mrb[0].mxu0
      %v2538 = vadd.f32 0.0, %v2537
      %v2539 = vpop.f32.mrb[0].mxu0
      %2540 = vmatprep.mubr.bf16.mxu0 0
      %2541 = vmatmul.mubr.bf16.gmra.mrb[0].mxu0 %v1846
      %v2542 = vpop.f32.mrb[0].mxu0
      %v2543 = vadd.f32 0.0, %v2542
      %v2544 = vpop.f32.mrb[0].mxu0
      %v2545 = vpop.f32.mrb[0].mxu0
      %v2546 = vadd.f32 0.0, %v2545
      %v2547 = vpop.f32.mrb[0].mxu0
      %2548 = vmatprep.mubr.bf16.mxu0 0
      %2549 = vmatmul.mubr.bf16.gmra.mrb[0].mxu0 %v1849
      %v2550 = vpop.f32.mrb[0].mxu0
      %v2551 = vadd.f32 0.0, %v2550
      %v2552 = vpop.f32.mrb[0].mxu0
      %v2553 = vpop.f32.mrb[0].mxu0
      %v2554 = vadd.f32 0.0, %v2553
      %v2555 = vpop.f32.mrb[0].mxu0
      %2556 = vmatprep.mubr.bf16.mxu0 0
      %2557 = vmatmul.mubr.bf16.gmra.mrb[0].mxu0 %v1852
      %v2558 = vpop.f32.mrb[0].mxu0
      %v2559 = vadd.f32 0.0, %v2558
      %v2560 = vpop.f32.mrb[0].mxu0
      %v2561 = vpop.f32.mrb[0].mxu0
      %v2562 = vadd.f32 0.0, %v2561
      %v2563 = vpop.f32.mrb[0].mxu0
      %2564 = vmatprep.mubr.bf16.mxu0 0
      %2565 = vmatmul.mubr.bf16.gmra.mrb[0].mxu0 %v1855
      %v2566 = vpop.f32.mrb[0].mxu0
      %v2567 = vadd.f32 0.0, %v2566
      %v2568 = vpop.f32.mrb[0].mxu0
      %v2569 = vpop.f32.mrb[0].mxu0
      %v2570 = vadd.f32 0.0, %v2569
      %v2571 = vpop.f32.mrb[0].mxu0
      %2572 = vmatprep.mubr.bf16.mxu0 0
      %2573 = vmatmul.mubr.bf16.gmra.mrb[0].mxu0 %v1858
      %v2574 = vpop.f32.mrb[0].mxu0
      %v2575 = vadd.f32 0.0, %v2574
      %v2576 = vpop.f32.mrb[0].mxu0
      %v2577 = vpop.f32.mrb[0].mxu0
      %v2578 = vadd.f32 0.0, %v2577
      %v2579 = vpop.f32.mrb[0].mxu0
      %2580 = vmatprep.mubr.bf16.mxu0 0
      %2581 = vmatmul.mubr.bf16.gmra.mrb[0].mxu0 %v1861
      %v2582 = vpop.f32.mrb[0].mxu0
      %v2583 = vadd.f32 0.0, %v2582
      %v2584 = vpop.f32.mrb[0].mxu0
      %v2585 = vpop.f32.mrb[0].mxu0
      %v2586 = vadd.f32 0.0, %v2585
      %v2587 = vpop.f32.mrb[0].mxu0
      %2588 = vmatprep.mubr.bf16.mxu0 0
      %2589 = vmatmul.mubr.bf16.gmra.mrb[0].mxu0 %v1864
      %v2590 = vpop.f32.mrb[0].mxu0
      %v2591 = vadd.f32 0.0, %v2590
      %v2592 = vpop.f32.mrb[0].mxu0
      %v2593 = vpop.f32.mrb[0].mxu0
      %v2594 = vadd.f32 0.0, %v2593
      %v2595 = vpop.f32.mrb[0].mxu0
      %2596 = vmatprep.mubr.bf16.mxu0 0
      %2597 = vmatmul.mubr.bf16.gmra.mrb[0].mxu0 %v1867
      %v2598 = vpop.f32.mrb[0].mxu0
      %v2599 = vadd.f32 0.0, %v2598
      %v2600 = vpop.f32.mrb[0].mxu0
      %v2601 = vpop.f32.mrb[0].mxu0
      %v2602 = vadd.f32 0.0, %v2601
      %v2603 = vpop.f32.mrb[0].mxu0
      %2604 = vmatprep.mubr.bf16.mxu0 0
      %2605 = vmatmul.mubr.bf16.gmra.mrb[0].mxu0 %v1870
      %v2606 = vpop.f32.mrb[0].mxu0
      %v2607 = vadd.f32 0.0, %v2606
      %v2608 = vpop.f32.mrb[0].mxu0
      %v2609 = vpop.f32.mrb[0].mxu0
      %v2610 = vadd.f32 0.0, %v2609
      %v2611 = vpop.f32.mrb[0].mxu0
      %2612 = vmatprep.mubr.bf16.mxu0 0
      %2613 = vmatmul.mubr.bf16.gmra.mrb[0].mxu0 %v1873
      %v2614 = vpop.f32.mrb[0].mxu0
      %v2615 = vadd.f32 0.0, %v2614
      %v2616 = vpop.f32.mrb[0].mxu0
      %v2617 = vpop.f32.mrb[0].mxu0
      %v2618 = vadd.f32 0.0, %v2617
      %v2619 = vpop.f32.mrb[0].mxu0
      %2620 = vmatprep.mubr.bf16.mxu0 0
      %2621 = vmatmul.mubr.bf16.gmra.mrb[0].mxu0 %v1876
      %v2622 = vpop.f32.mrb[0].mxu0
      %v2623 = vadd.f32 0.0, %v2622
      %v2624 = vpop.f32.mrb[0].mxu0
      %v2625 = vpop.f32.mrb[0].mxu0
      %v2626 = vadd.f32 0.0, %v2625
      %v2627 = vpop.f32.mrb[0].mxu0
      %2628 = vmatprep.mubr.bf16.mxu0 0
      %2629 = vmatmul.mubr.bf16.gmra.mrb[0].mxu0 %v1879
      %v2630 = vpop.f32.mrb[0].mxu0
      %v2631 = vadd.f32 0.0, %v2630
      %v2632 = vpop.f32.mrb[0].mxu0
      %v2633 = vpop.f32.mrb[0].mxu0
      %v2634 = vadd.f32 0.0, %v2633
      %v2635 = vpop.f32.mrb[0].mxu0
      %2636 = vmatprep.mubr.bf16.mxu0 0
      %2637 = vmatmul.mubr.bf16.gmra.mrb[0].mxu0 %v1882
      %v2638 = vpop.f32.mrb[0].mxu0
      %v2639 = vadd.f32 0.0, %v2638
      %v2640 = vpop.f32.mrb[0].mxu0
      %v2641 = vpop.f32.mrb[0].mxu0
      %v2642 = vadd.f32 0.0, %v2641
      %v2643 = vpop.f32.mrb[0].mxu0
      %2644 = vmatprep.mubr.bf16.mxu0 0
      %2645 = vmatmul.mubr.bf16.gmra.mrb[0].mxu0 %v1885
      %v2646 = vpop.f32.mrb[0].mxu0
      %v2647 = vadd.f32 0.0, %v2646
      %v2648 = vpop.f32.mrb[0].mxu0
      %v2649 = vpop.f32.mrb[0].mxu0
      %v2650 = vadd.f32 0.0, %v2649
      %v2651 = vpop.f32.mrb[0].mxu0
      %2652 = vmatprep.mubr.bf16.mxu0 0
      %2653 = vmatmul.mubr.bf16.gmra.mrb[0].mxu0 %v1888
      %v2654 = vpop.f32.mrb[0].mxu0
      %v2655 = vadd.f32 0.0, %v2654
      %v2656 = vpop.f32.mrb[0].mxu0
      %v2657 = vpop.f32.mrb[0].mxu0
      %v2658 = vadd.f32 0.0, %v2657
      %v2659 = vpop.f32.mrb[0].mxu0
      %2660 = vmatprep.mubr.bf16.mxu0 0
      %2661 = vmatmul.mubr.bf16.gmra.mrb[0].mxu0 %v1891
      %v2662 = vpop.f32.mrb[0].mxu0
      %v2663 = vadd.f32 0.0, %v2662
      %v2664 = vpop.f32.mrb[0].mxu0
      %v2665 = vpop.f32.mrb[0].mxu0
      %v2666 = vadd.f32 0.0, %v2665
      %v2667 = vpop.f32.mrb[0].mxu0
      %2668 = vmatprep.mubr.bf16.mxu0 0
      %2669 = vmatmul.mubr.bf16.gmra.mrb[0].mxu0 %v1894
      %v2670 = vpop.f32.mrb[0].mxu0
      %v2671 = vadd.f32 0.0, %v2670
      %v2672 = vpop.f32.mrb[0].mxu0
      %v2673 = vpop.f32.mrb[0].mxu0
      %v2674 = vadd.f32 0.0, %v2673
      %v2675 = vpop.f32.mrb[0].mxu0
      %2676 = vmatprep.mubr.bf16.mxu0 0
      %2677 = vmatmul.mubr.bf16.gmra.mrb[0].mxu0 %v1897
      %v2678 = vpop.f32.mrb[0].mxu0
      %v2679 = vadd.f32 0.0, %v2678
      %v2680 = vpop.f32.mrb[0].mxu0
      %v2681 = vpop.f32.mrb[0].mxu0
      %v2682 = vadd.f32 0.0, %v2681
      %v2683 = vpop.f32.mrb[0].mxu0
      %2684 = vmatprep.mubr.bf16.mxu0 0
      %2685 = vmatmul.mubr.bf16.gmra.mrb[0].mxu0 %v1900
      %v2686 = vpop.f32.mrb[0].mxu0
      %v2687 = vadd.f32 0.0, %v2686
      %v2688 = vpop.f32.mrb[0].mxu0
      %v2689 = vpop.f32.mrb[0].mxu0
      %v2690 = vadd.f32 0.0, %v2689
      %v2691 = vpop.f32.mrb[0].mxu0
      %2692 = vmatprep.mubr.bf16.mxu0 0
      %2693 = vmatmul.mubr.bf16.gmra.mrb[0].mxu0 %v1903
      %v2694 = vpop.f32.mrb[0].mxu0
      %v2695 = vadd.f32 0.0, %v2694
      %v2696 = vpop.f32.mrb[0].mxu0
      %v2697 = vpop.f32.mrb[0].mxu0
      %v2698 = vadd.f32 0.0, %v2697
      %v2699 = vpop.f32.mrb[0].mxu0
      %2700 = vmatprep.mubr.bf16.mxu0 0
      %2701 = vmatmul.mubr.bf16.gmra.mrb[0].mxu0 %v1906
      %v2702 = vpop.f32.mrb[0].mxu0
      %v2703 = vadd.f32 0.0, %v2702
      %v2704 = vpop.f32.mrb[0].mxu0
      %v2705 = vpop.f32.mrb[0].mxu0
      %v2706 = vadd.f32 0.0, %v2705
      %v2707 = vpop.f32.mrb[0].mxu0
      %2708 = vmatprep.mubr.bf16.mxu0 0
      %2709 = vmatmul.mubr.bf16.gmra.mrb[0].mxu0 %v1909
      %v2710 = vpop.f32.mrb[0].mxu0
      %v2711 = vadd.f32 0.0, %v2710
      %v2712 = vpop.f32.mrb[0].mxu0
      %v2713 = vpop.f32.mrb[0].mxu0
      %v2714 = vadd.f32 0.0, %v2713
      %v2715 = vpop.f32.mrb[0].mxu0
      %2716 = vmatprep.mubr.bf16.mxu0 0
      %2717 = vmatmul.mubr.bf16.gmra.mrb[0].mxu0 %v1912
      %v2718 = vpop.f32.mrb[0].mxu0
      %v2719 = vadd.f32 0.0, %v2718
      %v2720 = vpop.f32.mrb[0].mxu0
      %v2721 = vpop.f32.mrb[0].mxu0
      %v2722 = vadd.f32 0.0, %v2721
      %v2723 = vpop.f32.mrb[0].mxu0
      %2724 = vmatprep.mubr.bf16.mxu0 0
      %2725 = vmatmul.mubr.bf16.gmra.mrb[0].mxu0 %v1915
      %v2726 = vpop.f32.mrb[0].mxu0
      %v2727 = vadd.f32 0.0, %v2726
      %v2728 = vpop.f32.mrb[0].mxu0
      %v2729 = vpop.f32.mrb[0].mxu0
      %v2730 = vadd.f32 0.0, %v2729
      %v2731 = vpop.f32.mrb[0].mxu0
      %2732 = vmatprep.mubr.bf16.mxu0 0
      %2733 = vmatmul.mubr.bf16.gmra.mrb[0].mxu0 %v1918
      %v2734 = vpop.f32.mrb[0].mxu0
      %v2735 = vadd.f32 0.0, %v2734
      %v2736 = vpop.f32.mrb[0].mxu0
      %v2737 = vpop.f32.mrb[0].mxu0
      %v2738 = vadd.f32 0.0, %v2737
      %v2739 = vpop.f32.mrb[0].mxu0
      %2740 = vmatprep.mubr.bf16.mxu0 0
      %2741 = vmatmul.mubr.bf16.gmra.mrb[0].mxu0 %v1921
      %v2742 = vpop.f32.mrb[0].mxu0
      %v2743 = vadd.f32 0.0, %v2742
      %v2744 = vpop.f32.mrb[0].mxu0
      %v2745 = vpop.f32.mrb[0].mxu0
      %v2746 = vadd.f32 0.0, %v2745
      %v2747 = vpop.f32.mrb[0].mxu0
      %2748 = vmatprep.mubr.bf16.mxu0 0
      %2749 = vmatmul.mubr.bf16.gmra.mrb[0].mxu0 %v1924
      %v2750 = vpop.f32.mrb[0].mxu0
      %v2751 = vadd.f32 0.0, %v2750
      %v2752 = vpop.f32.mrb[0].mxu0
      %v2753 = vpop.f32.mrb[0].mxu0
      %v2754 = vadd.f32 0.0, %v2753
      %v2755 = vpop.f32.mrb[0].mxu0
      %2756 = vmatprep.mubr.bf16.mxu0 0
      %2757 = vmatmul.mubr.bf16.gmra.mrb[0].mxu0 %v1927
      %v2758 = vpop.f32.mrb[0].mxu0
      %v2759 = vadd.f32 0.0, %v2758
      %v2760 = vpop.f32.mrb[0].mxu0
      %v2761 = vpop.f32.mrb[0].mxu0
      %v2762 = vadd.f32 0.0, %v2761
      %v2763 = vpop.f32.mrb[0].mxu0
      %2764 = vmatprep.mubr.bf16.mxu0 0
      %2765 = vmatmul.mubr.bf16.gmra.mrb[0].mxu0 %v1930
      %v2766 = vpop.f32.mrb[0].mxu0
      %v2767 = vadd.f32 0.0, %v2766
      %v2768 = vpop.f32.mrb[0].mxu0
      %v2769 = vpop.f32.mrb[0].mxu0
      %v2770 = vadd.f32 0.0, %v2769
      %v2771 = vpop.f32.mrb[0].mxu0
      %2772 = vmatprep.mubr.bf16.mxu0 0
      %2773 = vmatmul.mubr.bf16.gmra.mrb[0].mxu0 %v1933
      %v2774 = vpop.f32.mrb[0].mxu0
      %v2775 = vadd.f32 0.0, %v2774
      %v2776 = vpop.f32.mrb[0].mxu0
      %v2777 = vpop.f32.mrb[0].mxu0
      %v2778 = vadd.f32 0.0, %v2777
      %v2779 = vpop.f32.mrb[0].mxu0
      %2780 = vmatprep.mubr.bf16.mxu0 0
      %2781 = vmatmul.mubr.bf16.gmra.mrb[0].mxu0 %v1936
      %v2782 = vpop.f32.mrb[0].mxu0
      %v2783 = vadd.f32 0.0, %v2782
      %v2784 = vpop.f32.mrb[0].mxu0
      %v2785 = vpop.f32.mrb[0].mxu0
      %v2786 = vadd.f32 0.0, %v2785
      %v2787 = vpop.f32.mrb[0].mxu0
      %2788 = vmatprep.mubr.bf16.mxu0 0
      %2789 = vmatmul.mubr.bf16.gmra.mrb[0].mxu0 %v1939
      %v2790 = vpop.f32.mrb[0].mxu0
      %v2791 = vadd.f32 0.0, %v2790
      %v2792 = vpop.f32.mrb[0].mxu0
      %v2793 = vpop.f32.mrb[0].mxu0
      %v2794 = vadd.f32 0.0, %v2793
      %v2795 = vpop.f32.mrb[0].mxu0
      %2796 = vmatprep.mubr.bf16.mxu0 0
      %2797 = vmatmul.mubr.bf16.gmra.mrb[0].mxu0 %v1942
      %v2798 = vpop.f32.mrb[0].mxu0
      %v2799 = vadd.f32 0.0, %v2798
      %v2800 = vpop.f32.mrb[0].mxu0
      %v2801 = vpop.f32.mrb[0].mxu0
      %v2802 = vadd.f32 0.0, %v2801
      %v2803 = vpop.f32.mrb[0].mxu0
      %2804 = vmatprep.mubr.bf16.mxu0 0
      %2805 = vmatmul.mubr.bf16.gmra.mrb[0].mxu0 %v1945
      %v2806 = vpop.f32.mrb[0].mxu0
      %v2807 = vadd.f32 0.0, %v2806
      %v2808 = vpop.f32.mrb[0].mxu0
      %v2809 = vpop.f32.mrb[0].mxu0
      %v2810 = vadd.f32 0.0, %v2809
      %v2811 = vpop.f32.mrb[0].mxu0
      %2812 = vmatprep.mubr.bf16.mxu0 0
      %2813 = vmatmul.mubr.bf16.gmra.mrb[0].mxu0 %v1948
      %v2814 = vpop.f32.mrb[0].mxu0
      %v2815 = vadd.f32 0.0, %v2814
      %v2816 = vpop.f32.mrb[0].mxu0
      %v2817 = vpop.f32.mrb[0].mxu0
      %v2818 = vadd.f32 0.0, %v2817
      %v2819 = vpop.f32.mrb[0].mxu0
      %2820 = vmatprep.mubr.bf16.mxu0 0
      %2821 = vmatmul.mubr.bf16.gmra.mrb[0].mxu0 %v1951
      %v2822 = vpop.f32.mrb[0].mxu0
      %v2823 = vadd.f32 0.0, %v2822
      %v2824 = vpop.f32.mrb[0].mxu0
      %v2825 = vpop.f32.mrb[0].mxu0
      %v2826 = vadd.f32 0.0, %v2825
      %v2827 = vpop.f32.mrb[0].mxu0
      %2828 = vmatprep.mubr.bf16.mxu0 0
      %2829 = vmatmul.mubr.bf16.gmra.mrb[0].mxu0 %v1954
      %v2830 = vpop.f32.mrb[0].mxu0
      %v2831 = vadd.f32 0.0, %v2830
      %v2832 = vpop.f32.mrb[0].mxu0
      %v2833 = vpop.f32.mrb[0].mxu0
      %v2834 = vadd.f32 0.0, %v2833
      %v2835 = vpop.f32.mrb[0].mxu0
      %2836 = vmatprep.mubr.bf16.mxu0 0
      %2837 = vmatmul.mubr.bf16.gmra.mrb[0].mxu0 %v1957
      %v2838 = vpop.f32.mrb[0].mxu0
      %v2839 = vadd.f32 0.0, %v2838
      %v2840 = vpop.f32.mrb[0].mxu0
      %v2841 = vpop.f32.mrb[0].mxu0
      %v2842 = vadd.f32 0.0, %v2841
      %v2843 = vpop.f32.mrb[0].mxu0
      %2844 = vmatprep.mubr.bf16.mxu0 0
      %2845 = vmatmul.mubr.bf16.gmra.mrb[0].mxu0 %v1960
      %v2846 = vpop.f32.mrb[0].mxu0
      %v2847 = vadd.f32 0.0, %v2846
      %v2848 = vpop.f32.mrb[0].mxu0
      %v2849 = vpop.f32.mrb[0].mxu0
      %v2850 = vadd.f32 0.0, %v2849
      %v2851 = vpop.f32.mrb[0].mxu0
      %2852 = vmatprep.mubr.bf16.mxu0 0
      %2853 = vmatmul.mubr.bf16.gmra.mrb[0].mxu0 %v1963
      %v2854 = vpop.f32.mrb[0].mxu0
      %v2855 = vadd.f32 0.0, %v2854
      %v2856 = vpop.f32.mrb[0].mxu0
      %v2857 = vpop.f32.mrb[0].mxu0
      %v2858 = vadd.f32 0.0, %v2857
      %v2859 = vpop.f32.mrb[0].mxu0
      %2860 = vmatprep.mubr.bf16.mxu0 0
      %2861 = vmatmul.mubr.bf16.gmra.mrb[0].mxu0 %v1966
      %v2862 = vpop.f32.mrb[0].mxu0
      %v2863 = vadd.f32 0.0, %v2862
      %v2864 = vpop.f32.mrb[0].mxu0
      %v2865 = vpop.f32.mrb[0].mxu0
      %v2866 = vadd.f32 0.0, %v2865
      %v2867 = vpop.f32.mrb[0].mxu0
      %2868 = vmatprep.mubr.bf16.mxu0 0
      %2869 = vmatmul.mubr.bf16.gmra.mrb[0].mxu0 %v1969
      %v2870 = vpop.f32.mrb[0].mxu0
      %v2871 = vadd.f32 0.0, %v2870
      %v2872 = vpop.f32.mrb[0].mxu0
      %v2873 = vpop.f32.mrb[0].mxu0
      %v2874 = vadd.f32 0.0, %v2873
      %v2875 = vpop.f32.mrb[0].mxu0
      %2876 = vmatprep.mubr.bf16.mxu0 0
      %2877 = vmatmul.mubr.bf16.gmra.mrb[0].mxu0 %v1972
      %v2878 = vpop.f32.mrb[0].mxu0
      %v2879 = vadd.f32 0.0, %v2878
      %v2880 = vpop.f32.mrb[0].mxu0
      %v2881 = vpop.f32.mrb[0].mxu0
      %v2882 = vadd.f32 0.0, %v2881
      %v2883 = vpop.f32.mrb[0].mxu0
      %2884 = vmatprep.mubr.bf16.mxu0 0
      %2885 = vmatmul.mubr.bf16.gmra.mrb[0].mxu0 %v1975
      %v2886 = vpop.f32.mrb[0].mxu0
      %v2887 = vadd.f32 0.0, %v2886
      %v2888 = vpop.f32.mrb[0].mxu0
      %v2889 = vpop.f32.mrb[0].mxu0
      %v2890 = vadd.f32 0.0, %v2889
      %v2891 = vpop.f32.mrb[0].mxu0
      %2892 = vmatprep.mubr.bf16.mxu0 0
      %2893 = vmatmul.mubr.bf16.gmra.mrb[0].mxu0 %v1978
      %v2894 = vpop.f32.mrb[0].mxu0
      %v2895 = vadd.f32 0.0, %v2894
      %v2896 = vpop.f32.mrb[0].mxu0
      %v2897 = vpop.f32.mrb[0].mxu0
      %v2898 = vadd.f32 0.0, %v2897
      %v2899 = vpop.f32.mrb[0].mxu0
      %2900 = vmatprep.mubr.bf16.mxu0 0
      %2901 = vmatmul.mubr.bf16.gmra.mrb[0].mxu0 %v1981
      %v2902 = vpop.f32.mrb[0].mxu0
      %v2903 = vadd.f32 0.0, %v2902
      %v2904 = vpop.f32.mrb[0].mxu0
      %v2905 = vpop.f32.mrb[0].mxu0
      %v2906 = vadd.f32 0.0, %v2905
      %v2907 = vpop.f32.mrb[0].mxu0
      %2908 = vmatprep.mubr.bf16.mxu0 0
      %2909 = vmatmul.mubr.bf16.gmra.mrb[0].mxu0 %v1984
      %v2910 = vpop.f32.mrb[0].mxu0
      %v2911 = vadd.f32 0.0, %v2910
      %v2912 = vpop.f32.mrb[0].mxu0
      %v2913 = vpop.f32.mrb[0].mxu0
      %v2914 = vadd.f32 0.0, %v2913
      %v2915 = vpop.f32.mrb[0].mxu0
      %2916 = vmatprep.mubr.bf16.mxu0 0
      %2917 = vmatmul.mubr.bf16.gmra.mrb[0].mxu0 %v1987
      %v2918 = vpop.f32.mrb[0].mxu0
      %v2919 = vadd.f32 0.0, %v2918
      %v2920 = vpop.f32.mrb[0].mxu0
      %v2921 = vpop.f32.mrb[0].mxu0
      %v2922 = vadd.f32 0.0, %v2921
      %v2923 = vpop.f32.mrb[0].mxu0
      %2924 = vmatprep.mubr.bf16.mxu0 0
      %2925 = vmatmul.mubr.bf16.gmra.mrb[0].mxu0 %v1990
      %v2926 = vpop.f32.mrb[0].mxu0
      %v2927 = vadd.f32 0.0, %v2926
      %v2928 = vpop.f32.mrb[0].mxu0
      %v2929 = vpop.f32.mrb[0].mxu0
      %v2930 = vadd.f32 0.0, %v2929
      %v2931 = vpop.f32.mrb[0].mxu0
      %2932 = vmatprep.mubr.bf16.mxu0 0
      %2933 = vmatmul.mubr.bf16.gmra.mrb[0].mxu0 %v1993
      %v2934 = vpop.f32.mrb[0].mxu0
      %v2935 = vadd.f32 0.0, %v2934
      %v2936 = vpop.f32.mrb[0].mxu0
      %v2937 = vpop.f32.mrb[0].mxu0
      %v2938 = vadd.f32 0.0, %v2937
      %v2939 = vpop.f32.mrb[0].mxu0
      %2940 = vmatprep.mubr.bf16.mxu0 0
      %2941 = vmatmul.mubr.bf16.gmra.mrb[0].mxu0 %v1996
      %v2942 = vpop.f32.mrb[0].mxu0
      %v2943 = vadd.f32 0.0, %v2942
      %v2944 = vpop.f32.mrb[0].mxu0
      %v2945 = vpop.f32.mrb[0].mxu0
      %v2946 = vadd.f32 0.0, %v2945
      %v2947 = vpop.f32.mrb[0].mxu0
      %2948 = vmatprep.mubr.bf16.mxu0 0
      %2949 = vmatmul.mubr.bf16.gmra.mrb[0].mxu0 %v1999
      %v2950 = vpop.f32.mrb[0].mxu0
      %v2951 = vadd.f32 0.0, %v2950
      %v2952 = vpop.f32.mrb[0].mxu0
      %v2953 = vpop.f32.mrb[0].mxu0
      %v2954 = vadd.f32 0.0, %v2953
      %v2955 = vpop.f32.mrb[0].mxu0
      %2956 = vmatprep.mubr.bf16.mxu0 0
      %2957 = vmatmul.mubr.bf16.gmra.mrb[0].mxu0 %v2002
      %v2958 = vpop.f32.mrb[0].mxu0
      %v2959 = vadd.f32 0.0, %v2958
      %v2960 = vpop.f32.mrb[0].mxu0
      %v2961 = vpop.f32.mrb[0].mxu0
      %v2962 = vadd.f32 0.0, %v2961
      %v2963 = vpop.f32.mrb[0].mxu0
      %2964 = vmatprep.mubr.bf16.mxu0 0
      %2965 = vmatmul.mubr.bf16.gmra.mrb[0].mxu0 %v2005
      %v2966 = vpop.f32.mrb[0].mxu0
      %v2967 = vadd.f32 0.0, %v2966
      %v2968 = vpop.f32.mrb[0].mxu0
      %v2969 = vpop.f32.mrb[0].mxu0
      %v2970 = vadd.f32 0.0, %v2969
      %v2971 = vpop.f32.mrb[0].mxu0
      %2972 = vmatprep.mubr.bf16.mxu0 0
      %2973 = vmatmul.mubr.bf16.gmra.mrb[0].mxu0 %v2008
      %v2974 = vpop.f32.mrb[0].mxu0
      %v2975 = vadd.f32 0.0, %v2974
      %v2976 = vpop.f32.mrb[0].mxu0
      %v2977 = vpop.f32.mrb[0].mxu0
      %v2978 = vadd.f32 0.0, %v2977
      %v2979 = vpop.f32.mrb[0].mxu0
      %2980 = vmatprep.mubr.bf16.mxu0 0
      %2981 = vmatmul.mubr.bf16.gmra.mrb[0].mxu0 %v2011
      %v2982 = vpop.f32.mrb[0].mxu0
      %v2983 = vadd.f32 0.0, %v2982
      %v2984 = vpop.f32.mrb[0].mxu0
      %v2985 = vpop.f32.mrb[0].mxu0
      %v2986 = vadd.f32 0.0, %v2985
      %v2987 = vpop.f32.mrb[0].mxu0
      %2988 = vmatprep.mubr.bf16.mxu0 0
      %2989 = vmatmul.mubr.bf16.gmra.mrb[0].mxu0 %v2014
      %v2990 = vpop.f32.mrb[0].mxu0
      %v2991 = vadd.f32 0.0, %v2990
      %v2992 = vpop.f32.mrb[0].mxu0
      %v2993 = vpop.f32.mrb[0].mxu0
      %v2994 = vadd.f32 0.0, %v2993
      %v2995 = vpop.f32.mrb[0].mxu0
      %2996 = vmatprep.mubr.bf16.mxu0 0
      %2997 = vmatmul.mubr.bf16.gmra.mrb[0].mxu0 %v2017
      %v2998 = vpop.f32.mrb[0].mxu0
      %v2999 = vadd.f32 0.0, %v2998
      %v3000 = vpop.f32.mrb[0].mxu0
      %v3001 = vpop.f32.mrb[0].mxu0
      %v3002 = vadd.f32 0.0, %v3001
      %v3003 = vpop.f32.mrb[0].mxu0
      %3004 = vmatprep.mubr.bf16.mxu0 0
      %3005 = vmatmul.mubr.bf16.gmra.mrb[0].mxu0 %v2020
      %v3006 = vpop.f32.mrb[0].mxu0
      %v3007 = vadd.f32 0.0, %v3006
      %v3008 = vpop.f32.mrb[0].mxu0
      %v3009 = vpop.f32.mrb[0].mxu0
      %v3010 = vadd.f32 0.0, %v3009
      %v3011 = vpop.f32.mrb[0].mxu0
      %3012 = vmatprep.mubr.bf16.mxu0 0
      %3013 = vmatmul.mubr.bf16.gmra.mrb[0].mxu0 %v2023
      %v3014 = vpop.f32.mrb[0].mxu0
      %v3015 = vadd.f32 0.0, %v3014
      %v3016 = vpop.f32.mrb[0].mxu0
      %v3017 = vpop.f32.mrb[0].mxu0
      %v3018 = vadd.f32 0.0, %v3017
      %v3019 = vpop.f32.mrb[0].mxu0
      %3020 = vmatprep.mubr.bf16.mxu0 0
      %3021 = vmatmul.mubr.bf16.gmra.mrb[0].mxu0 %v2026
      %v3022 = vpop.f32.mrb[0].mxu0
      %v3023 = vadd.f32 0.0, %v3022
      %v3024 = vpop.f32.mrb[0].mxu0
      %v3025 = vpop.f32.mrb[0].mxu0
      %v3026 = vadd.f32 0.0, %v3025
      %v3027 = vpop.f32.mrb[0].mxu0
      %3028 = vmatprep.mubr.bf16.mxu0 0
      %3029 = vmatmul.mubr.bf16.gmra.mrb[0].mxu0 %v2029
      %v3030 = vpop.f32.mrb[0].mxu0
      %v3031 = vadd.f32 0.0, %v3030
      %v3032 = vpop.f32.mrb[0].mxu0
      %v3033 = vpop.f32.mrb[0].mxu0
      %v3034 = vadd.f32 0.0, %v3033
      %v3035 = vpop.f32.mrb[0].mxu0
      %3036 = vmatprep.mubr.bf16.mxu0 0
      %3037 = vmatmul.mubr.bf16.gmra.mrb[0].mxu0 %v2032
      %v3038 = vpop.f32.mrb[0].mxu0
      %v3039 = vadd.f32 0.0, %v3038
      %v3040 = vpop.f32.mrb[0].mxu0
      %v3041 = vpop.f32.mrb[0].mxu0
      %v3042 = vadd.f32 0.0, %v3041
      %v3043 = vpop.f32.mrb[0].mxu0
      %3044 = vmatprep.mubr.bf16.mxu0 0
      %3045 = vmatmul.mubr.bf16.gmra.mrb[0].mxu0 %v2035
      %v3046 = vpop.f32.mrb[0].mxu0
      %v3047 = vadd.f32 0.0, %v3046
      %v3048 = vpop.f32.mrb[0].mxu0
      %v3049 = vpop.f32.mrb[0].mxu0
      %v3050 = vadd.f32 0.0, %v3049
      %v3051 = vpop.f32.mrb[0].mxu0
      %3052 = vmatprep.mubr.bf16.mxu0 0
      %3053 = vmatmul.mubr.bf16.gmra.mrb[0].mxu0 %v2038
      %v3054 = vpop.f32.mrb[0].mxu0
      %v3055 = vadd.f32 0.0, %v3054
      %v3056 = vpop.f32.mrb[0].mxu0
      %v3057 = vpop.f32.mrb[0].mxu0
      %v3058 = vadd.f32 0.0, %v3057
      %v3059 = vpop.f32.mrb[0].mxu0
      %3060 = vmatprep.mubr.bf16.mxu0 0
      %3061 = vmatmul.mubr.bf16.gmra.mrb[0].mxu0 %v2041
      %v3062 = vpop.f32.mrb[0].mxu0
      %v3063 = vadd.f32 0.0, %v3062
      %v3064 = vpop.f32.mrb[0].mxu0
      %v3065 = vpop.f32.mrb[0].mxu0
      %v3066 = vadd.f32 0.0, %v3065
      %v3067 = vpop.f32.mrb[0].mxu0
      %3068 = vmatprep.mubr.bf16.mxu0 0
      %3069 = vmatmul.mubr.bf16.gmra.mrb[0].mxu0 %v2044
      %v3070 = vpop.f32.mrb[0].mxu0
      %v3071 = vadd.f32 0.0, %v3070
      %v3072 = vpop.f32.mrb[0].mxu0
      %v3073 = vpop.f32.mrb[0].mxu0
      %v3074 = vadd.f32 0.0, %v3073
      %v3075 = vpop.f32.mrb[0].mxu0
      %3076 = vmatprep.mubr.bf16.mxu0 0
      %3077 = vmatmul.mubr.bf16.gmra.mrb[0].mxu0 %v2047
      %v3078 = vpop.f32.mrb[0].mxu0
      %v3079 = vadd.f32 0.0, %v3078
      %v3080 = vpop.f32.mrb[0].mxu0
      %v3081 = vpop.f32.mrb[0].mxu0
      %v3082 = vadd.f32 0.0, %v3081
      %v3083 = vpop.f32.mrb[0].mxu0
      %3084 = vmatprep.mubr.bf16.mxu0 0
      %3085 = vmatmul.mubr.bf16.gmra.mrb[0].mxu0 %v2050
      %v3086 = vpop.f32.mrb[0].mxu0
      %v3087 = vadd.f32 0.0, %v3086
      %v3088 = vpop.f32.mrb[0].mxu0
      %v3089 = vpop.f32.mrb[0].mxu0
      %v3090 = vadd.f32 0.0, %v3089
      %v3091 = vpop.f32.mrb[0].mxu0
      %3092 = vmatprep.mubr.bf16.mxu0 0
      %3093 = vmatmul.mubr.bf16.gmra.mrb[0].mxu0 %v2053
      %v3094 = vpop.f32.mrb[0].mxu0
      %v3095 = vadd.f32 0.0, %v3094
      %v3096 = vpop.f32.mrb[0].mxu0
      %v3097 = vpop.f32.mrb[0].mxu0
      %v3098 = vadd.f32 0.0, %v3097
      %v3099 = vpop.f32.mrb[0].mxu0
      %3100 = vmatprep.mubr.bf16.mxu0 0
      %3101 = vmatmul.mubr.bf16.gmra.mrb[0].mxu0 %v2056
      %v3102 = vpop.f32.mrb[0].mxu0
      %v3103 = vadd.f32 0.0, %v3102
      %v3104 = vpop.f32.mrb[0].mxu0
      %v3105 = vpop.f32.mrb[0].mxu0
      %v3106 = vadd.f32 0.0, %v3105
      %v3107 = vpop.f32.mrb[0].mxu0
      %3108 = vmatprep.mubr.bf16.mxu0 0
      %3109 = vmatmul.mubr.bf16.gmra.mrb[0].mxu0 %v2059
      %v3110 = vpop.f32.mrb[0].mxu0
      %v3111 = vadd.f32 0.0, %v3110
      %v3112 = vpop.f32.mrb[0].mxu0
      %v3113 = vpop.f32.mrb[0].mxu0
      %v3114 = vadd.f32 0.0, %v3113
      %v3115 = vpop.f32.mrb[0].mxu0
      %3116 = vmatprep.mubr.bf16.mxu0 0
      %3117 = vmatmul.mubr.bf16.gmra.mrb[0].mxu0 %v2062
      %v3118 = vpop.f32.mrb[0].mxu0
      %v3119 = vadd.f32 0.0, %v3118
      %v3120 = vpop.f32.mrb[0].mxu0
      %v3121 = vpop.f32.mrb[0].mxu0
      %v3122 = vadd.f32 0.0, %v3121
      %v3123 = vpop.f32.mrb[0].mxu0
      %3124 = vdwg.mxu0
      %v3125 = vadd.f32 %v526, %v2103
      %v3126 = vadd.f32 %v527, %v2106
      %v3127 = vadd.f32 %v528, %v2111
      %v3128 = vadd.f32 %v529, %v2114
      %v3129 = vadd.f32 %v530, %v2119
      %v3130 = vadd.f32 %v531, %v2122
      %v3131 = vadd.f32 %v532, %v2127
      %v3132 = vadd.f32 %v533, %v2130
      %v3133 = vadd.f32 %v534, %v2135
      %v3134 = vadd.f32 %v535, %v2138
      %v3135 = vadd.f32 %v536, %v2143
      %v3136 = vadd.f32 %v537, %v2146
      %v3137 = vadd.f32 %v538, %v2151
      %v3138 = vadd.f32 %v539, %v2154
      %v3139 = vadd.f32 %v540, %v2159
      %v3140 = vadd.f32 %v541, %v2162
      %v3141 = vadd.f32 %v542, %v2167
      %v3142 = vadd.f32 %v543, %v2170
      %v3143 = vadd.f32 %v544, %v2175
      %v3144 = vadd.f32 %v545, %v2178
      %v3145 = vadd.f32 %v546, %v2183
      %v3146 = vadd.f32 %v547, %v2186
      %v3147 = vadd.f32 %v548, %v2191
      %v3148 = vadd.f32 %v549, %v2194
      %v3149 = vadd.f32 %v550, %v2199
      %v3150 = vadd.f32 %v551, %v2202
      %v3151 = vadd.f32 %v552, %v2207
      %v3152 = vadd.f32 %v553, %v2210
      %v3153 = vadd.f32 %v554, %v2215
      %v3154 = vadd.f32 %v555, %v2218
      %v3155 = vadd.f32 %v556, %v2223
      %v3156 = vadd.f32 %v557, %v2226
      %v3157 = vadd.f32 %v558, %v2231
      %v3158 = vadd.f32 %v559, %v2234
      %v3159 = vadd.f32 %v560, %v2239
      %v3160 = vadd.f32 %v561, %v2242
      %v3161 = vadd.f32 %v562, %v2247
      %v3162 = vadd.f32 %v563, %v2250
      %v3163 = vadd.f32 %v564, %v2255
      %v3164 = vadd.f32 %v565, %v2258
      %v3165 = vadd.f32 %v566, %v2263
      %v3166 = vadd.f32 %v567, %v2266
      %v3167 = vadd.f32 %v568, %v2271
      %v3168 = vadd.f32 %v569, %v2274
      %v3169 = vadd.f32 %v570, %v2279
      %v3170 = vadd.f32 %v571, %v2282
      %v3171 = vadd.f32 %v572, %v2287
      %v3172 = vadd.f32 %v573, %v2290
      %v3173 = vadd.f32 %v574, %v2295
      %v3174 = vadd.f32 %v575, %v2298
      %v3175 = vadd.f32 %v576, %v2303
      %v3176 = vadd.f32 %v577, %v2306
      %v3177 = vadd.f32 %v578, %v2311
      %v3178 = vadd.f32 %v579, %v2314
      %v3179 = vadd.f32 %v580, %v2319
      %v3180 = vadd.f32 %v581, %v2322
      %v3181 = vadd.f32 %v582, %v2327
      %v3182 = vadd.f32 %v583, %v2330
      %v3183 = vadd.f32 %v584, %v2335
      %v3184 = vadd.f32 %v585, %v2338
      %v3185 = vadd.f32 %v586, %v2343
      %v3186 = vadd.f32 %v587, %v2346
      %v3187 = vadd.f32 %v588, %v2351
      %v3188 = vadd.f32 %v589, %v2354
      %v3189 = vadd.f32 %v590, %v2359
      %v3190 = vadd.f32 %v591, %v2362
      %v3191 = vadd.f32 %v592, %v2367
      %v3192 = vadd.f32 %v593, %v2370
      %v3193 = vadd.f32 %v594, %v2375
      %v3194 = vadd.f32 %v595, %v2378
      %v3195 = vadd.f32 %v596, %v2383
      %v3196 = vadd.f32 %v597, %v2386
      %v3197 = vadd.f32 %v598, %v2391
      %v3198 = vadd.f32 %v599, %v2394
      %v3199 = vadd.f32 %v600, %v2399
      %v3200 = vadd.f32 %v601, %v2402
      %v3201 = vadd.f32 %v602, %v2407
      %v3202 = vadd.f32 %v603, %v2410
      %v3203 = vadd.f32 %v604, %v2415
      %v3204 = vadd.f32 %v605, %v2418
      %v3205 = vadd.f32 %v606, %v2423
      %v3206 = vadd.f32 %v607, %v2426
      %v3207 = vadd.f32 %v608, %v2431
      %v3208 = vadd.f32 %v609, %v2434
      %v3209 = vadd.f32 %v610, %v2439
      %v3210 = vadd.f32 %v611, %v2442
      %v3211 = vadd.f32 %v612, %v2447
      %v3212 = vadd.f32 %v613, %v2450
      %v3213 = vadd.f32 %v614, %v2455
      %v3214 = vadd.f32 %v615, %v2458
      %v3215 = vadd.f32 %v616, %v2463
      %v3216 = vadd.f32 %v617, %v2466
      %v3217 = vadd.f32 %v618, %v2471
      %v3218 = vadd.f32 %v619, %v2474
      %v3219 = vadd.f32 %v620, %v2479
      %v3220 = vadd.f32 %v621, %v2482
      %v3221 = vadd.f32 %v622, %v2487
      %v3222 = vadd.f32 %v623, %v2490
      %v3223 = vadd.f32 %v624, %v2495
      %v3224 = vadd.f32 %v625, %v2498
      %v3225 = vadd.f32 %v626, %v2503
      %v3226 = vadd.f32 %v627, %v2506
      %v3227 = vadd.f32 %v628, %v2511
      %v3228 = vadd.f32 %v629, %v2514
      %v3229 = vadd.f32 %v630, %v2519
      %v3230 = vadd.f32 %v631, %v2522
      %v3231 = vadd.f32 %v632, %v2527
      %v3232 = vadd.f32 %v633, %v2530
      %v3233 = vadd.f32 %v634, %v2535
      %v3234 = vadd.f32 %v635, %v2538
      %v3235 = vadd.f32 %v636, %v2543
      %v3236 = vadd.f32 %v637, %v2546
      %v3237 = vadd.f32 %v638, %v2551
      %v3238 = vadd.f32 %v639, %v2554
      %v3239 = vadd.f32 %v640, %v2559
      %v3240 = vadd.f32 %v641, %v2562
      %v3241 = vadd.f32 %v642, %v2567
      %v3242 = vadd.f32 %v643, %v2570
      %v3243 = vadd.f32 %v644, %v2575
      %v3244 = vadd.f32 %v645, %v2578
      %v3245 = vadd.f32 %v646, %v2583
      %v3246 = vadd.f32 %v647, %v2586
      %v3247 = vadd.f32 %v648, %v2591
      %v3248 = vadd.f32 %v649, %v2594
      %v3249 = vadd.f32 %v650, %v2599
      %v3250 = vadd.f32 %v651, %v2602
      %v3251 = vadd.f32 %v652, %v2607
      %v3252 = vadd.f32 %v653, %v2610
      %v3253 = vadd.f32 %v654, %v2615
      %v3254 = vadd.f32 %v655, %v2618
      %v3255 = vadd.f32 %v656, %v2623
      %v3256 = vadd.f32 %v657, %v2626
      %v3257 = vadd.f32 %v658, %v2631
      %v3258 = vadd.f32 %v659, %v2634
      %v3259 = vadd.f32 %v660, %v2639
      %v3260 = vadd.f32 %v661, %v2642
      %v3261 = vadd.f32 %v662, %v2647
      %v3262 = vadd.f32 %v663, %v2650
      %v3263 = vadd.f32 %v664, %v2655
      %v3264 = vadd.f32 %v665, %v2658
      %v3265 = vadd.f32 %v666, %v2663
      %v3266 = vadd.f32 %v667, %v2666
      %v3267 = vadd.f32 %v668, %v2671
      %v3268 = vadd.f32 %v669, %v2674
      %v3269 = vadd.f32 %v670, %v2679
      %v3270 = vadd.f32 %v671, %v2682
      %v3271 = vadd.f32 %v672, %v2687
      %v3272 = vadd.f32 %v673, %v2690
      %v3273 = vadd.f32 %v674, %v2695
      %v3274 = vadd.f32 %v675, %v2698
      %v3275 = vadd.f32 %v676, %v2703
      %v3276 = vadd.f32 %v677, %v2706
      %v3277 = vadd.f32 %v678, %v2711
      %v3278 = vadd.f32 %v679, %v2714
      %v3279 = vadd.f32 %v680, %v2719
      %v3280 = vadd.f32 %v681, %v2722
      %v3281 = vadd.f32 %v682, %v2727
      %v3282 = vadd.f32 %v683, %v2730
      %v3283 = vadd.f32 %v684, %v2735
      %v3284 = vadd.f32 %v685, %v2738
      %v3285 = vadd.f32 %v686, %v2743
      %v3286 = vadd.f32 %v687, %v2746
      %v3287 = vadd.f32 %v688, %v2751
      %v3288 = vadd.f32 %v689, %v2754
      %v3289 = vadd.f32 %v690, %v2759
      %v3290 = vadd.f32 %v691, %v2762
      %v3291 = vadd.f32 %v692, %v2767
      %v3292 = vadd.f32 %v693, %v2770
      %v3293 = vadd.f32 %v694, %v2775
      %v3294 = vadd.f32 %v695, %v2778
      %v3295 = vadd.f32 %v696, %v2783
      %v3296 = vadd.f32 %v697, %v2786
      %v3297 = vadd.f32 %v698, %v2791
      %v3298 = vadd.f32 %v699, %v2794
      %v3299 = vadd.f32 %v700, %v2799
      %v3300 = vadd.f32 %v701, %v2802
      %v3301 = vadd.f32 %v702, %v2807
      %v3302 = vadd.f32 %v703, %v2810
      %v3303 = vadd.f32 %v704, %v2815
      %v3304 = vadd.f32 %v705, %v2818
      %v3305 = vadd.f32 %v706, %v2823
      %v3306 = vadd.f32 %v707, %v2826
      %v3307 = vadd.f32 %v708, %v2831
      %v3308 = vadd.f32 %v709, %v2834
      %v3309 = vadd.f32 %v710, %v2839
      %v3310 = vadd.f32 %v711, %v2842
      %v3311 = vadd.f32 %v712, %v2847
      %v3312 = vadd.f32 %v713, %v2850
      %v3313 = vadd.f32 %v714, %v2855
      %v3314 = vadd.f32 %v715, %v2858
      %v3315 = vadd.f32 %v716, %v2863
      %v3316 = vadd.f32 %v717, %v2866
      %v3317 = vadd.f32 %v718, %v2871
      %v3318 = vadd.f32 %v719, %v2874
      %v3319 = vadd.f32 %v720, %v2879
      %v3320 = vadd.f32 %v721, %v2882
      %v3321 = vadd.f32 %v722, %v2887
      %v3322 = vadd.f32 %v723, %v2890
      %v3323 = vadd.f32 %v724, %v2895
      %v3324 = vadd.f32 %v725, %v2898
      %v3325 = vadd.f32 %v726, %v2903
      %v3326 = vadd.f32 %v727, %v2906
      %v3327 = vadd.f32 %v728, %v2911
      %v3328 = vadd.f32 %v729, %v2914
      %v3329 = vadd.f32 %v730, %v2919
      %v3330 = vadd.f32 %v731, %v2922
      %v3331 = vadd.f32 %v732, %v2927
      %v3332 = vadd.f32 %v733, %v2930
      %v3333 = vadd.f32 %v734, %v2935
      %v3334 = vadd.f32 %v735, %v2938
      %v3335 = vadd.f32 %v736, %v2943
      %v3336 = vadd.f32 %v737, %v2946
      %v3337 = vadd.f32 %v738, %v2951
      %v3338 = vadd.f32 %v739, %v2954
      %v3339 = vadd.f32 %v740, %v2959
      %v3340 = vadd.f32 %v741, %v2962
      %v3341 = vadd.f32 %v742, %v2967
      %v3342 = vadd.f32 %v743, %v2970
      %v3343 = vadd.f32 %v744, %v2975
      %v3344 = vadd.f32 %v745, %v2978
      %v3345 = vadd.f32 %v746, %v2983
      %v3346 = vadd.f32 %v747, %v2986
      %v3347 = vadd.f32 %v748, %v2991
      %v3348 = vadd.f32 %v749, %v2994
      %v3349 = vadd.f32 %v750, %v2999
      %v3350 = vadd.f32 %v751, %v3002
      %v3351 = vadd.f32 %v752, %v3007
      %v3352 = vadd.f32 %v753, %v3010
      %v3353 = vadd.f32 %v754, %v3015
      %v3354 = vadd.f32 %v755, %v3018
      %v3355 = vadd.f32 %v756, %v3023
      %v3356 = vadd.f32 %v757, %v3026
      %v3357 = vadd.f32 %v758, %v3031
      %v3358 = vadd.f32 %v759, %v3034
      %v3359 = vadd.f32 %v760, %v3039
      %v3360 = vadd.f32 %v761, %v3042
      %v3361 = vadd.f32 %v762, %v3047
      %v3362 = vadd.f32 %v763, %v3050
      %v3363 = vadd.f32 %v764, %v3055
      %v3364 = vadd.f32 %v765, %v3058
      %v3365 = vadd.f32 %v766, %v3063
      %v3366 = vadd.f32 %v767, %v3066
      %v3367 = vadd.f32 %v768, %v3071
      %v3368 = vadd.f32 %v769, %v3074
      %v3369 = vadd.f32 %v770, %v3079
      %v3370 = vadd.f32 %v771, %v3082
      %v3371 = vadd.f32 %v772, %v3087
      %v3372 = vadd.f32 %v773, %v3090
      %v3373 = vadd.f32 %v774, %v3095
      %v3374 = vadd.f32 %v775, %v3098
      %v3375 = vadd.f32 %v776, %v3103
      %v3376 = vadd.f32 %v777, %v3106
      %v3377 = vadd.f32 %v778, %v3111
      %v3378 = vadd.f32 %v779, %v3114
      %v3379 = vadd.f32 %v780, %v3119
      %v3380 = vadd.f32 %v781, %v3122
      %vm3381 = vcmask 523264
      %3382 = vst.msk [vmem:[#allocation2] sm:$0xff] %vm3381, %v3125
      %3383 = vst.msk [vmem:[#allocation2 + $0x8] sm:$0xff] %vm3381, %v3126
      %3384 = vst.msk [vmem:[#allocation2 + $0x10] sm:$0xff] %vm3381, %v3127
      %3385 = vst.msk [vmem:[#allocation2 + $0x18] sm:$0xff] %vm3381, %v3128
      %3386 = vst.msk [vmem:[#allocation2 + $0x20] sm:$0xff] %vm3381, %v3129
      %3387 = vst.msk [vmem:[#allocation2 + $0x28] sm:$0xff] %vm3381, %v3130
      %3388 = vst.msk [vmem:[#allocation2 + $0x30] sm:$0xff] %vm3381, %v3131
      %3389 = vst.msk [vmem:[#allocation2 + $0x38] sm:$0xff] %vm3381, %v3132
      %3390 = vst.msk [vmem:[#allocation2 + $0x40] sm:$0xff] %vm3381, %v3133
      %3391 = vst.msk [vmem:[#allocation2 + $0x48] sm:$0xff] %vm3381, %v3134
      %3392 = vst.msk [vmem:[#allocation2 + $0x50] sm:$0xff] %vm3381, %v3135
      %3393 = vst.msk [vmem:[#allocation2 + $0x58] sm:$0xff] %vm3381, %v3136
      %3394 = vst.msk [vmem:[#allocation2 + $0x60] sm:$0xff] %vm3381, %v3137
      %3395 = vst.msk [vmem:[#allocation2 + $0x68] sm:$0xff] %vm3381, %v3138
      %3396 = vst.msk [vmem:[#allocation2 + $0x70] sm:$0xff] %vm3381, %v3139
      %3397 = vst.msk [vmem:[#allocation2 + $0x78] sm:$0xff] %vm3381, %v3140
      %3398 = vst.msk [vmem:[#allocation2 + $0x80] sm:$0xff] %vm3381, %v3141
      %3399 = vst.msk [vmem:[#allocation2 + $0x88] sm:$0xff] %vm3381, %v3142
      %3400 = vst.msk [vmem:[#allocation2 + $0x90] sm:$0xff] %vm3381, %v3143
      %3401 = vst.msk [vmem:[#allocation2 + $0x98] sm:$0xff] %vm3381, %v3144
      %3402 = vst.msk [vmem:[#allocation2 + $0xa0] sm:$0xff] %vm3381, %v3145
      %3403 = vst.msk [vmem:[#allocation2 + $0xa8] sm:$0xff] %vm3381, %v3146
      %3404 = vst.msk [vmem:[#allocation2 + $0xb0] sm:$0xff] %vm3381, %v3147
      %3405 = vst.msk [vmem:[#allocation2 + $0xb8] sm:$0xff] %vm3381, %v3148
      %3406 = vst.msk [vmem:[#allocation2 + $0xc0] sm:$0xff] %vm3381, %v3149
      %3407 = vst.msk [vmem:[#allocation2 + $0xc8] sm:$0xff] %vm3381, %v3150
      %3408 = vst.msk [vmem:[#allocation2 + $0xd0] sm:$0xff] %vm3381, %v3151
      %3409 = vst.msk [vmem:[#allocation2 + $0xd8] sm:$0xff] %vm3381, %v3152
      %3410 = vst.msk [vmem:[#allocation2 + $0xe0] sm:$0xff] %vm3381, %v3153
      %3411 = vst.msk [vmem:[#allocation2 + $0xe8] sm:$0xff] %vm3381, %v3154
      %3412 = vst.msk [vmem:[#allocation2 + $0xf0] sm:$0xff] %vm3381, %v3155
      %3413 = vst.msk [vmem:[#allocation2 + $0xf8] sm:$0xff] %vm3381, %v3156
      %3414 = vst.msk [vmem:[#allocation2 + $0x100] sm:$0xff] %vm3381, %v3157
      %3415 = vst.msk [vmem:[#allocation2 + $0x108] sm:$0xff] %vm3381, %v3158
      %3416 = vst.msk [vmem:[#allocation2 + $0x110] sm:$0xff] %vm3381, %v3159
      %3417 = vst.msk [vmem:[#allocation2 + $0x118] sm:$0xff] %vm3381, %v3160
      %3418 = vst.msk [vmem:[#allocation2 + $0x120] sm:$0xff] %vm3381, %v3161
      %3419 = vst.msk [vmem:[#allocation2 + $0x128] sm:$0xff] %vm3381, %v3162
      %3420 = vst.msk [vmem:[#allocation2 + $0x130] sm:$0xff] %vm3381, %v3163
      %3421 = vst.msk [vmem:[#allocation2 + $0x138] sm:$0xff] %vm3381, %v3164
      %3422 = vst.msk [vmem:[#allocation2 + $0x140] sm:$0xff] %vm3381, %v3165
      %3423 = vst.msk [vmem:[#allocation2 + $0x148] sm:$0xff] %vm3381, %v3166
      %3424 = vst.msk [vmem:[#allocation2 + $0x150] sm:$0xff] %vm3381, %v3167
      %3425 = vst.msk [vmem:[#allocation2 + $0x158] sm:$0xff] %vm3381, %v3168
      %3426 = vst.msk [vmem:[#allocation2 + $0x160] sm:$0xff] %vm3381, %v3169
      %3427 = vst.msk [vmem:[#allocation2 + $0x168] sm:$0xff] %vm3381, %v3170
      %3428 = vst.msk [vmem:[#allocation2 + $0x170] sm:$0xff] %vm3381, %v3171
      %3429 = vst.msk [vmem:[#allocation2 + $0x178] sm:$0xff] %vm3381, %v3172
      %3430 = vst.msk [vmem:[#allocation2 + $0x180] sm:$0xff] %vm3381, %v3173
      %3431 = vst.msk [vmem:[#allocation2 + $0x188] sm:$0xff] %vm3381, %v3174
      %3432 = vst.msk [vmem:[#allocation2 + $0x190] sm:$0xff] %vm3381, %v3175
      %3433 = vst.msk [vmem:[#allocation2 + $0x198] sm:$0xff] %vm3381, %v3176
      %3434 = vst.msk [vmem:[#allocation2 + $0x1a0] sm:$0xff] %vm3381, %v3177
      %3435 = vst.msk [vmem:[#allocation2 + $0x1a8] sm:$0xff] %vm3381, %v3178
      %3436 = vst.msk [vmem:[#allocation2 + $0x1b0] sm:$0xff] %vm3381, %v3179
      %3437 = vst.msk [vmem:[#allocation2 + $0x1b8] sm:$0xff] %vm3381, %v3180
      %3438 = vst.msk [vmem:[#allocation2 + $0x1c0] sm:$0xff] %vm3381, %v3181
      %3439 = vst.msk [vmem:[#allocation2 + $0x1c8] sm:$0xff] %vm3381, %v3182
      %3440 = vst.msk [vmem:[#allocation2 + $0x1d0] sm:$0xff] %vm3381, %v3183
      %3441 = vst.msk [vmem:[#allocation2 + $0x1d8] sm:$0xff] %vm3381, %v3184
      %3442 = vst.msk [vmem:[#allocation2 + $0x1e0] sm:$0xff] %vm3381, %v3185
      %3443 = vst.msk [vmem:[#allocation2 + $0x1e8] sm:$0xff] %vm3381, %v3186
      %3444 = vst.msk [vmem:[#allocation2 + $0x1f0] sm:$0xff] %vm3381, %v3187
      %3445 = vst.msk [vmem:[#allocation2 + $0x1f8] sm:$0xff] %vm3381, %v3188
      %3446 = vst.msk [vmem:[#allocation2 + $0x200] sm:$0xff] %vm3381, %v3189
      %3447 = vst.msk [vmem:[#allocation2 + $0x208] sm:$0xff] %vm3381, %v3190
      %3448 = vst.msk [vmem:[#allocation2 + $0x210] sm:$0xff] %vm3381, %v3191
      %3449 = vst.msk [vmem:[#allocation2 + $0x218] sm:$0xff] %vm3381, %v3192
      %3450 = vst.msk [vmem:[#allocation2 + $0x220] sm:$0xff] %vm3381, %v3193
      %3451 = vst.msk [vmem:[#allocation2 + $0x228] sm:$0xff] %vm3381, %v3194
      %3452 = vst.msk [vmem:[#allocation2 + $0x230] sm:$0xff] %vm3381, %v3195
      %3453 = vst.msk [vmem:[#allocation2 + $0x238] sm:$0xff] %vm3381, %v3196
      %3454 = vst.msk [vmem:[#allocation2 + $0x240] sm:$0xff] %vm3381, %v3197
      %3455 = vst.msk [vmem:[#allocation2 + $0x248] sm:$0xff] %vm3381, %v3198
      %3456 = vst.msk [vmem:[#allocation2 + $0x250] sm:$0xff] %vm3381, %v3199
      %3457 = vst.msk [vmem:[#allocation2 + $0x258] sm:$0xff] %vm3381, %v3200
      %3458 = vst.msk [vmem:[#allocation2 + $0x260] sm:$0xff] %vm3381, %v3201
      %3459 = vst.msk [vmem:[#allocation2 + $0x268] sm:$0xff] %vm3381, %v3202
      %3460 = vst.msk [vmem:[#allocation2 + $0x270] sm:$0xff] %vm3381, %v3203
      %3461 = vst.msk [vmem:[#allocation2 + $0x278] sm:$0xff] %vm3381, %v3204
      %3462 = vst.msk [vmem:[#allocation2 + $0x280] sm:$0xff] %vm3381, %v3205
      %3463 = vst.msk [vmem:[#allocation2 + $0x288] sm:$0xff] %vm3381, %v3206
      %3464 = vst.msk [vmem:[#allocation2 + $0x290] sm:$0xff] %vm3381, %v3207
      %3465 = vst.msk [vmem:[#allocation2 + $0x298] sm:$0xff] %vm3381, %v3208
      %3466 = vst.msk [vmem:[#allocation2 + $0x2a0] sm:$0xff] %vm3381, %v3209
      %3467 = vst.msk [vmem:[#allocation2 + $0x2a8] sm:$0xff] %vm3381, %v3210
      %3468 = vst.msk [vmem:[#allocation2 + $0x2b0] sm:$0xff] %vm3381, %v3211
      %3469 = vst.msk [vmem:[#allocation2 + $0x2b8] sm:$0xff] %vm3381, %v3212
      %3470 = vst.msk [vmem:[#allocation2 + $0x2c0] sm:$0xff] %vm3381, %v3213
      %3471 = vst.msk [vmem:[#allocation2 + $0x2c8] sm:$0xff] %vm3381, %v3214
      %3472 = vst.msk [vmem:[#allocation2 + $0x2d0] sm:$0xff] %vm3381, %v3215
      %3473 = vst.msk [vmem:[#allocation2 + $0x2d8] sm:$0xff] %vm3381, %v3216
      %3474 = vst.msk [vmem:[#allocation2 + $0x2e0] sm:$0xff] %vm3381, %v3217
      %3475 = vst.msk [vmem:[#allocation2 + $0x2e8] sm:$0xff] %vm3381, %v3218
      %3476 = vst.msk [vmem:[#allocation2 + $0x2f0] sm:$0xff] %vm3381, %v3219
      %3477 = vst.msk [vmem:[#allocation2 + $0x2f8] sm:$0xff] %vm3381, %v3220
      %3478 = vst.msk [vmem:[#allocation2 + $0x300] sm:$0xff] %vm3381, %v3221
      %3479 = vst.msk [vmem:[#allocation2 + $0x308] sm:$0xff] %vm3381, %v3222
      %3480 = vst.msk [vmem:[#allocation2 + $0x310] sm:$0xff] %vm3381, %v3223
      %3481 = vst.msk [vmem:[#allocation2 + $0x318] sm:$0xff] %vm3381, %v3224
      %3482 = vst.msk [vmem:[#allocation2 + $0x320] sm:$0xff] %vm3381, %v3225
      %3483 = vst.msk [vmem:[#allocation2 + $0x328] sm:$0xff] %vm3381, %v3226
      %3484 = vst.msk [vmem:[#allocation2 + $0x330] sm:$0xff] %vm3381, %v3227
      %3485 = vst.msk [vmem:[#allocation2 + $0x338] sm:$0xff] %vm3381, %v3228
      %3486 = vst.msk [vmem:[#allocation2 + $0x340] sm:$0xff] %vm3381, %v3229
      %3487 = vst.msk [vmem:[#allocation2 + $0x348] sm:$0xff] %vm3381, %v3230
      %3488 = vst.msk [vmem:[#allocation2 + $0x350] sm:$0xff] %vm3381, %v3231
      %3489 = vst.msk [vmem:[#allocation2 + $0x358] sm:$0xff] %vm3381, %v3232
      %3490 = vst.msk [vmem:[#allocation2 + $0x360] sm:$0xff] %vm3381, %v3233
      %3491 = vst.msk [vmem:[#allocation2 + $0x368] sm:$0xff] %vm3381, %v3234
      %3492 = vst.msk [vmem:[#allocation2 + $0x370] sm:$0xff] %vm3381, %v3235
      %3493 = vst.msk [vmem:[#allocation2 + $0x378] sm:$0xff] %vm3381, %v3236
      %3494 = vst.msk [vmem:[#allocation2 + $0x380] sm:$0xff] %vm3381, %v3237
      %3495 = vst.msk [vmem:[#allocation2 + $0x388] sm:$0xff] %vm3381, %v3238
      %3496 = vst.msk [vmem:[#allocation2 + $0x390] sm:$0xff] %vm3381, %v3239
      %3497 = vst.msk [vmem:[#allocation2 + $0x398] sm:$0xff] %vm3381, %v3240
      %3498 = vst.msk [vmem:[#allocation2 + $0x3a0] sm:$0xff] %vm3381, %v3241
      %3499 = vst.msk [vmem:[#allocation2 + $0x3a8] sm:$0xff] %vm3381, %v3242
      %3500 = vst.msk [vmem:[#allocation2 + $0x3b0] sm:$0xff] %vm3381, %v3243
      %3501 = vst.msk [vmem:[#allocation2 + $0x3b8] sm:$0xff] %vm3381, %v3244
      %3502 = vst.msk [vmem:[#allocation2 + $0x3c0] sm:$0xff] %vm3381, %v3245
      %3503 = vst.msk [vmem:[#allocation2 + $0x3c8] sm:$0xff] %vm3381, %v3246
      %3504 = vst.msk [vmem:[#allocation2 + $0x3d0] sm:$0xff] %vm3381, %v3247
      %3505 = vst.msk [vmem:[#allocation2 + $0x3d8] sm:$0xff] %vm3381, %v3248
      %3506 = vst.msk [vmem:[#allocation2 + $0x3e0] sm:$0xff] %vm3381, %v3249
      %3507 = vst.msk [vmem:[#allocation2 + $0x3e8] sm:$0xff] %vm3381, %v3250
      %3508 = vst.msk [vmem:[#allocation2 + $0x3f0] sm:$0xff] %vm3381, %v3251
      %3509 = vst.msk [vmem:[#allocation2 + $0x3f8] sm:$0xff] %vm3381, %v3252
      %3510 = vst.msk [vmem:[#allocation2 + $0x400] sm:$0xff] %vm3381, %v3253
      %3511 = vst.msk [vmem:[#allocation2 + $0x408] sm:$0xff] %vm3381, %v3254
      %3512 = vst.msk [vmem:[#allocation2 + $0x410] sm:$0xff] %vm3381, %v3255
      %3513 = vst.msk [vmem:[#allocation2 + $0x418] sm:$0xff] %vm3381, %v3256
      %3514 = vst.msk [vmem:[#allocation2 + $0x420] sm:$0xff] %vm3381, %v3257
      %3515 = vst.msk [vmem:[#allocation2 + $0x428] sm:$0xff] %vm3381, %v3258
      %3516 = vst.msk [vmem:[#allocation2 + $0x430] sm:$0xff] %vm3381, %v3259
      %3517 = vst.msk [vmem:[#allocation2 + $0x438] sm:$0xff] %vm3381, %v3260
      %3518 = vst.msk [vmem:[#allocation2 + $0x440] sm:$0xff] %vm3381, %v3261
      %3519 = vst.msk [vmem:[#allocation2 + $0x448] sm:$0xff] %vm3381, %v3262
      %3520 = vst.msk [vmem:[#allocation2 + $0x450] sm:$0xff] %vm3381, %v3263
      %3521 = vst.msk [vmem:[#allocation2 + $0x458] sm:$0xff] %vm3381, %v3264
      %3522 = vst.msk [vmem:[#allocation2 + $0x460] sm:$0xff] %vm3381, %v3265
      %3523 = vst.msk [vmem:[#allocation2 + $0x468] sm:$0xff] %vm3381, %v3266
      %3524 = vst.msk [vmem:[#allocation2 + $0x470] sm:$0xff] %vm3381, %v3267
      %3525 = vst.msk [vmem:[#allocation2 + $0x478] sm:$0xff] %vm3381, %v3268
      %3526 = vst.msk [vmem:[#allocation2 + $0x480] sm:$0xff] %vm3381, %v3269
      %3527 = vst.msk [vmem:[#allocation2 + $0x488] sm:$0xff] %vm3381, %v3270
      %3528 = vst.msk [vmem:[#allocation2 + $0x490] sm:$0xff] %vm3381, %v3271
      %3529 = vst.msk [vmem:[#allocation2 + $0x498] sm:$0xff] %vm3381, %v3272
      %3530 = vst.msk [vmem:[#allocation2 + $0x4a0] sm:$0xff] %vm3381, %v3273
      %3531 = vst.msk [vmem:[#allocation2 + $0x4a8] sm:$0xff] %vm3381, %v3274
      %3532 = vst.msk [vmem:[#allocation2 + $0x4b0] sm:$0xff] %vm3381, %v3275
      %3533 = vst.msk [vmem:[#allocation2 + $0x4b8] sm:$0xff] %vm3381, %v3276
      %3534 = vst.msk [vmem:[#allocation2 + $0x4c0] sm:$0xff] %vm3381, %v3277
      %3535 = vst.msk [vmem:[#allocation2 + $0x4c8] sm:$0xff] %vm3381, %v3278
      %3536 = vst.msk [vmem:[#allocation2 + $0x4d0] sm:$0xff] %vm3381, %v3279
      %3537 = vst.msk [vmem:[#allocation2 + $0x4d8] sm:$0xff] %vm3381, %v3280
      %3538 = vst.msk [vmem:[#allocation2 + $0x4e0] sm:$0xff] %vm3381, %v3281
      %3539 = vst.msk [vmem:[#allocation2 + $0x4e8] sm:$0xff] %vm3381, %v3282
      %3540 = vst.msk [vmem:[#allocation2 + $0x4f0] sm:$0xff] %vm3381, %v3283
      %3541 = vst.msk [vmem:[#allocation2 + $0x4f8] sm:$0xff] %vm3381, %v3284
      %3542 = vst.msk [vmem:[#allocation2 + $0x500] sm:$0xff] %vm3381, %v3285
      %3543 = vst.msk [vmem:[#allocation2 + $0x508] sm:$0xff] %vm3381, %v3286
      %3544 = vst.msk [vmem:[#allocation2 + $0x510] sm:$0xff] %vm3381, %v3287
      %3545 = vst.msk [vmem:[#allocation2 + $0x518] sm:$0xff] %vm3381, %v3288
      %3546 = vst.msk [vmem:[#allocation2 + $0x520] sm:$0xff] %vm3381, %v3289
      %3547 = vst.msk [vmem:[#allocation2 + $0x528] sm:$0xff] %vm3381, %v3290
      %3548 = vst.msk [vmem:[#allocation2 + $0x530] sm:$0xff] %vm3381, %v3291
      %3549 = vst.msk [vmem:[#allocation2 + $0x538] sm:$0xff] %vm3381, %v3292
      %3550 = vst.msk [vmem:[#allocation2 + $0x540] sm:$0xff] %vm3381, %v3293
      %3551 = vst.msk [vmem:[#allocation2 + $0x548] sm:$0xff] %vm3381, %v3294
      %3552 = vst.msk [vmem:[#allocation2 + $0x550] sm:$0xff] %vm3381, %v3295
      %3553 = vst.msk [vmem:[#allocation2 + $0x558] sm:$0xff] %vm3381, %v3296
      %3554 = vst.msk [vmem:[#allocation2 + $0x560] sm:$0xff] %vm3381, %v3297
      %3555 = vst.msk [vmem:[#allocation2 + $0x568] sm:$0xff] %vm3381, %v3298
      %3556 = vst.msk [vmem:[#allocation2 + $0x570] sm:$0xff] %vm3381, %v3299
      %3557 = vst.msk [vmem:[#allocation2 + $0x578] sm:$0xff] %vm3381, %v3300
      %3558 = vst.msk [vmem:[#allocation2 + $0x580] sm:$0xff] %vm3381, %v3301
      %3559 = vst.msk [vmem:[#allocation2 + $0x588] sm:$0xff] %vm3381, %v3302
      %3560 = vst.msk [vmem:[#allocation2 + $0x590] sm:$0xff] %vm3381, %v3303
      %3561 = vst.msk [vmem:[#allocation2 + $0x598] sm:$0xff] %vm3381, %v3304
      %3562 = vst.msk [vmem:[#allocation2 + $0x5a0] sm:$0xff] %vm3381, %v3305
      %3563 = vst.msk [vmem:[#allocation2 + $0x5a8] sm:$0xff] %vm3381, %v3306
      %3564 = vst.msk [vmem:[#allocation2 + $0x5b0] sm:$0xff] %vm3381, %v3307
      %3565 = vst.msk [vmem:[#allocation2 + $0x5b8] sm:$0xff] %vm3381, %v3308
      %3566 = vst.msk [vmem:[#allocation2 + $0x5c0] sm:$0xff] %vm3381, %v3309
      %3567 = vst.msk [vmem:[#allocation2 + $0x5c8] sm:$0xff] %vm3381, %v3310
      %3568 = vst.msk [vmem:[#allocation2 + $0x5d0] sm:$0xff] %vm3381, %v3311
      %3569 = vst.msk [vmem:[#allocation2 + $0x5d8] sm:$0xff] %vm3381, %v3312
      %3570 = vst.msk [vmem:[#allocation2 + $0x5e0] sm:$0xff] %vm3381, %v3313
      %3571 = vst.msk [vmem:[#allocation2 + $0x5e8] sm:$0xff] %vm3381, %v3314
      %3572 = vst.msk [vmem:[#allocation2 + $0x5f0] sm:$0xff] %vm3381, %v3315
      %3573 = vst.msk [vmem:[#allocation2 + $0x5f8] sm:$0xff] %vm3381, %v3316
      %3574 = vst.msk [vmem:[#allocation2 + $0x600] sm:$0xff] %vm3381, %v3317
      %3575 = vst.msk [vmem:[#allocation2 + $0x608] sm:$0xff] %vm3381, %v3318
      %3576 = vst.msk [vmem:[#allocation2 + $0x610] sm:$0xff] %vm3381, %v3319
      %3577 = vst.msk [vmem:[#allocation2 + $0x618] sm:$0xff] %vm3381, %v3320
      %3578 = vst.msk [vmem:[#allocation2 + $0x620] sm:$0xff] %vm3381, %v3321
      %3579 = vst.msk [vmem:[#allocation2 + $0x628] sm:$0xff] %vm3381, %v3322
      %3580 = vst.msk [vmem:[#allocation2 + $0x630] sm:$0xff] %vm3381, %v3323
      %3581 = vst.msk [vmem:[#allocation2 + $0x638] sm:$0xff] %vm3381, %v3324
      %3582 = vst.msk [vmem:[#allocation2 + $0x640] sm:$0xff] %vm3381, %v3325
      %3583 = vst.msk [vmem:[#allocation2 + $0x648] sm:$0xff] %vm3381, %v3326
      %3584 = vst.msk [vmem:[#allocation2 + $0x650] sm:$0xff] %vm3381, %v3327
      %3585 = vst.msk [vmem:[#allocation2 + $0x658] sm:$0xff] %vm3381, %v3328
      %3586 = vst.msk [vmem:[#allocation2 + $0x660] sm:$0xff] %vm3381, %v3329
      %3587 = vst.msk [vmem:[#allocation2 + $0x668] sm:$0xff] %vm3381, %v3330
      %3588 = vst.msk [vmem:[#allocation2 + $0x670] sm:$0xff] %vm3381, %v3331
      %3589 = vst.msk [vmem:[#allocation2 + $0x678] sm:$0xff] %vm3381, %v3332
      %3590 = vst.msk [vmem:[#allocation2 + $0x680] sm:$0xff] %vm3381, %v3333
      %3591 = vst.msk [vmem:[#allocation2 + $0x688] sm:$0xff] %vm3381, %v3334
      %3592 = vst.msk [vmem:[#allocation2 + $0x690] sm:$0xff] %vm3381, %v3335
      %3593 = vst.msk [vmem:[#allocation2 + $0x698] sm:$0xff] %vm3381, %v3336
      %3594 = vst.msk [vmem:[#allocation2 + $0x6a0] sm:$0xff] %vm3381, %v3337
      %3595 = vst.msk [vmem:[#allocation2 + $0x6a8] sm:$0xff] %vm3381, %v3338
      %3596 = vst.msk [vmem:[#allocation2 + $0x6b0] sm:$0xff] %vm3381, %v3339
      %3597 = vst.msk [vmem:[#allocation2 + $0x6b8] sm:$0xff] %vm3381, %v3340
      %3598 = vst.msk [vmem:[#allocation2 + $0x6c0] sm:$0xff] %vm3381, %v3341
      %3599 = vst.msk [vmem:[#allocation2 + $0x6c8] sm:$0xff] %vm3381, %v3342
      %3600 = vst.msk [vmem:[#allocation2 + $0x6d0] sm:$0xff] %vm3381, %v3343
      %3601 = vst.msk [vmem:[#allocation2 + $0x6d8] sm:$0xff] %vm3381, %v3344
      %3602 = vst.msk [vmem:[#allocation2 + $0x6e0] sm:$0xff] %vm3381, %v3345
      %3603 = vst.msk [vmem:[#allocation2 + $0x6e8] sm:$0xff] %vm3381, %v3346
      %3604 = vst.msk [vmem:[#allocation2 + $0x6f0] sm:$0xff] %vm3381, %v3347
      %3605 = vst.msk [vmem:[#allocation2 + $0x6f8] sm:$0xff] %vm3381, %v3348
      %3606 = vst.msk [vmem:[#allocation2 + $0x700] sm:$0xff] %vm3381, %v3349
      %3607 = vst.msk [vmem:[#allocation2 + $0x708] sm:$0xff] %vm3381, %v3350
      %3608 = vst.msk [vmem:[#allocation2 + $0x710] sm:$0xff] %vm3381, %v3351
      %3609 = vst.msk [vmem:[#allocation2 + $0x718] sm:$0xff] %vm3381, %v3352
      %3610 = vst.msk [vmem:[#allocation2 + $0x720] sm:$0xff] %vm3381, %v3353
      %3611 = vst.msk [vmem:[#allocation2 + $0x728] sm:$0xff] %vm3381, %v3354
      %3612 = vst.msk [vmem:[#allocation2 + $0x730] sm:$0xff] %vm3381, %v3355
      %3613 = vst.msk [vmem:[#allocation2 + $0x738] sm:$0xff] %vm3381, %v3356
      %3614 = vst.msk [vmem:[#allocation2 + $0x740] sm:$0xff] %vm3381, %v3357
      %3615 = vst.msk [vmem:[#allocation2 + $0x748] sm:$0xff] %vm3381, %v3358
      %3616 = vst.msk [vmem:[#allocation2 + $0x750] sm:$0xff] %vm3381, %v3359
      %3617 = vst.msk [vmem:[#allocation2 + $0x758] sm:$0xff] %vm3381, %v3360
      %3618 = vst.msk [vmem:[#allocation2 + $0x760] sm:$0xff] %vm3381, %v3361
      %3619 = vst.msk [vmem:[#allocation2 + $0x768] sm:$0xff] %vm3381, %v3362
      %3620 = vst.msk [vmem:[#allocation2 + $0x770] sm:$0xff] %vm3381, %v3363
      %3621 = vst.msk [vmem:[#allocation2 + $0x778] sm:$0xff] %vm3381, %v3364
      %3622 = vst.msk [vmem:[#allocation2 + $0x780] sm:$0xff] %vm3381, %v3365
      %3623 = vst.msk [vmem:[#allocation2 + $0x788] sm:$0xff] %vm3381, %v3366
      %3624 = vst.msk [vmem:[#allocation2 + $0x790] sm:$0xff] %vm3381, %v3367
      %3625 = vst.msk [vmem:[#allocation2 + $0x798] sm:$0xff] %vm3381, %v3368
      %3626 = vst.msk [vmem:[#allocation2 + $0x7a0] sm:$0xff] %vm3381, %v3369
      %3627 = vst.msk [vmem:[#allocation2 + $0x7a8] sm:$0xff] %vm3381, %v3370
      %3628 = vst.msk [vmem:[#allocation2 + $0x7b0] sm:$0xff] %vm3381, %v3371
      %3629 = vst.msk [vmem:[#allocation2 + $0x7b8] sm:$0xff] %vm3381, %v3372
      %3630 = vst.msk [vmem:[#allocation2 + $0x7c0] sm:$0xff] %vm3381, %v3373
      %3631 = vst.msk [vmem:[#allocation2 + $0x7c8] sm:$0xff] %vm3381, %v3374
      %3632 = vst.msk [vmem:[#allocation2 + $0x7d0] sm:$0xff] %vm3381, %v3375
      %3633 = vst.msk [vmem:[#allocation2 + $0x7d8] sm:$0xff] %vm3381, %v3376
      %3634 = vst.msk [vmem:[#allocation2 + $0x7e0] sm:$0xff] %vm3381, %v3377
      %3635 = vst.msk [vmem:[#allocation2 + $0x7e8] sm:$0xff] %vm3381, %v3378
      %3636 = vst.msk [vmem:[#allocation2 + $0x7f0] sm:$0xff] %vm3381, %v3379
      %3637 = vst.msk [vmem:[#allocation2 + $0x7f8] sm:$0xff] %vm3381, %v3380
      %p3638 = scmp.eq.s32.totalorder %s20, 8
      // Predicated region
      $region41: #{tpu_custom_call.1} parent=35 // pred_check
        %p3639 = pneg %p3638
      $region42: #{tpu_custom_call.1} parent=35 // pred_check_branch
        %3641 = sbr.rel (%p3639) target = $region44
      $region43: #{tpu_custom_call.1} parent=35 // pred_region
        %v3642 = vld [vmem:[#allocation2] sm:$0xff]
        %v3643 = vld [vmem:[#allocation2 + $0x8] sm:$0xff]
        %v3644 = vld [vmem:[#allocation2 + $0x10] sm:$0xff]
        %v3645 = vld [vmem:[#allocation2 + $0x18] sm:$0xff]
        %v3646 = vld [vmem:[#allocation2 + $0x20] sm:$0xff]
        %v3647 = vld [vmem:[#allocation2 + $0x28] sm:$0xff]
        %v3648 = vld [vmem:[#allocation2 + $0x30] sm:$0xff]
        %v3649 = vld [vmem:[#allocation2 + $0x38] sm:$0xff]
        %v3650 = vld [vmem:[#allocation2 + $0x40] sm:$0xff]
        %v3651 = vld [vmem:[#allocation2 + $0x48] sm:$0xff]
        %v3652 = vld [vmem:[#allocation2 + $0x50] sm:$0xff]
        %v3653 = vld [vmem:[#allocation2 + $0x58] sm:$0xff]
        %v3654 = vld [vmem:[#allocation2 + $0x60] sm:$0xff]
        %v3655 = vld [vmem:[#allocation2 + $0x68] sm:$0xff]
        %v3656 = vld [vmem:[#allocation2 + $0x70] sm:$0xff]
        %v3657 = vld [vmem:[#allocation2 + $0x78] sm:$0xff]
        %v3658 = vld [vmem:[#allocation2 + $0x80] sm:$0xff]
        %v3659 = vld [vmem:[#allocation2 + $0x88] sm:$0xff]
        %v3660 = vld [vmem:[#allocation2 + $0x90] sm:$0xff]
        %v3661 = vld [vmem:[#allocation2 + $0x98] sm:$0xff]
        %v3662 = vld [vmem:[#allocation2 + $0xa0] sm:$0xff]
        %v3663 = vld [vmem:[#allocation2 + $0xa8] sm:$0xff]
        %v3664 = vld [vmem:[#allocation2 + $0xb0] sm:$0xff]
        %v3665 = vld [vmem:[#allocation2 + $0xb8] sm:$0xff]
        %v3666 = vld [vmem:[#allocation2 + $0xc0] sm:$0xff]
        %v3667 = vld [vmem:[#allocation2 + $0xc8] sm:$0xff]
        %v3668 = vld [vmem:[#allocation2 + $0xd0] sm:$0xff]
        %v3669 = vld [vmem:[#allocation2 + $0xd8] sm:$0xff]
        %v3670 = vld [vmem:[#allocation2 + $0xe0] sm:$0xff]
        %v3671 = vld [vmem:[#allocation2 + $0xe8] sm:$0xff]
        %v3672 = vld [vmem:[#allocation2 + $0xf0] sm:$0xff]
        %v3673 = vld [vmem:[#allocation2 + $0xf8] sm:$0xff]
        %v3674 = vld [vmem:[#allocation2 + $0x100] sm:$0xff]
        %v3675 = vld [vmem:[#allocation2 + $0x108] sm:$0xff]
        %v3676 = vld [vmem:[#allocation2 + $0x110] sm:$0xff]
        %v3677 = vld [vmem:[#allocation2 + $0x118] sm:$0xff]
        %v3678 = vld [vmem:[#allocation2 + $0x120] sm:$0xff]
        %v3679 = vld [vmem:[#allocation2 + $0x128] sm:$0xff]
        %v3680 = vld [vmem:[#allocation2 + $0x130] sm:$0xff]
        %v3681 = vld [vmem:[#allocation2 + $0x138] sm:$0xff]
        %v3682 = vld [vmem:[#allocation2 + $0x140] sm:$0xff]
        %v3683 = vld [vmem:[#allocation2 + $0x148] sm:$0xff]
        %v3684 = vld [vmem:[#allocation2 + $0x150] sm:$0xff]
        %v3685 = vld [vmem:[#allocation2 + $0x158] sm:$0xff]
        %v3686 = vld [vmem:[#allocation2 + $0x160] sm:$0xff]
        %v3687 = vld [vmem:[#allocation2 + $0x168] sm:$0xff]
        %v3688 = vld [vmem:[#allocation2 + $0x170] sm:$0xff]
        %v3689 = vld [vmem:[#allocation2 + $0x178] sm:$0xff]
        %v3690 = vld [vmem:[#allocation2 + $0x180] sm:$0xff]
        %v3691 = vld [vmem:[#allocation2 + $0x188] sm:$0xff]
        %v3692 = vld [vmem:[#allocation2 + $0x190] sm:$0xff]
        %v3693 = vld [vmem:[#allocation2 + $0x198] sm:$0xff]
        %v3694 = vld [vmem:[#allocation2 + $0x1a0] sm:$0xff]
        %v3695 = vld [vmem:[#allocation2 + $0x1a8] sm:$0xff]
        %v3696 = vld [vmem:[#allocation2 + $0x1b0] sm:$0xff]
        %v3697 = vld [vmem:[#allocation2 + $0x1b8] sm:$0xff]
        %v3698 = vld [vmem:[#allocation2 + $0x1c0] sm:$0xff]
        %v3699 = vld [vmem:[#allocation2 + $0x1c8] sm:$0xff]
        %v3700 = vld [vmem:[#allocation2 + $0x1d0] sm:$0xff]
        %v3701 = vld [vmem:[#allocation2 + $0x1d8] sm:$0xff]
        %v3702 = vld [vmem:[#allocation2 + $0x1e0] sm:$0xff]
        %v3703 = vld [vmem:[#allocation2 + $0x1e8] sm:$0xff]
        %v3704 = vld [vmem:[#allocation2 + $0x1f0] sm:$0xff]
        %v3705 = vld [vmem:[#allocation2 + $0x1f8] sm:$0xff]
        %v3706 = vld [vmem:[#allocation2 + $0x200] sm:$0xff]
        %v3707 = vld [vmem:[#allocation2 + $0x208] sm:$0xff]
        %v3708 = vld [vmem:[#allocation2 + $0x210] sm:$0xff]
        %v3709 = vld [vmem:[#allocation2 + $0x218] sm:$0xff]
        %v3710 = vld [vmem:[#allocation2 + $0x220] sm:$0xff]
        %v3711 = vld [vmem:[#allocation2 + $0x228] sm:$0xff]
        %v3712 = vld [vmem:[#allocation2 + $0x230] sm:$0xff]
        %v3713 = vld [vmem:[#allocation2 + $0x238] sm:$0xff]
        %v3714 = vld [vmem:[#allocation2 + $0x240] sm:$0xff]
        %v3715 = vld [vmem:[#allocation2 + $0x248] sm:$0xff]
        %v3716 = vld [vmem:[#allocation2 + $0x250] sm:$0xff]
        %v3717 = vld [vmem:[#allocation2 + $0x258] sm:$0xff]
        %v3718 = vld [vmem:[#allocation2 + $0x260] sm:$0xff]
        %v3719 = vld [vmem:[#allocation2 + $0x268] sm:$0xff]
        %v3720 = vld [vmem:[#allocation2 + $0x270] sm:$0xff]
        %v3721 = vld [vmem:[#allocation2 + $0x278] sm:$0xff]
        %v3722 = vld [vmem:[#allocation2 + $0x280] sm:$0xff]
        %v3723 = vld [vmem:[#allocation2 + $0x288] sm:$0xff]
        %v3724 = vld [vmem:[#allocation2 + $0x290] sm:$0xff]
        %v3725 = vld [vmem:[#allocation2 + $0x298] sm:$0xff]
        %v3726 = vld [vmem:[#allocation2 + $0x2a0] sm:$0xff]
        %v3727 = vld [vmem:[#allocation2 + $0x2a8] sm:$0xff]
        %v3728 = vld [vmem:[#allocation2 + $0x2b0] sm:$0xff]
        %v3729 = vld [vmem:[#allocation2 + $0x2b8] sm:$0xff]
        %v3730 = vld [vmem:[#allocation2 + $0x2c0] sm:$0xff]
        %v3731 = vld [vmem:[#allocation2 + $0x2c8] sm:$0xff]
        %v3732 = vld [vmem:[#allocation2 + $0x2d0] sm:$0xff]
        %v3733 = vld [vmem:[#allocation2 + $0x2d8] sm:$0xff]
        %v3734 = vld [vmem:[#allocation2 + $0x2e0] sm:$0xff]
        %v3735 = vld [vmem:[#allocation2 + $0x2e8] sm:$0xff]
        %v3736 = vld [vmem:[#allocation2 + $0x2f0] sm:$0xff]
        %v3737 = vld [vmem:[#allocation2 + $0x2f8] sm:$0xff]
        %v3738 = vld [vmem:[#allocation2 + $0x300] sm:$0xff]
        %v3739 = vld [vmem:[#allocation2 + $0x308] sm:$0xff]
        %v3740 = vld [vmem:[#allocation2 + $0x310] sm:$0xff]
        %v3741 = vld [vmem:[#allocation2 + $0x318] sm:$0xff]
        %v3742 = vld [vmem:[#allocation2 + $0x320] sm:$0xff]
        %v3743 = vld [vmem:[#allocation2 + $0x328] sm:$0xff]
        %v3744 = vld [vmem:[#allocation2 + $0x330] sm:$0xff]
        %v3745 = vld [vmem:[#allocation2 + $0x338] sm:$0xff]
        %v3746 = vld [vmem:[#allocation2 + $0x340] sm:$0xff]
        %v3747 = vld [vmem:[#allocation2 + $0x348] sm:$0xff]
        %v3748 = vld [vmem:[#allocation2 + $0x350] sm:$0xff]
        %v3749 = vld [vmem:[#allocation2 + $0x358] sm:$0xff]
        %v3750 = vld [vmem:[#allocation2 + $0x360] sm:$0xff]
        %v3751 = vld [vmem:[#allocation2 + $0x368] sm:$0xff]
        %v3752 = vld [vmem:[#allocation2 + $0x370] sm:$0xff]
        %v3753 = vld [vmem:[#allocation2 + $0x378] sm:$0xff]
        %v3754 = vld [vmem:[#allocation2 + $0x380] sm:$0xff]
        %v3755 = vld [vmem:[#allocation2 + $0x388] sm:$0xff]
        %v3756 = vld [vmem:[#allocation2 + $0x390] sm:$0xff]
        %v3757 = vld [vmem:[#allocation2 + $0x398] sm:$0xff]
        %v3758 = vld [vmem:[#allocation2 + $0x3a0] sm:$0xff]
        %v3759 = vld [vmem:[#allocation2 + $0x3a8] sm:$0xff]
        %v3760 = vld [vmem:[#allocation2 + $0x3b0] sm:$0xff]
        %v3761 = vld [vmem:[#allocation2 + $0x3b8] sm:$0xff]
        %v3762 = vld [vmem:[#allocation2 + $0x3c0] sm:$0xff]
        %v3763 = vld [vmem:[#allocation2 + $0x3c8] sm:$0xff]
        %v3764 = vld [vmem:[#allocation2 + $0x3d0] sm:$0xff]
        %v3765 = vld [vmem:[#allocation2 + $0x3d8] sm:$0xff]
        %v3766 = vld [vmem:[#allocation2 + $0x3e0] sm:$0xff]
        %v3767 = vld [vmem:[#allocation2 + $0x3e8] sm:$0xff]
        %v3768 = vld [vmem:[#allocation2 + $0x3f0] sm:$0xff]
        %v3769 = vld [vmem:[#allocation2 + $0x3f8] sm:$0xff]
        %v3770 = vld [vmem:[#allocation2 + $0x400] sm:$0xff]
        %v3771 = vld [vmem:[#allocation2 + $0x408] sm:$0xff]
        %v3772 = vld [vmem:[#allocation2 + $0x410] sm:$0xff]
        %v3773 = vld [vmem:[#allocation2 + $0x418] sm:$0xff]
        %v3774 = vld [vmem:[#allocation2 + $0x420] sm:$0xff]
        %v3775 = vld [vmem:[#allocation2 + $0x428] sm:$0xff]
        %v3776 = vld [vmem:[#allocation2 + $0x430] sm:$0xff]
        %v3777 = vld [vmem:[#allocation2 + $0x438] sm:$0xff]
        %v3778 = vld [vmem:[#allocation2 + $0x440] sm:$0xff]
        %v3779 = vld [vmem:[#allocation2 + $0x448] sm:$0xff]
        %v3780 = vld [vmem:[#allocation2 + $0x450] sm:$0xff]
        %v3781 = vld [vmem:[#allocation2 + $0x458] sm:$0xff]
        %v3782 = vld [vmem:[#allocation2 + $0x460] sm:$0xff]
        %v3783 = vld [vmem:[#allocation2 + $0x468] sm:$0xff]
        %v3784 = vld [vmem:[#allocation2 + $0x470] sm:$0xff]
        %v3785 = vld [vmem:[#allocation2 + $0x478] sm:$0xff]
        %v3786 = vld [vmem:[#allocation2 + $0x480] sm:$0xff]
        %v3787 = vld [vmem:[#allocation2 + $0x488] sm:$0xff]
        %v3788 = vld [vmem:[#allocation2 + $0x490] sm:$0xff]
        %v3789 = vld [vmem:[#allocation2 + $0x498] sm:$0xff]
        %v3790 = vld [vmem:[#allocation2 + $0x4a0] sm:$0xff]
        %v3791 = vld [vmem:[#allocation2 + $0x4a8] sm:$0xff]
        %v3792 = vld [vmem:[#allocation2 + $0x4b0] sm:$0xff]
        %v3793 = vld [vmem:[#allocation2 + $0x4b8] sm:$0xff]
        %v3794 = vld [vmem:[#allocation2 + $0x4c0] sm:$0xff]
        %v3795 = vld [vmem:[#allocation2 + $0x4c8] sm:$0xff]
        %v3796 = vld [vmem:[#allocation2 + $0x4d0] sm:$0xff]
        %v3797 = vld [vmem:[#allocation2 + $0x4d8] sm:$0xff]
        %v3798 = vld [vmem:[#allocation2 + $0x4e0] sm:$0xff]
        %v3799 = vld [vmem:[#allocation2 + $0x4e8] sm:$0xff]
        %v3800 = vld [vmem:[#allocation2 + $0x4f0] sm:$0xff]
        %v3801 = vld [vmem:[#allocation2 + $0x4f8] sm:$0xff]
        %v3802 = vld [vmem:[#allocation2 + $0x500] sm:$0xff]
        %v3803 = vld [vmem:[#allocation2 + $0x508] sm:$0xff]
        %v3804 = vld [vmem:[#allocation2 + $0x510] sm:$0xff]
        %v3805 = vld [vmem:[#allocation2 + $0x518] sm:$0xff]
        %v3806 = vld [vmem:[#allocation2 + $0x520] sm:$0xff]
        %v3807 = vld [vmem:[#allocation2 + $0x528] sm:$0xff]
        %v3808 = vld [vmem:[#allocation2 + $0x530] sm:$0xff]
        %v3809 = vld [vmem:[#allocation2 + $0x538] sm:$0xff]
        %v3810 = vld [vmem:[#allocation2 + $0x540] sm:$0xff]
        %v3811 = vld [vmem:[#allocation2 + $0x548] sm:$0xff]
        %v3812 = vld [vmem:[#allocation2 + $0x550] sm:$0xff]
        %v3813 = vld [vmem:[#allocation2 + $0x558] sm:$0xff]
        %v3814 = vld [vmem:[#allocation2 + $0x560] sm:$0xff]
        %v3815 = vld [vmem:[#allocation2 + $0x568] sm:$0xff]
        %v3816 = vld [vmem:[#allocation2 + $0x570] sm:$0xff]
        %v3817 = vld [vmem:[#allocation2 + $0x578] sm:$0xff]
        %v3818 = vld [vmem:[#allocation2 + $0x580] sm:$0xff]
        %v3819 = vld [vmem:[#allocation2 + $0x588] sm:$0xff]
        %v3820 = vld [vmem:[#allocation2 + $0x590] sm:$0xff]
        %v3821 = vld [vmem:[#allocation2 + $0x598] sm:$0xff]
        %v3822 = vld [vmem:[#allocation2 + $0x5a0] sm:$0xff]
        %v3823 = vld [vmem:[#allocation2 + $0x5a8] sm:$0xff]
        %v3824 = vld [vmem:[#allocation2 + $0x5b0] sm:$0xff]
        %v3825 = vld [vmem:[#allocation2 + $0x5b8] sm:$0xff]
        %v3826 = vld [vmem:[#allocation2 + $0x5c0] sm:$0xff]
        %v3827 = vld [vmem:[#allocation2 + $0x5c8] sm:$0xff]
        %v3828 = vld [vmem:[#allocation2 + $0x5d0] sm:$0xff]
        %v3829 = vld [vmem:[#allocation2 + $0x5d8] sm:$0xff]
        %v3830 = vld [vmem:[#allocation2 + $0x5e0] sm:$0xff]
        %v3831 = vld [vmem:[#allocation2 + $0x5e8] sm:$0xff]
        %v3832 = vld [vmem:[#allocation2 + $0x5f0] sm:$0xff]
        %v3833 = vld [vmem:[#allocation2 + $0x5f8] sm:$0xff]
        %v3834 = vld [vmem:[#allocation2 + $0x600] sm:$0xff]
        %v3835 = vld [vmem:[#allocation2 + $0x608] sm:$0xff]
        %v3836 = vld [vmem:[#allocation2 + $0x610] sm:$0xff]
        %v3837 = vld [vmem:[#allocation2 + $0x618] sm:$0xff]
        %v3838 = vld [vmem:[#allocation2 + $0x620] sm:$0xff]
        %v3839 = vld [vmem:[#allocation2 + $0x628] sm:$0xff]
        %v3840 = vld [vmem:[#allocation2 + $0x630] sm:$0xff]
        %v3841 = vld [vmem:[#allocation2 + $0x638] sm:$0xff]
        %v3842 = vld [vmem:[#allocation2 + $0x640] sm:$0xff]
        %v3843 = vld [vmem:[#allocation2 + $0x648] sm:$0xff]
        %v3844 = vld [vmem:[#allocation2 + $0x650] sm:$0xff]
        %v3845 = vld [vmem:[#allocation2 + $0x658] sm:$0xff]
        %v3846 = vld [vmem:[#allocation2 + $0x660] sm:$0xff]
        %v3847 = vld [vmem:[#allocation2 + $0x668] sm:$0xff]
        %v3848 = vld [vmem:[#allocation2 + $0x670] sm:$0xff]
        %v3849 = vld [vmem:[#allocation2 + $0x678] sm:$0xff]
        %v3850 = vld [vmem:[#allocation2 + $0x680] sm:$0xff]
        %v3851 = vld [vmem:[#allocation2 + $0x688] sm:$0xff]
        %v3852 = vld [vmem:[#allocation2 + $0x690] sm:$0xff]
        %v3853 = vld [vmem:[#allocation2 + $0x698] sm:$0xff]
        %v3854 = vld [vmem:[#allocation2 + $0x6a0] sm:$0xff]
        %v3855 = vld [vmem:[#allocation2 + $0x6a8] sm:$0xff]
        %v3856 = vld [vmem:[#allocation2 + $0x6b0] sm:$0xff]
        %v3857 = vld [vmem:[#allocation2 + $0x6b8] sm:$0xff]
        %v3858 = vld [vmem:[#allocation2 + $0x6c0] sm:$0xff]
        %v3859 = vld [vmem:[#allocation2 + $0x6c8] sm:$0xff]
        %v3860 = vld [vmem:[#allocation2 + $0x6d0] sm:$0xff]
        %v3861 = vld [vmem:[#allocation2 + $0x6d8] sm:$0xff]
        %v3862 = vld [vmem:[#allocation2 + $0x6e0] sm:$0xff]
        %v3863 = vld [vmem:[#allocation2 + $0x6e8] sm:$0xff]
        %v3864 = vld [vmem:[#allocation2 + $0x6f0] sm:$0xff]
        %v3865 = vld [vmem:[#allocation2 + $0x6f8] sm:$0xff]
        %v3866 = vld [vmem:[#allocation2 + $0x700] sm:$0xff]
        %v3867 = vld [vmem:[#allocation2 + $0x708] sm:$0xff]
        %v3868 = vld [vmem:[#allocation2 + $0x710] sm:$0xff]
        %v3869 = vld [vmem:[#allocation2 + $0x718] sm:$0xff]
        %v3870 = vld [vmem:[#allocation2 + $0x720] sm:$0xff]
        %v3871 = vld [vmem:[#allocation2 + $0x728] sm:$0xff]
        %v3872 = vld [vmem:[#allocation2 + $0x730] sm:$0xff]
        %v3873 = vld [vmem:[#allocation2 + $0x738] sm:$0xff]
        %v3874 = vld [vmem:[#allocation2 + $0x740] sm:$0xff]
        %v3875 = vld [vmem:[#allocation2 + $0x748] sm:$0xff]
        %v3876 = vld [vmem:[#allocation2 + $0x750] sm:$0xff]
        %v3877 = vld [vmem:[#allocation2 + $0x758] sm:$0xff]
        %v3878 = vld [vmem:[#allocation2 + $0x760] sm:$0xff]
        %v3879 = vld [vmem:[#allocation2 + $0x768] sm:$0xff]
        %v3880 = vld [vmem:[#allocation2 + $0x770] sm:$0xff]
        %v3881 = vld [vmem:[#allocation2 + $0x778] sm:$0xff]
        %v3882 = vld [vmem:[#allocation2 + $0x780] sm:$0xff]
        %v3883 = vld [vmem:[#allocation2 + $0x788] sm:$0xff]
        %v3884 = vld [vmem:[#allocation2 + $0x790] sm:$0xff]
        %v3885 = vld [vmem:[#allocation2 + $0x798] sm:$0xff]
        %v3886 = vld [vmem:[#allocation2 + $0x7a0] sm:$0xff]
        %v3887 = vld [vmem:[#allocation2 + $0x7a8] sm:$0xff]
        %v3888 = vld [vmem:[#allocation2 + $0x7b0] sm:$0xff]
        %v3889 = vld [vmem:[#allocation2 + $0x7b8] sm:$0xff]
        %v3890 = vld [vmem:[#allocation2 + $0x7c0] sm:$0xff]
        %v3891 = vld [vmem:[#allocation2 + $0x7c8] sm:$0xff]
        %v3892 = vld [vmem:[#allocation2 + $0x7d0] sm:$0xff]
        %v3893 = vld [vmem:[#allocation2 + $0x7d8] sm:$0xff]
        %v3894 = vld [vmem:[#allocation2 + $0x7e0] sm:$0xff]
        %v3895 = vld [vmem:[#allocation2 + $0x7e8] sm:$0xff]
        %v3896 = vld [vmem:[#allocation2 + $0x7f0] sm:$0xff]
        %v3897 = vld [vmem:[#allocation2 + $0x7f8] sm:$0xff]
        %v3898 = vsel %vm3381, %v3642, 0.0
        %v3899 = vsel %vm3381, %v3643, 0.0
        %v3900 = vadd.f32 %v3898, %v3899
        %v3901 = vsel %vm3381, %v3644, 0.0
        %v3902 = vadd.f32 %v3900, %v3901
        %v3903 = vsel %vm3381, %v3645, 0.0
        %v3904 = vadd.f32 %v3902, %v3903
        %v3905 = vsel %vm3381, %v3646, 0.0
        %v3906 = vadd.f32 %v3904, %v3905
        %v3907 = vsel %vm3381, %v3647, 0.0
        %v3908 = vadd.f32 %v3906, %v3907
        %v3909 = vsel %vm3381, %v3648, 0.0
        %v3910 = vadd.f32 %v3908, %v3909
        %v3911 = vsel %vm3381, %v3649, 0.0
        %v3912 = vadd.f32 %v3910, %v3911
        %v3913 = vsel %vm3381, %v3650, 0.0
        %v3914 = vadd.f32 %v3912, %v3913
        %v3915 = vsel %vm3381, %v3651, 0.0
        %v3916 = vadd.f32 %v3914, %v3915
        %v3917 = vsel %vm3381, %v3652, 0.0
        %v3918 = vadd.f32 %v3916, %v3917
        %v3919 = vsel %vm3381, %v3653, 0.0
        %v3920 = vadd.f32 %v3918, %v3919
        %v3921 = vsel %vm3381, %v3654, 0.0
        %v3922 = vadd.f32 %v3920, %v3921
        %v3923 = vsel %vm3381, %v3655, 0.0
        %v3924 = vadd.f32 %v3922, %v3923
        %v3925 = vsel %vm3381, %v3656, 0.0
        %v3926 = vadd.f32 %v3924, %v3925
        %v3927 = vsel %vm3381, %v3657, 0.0
        %v3928 = vadd.f32 %v3926, %v3927
        %v3929 = vsel %vm3381, %v3658, 0.0
        %v3930 = vadd.f32 %v3928, %v3929
        %v3931 = vsel %vm3381, %v3659, 0.0
        %v3932 = vadd.f32 %v3930, %v3931
        %v3933 = vsel %vm3381, %v3660, 0.0
        %v3934 = vadd.f32 %v3932, %v3933
        %v3935 = vsel %vm3381, %v3661, 0.0
        %v3936 = vadd.f32 %v3934, %v3935
        %v3937 = vsel %vm3381, %v3662, 0.0
        %v3938 = vadd.f32 %v3936, %v3937
        %v3939 = vsel %vm3381, %v3663, 0.0
        %v3940 = vadd.f32 %v3938, %v3939
        %v3941 = vsel %vm3381, %v3664, 0.0
        %v3942 = vadd.f32 %v3940, %v3941
        %v3943 = vsel %vm3381, %v3665, 0.0
        %v3944 = vadd.f32 %v3942, %v3943
        %v3945 = vsel %vm3381, %v3666, 0.0
        %v3946 = vadd.f32 %v3944, %v3945
        %v3947 = vsel %vm3381, %v3667, 0.0
        %v3948 = vadd.f32 %v3946, %v3947
        %v3949 = vsel %vm3381, %v3668, 0.0
        %v3950 = vadd.f32 %v3948, %v3949
        %v3951 = vsel %vm3381, %v3669, 0.0
        %v3952 = vadd.f32 %v3950, %v3951
        %v3953 = vsel %vm3381, %v3670, 0.0
        %v3954 = vadd.f32 %v3952, %v3953
        %v3955 = vsel %vm3381, %v3671, 0.0
        %v3956 = vadd.f32 %v3954, %v3955
        %v3957 = vsel %vm3381, %v3672, 0.0
        %v3958 = vadd.f32 %v3956, %v3957
        %v3959 = vsel %vm3381, %v3673, 0.0
        %v3960 = vadd.f32 %v3958, %v3959
        %v3961 = vsel %vm3381, %v3674, 0.0
        %v3962 = vadd.f32 %v3960, %v3961
        %v3963 = vsel %vm3381, %v3675, 0.0
        %v3964 = vadd.f32 %v3962, %v3963
        %v3965 = vsel %vm3381, %v3676, 0.0
        %v3966 = vadd.f32 %v3964, %v3965
        %v3967 = vsel %vm3381, %v3677, 0.0
        %v3968 = vadd.f32 %v3966, %v3967
        %v3969 = vsel %vm3381, %v3678, 0.0
        %v3970 = vadd.f32 %v3968, %v3969
        %v3971 = vsel %vm3381, %v3679, 0.0
        %v3972 = vadd.f32 %v3970, %v3971
        %v3973 = vsel %vm3381, %v3680, 0.0
        %v3974 = vadd.f32 %v3972, %v3973
        %v3975 = vsel %vm3381, %v3681, 0.0
        %v3976 = vadd.f32 %v3974, %v3975
        %v3977 = vsel %vm3381, %v3682, 0.0
        %v3978 = vadd.f32 %v3976, %v3977
        %v3979 = vsel %vm3381, %v3683, 0.0
        %v3980 = vadd.f32 %v3978, %v3979
        %v3981 = vsel %vm3381, %v3684, 0.0
        %v3982 = vadd.f32 %v3980, %v3981
        %v3983 = vsel %vm3381, %v3685, 0.0
        %v3984 = vadd.f32 %v3982, %v3983
        %v3985 = vsel %vm3381, %v3686, 0.0
        %v3986 = vadd.f32 %v3984, %v3985
        %v3987 = vsel %vm3381, %v3687, 0.0
        %v3988 = vadd.f32 %v3986, %v3987
        %v3989 = vsel %vm3381, %v3688, 0.0
        %v3990 = vadd.f32 %v3988, %v3989
        %v3991 = vsel %vm3381, %v3689, 0.0
        %v3992 = vadd.f32 %v3990, %v3991
        %v3993 = vsel %vm3381, %v3690, 0.0
        %v3994 = vadd.f32 %v3992, %v3993
        %v3995 = vsel %vm3381, %v3691, 0.0
        %v3996 = vadd.f32 %v3994, %v3995
        %v3997 = vsel %vm3381, %v3692, 0.0
        %v3998 = vadd.f32 %v3996, %v3997
        %v3999 = vsel %vm3381, %v3693, 0.0
        %v4000 = vadd.f32 %v3998, %v3999
        %v4001 = vsel %vm3381, %v3694, 0.0
        %v4002 = vadd.f32 %v4000, %v4001
        %v4003 = vsel %vm3381, %v3695, 0.0
        %v4004 = vadd.f32 %v4002, %v4003
        %v4005 = vsel %vm3381, %v3696, 0.0
        %v4006 = vadd.f32 %v4004, %v4005
        %v4007 = vsel %vm3381, %v3697, 0.0
        %v4008 = vadd.f32 %v4006, %v4007
        %v4009 = vsel %vm3381, %v3698, 0.0
        %v4010 = vadd.f32 %v4008, %v4009
        %v4011 = vsel %vm3381, %v3699, 0.0
        %v4012 = vadd.f32 %v4010, %v4011
        %v4013 = vsel %vm3381, %v3700, 0.0
        %v4014 = vadd.f32 %v4012, %v4013
        %v4015 = vsel %vm3381, %v3701, 0.0
        %v4016 = vadd.f32 %v4014, %v4015
        %v4017 = vsel %vm3381, %v3702, 0.0
        %v4018 = vadd.f32 %v4016, %v4017
        %v4019 = vsel %vm3381, %v3703, 0.0
        %v4020 = vadd.f32 %v4018, %v4019
        %v4021 = vsel %vm3381, %v3704, 0.0
        %v4022 = vadd.f32 %v4020, %v4021
        %v4023 = vsel %vm3381, %v3705, 0.0
        %v4024 = vadd.f32 %v4022, %v4023
        %v4025 = vsel %vm3381, %v3706, 0.0
        %v4026 = vadd.f32 %v4024, %v4025
        %v4027 = vsel %vm3381, %v3707, 0.0
        %v4028 = vadd.f32 %v4026, %v4027
        %v4029 = vsel %vm3381, %v3708, 0.0
        %v4030 = vadd.f32 %v4028, %v4029
        %v4031 = vsel %vm3381, %v3709, 0.0
        %v4032 = vadd.f32 %v4030, %v4031
        %v4033 = vsel %vm3381, %v3710, 0.0
        %v4034 = vadd.f32 %v4032, %v4033
        %v4035 = vsel %vm3381, %v3711, 0.0
        %v4036 = vadd.f32 %v4034, %v4035
        %v4037 = vsel %vm3381, %v3712, 0.0
        %v4038 = vadd.f32 %v4036, %v4037
        %v4039 = vsel %vm3381, %v3713, 0.0
        %v4040 = vadd.f32 %v4038, %v4039
        %v4041 = vsel %vm3381, %v3714, 0.0
        %v4042 = vadd.f32 %v4040, %v4041
        %v4043 = vsel %vm3381, %v3715, 0.0
        %v4044 = vadd.f32 %v4042, %v4043
        %v4045 = vsel %vm3381, %v3716, 0.0
        %v4046 = vadd.f32 %v4044, %v4045
        %v4047 = vsel %vm3381, %v3717, 0.0
        %v4048 = vadd.f32 %v4046, %v4047
        %v4049 = vsel %vm3381, %v3718, 0.0
        %v4050 = vadd.f32 %v4048, %v4049
        %v4051 = vsel %vm3381, %v3719, 0.0
        %v4052 = vadd.f32 %v4050, %v4051
        %v4053 = vsel %vm3381, %v3720, 0.0
        %v4054 = vadd.f32 %v4052, %v4053
        %v4055 = vsel %vm3381, %v3721, 0.0
        %v4056 = vadd.f32 %v4054, %v4055
        %v4057 = vsel %vm3381, %v3722, 0.0
        %v4058 = vadd.f32 %v4056, %v4057
        %v4059 = vsel %vm3381, %v3723, 0.0
        %v4060 = vadd.f32 %v4058, %v4059
        %v4061 = vsel %vm3381, %v3724, 0.0
        %v4062 = vadd.f32 %v4060, %v4061
        %v4063 = vsel %vm3381, %v3725, 0.0
        %v4064 = vadd.f32 %v4062, %v4063
        %v4065 = vsel %vm3381, %v3726, 0.0
        %v4066 = vadd.f32 %v4064, %v4065
        %v4067 = vsel %vm3381, %v3727, 0.0
        %v4068 = vadd.f32 %v4066, %v4067
        %v4069 = vsel %vm3381, %v3728, 0.0
        %v4070 = vadd.f32 %v4068, %v4069
        %v4071 = vsel %vm3381, %v3729, 0.0
        %v4072 = vadd.f32 %v4070, %v4071
        %v4073 = vsel %vm3381, %v3730, 0.0
        %v4074 = vadd.f32 %v4072, %v4073
        %v4075 = vsel %vm3381, %v3731, 0.0
        %v4076 = vadd.f32 %v4074, %v4075
        %v4077 = vsel %vm3381, %v3732, 0.0
        %v4078 = vadd.f32 %v4076, %v4077
        %v4079 = vsel %vm3381, %v3733, 0.0
        %v4080 = vadd.f32 %v4078, %v4079
        %v4081 = vsel %vm3381, %v3734, 0.0
        %v4082 = vadd.f32 %v4080, %v4081
        %v4083 = vsel %vm3381, %v3735, 0.0
        %v4084 = vadd.f32 %v4082, %v4083
        %v4085 = vsel %vm3381, %v3736, 0.0
        %v4086 = vadd.f32 %v4084, %v4085
        %v4087 = vsel %vm3381, %v3737, 0.0
        %v4088 = vadd.f32 %v4086, %v4087
        %v4089 = vsel %vm3381, %v3738, 0.0
        %v4090 = vadd.f32 %v4088, %v4089
        %v4091 = vsel %vm3381, %v3739, 0.0
        %v4092 = vadd.f32 %v4090, %v4091
        %v4093 = vsel %vm3381, %v3740, 0.0
        %v4094 = vadd.f32 %v4092, %v4093
        %v4095 = vsel %vm3381, %v3741, 0.0
        %v4096 = vadd.f32 %v4094, %v4095
        %v4097 = vsel %vm3381, %v3742, 0.0
        %v4098 = vadd.f32 %v4096, %v4097
        %v4099 = vsel %vm3381, %v3743, 0.0
        %v4100 = vadd.f32 %v4098, %v4099
        %v4101 = vsel %vm3381, %v3744, 0.0
        %v4102 = vadd.f32 %v4100, %v4101
        %v4103 = vsel %vm3381, %v3745, 0.0
        %v4104 = vadd.f32 %v4102, %v4103
        %v4105 = vsel %vm3381, %v3746, 0.0
        %v4106 = vadd.f32 %v4104, %v4105
        %v4107 = vsel %vm3381, %v3747, 0.0
        %v4108 = vadd.f32 %v4106, %v4107
        %v4109 = vsel %vm3381, %v3748, 0.0
        %v4110 = vadd.f32 %v4108, %v4109
        %v4111 = vsel %vm3381, %v3749, 0.0
        %v4112 = vadd.f32 %v4110, %v4111
        %v4113 = vsel %vm3381, %v3750, 0.0
        %v4114 = vadd.f32 %v4112, %v4113
        %v4115 = vsel %vm3381, %v3751, 0.0
        %v4116 = vadd.f32 %v4114, %v4115
        %v4117 = vsel %vm3381, %v3752, 0.0
        %v4118 = vadd.f32 %v4116, %v4117
        %v4119 = vsel %vm3381, %v3753, 0.0
        %v4120 = vadd.f32 %v4118, %v4119
        %v4121 = vsel %vm3381, %v3754, 0.0
        %v4122 = vadd.f32 %v4120, %v4121
        %v4123 = vsel %vm3381, %v3755, 0.0
        %v4124 = vadd.f32 %v4122, %v4123
        %v4125 = vsel %vm3381, %v3756, 0.0
        %v4126 = vadd.f32 %v4124, %v4125
        %v4127 = vsel %vm3381, %v3757, 0.0
        %v4128 = vadd.f32 %v4126, %v4127
        %v4129 = vsel %vm3381, %v3758, 0.0
        %v4130 = vadd.f32 %v4128, %v4129
        %v4131 = vsel %vm3381, %v3759, 0.0
        %v4132 = vadd.f32 %v4130, %v4131
        %v4133 = vsel %vm3381, %v3760, 0.0
        %v4134 = vadd.f32 %v4132, %v4133
        %v4135 = vsel %vm3381, %v3761, 0.0
        %v4136 = vadd.f32 %v4134, %v4135
        %v4137 = vsel %vm3381, %v3762, 0.0
        %v4138 = vadd.f32 %v4136, %v4137
        %v4139 = vsel %vm3381, %v3763, 0.0
        %v4140 = vadd.f32 %v4138, %v4139
        %v4141 = vsel %vm3381, %v3764, 0.0
        %v4142 = vadd.f32 %v4140, %v4141
        %v4143 = vsel %vm3381, %v3765, 0.0
        %v4144 = vadd.f32 %v4142, %v4143
        %v4145 = vsel %vm3381, %v3766, 0.0
        %v4146 = vadd.f32 %v4144, %v4145
        %v4147 = vsel %vm3381, %v3767, 0.0
        %v4148 = vadd.f32 %v4146, %v4147
        %v4149 = vsel %vm3381, %v3768, 0.0
        %v4150 = vadd.f32 %v4148, %v4149
        %v4151 = vsel %vm3381, %v3769, 0.0
        %v4152 = vadd.f32 %v4150, %v4151
        %v4153 = vsel %vm3381, %v3770, 0.0
        %v4154 = vadd.f32 %v4152, %v4153
        %v4155 = vsel %vm3381, %v3771, 0.0
        %v4156 = vadd.f32 %v4154, %v4155
        %v4157 = vsel %vm3381, %v3772, 0.0
        %v4158 = vadd.f32 %v4156, %v4157
        %v4159 = vsel %vm3381, %v3773, 0.0
        %v4160 = vadd.f32 %v4158, %v4159
        %v4161 = vsel %vm3381, %v3774, 0.0
        %v4162 = vadd.f32 %v4160, %v4161
        %v4163 = vsel %vm3381, %v3775, 0.0
        %v4164 = vadd.f32 %v4162, %v4163
        %v4165 = vsel %vm3381, %v3776, 0.0
        %v4166 = vadd.f32 %v4164, %v4165
        %v4167 = vsel %vm3381, %v3777, 0.0
        %v4168 = vadd.f32 %v4166, %v4167
        %v4169 = vsel %vm3381, %v3778, 0.0
        %v4170 = vadd.f32 %v4168, %v4169
        %v4171 = vsel %vm3381, %v3779, 0.0
        %v4172 = vadd.f32 %v4170, %v4171
        %v4173 = vsel %vm3381, %v3780, 0.0
        %v4174 = vadd.f32 %v4172, %v4173
        %v4175 = vsel %vm3381, %v3781, 0.0
        %v4176 = vadd.f32 %v4174, %v4175
        %v4177 = vsel %vm3381, %v3782, 0.0
        %v4178 = vadd.f32 %v4176, %v4177
        %v4179 = vsel %vm3381, %v3783, 0.0
        %v4180 = vadd.f32 %v4178, %v4179
        %v4181 = vsel %vm3381, %v3784, 0.0
        %v4182 = vadd.f32 %v4180, %v4181
        %v4183 = vsel %vm3381, %v3785, 0.0
        %v4184 = vadd.f32 %v4182, %v4183
        %v4185 = vsel %vm3381, %v3786, 0.0
        %v4186 = vadd.f32 %v4184, %v4185
        %v4187 = vsel %vm3381, %v3787, 0.0
        %v4188 = vadd.f32 %v4186, %v4187
        %v4189 = vsel %vm3381, %v3788, 0.0
        %v4190 = vadd.f32 %v4188, %v4189
        %v4191 = vsel %vm3381, %v3789, 0.0
        %v4192 = vadd.f32 %v4190, %v4191
        %v4193 = vsel %vm3381, %v3790, 0.0
        %v4194 = vadd.f32 %v4192, %v4193
        %v4195 = vsel %vm3381, %v3791, 0.0
        %v4196 = vadd.f32 %v4194, %v4195
        %v4197 = vsel %vm3381, %v3792, 0.0
        %v4198 = vadd.f32 %v4196, %v4197
        %v4199 = vsel %vm3381, %v3793, 0.0
        %v4200 = vadd.f32 %v4198, %v4199
        %v4201 = vsel %vm3381, %v3794, 0.0
        %v4202 = vadd.f32 %v4200, %v4201
        %v4203 = vsel %vm3381, %v3795, 0.0
        %v4204 = vadd.f32 %v4202, %v4203
        %v4205 = vsel %vm3381, %v3796, 0.0
        %v4206 = vadd.f32 %v4204, %v4205
        %v4207 = vsel %vm3381, %v3797, 0.0
        %v4208 = vadd.f32 %v4206, %v4207
        %v4209 = vsel %vm3381, %v3798, 0.0
        %v4210 = vadd.f32 %v4208, %v4209
        %v4211 = vsel %vm3381, %v3799, 0.0
        %v4212 = vadd.f32 %v4210, %v4211
        %v4213 = vsel %vm3381, %v3800, 0.0
        %v4214 = vadd.f32 %v4212, %v4213
        %v4215 = vsel %vm3381, %v3801, 0.0
        %v4216 = vadd.f32 %v4214, %v4215
        %v4217 = vsel %vm3381, %v3802, 0.0
        %v4218 = vadd.f32 %v4216, %v4217
        %v4219 = vsel %vm3381, %v3803, 0.0
        %v4220 = vadd.f32 %v4218, %v4219
        %v4221 = vsel %vm3381, %v3804, 0.0
        %v4222 = vadd.f32 %v4220, %v4221
        %v4223 = vsel %vm3381, %v3805, 0.0
        %v4224 = vadd.f32 %v4222, %v4223
        %v4225 = vsel %vm3381, %v3806, 0.0
        %v4226 = vadd.f32 %v4224, %v4225
        %v4227 = vsel %vm3381, %v3807, 0.0
        %v4228 = vadd.f32 %v4226, %v4227
        %v4229 = vsel %vm3381, %v3808, 0.0
        %v4230 = vadd.f32 %v4228, %v4229
        %v4231 = vsel %vm3381, %v3809, 0.0
        %v4232 = vadd.f32 %v4230, %v4231
        %v4233 = vsel %vm3381, %v3810, 0.0
        %v4234 = vadd.f32 %v4232, %v4233
        %v4235 = vsel %vm3381, %v3811, 0.0
        %v4236 = vadd.f32 %v4234, %v4235
        %v4237 = vsel %vm3381, %v3812, 0.0
        %v4238 = vadd.f32 %v4236, %v4237
        %v4239 = vsel %vm3381, %v3813, 0.0
        %v4240 = vadd.f32 %v4238, %v4239
        %v4241 = vsel %vm3381, %v3814, 0.0
        %v4242 = vadd.f32 %v4240, %v4241
        %v4243 = vsel %vm3381, %v3815, 0.0
        %v4244 = vadd.f32 %v4242, %v4243
        %v4245 = vsel %vm3381, %v3816, 0.0
        %v4246 = vadd.f32 %v4244, %v4245
        %v4247 = vsel %vm3381, %v3817, 0.0
        %v4248 = vadd.f32 %v4246, %v4247
        %v4249 = vsel %vm3381, %v3818, 0.0
        %v4250 = vadd.f32 %v4248, %v4249
        %v4251 = vsel %vm3381, %v3819, 0.0
        %v4252 = vadd.f32 %v4250, %v4251
        %v4253 = vsel %vm3381, %v3820, 0.0
        %v4254 = vadd.f32 %v4252, %v4253
        %v4255 = vsel %vm3381, %v3821, 0.0
        %v4256 = vadd.f32 %v4254, %v4255
        %v4257 = vsel %vm3381, %v3822, 0.0
        %v4258 = vadd.f32 %v4256, %v4257
        %v4259 = vsel %vm3381, %v3823, 0.0
        %v4260 = vadd.f32 %v4258, %v4259
        %v4261 = vsel %vm3381, %v3824, 0.0
        %v4262 = vadd.f32 %v4260, %v4261
        %v4263 = vsel %vm3381, %v3825, 0.0
        %v4264 = vadd.f32 %v4262, %v4263
        %v4265 = vsel %vm3381, %v3826, 0.0
        %v4266 = vadd.f32 %v4264, %v4265
        %v4267 = vsel %vm3381, %v3827, 0.0
        %v4268 = vadd.f32 %v4266, %v4267
        %v4269 = vsel %vm3381, %v3828, 0.0
        %v4270 = vadd.f32 %v4268, %v4269
        %v4271 = vsel %vm3381, %v3829, 0.0
        %v4272 = vadd.f32 %v4270, %v4271
        %v4273 = vsel %vm3381, %v3830, 0.0
        %v4274 = vadd.f32 %v4272, %v4273
        %v4275 = vsel %vm3381, %v3831, 0.0
        %v4276 = vadd.f32 %v4274, %v4275
        %v4277 = vsel %vm3381, %v3832, 0.0
        %v4278 = vadd.f32 %v4276, %v4277
        %v4279 = vsel %vm3381, %v3833, 0.0
        %v4280 = vadd.f32 %v4278, %v4279
        %v4281 = vsel %vm3381, %v3834, 0.0
        %v4282 = vadd.f32 %v4280, %v4281
        %v4283 = vsel %vm3381, %v3835, 0.0
        %v4284 = vadd.f32 %v4282, %v4283
        %v4285 = vsel %vm3381, %v3836, 0.0
        %v4286 = vadd.f32 %v4284, %v4285
        %v4287 = vsel %vm3381, %v3837, 0.0
        %v4288 = vadd.f32 %v4286, %v4287
        %v4289 = vsel %vm3381, %v3838, 0.0
        %v4290 = vadd.f32 %v4288, %v4289
        %v4291 = vsel %vm3381, %v3839, 0.0
        %v4292 = vadd.f32 %v4290, %v4291
        %v4293 = vsel %vm3381, %v3840, 0.0
        %v4294 = vadd.f32 %v4292, %v4293
        %v4295 = vsel %vm3381, %v3841, 0.0
        %v4296 = vadd.f32 %v4294, %v4295
        %v4297 = vsel %vm3381, %v3842, 0.0
        %v4298 = vadd.f32 %v4296, %v4297
        %v4299 = vsel %vm3381, %v3843, 0.0
        %v4300 = vadd.f32 %v4298, %v4299
        %v4301 = vsel %vm3381, %v3844, 0.0
        %v4302 = vadd.f32 %v4300, %v4301
        %v4303 = vsel %vm3381, %v3845, 0.0
        %v4304 = vadd.f32 %v4302, %v4303
        %v4305 = vsel %vm3381, %v3846, 0.0
        %v4306 = vadd.f32 %v4304, %v4305
        %v4307 = vsel %vm3381, %v3847, 0.0
        %v4308 = vadd.f32 %v4306, %v4307
        %v4309 = vsel %vm3381, %v3848, 0.0
        %v4310 = vadd.f32 %v4308, %v4309
        %v4311 = vsel %vm3381, %v3849, 0.0
        %v4312 = vadd.f32 %v4310, %v4311
        %v4313 = vsel %vm3381, %v3850, 0.0
        %v4314 = vadd.f32 %v4312, %v4313
        %v4315 = vsel %vm3381, %v3851, 0.0
        %v4316 = vadd.f32 %v4314, %v4315
        %v4317 = vsel %vm3381, %v3852, 0.0
        %v4318 = vadd.f32 %v4316, %v4317
        %v4319 = vsel %vm3381, %v3853, 0.0
        %v4320 = vadd.f32 %v4318, %v4319
        %v4321 = vsel %vm3381, %v3854, 0.0
        %v4322 = vadd.f32 %v4320, %v4321
        %v4323 = vsel %vm3381, %v3855, 0.0
        %v4324 = vadd.f32 %v4322, %v4323
        %v4325 = vsel %vm3381, %v3856, 0.0
        %v4326 = vadd.f32 %v4324, %v4325
        %v4327 = vsel %vm3381, %v3857, 0.0
        %v4328 = vadd.f32 %v4326, %v4327
        %v4329 = vsel %vm3381, %v3858, 0.0
        %v4330 = vadd.f32 %v4328, %v4329
        %v4331 = vsel %vm3381, %v3859, 0.0
        %v4332 = vadd.f32 %v4330, %v4331
        %v4333 = vsel %vm3381, %v3860, 0.0
        %v4334 = vadd.f32 %v4332, %v4333
        %v4335 = vsel %vm3381, %v3861, 0.0
        %v4336 = vadd.f32 %v4334, %v4335
        %v4337 = vsel %vm3381, %v3862, 0.0
        %v4338 = vadd.f32 %v4336, %v4337
        %v4339 = vsel %vm3381, %v3863, 0.0
        %v4340 = vadd.f32 %v4338, %v4339
        %v4341 = vsel %vm3381, %v3864, 0.0
        %v4342 = vadd.f32 %v4340, %v4341
        %v4343 = vsel %vm3381, %v3865, 0.0
        %v4344 = vadd.f32 %v4342, %v4343
        %v4345 = vsel %vm3381, %v3866, 0.0
        %v4346 = vadd.f32 %v4344, %v4345
        %v4347 = vsel %vm3381, %v3867, 0.0
        %v4348 = vadd.f32 %v4346, %v4347
        %v4349 = vsel %vm3381, %v3868, 0.0
        %v4350 = vadd.f32 %v4348, %v4349
        %v4351 = vsel %vm3381, %v3869, 0.0
        %v4352 = vadd.f32 %v4350, %v4351
        %v4353 = vsel %vm3381, %v3870, 0.0
        %v4354 = vadd.f32 %v4352, %v4353
        %v4355 = vsel %vm3381, %v3871, 0.0
        %v4356 = vadd.f32 %v4354, %v4355
        %v4357 = vsel %vm3381, %v3872, 0.0
        %v4358 = vadd.f32 %v4356, %v4357
        %v4359 = vsel %vm3381, %v3873, 0.0
        %v4360 = vadd.f32 %v4358, %v4359
        %v4361 = vsel %vm3381, %v3874, 0.0
        %v4362 = vadd.f32 %v4360, %v4361
        %v4363 = vsel %vm3381, %v3875, 0.0
        %v4364 = vadd.f32 %v4362, %v4363
        %v4365 = vsel %vm3381, %v3876, 0.0
        %v4366 = vadd.f32 %v4364, %v4365
        %v4367 = vsel %vm3381, %v3877, 0.0
        %v4368 = vadd.f32 %v4366, %v4367
        %v4369 = vsel %vm3381, %v3878, 0.0
        %v4370 = vadd.f32 %v4368, %v4369
        %v4371 = vsel %vm3381, %v3879, 0.0
        %v4372 = vadd.f32 %v4370, %v4371
        %v4373 = vsel %vm3381, %v3880, 0.0
        %v4374 = vadd.f32 %v4372, %v4373
        %v4375 = vsel %vm3381, %v3881, 0.0
        %v4376 = vadd.f32 %v4374, %v4375
        %v4377 = vsel %vm3381, %v3882, 0.0
        %v4378 = vadd.f32 %v4376, %v4377
        %v4379 = vsel %vm3381, %v3883, 0.0
        %v4380 = vadd.f32 %v4378, %v4379
        %v4381 = vsel %vm3381, %v3884, 0.0
        %v4382 = vadd.f32 %v4380, %v4381
        %v4383 = vsel %vm3381, %v3885, 0.0
        %v4384 = vadd.f32 %v4382, %v4383
        %v4385 = vsel %vm3381, %v3886, 0.0
        %v4386 = vadd.f32 %v4384, %v4385
        %v4387 = vsel %vm3381, %v3887, 0.0
        %v4388 = vadd.f32 %v4386, %v4387
        %v4389 = vsel %vm3381, %v3888, 0.0
        %v4390 = vadd.f32 %v4388, %v4389
        %v4391 = vsel %vm3381, %v3889, 0.0
        %v4392 = vadd.f32 %v4390, %v4391
        %v4393 = vsel %vm3381, %v3890, 0.0
        %v4394 = vadd.f32 %v4392, %v4393
        %v4395 = vsel %vm3381, %v3891, 0.0
        %v4396 = vadd.f32 %v4394, %v4395
        %v4397 = vsel %vm3381, %v3892, 0.0
        %v4398 = vadd.f32 %v4396, %v4397
        %v4399 = vsel %vm3381, %v3893, 0.0
        %v4400 = vadd.f32 %v4398, %v4399
        %v4401 = vsel %vm3381, %v3894, 0.0
        %v4402 = vadd.f32 %v4400, %v4401
        %v4403 = vsel %vm3381, %v3895, 0.0
        %v4404 = vadd.f32 %v4402, %v4403
        %v4405 = vsel %vm3381, %v3896, 0.0
        %v4406 = vadd.f32 %v4404, %v4405
        %v4407 = vsel %vm3381, %v3897, 0.0
        %v4408 = vadd.f32 %v4406, %v4407
        %v4409 = vrot.slane %v4408, 4
        %v4410 = vadd.f32 %v4408, %v4409
        %v4411 = vrot.slane %v4410, 2
        %v4412 = vadd.f32 %v4410, %v4411
        %v4413 = vrot.slane %v4412, 1
        %v4414 = vadd.f32 %v4412, %v4413
        %v4415 = vmul.f32 %v4414, 0.00048828125
        %v4416 = vsub.f32 %v3642, %v4415
        %v4417 = vsub.f32 %v3643, %v4415
        %v4418 = vsub.f32 %v3644, %v4415
        %v4419 = vsub.f32 %v3645, %v4415
        %v4420 = vsub.f32 %v3646, %v4415
        %v4421 = vsub.f32 %v3647, %v4415
        %v4422 = vsub.f32 %v3648, %v4415
        %v4423 = vsub.f32 %v3649, %v4415
        %v4424 = vsub.f32 %v3650, %v4415
        %v4425 = vsub.f32 %v3651, %v4415
        %v4426 = vsub.f32 %v3652, %v4415
        %v4427 = vsub.f32 %v3653, %v4415
        %v4428 = vsub.f32 %v3654, %v4415
        %v4429 = vsub.f32 %v3655, %v4415
        %v4430 = vsub.f32 %v3656, %v4415
        %v4431 = vsub.f32 %v3657, %v4415
        %v4432 = vsub.f32 %v3658, %v4415
        %v4433 = vsub.f32 %v3659, %v4415
        %v4434 = vsub.f32 %v3660, %v4415
        %v4435 = vsub.f32 %v3661, %v4415
        %v4436 = vsub.f32 %v3662, %v4415
        %v4437 = vsub.f32 %v3663, %v4415
        %v4438 = vsub.f32 %v3664, %v4415
        %v4439 = vsub.f32 %v3665, %v4415
        %v4440 = vsub.f32 %v3666, %v4415
        %v4441 = vsub.f32 %v3667, %v4415
        %v4442 = vsub.f32 %v3668, %v4415
        %v4443 = vsub.f32 %v3669, %v4415
        %v4444 = vsub.f32 %v3670, %v4415
        %v4445 = vsub.f32 %v3671, %v4415
        %v4446 = vsub.f32 %v3672, %v4415
        %v4447 = vsub.f32 %v3673, %v4415
        %v4448 = vsub.f32 %v3674, %v4415
        %v4449 = vsub.f32 %v3675, %v4415
        %v4450 = vsub.f32 %v3676, %v4415
        %v4451 = vsub.f32 %v3677, %v4415
        %v4452 = vsub.f32 %v3678, %v4415
        %v4453 = vsub.f32 %v3679, %v4415
        %v4454 = vsub.f32 %v3680, %v4415
        %v4455 = vsub.f32 %v3681, %v4415
        %v4456 = vsub.f32 %v3682, %v4415
        %v4457 = vsub.f32 %v3683, %v4415
        %v4458 = vsub.f32 %v3684, %v4415
        %v4459 = vsub.f32 %v3685, %v4415
        %v4460 = vsub.f32 %v3686, %v4415
        %v4461 = vsub.f32 %v3687, %v4415
        %v4462 = vsub.f32 %v3688, %v4415
        %v4463 = vsub.f32 %v3689, %v4415
        %v4464 = vsub.f32 %v3690, %v4415
        %v4465 = vsub.f32 %v3691, %v4415
        %v4466 = vsub.f32 %v3692, %v4415
        %v4467 = vsub.f32 %v3693, %v4415
        %v4468 = vsub.f32 %v3694, %v4415
        %v4469 = vsub.f32 %v3695, %v4415
        %v4470 = vsub.f32 %v3696, %v4415
        %v4471 = vsub.f32 %v3697, %v4415
        %v4472 = vsub.f32 %v3698, %v4415
        %v4473 = vsub.f32 %v3699, %v4415
        %v4474 = vsub.f32 %v3700, %v4415
        %v4475 = vsub.f32 %v3701, %v4415
        %v4476 = vsub.f32 %v3702, %v4415
        %v4477 = vsub.f32 %v3703, %v4415
        %v4478 = vsub.f32 %v3704, %v4415
        %v4479 = vsub.f32 %v3705, %v4415
        %v4480 = vsub.f32 %v3706, %v4415
        %v4481 = vsub.f32 %v3707, %v4415
        %v4482 = vsub.f32 %v3708, %v4415
        %v4483 = vsub.f32 %v3709, %v4415
        %v4484 = vsub.f32 %v3710, %v4415
        %v4485 = vsub.f32 %v3711, %v4415
        %v4486 = vsub.f32 %v3712, %v4415
        %v4487 = vsub.f32 %v3713, %v4415
        %v4488 = vsub.f32 %v3714, %v4415
        %v4489 = vsub.f32 %v3715, %v4415
        %v4490 = vsub.f32 %v3716, %v4415
        %v4491 = vsub.f32 %v3717, %v4415
        %v4492 = vsub.f32 %v3718, %v4415
        %v4493 = vsub.f32 %v3719, %v4415
        %v4494 = vsub.f32 %v3720, %v4415
        %v4495 = vsub.f32 %v3721, %v4415
        %v4496 = vsub.f32 %v3722, %v4415
        %v4497 = vsub.f32 %v3723, %v4415
        %v4498 = vsub.f32 %v3724, %v4415
        %v4499 = vsub.f32 %v3725, %v4415
        %v4500 = vsub.f32 %v3726, %v4415
        %v4501 = vsub.f32 %v3727, %v4415
        %v4502 = vsub.f32 %v3728, %v4415
        %v4503 = vsub.f32 %v3729, %v4415
        %v4504 = vsub.f32 %v3730, %v4415
        %v4505 = vsub.f32 %v3731, %v4415
        %v4506 = vsub.f32 %v3732, %v4415
        %v4507 = vsub.f32 %v3733, %v4415
        %v4508 = vsub.f32 %v3734, %v4415
        %v4509 = vsub.f32 %v3735, %v4415
        %v4510 = vsub.f32 %v3736, %v4415
        %v4511 = vsub.f32 %v3737, %v4415
        %v4512 = vsub.f32 %v3738, %v4415
        %v4513 = vsub.f32 %v3739, %v4415
        %v4514 = vsub.f32 %v3740, %v4415
        %v4515 = vsub.f32 %v3741, %v4415
        %v4516 = vsub.f32 %v3742, %v4415
        %v4517 = vsub.f32 %v3743, %v4415
        %v4518 = vsub.f32 %v3744, %v4415
        %v4519 = vsub.f32 %v3745, %v4415
        %v4520 = vsub.f32 %v3746, %v4415
        %v4521 = vsub.f32 %v3747, %v4415
        %v4522 = vsub.f32 %v3748, %v4415
        %v4523 = vsub.f32 %v3749, %v4415
        %v4524 = vsub.f32 %v3750, %v4415
        %v4525 = vsub.f32 %v3751, %v4415
        %v4526 = vsub.f32 %v3752, %v4415
        %v4527 = vsub.f32 %v3753, %v4415
        %v4528 = vsub.f32 %v3754, %v4415
        %v4529 = vsub.f32 %v3755, %v4415
        %v4530 = vsub.f32 %v3756, %v4415
        %v4531 = vsub.f32 %v3757, %v4415
        %v4532 = vsub.f32 %v3758, %v4415
        %v4533 = vsub.f32 %v3759, %v4415
        %v4534 = vsub.f32 %v3760, %v4415
        %v4535 = vsub.f32 %v3761, %v4415
        %v4536 = vsub.f32 %v3762, %v4415
        %v4537 = vsub.f32 %v3763, %v4415
        %v4538 = vsub.f32 %v3764, %v4415
        %v4539 = vsub.f32 %v3765, %v4415
        %v4540 = vsub.f32 %v3766, %v4415
        %v4541 = vsub.f32 %v3767, %v4415
        %v4542 = vsub.f32 %v3768, %v4415
        %v4543 = vsub.f32 %v3769, %v4415
        %v4544 = vsub.f32 %v3770, %v4415
        %v4545 = vsub.f32 %v3771, %v4415
        %v4546 = vsub.f32 %v3772, %v4415
        %v4547 = vsub.f32 %v3773, %v4415
        %v4548 = vsub.f32 %v3774, %v4415
        %v4549 = vsub.f32 %v3775, %v4415
        %v4550 = vsub.f32 %v3776, %v4415
        %v4551 = vsub.f32 %v3777, %v4415
        %v4552 = vsub.f32 %v3778, %v4415
        %v4553 = vsub.f32 %v3779, %v4415
        %v4554 = vsub.f32 %v3780, %v4415
        %v4555 = vsub.f32 %v3781, %v4415
        %v4556 = vsub.f32 %v3782, %v4415
        %v4557 = vsub.f32 %v3783, %v4415
        %v4558 = vsub.f32 %v3784, %v4415
        %v4559 = vsub.f32 %v3785, %v4415
        %v4560 = vsub.f32 %v3786, %v4415
        %v4561 = vsub.f32 %v3787, %v4415
        %v4562 = vsub.f32 %v3788, %v4415
        %v4563 = vsub.f32 %v3789, %v4415
        %v4564 = vsub.f32 %v3790, %v4415
        %v4565 = vsub.f32 %v3791, %v4415
        %v4566 = vsub.f32 %v3792, %v4415
        %v4567 = vsub.f32 %v3793, %v4415
        %v4568 = vsub.f32 %v3794, %v4415
        %v4569 = vsub.f32 %v3795, %v4415
        %v4570 = vsub.f32 %v3796, %v4415
        %v4571 = vsub.f32 %v3797, %v4415
        %v4572 = vsub.f32 %v3798, %v4415
        %v4573 = vsub.f32 %v3799, %v4415
        %v4574 = vsub.f32 %v3800, %v4415
        %v4575 = vsub.f32 %v3801, %v4415
        %v4576 = vsub.f32 %v3802, %v4415
        %v4577 = vsub.f32 %v3803, %v4415
        %v4578 = vsub.f32 %v3804, %v4415
        %v4579 = vsub.f32 %v3805, %v4415
        %v4580 = vsub.f32 %v3806, %v4415
        %v4581 = vsub.f32 %v3807, %v4415
        %v4582 = vsub.f32 %v3808, %v4415
        %v4583 = vsub.f32 %v3809, %v4415
        %v4584 = vsub.f32 %v3810, %v4415
        %v4585 = vsub.f32 %v3811, %v4415
        %v4586 = vsub.f32 %v3812, %v4415
        %v4587 = vsub.f32 %v3813, %v4415
        %v4588 = vsub.f32 %v3814, %v4415
        %v4589 = vsub.f32 %v3815, %v4415
        %v4590 = vsub.f32 %v3816, %v4415
        %v4591 = vsub.f32 %v3817, %v4415
        %v4592 = vsub.f32 %v3818, %v4415
        %v4593 = vsub.f32 %v3819, %v4415
        %v4594 = vsub.f32 %v3820, %v4415
        %v4595 = vsub.f32 %v3821, %v4415
        %v4596 = vsub.f32 %v3822, %v4415
        %v4597 = vsub.f32 %v3823, %v4415
        %v4598 = vsub.f32 %v3824, %v4415
        %v4599 = vsub.f32 %v3825, %v4415
        %v4600 = vsub.f32 %v3826, %v4415
        %v4601 = vsub.f32 %v3827, %v4415
        %v4602 = vsub.f32 %v3828, %v4415
        %v4603 = vsub.f32 %v3829, %v4415
        %v4604 = vsub.f32 %v3830, %v4415
        %v4605 = vsub.f32 %v3831, %v4415
        %v4606 = vsub.f32 %v3832, %v4415
        %v4607 = vsub.f32 %v3833, %v4415
        %v4608 = vsub.f32 %v3834, %v4415
        %v4609 = vsub.f32 %v3835, %v4415
        %v4610 = vsub.f32 %v3836, %v4415
        %v4611 = vsub.f32 %v3837, %v4415
        %v4612 = vsub.f32 %v3838, %v4415
        %v4613 = vsub.f32 %v3839, %v4415
        %v4614 = vsub.f32 %v3840, %v4415
        %v4615 = vsub.f32 %v3841, %v4415
        %v4616 = vsub.f32 %v3842, %v4415
        %v4617 = vsub.f32 %v3843, %v4415
        %v4618 = vsub.f32 %v3844, %v4415
        %v4619 = vsub.f32 %v3845, %v4415
        %v4620 = vsub.f32 %v3846, %v4415
        %v4621 = vsub.f32 %v3847, %v4415
        %v4622 = vsub.f32 %v3848, %v4415
        %v4623 = vsub.f32 %v3849, %v4415
        %v4624 = vsub.f32 %v3850, %v4415
        %v4625 = vsub.f32 %v3851, %v4415
        %v4626 = vsub.f32 %v3852, %v4415
        %v4627 = vsub.f32 %v3853, %v4415
        %v4628 = vsub.f32 %v3854, %v4415
        %v4629 = vsub.f32 %v3855, %v4415
        %v4630 = vsub.f32 %v3856, %v4415
        %v4631 = vsub.f32 %v3857, %v4415
        %v4632 = vsub.f32 %v3858, %v4415
        %v4633 = vsub.f32 %v3859, %v4415
        %v4634 = vsub.f32 %v3860, %v4415
        %v4635 = vsub.f32 %v3861, %v4415
        %v4636 = vsub.f32 %v3862, %v4415
        %v4637 = vsub.f32 %v3863, %v4415
        %v4638 = vsub.f32 %v3864, %v4415
        %v4639 = vsub.f32 %v3865, %v4415
        %v4640 = vsub.f32 %v3866, %v4415
        %v4641 = vsub.f32 %v3867, %v4415
        %v4642 = vsub.f32 %v3868, %v4415
        %v4643 = vsub.f32 %v3869, %v4415
        %v4644 = vsub.f32 %v3870, %v4415
        %v4645 = vsub.f32 %v3871, %v4415
        %v4646 = vsub.f32 %v3872, %v4415
        %v4647 = vsub.f32 %v3873, %v4415
        %v4648 = vsub.f32 %v3874, %v4415
        %v4649 = vsub.f32 %v3875, %v4415
        %v4650 = vsub.f32 %v3876, %v4415
        %v4651 = vsub.f32 %v3877, %v4415
        %v4652 = vsub.f32 %v3878, %v4415
        %v4653 = vsub.f32 %v3879, %v4415
        %v4654 = vsub.f32 %v3880, %v4415
        %v4655 = vsub.f32 %v3881, %v4415
        %v4656 = vsub.f32 %v3882, %v4415
        %v4657 = vsub.f32 %v3883, %v4415
        %v4658 = vsub.f32 %v3884, %v4415
        %v4659 = vsub.f32 %v3885, %v4415
        %v4660 = vsub.f32 %v3886, %v4415
        %v4661 = vsub.f32 %v3887, %v4415
        %v4662 = vsub.f32 %v3888, %v4415
        %v4663 = vsub.f32 %v3889, %v4415
        %v4664 = vsub.f32 %v3890, %v4415
        %v4665 = vsub.f32 %v3891, %v4415
        %v4666 = vsub.f32 %v3892, %v4415
        %v4667 = vsub.f32 %v3893, %v4415
        %v4668 = vsub.f32 %v3894, %v4415
        %v4669 = vsub.f32 %v3895, %v4415
        %v4670 = vsub.f32 %v3896, %v4415
        %v4671 = vsub.f32 %v3897, %v4415
        %v4672 = vmul.f32 %v4416, %v4416
        %v4673 = vmul.f32 %v4417, %v4417
        %v4674 = vmul.f32 %v4418, %v4418
        %v4675 = vmul.f32 %v4419, %v4419
        %v4676 = vmul.f32 %v4420, %v4420
        %v4677 = vmul.f32 %v4421, %v4421
        %v4678 = vmul.f32 %v4422, %v4422
        %v4679 = vmul.f32 %v4423, %v4423
        %v4680 = vmul.f32 %v4424, %v4424
        %v4681 = vmul.f32 %v4425, %v4425
        %v4682 = vmul.f32 %v4426, %v4426
        %v4683 = vmul.f32 %v4427, %v4427
        %v4684 = vmul.f32 %v4428, %v4428
        %v4685 = vmul.f32 %v4429, %v4429
        %v4686 = vmul.f32 %v4430, %v4430
        %v4687 = vmul.f32 %v4431, %v4431
        %v4688 = vmul.f32 %v4432, %v4432
        %v4689 = vmul.f32 %v4433, %v4433
        %v4690 = vmul.f32 %v4434, %v4434
        %v4691 = vmul.f32 %v4435, %v4435
        %v4692 = vmul.f32 %v4436, %v4436
        %v4693 = vmul.f32 %v4437, %v4437
        %v4694 = vmul.f32 %v4438, %v4438
        %v4695 = vmul.f32 %v4439, %v4439
        %v4696 = vmul.f32 %v4440, %v4440
        %v4697 = vmul.f32 %v4441, %v4441
        %v4698 = vmul.f32 %v4442, %v4442
        %v4699 = vmul.f32 %v4443, %v4443
        %v4700 = vmul.f32 %v4444, %v4444
        %v4701 = vmul.f32 %v4445, %v4445
        %v4702 = vmul.f32 %v4446, %v4446
        %v4703 = vmul.f32 %v4447, %v4447
        %v4704 = vmul.f32 %v4448, %v4448
        %v4705 = vmul.f32 %v4449, %v4449
        %v4706 = vmul.f32 %v4450, %v4450
        %v4707 = vmul.f32 %v4451, %v4451
        %v4708 = vmul.f32 %v4452, %v4452
        %v4709 = vmul.f32 %v4453, %v4453
        %v4710 = vmul.f32 %v4454, %v4454
        %v4711 = vmul.f32 %v4455, %v4455
        %v4712 = vmul.f32 %v4456, %v4456
        %v4713 = vmul.f32 %v4457, %v4457
        %v4714 = vmul.f32 %v4458, %v4458
        %v4715 = vmul.f32 %v4459, %v4459
        %v4716 = vmul.f32 %v4460, %v4460
        %v4717 = vmul.f32 %v4461, %v4461
        %v4718 = vmul.f32 %v4462, %v4462
        %v4719 = vmul.f32 %v4463, %v4463
        %v4720 = vmul.f32 %v4464, %v4464
        %v4721 = vmul.f32 %v4465, %v4465
        %v4722 = vmul.f32 %v4466, %v4466
        %v4723 = vmul.f32 %v4467, %v4467
        %v4724 = vmul.f32 %v4468, %v4468
        %v4725 = vmul.f32 %v4469, %v4469
        %v4726 = vmul.f32 %v4470, %v4470
        %v4727 = vmul.f32 %v4471, %v4471
        %v4728 = vmul.f32 %v4472, %v4472
        %v4729 = vmul.f32 %v4473, %v4473
        %v4730 = vmul.f32 %v4474, %v4474
        %v4731 = vmul.f32 %v4475, %v4475
        %v4732 = vmul.f32 %v4476, %v4476
        %v4733 = vmul.f32 %v4477, %v4477
        %v4734 = vmul.f32 %v4478, %v4478
        %v4735 = vmul.f32 %v4479, %v4479
        %v4736 = vmul.f32 %v4480, %v4480
        %v4737 = vmul.f32 %v4481, %v4481
        %v4738 = vmul.f32 %v4482, %v4482
        %v4739 = vmul.f32 %v4483, %v4483
        %v4740 = vmul.f32 %v4484, %v4484
        %v4741 = vmul.f32 %v4485, %v4485
        %v4742 = vmul.f32 %v4486, %v4486
        %v4743 = vmul.f32 %v4487, %v4487
        %v4744 = vmul.f32 %v4488, %v4488
        %v4745 = vmul.f32 %v4489, %v4489
        %v4746 = vmul.f32 %v4490, %v4490
        %v4747 = vmul.f32 %v4491, %v4491
        %v4748 = vmul.f32 %v4492, %v4492
        %v4749 = vmul.f32 %v4493, %v4493
        %v4750 = vmul.f32 %v4494, %v4494
        %v4751 = vmul.f32 %v4495, %v4495
        %v4752 = vmul.f32 %v4496, %v4496
        %v4753 = vmul.f32 %v4497, %v4497
        %v4754 = vmul.f32 %v4498, %v4498
        %v4755 = vmul.f32 %v4499, %v4499
        %v4756 = vmul.f32 %v4500, %v4500
        %v4757 = vmul.f32 %v4501, %v4501
        %v4758 = vmul.f32 %v4502, %v4502
        %v4759 = vmul.f32 %v4503, %v4503
        %v4760 = vmul.f32 %v4504, %v4504
        %v4761 = vmul.f32 %v4505, %v4505
        %v4762 = vmul.f32 %v4506, %v4506
        %v4763 = vmul.f32 %v4507, %v4507
        %v4764 = vmul.f32 %v4508, %v4508
        %v4765 = vmul.f32 %v4509, %v4509
        %v4766 = vmul.f32 %v4510, %v4510
        %v4767 = vmul.f32 %v4511, %v4511
        %v4768 = vmul.f32 %v4512, %v4512
        %v4769 = vmul.f32 %v4513, %v4513
        %v4770 = vmul.f32 %v4514, %v4514
        %v4771 = vmul.f32 %v4515, %v4515
        %v4772 = vmul.f32 %v4516, %v4516
        %v4773 = vmul.f32 %v4517, %v4517
        %v4774 = vmul.f32 %v4518, %v4518
        %v4775 = vmul.f32 %v4519, %v4519
        %v4776 = vmul.f32 %v4520, %v4520
        %v4777 = vmul.f32 %v4521, %v4521
        %v4778 = vmul.f32 %v4522, %v4522
        %v4779 = vmul.f32 %v4523, %v4523
        %v4780 = vmul.f32 %v4524, %v4524
        %v4781 = vmul.f32 %v4525, %v4525
        %v4782 = vmul.f32 %v4526, %v4526
        %v4783 = vmul.f32 %v4527, %v4527
        %v4784 = vmul.f32 %v4528, %v4528
        %v4785 = vmul.f32 %v4529, %v4529
        %v4786 = vmul.f32 %v4530, %v4530
        %v4787 = vmul.f32 %v4531, %v4531
        %v4788 = vmul.f32 %v4532, %v4532
        %v4789 = vmul.f32 %v4533, %v4533
        %v4790 = vmul.f32 %v4534, %v4534
        %v4791 = vmul.f32 %v4535, %v4535
        %v4792 = vmul.f32 %v4536, %v4536
        %v4793 = vmul.f32 %v4537, %v4537
        %v4794 = vmul.f32 %v4538, %v4538
        %v4795 = vmul.f32 %v4539, %v4539
        %v4796 = vmul.f32 %v4540, %v4540
        %v4797 = vmul.f32 %v4541, %v4541
        %v4798 = vmul.f32 %v4542, %v4542
        %v4799 = vmul.f32 %v4543, %v4543
        %v4800 = vmul.f32 %v4544, %v4544
        %v4801 = vmul.f32 %v4545, %v4545
        %v4802 = vmul.f32 %v4546, %v4546
        %v4803 = vmul.f32 %v4547, %v4547
        %v4804 = vmul.f32 %v4548, %v4548
        %v4805 = vmul.f32 %v4549, %v4549
        %v4806 = vmul.f32 %v4550, %v4550
        %v4807 = vmul.f32 %v4551, %v4551
        %v4808 = vmul.f32 %v4552, %v4552
        %v4809 = vmul.f32 %v4553, %v4553
        %v4810 = vmul.f32 %v4554, %v4554
        %v4811 = vmul.f32 %v4555, %v4555
        %v4812 = vmul.f32 %v4556, %v4556
        %v4813 = vmul.f32 %v4557, %v4557
        %v4814 = vmul.f32 %v4558, %v4558
        %v4815 = vmul.f32 %v4559, %v4559
        %v4816 = vmul.f32 %v4560, %v4560
        %v4817 = vmul.f32 %v4561, %v4561
        %v4818 = vmul.f32 %v4562, %v4562
        %v4819 = vmul.f32 %v4563, %v4563
        %v4820 = vmul.f32 %v4564, %v4564
        %v4821 = vmul.f32 %v4565, %v4565
        %v4822 = vmul.f32 %v4566, %v4566
        %v4823 = vmul.f32 %v4567, %v4567
        %v4824 = vmul.f32 %v4568, %v4568
        %v4825 = vmul.f32 %v4569, %v4569
        %v4826 = vmul.f32 %v4570, %v4570
        %v4827 = vmul.f32 %v4571, %v4571
        %v4828 = vmul.f32 %v4572, %v4572
        %v4829 = vmul.f32 %v4573, %v4573
        %v4830 = vmul.f32 %v4574, %v4574
        %v4831 = vmul.f32 %v4575, %v4575
        %v4832 = vmul.f32 %v4576, %v4576
        %v4833 = vmul.f32 %v4577, %v4577
        %v4834 = vmul.f32 %v4578, %v4578
        %v4835 = vmul.f32 %v4579, %v4579
        %v4836 = vmul.f32 %v4580, %v4580
        %v4837 = vmul.f32 %v4581, %v4581
        %v4838 = vmul.f32 %v4582, %v4582
        %v4839 = vmul.f32 %v4583, %v4583
        %v4840 = vmul.f32 %v4584, %v4584
        %v4841 = vmul.f32 %v4585, %v4585
        %v4842 = vmul.f32 %v4586, %v4586
        %v4843 = vmul.f32 %v4587, %v4587
        %v4844 = vmul.f32 %v4588, %v4588
        %v4845 = vmul.f32 %v4589, %v4589
        %v4846 = vmul.f32 %v4590, %v4590
        %v4847 = vmul.f32 %v4591, %v4591
        %v4848 = vmul.f32 %v4592, %v4592
        %v4849 = vmul.f32 %v4593, %v4593
        %v4850 = vmul.f32 %v4594, %v4594
        %v4851 = vmul.f32 %v4595, %v4595
        %v4852 = vmul.f32 %v4596, %v4596
        %v4853 = vmul.f32 %v4597, %v4597
        %v4854 = vmul.f32 %v4598, %v4598
        %v4855 = vmul.f32 %v4599, %v4599
        %v4856 = vmul.f32 %v4600, %v4600
        %v4857 = vmul.f32 %v4601, %v4601
        %v4858 = vmul.f32 %v4602, %v4602
        %v4859 = vmul.f32 %v4603, %v4603
        %v4860 = vmul.f32 %v4604, %v4604
        %v4861 = vmul.f32 %v4605, %v4605
        %v4862 = vmul.f32 %v4606, %v4606
        %v4863 = vmul.f32 %v4607, %v4607
        %v4864 = vmul.f32 %v4608, %v4608
        %v4865 = vmul.f32 %v4609, %v4609
        %v4866 = vmul.f32 %v4610, %v4610
        %v4867 = vmul.f32 %v4611, %v4611
        %v4868 = vmul.f32 %v4612, %v4612
        %v4869 = vmul.f32 %v4613, %v4613
        %v4870 = vmul.f32 %v4614, %v4614
        %v4871 = vmul.f32 %v4615, %v4615
        %v4872 = vmul.f32 %v4616, %v4616
        %v4873 = vmul.f32 %v4617, %v4617
        %v4874 = vmul.f32 %v4618, %v4618
        %v4875 = vmul.f32 %v4619, %v4619
        %v4876 = vmul.f32 %v4620, %v4620
        %v4877 = vmul.f32 %v4621, %v4621
        %v4878 = vmul.f32 %v4622, %v4622
        %v4879 = vmul.f32 %v4623, %v4623
        %v4880 = vmul.f32 %v4624, %v4624
        %v4881 = vmul.f32 %v4625, %v4625
        %v4882 = vmul.f32 %v4626, %v4626
        %v4883 = vmul.f32 %v4627, %v4627
        %v4884 = vmul.f32 %v4628, %v4628
        %v4885 = vmul.f32 %v4629, %v4629
        %v4886 = vmul.f32 %v4630, %v4630
        %v4887 = vmul.f32 %v4631, %v4631
        %v4888 = vmul.f32 %v4632, %v4632
        %v4889 = vmul.f32 %v4633, %v4633
        %v4890 = vmul.f32 %v4634, %v4634
        %v4891 = vmul.f32 %v4635, %v4635
        %v4892 = vmul.f32 %v4636, %v4636
        %v4893 = vmul.f32 %v4637, %v4637
        %v4894 = vmul.f32 %v4638, %v4638
        %v4895 = vmul.f32 %v4639, %v4639
        %v4896 = vmul.f32 %v4640, %v4640
        %v4897 = vmul.f32 %v4641, %v4641
        %v4898 = vmul.f32 %v4642, %v4642
        %v4899 = vmul.f32 %v4643, %v4643
        %v4900 = vmul.f32 %v4644, %v4644
        %v4901 = vmul.f32 %v4645, %v4645
        %v4902 = vmul.f32 %v4646, %v4646
        %v4903 = vmul.f32 %v4647, %v4647
        %v4904 = vmul.f32 %v4648, %v4648
        %v4905 = vmul.f32 %v4649, %v4649
        %v4906 = vmul.f32 %v4650, %v4650
        %v4907 = vmul.f32 %v4651, %v4651
        %v4908 = vmul.f32 %v4652, %v4652
        %v4909 = vmul.f32 %v4653, %v4653
        %v4910 = vmul.f32 %v4654, %v4654
        %v4911 = vmul.f32 %v4655, %v4655
        %v4912 = vmul.f32 %v4656, %v4656
        %v4913 = vmul.f32 %v4657, %v4657
        %v4914 = vmul.f32 %v4658, %v4658
        %v4915 = vmul.f32 %v4659, %v4659
        %v4916 = vmul.f32 %v4660, %v4660
        %v4917 = vmul.f32 %v4661, %v4661
        %v4918 = vmul.f32 %v4662, %v4662
        %v4919 = vmul.f32 %v4663, %v4663
        %v4920 = vmul.f32 %v4664, %v4664
        %v4921 = vmul.f32 %v4665, %v4665
        %v4922 = vmul.f32 %v4666, %v4666
        %v4923 = vmul.f32 %v4667, %v4667
        %v4924 = vmul.f32 %v4668, %v4668
        %v4925 = vmul.f32 %v4669, %v4669
        %v4926 = vmul.f32 %v4670, %v4670
        %v4927 = vmul.f32 %v4671, %v4671
        %v4928 = vsel %vm3381, %v4672, 0.0
        %v4929 = vsel %vm3381, %v4673, 0.0
        %v4930 = vadd.f32 %v4928, %v4929
        %v4931 = vsel %vm3381, %v4674, 0.0
        %v4932 = vadd.f32 %v4930, %v4931
        %v4933 = vsel %vm3381, %v4675, 0.0
        %v4934 = vadd.f32 %v4932, %v4933
        %v4935 = vsel %vm3381, %v4676, 0.0
        %v4936 = vadd.f32 %v4934, %v4935
        %v4937 = vsel %vm3381, %v4677, 0.0
        %v4938 = vadd.f32 %v4936, %v4937
        %v4939 = vsel %vm3381, %v4678, 0.0
        %v4940 = vadd.f32 %v4938, %v4939
        %v4941 = vsel %vm3381, %v4679, 0.0
        %v4942 = vadd.f32 %v4940, %v4941
        %v4943 = vsel %vm3381, %v4680, 0.0
        %v4944 = vadd.f32 %v4942, %v4943
        %v4945 = vsel %vm3381, %v4681, 0.0
        %v4946 = vadd.f32 %v4944, %v4945
        %v4947 = vsel %vm3381, %v4682, 0.0
        %v4948 = vadd.f32 %v4946, %v4947
        %v4949 = vsel %vm3381, %v4683, 0.0
        %v4950 = vadd.f32 %v4948, %v4949
        %v4951 = vsel %vm3381, %v4684, 0.0
        %v4952 = vadd.f32 %v4950, %v4951
        %v4953 = vsel %vm3381, %v4685, 0.0
        %v4954 = vadd.f32 %v4952, %v4953
        %v4955 = vsel %vm3381, %v4686, 0.0
        %v4956 = vadd.f32 %v4954, %v4955
        %v4957 = vsel %vm3381, %v4687, 0.0
        %v4958 = vadd.f32 %v4956, %v4957
        %v4959 = vsel %vm3381, %v4688, 0.0
        %v4960 = vadd.f32 %v4958, %v4959
        %v4961 = vsel %vm3381, %v4689, 0.0
        %v4962 = vadd.f32 %v4960, %v4961
        %v4963 = vsel %vm3381, %v4690, 0.0
        %v4964 = vadd.f32 %v4962, %v4963
        %v4965 = vsel %vm3381, %v4691, 0.0
        %v4966 = vadd.f32 %v4964, %v4965
        %v4967 = vsel %vm3381, %v4692, 0.0
        %v4968 = vadd.f32 %v4966, %v4967
        %v4969 = vsel %vm3381, %v4693, 0.0
        %v4970 = vadd.f32 %v4968, %v4969
        %v4971 = vsel %vm3381, %v4694, 0.0
        %v4972 = vadd.f32 %v4970, %v4971
        %v4973 = vsel %vm3381, %v4695, 0.0
        %v4974 = vadd.f32 %v4972, %v4973
        %v4975 = vsel %vm3381, %v4696, 0.0
        %v4976 = vadd.f32 %v4974, %v4975
        %v4977 = vsel %vm3381, %v4697, 0.0
        %v4978 = vadd.f32 %v4976, %v4977
        %v4979 = vsel %vm3381, %v4698, 0.0
        %v4980 = vadd.f32 %v4978, %v4979
        %v4981 = vsel %vm3381, %v4699, 0.0
        %v4982 = vadd.f32 %v4980, %v4981
        %v4983 = vsel %vm3381, %v4700, 0.0
        %v4984 = vadd.f32 %v4982, %v4983
        %v4985 = vsel %vm3381, %v4701, 0.0
        %v4986 = vadd.f32 %v4984, %v4985
        %v4987 = vsel %vm3381, %v4702, 0.0
        %v4988 = vadd.f32 %v4986, %v4987
        %v4989 = vsel %vm3381, %v4703, 0.0
        %v4990 = vadd.f32 %v4988, %v4989
        %v4991 = vsel %vm3381, %v4704, 0.0
        %v4992 = vadd.f32 %v4990, %v4991
        %v4993 = vsel %vm3381, %v4705, 0.0
        %v4994 = vadd.f32 %v4992, %v4993
        %v4995 = vsel %vm3381, %v4706, 0.0
        %v4996 = vadd.f32 %v4994, %v4995
        %v4997 = vsel %vm3381, %v4707, 0.0
        %v4998 = vadd.f32 %v4996, %v4997
        %v4999 = vsel %vm3381, %v4708, 0.0
        %v5000 = vadd.f32 %v4998, %v4999
        %v5001 = vsel %vm3381, %v4709, 0.0
        %v5002 = vadd.f32 %v5000, %v5001
        %v5003 = vsel %vm3381, %v4710, 0.0
        %v5004 = vadd.f32 %v5002, %v5003
        %v5005 = vsel %vm3381, %v4711, 0.0
        %v5006 = vadd.f32 %v5004, %v5005
        %v5007 = vsel %vm3381, %v4712, 0.0
        %v5008 = vadd.f32 %v5006, %v5007
        %v5009 = vsel %vm3381, %v4713, 0.0
        %v5010 = vadd.f32 %v5008, %v5009
        %v5011 = vsel %vm3381, %v4714, 0.0
        %v5012 = vadd.f32 %v5010, %v5011
        %v5013 = vsel %vm3381, %v4715, 0.0
        %v5014 = vadd.f32 %v5012, %v5013
        %v5015 = vsel %vm3381, %v4716, 0.0
        %v5016 = vadd.f32 %v5014, %v5015
        %v5017 = vsel %vm3381, %v4717, 0.0
        %v5018 = vadd.f32 %v5016, %v5017
        %v5019 = vsel %vm3381, %v4718, 0.0
        %v5020 = vadd.f32 %v5018, %v5019
        %v5021 = vsel %vm3381, %v4719, 0.0
        %v5022 = vadd.f32 %v5020, %v5021
        %v5023 = vsel %vm3381, %v4720, 0.0
        %v5024 = vadd.f32 %v5022, %v5023
        %v5025 = vsel %vm3381, %v4721, 0.0
        %v5026 = vadd.f32 %v5024, %v5025
        %v5027 = vsel %vm3381, %v4722, 0.0
        %v5028 = vadd.f32 %v5026, %v5027
        %v5029 = vsel %vm3381, %v4723, 0.0
        %v5030 = vadd.f32 %v5028, %v5029
        %v5031 = vsel %vm3381, %v4724, 0.0
        %v5032 = vadd.f32 %v5030, %v5031
        %v5033 = vsel %vm3381, %v4725, 0.0
        %v5034 = vadd.f32 %v5032, %v5033
        %v5035 = vsel %vm3381, %v4726, 0.0
        %v5036 = vadd.f32 %v5034, %v5035
        %v5037 = vsel %vm3381, %v4727, 0.0
        %v5038 = vadd.f32 %v5036, %v5037
        %v5039 = vsel %vm3381, %v4728, 0.0
        %v5040 = vadd.f32 %v5038, %v5039
        %v5041 = vsel %vm3381, %v4729, 0.0
        %v5042 = vadd.f32 %v5040, %v5041
        %v5043 = vsel %vm3381, %v4730, 0.0
        %v5044 = vadd.f32 %v5042, %v5043
        %v5045 = vsel %vm3381, %v4731, 0.0
        %v5046 = vadd.f32 %v5044, %v5045
        %v5047 = vsel %vm3381, %v4732, 0.0
        %v5048 = vadd.f32 %v5046, %v5047
        %v5049 = vsel %vm3381, %v4733, 0.0
        %v5050 = vadd.f32 %v5048, %v5049
        %v5051 = vsel %vm3381, %v4734, 0.0
        %v5052 = vadd.f32 %v5050, %v5051
        %v5053 = vsel %vm3381, %v4735, 0.0
        %v5054 = vadd.f32 %v5052, %v5053
        %v5055 = vsel %vm3381, %v4736, 0.0
        %v5056 = vadd.f32 %v5054, %v5055
        %v5057 = vsel %vm3381, %v4737, 0.0
        %v5058 = vadd.f32 %v5056, %v5057
        %v5059 = vsel %vm3381, %v4738, 0.0
        %v5060 = vadd.f32 %v5058, %v5059
        %v5061 = vsel %vm3381, %v4739, 0.0
        %v5062 = vadd.f32 %v5060, %v5061
        %v5063 = vsel %vm3381, %v4740, 0.0
        %v5064 = vadd.f32 %v5062, %v5063
        %v5065 = vsel %vm3381, %v4741, 0.0
        %v5066 = vadd.f32 %v5064, %v5065
        %v5067 = vsel %vm3381, %v4742, 0.0
        %v5068 = vadd.f32 %v5066, %v5067
        %v5069 = vsel %vm3381, %v4743, 0.0
        %v5070 = vadd.f32 %v5068, %v5069
        %v5071 = vsel %vm3381, %v4744, 0.0
        %v5072 = vadd.f32 %v5070, %v5071
        %v5073 = vsel %vm3381, %v4745, 0.0
        %v5074 = vadd.f32 %v5072, %v5073
        %v5075 = vsel %vm3381, %v4746, 0.0
        %v5076 = vadd.f32 %v5074, %v5075
        %v5077 = vsel %vm3381, %v4747, 0.0
        %v5078 = vadd.f32 %v5076, %v5077
        %v5079 = vsel %vm3381, %v4748, 0.0
        %v5080 = vadd.f32 %v5078, %v5079
        %v5081 = vsel %vm3381, %v4749, 0.0
        %v5082 = vadd.f32 %v5080, %v5081
        %v5083 = vsel %vm3381, %v4750, 0.0
        %v5084 = vadd.f32 %v5082, %v5083
        %v5085 = vsel %vm3381, %v4751, 0.0
        %v5086 = vadd.f32 %v5084, %v5085
        %v5087 = vsel %vm3381, %v4752, 0.0
        %v5088 = vadd.f32 %v5086, %v5087
        %v5089 = vsel %vm3381, %v4753, 0.0
        %v5090 = vadd.f32 %v5088, %v5089
        %v5091 = vsel %vm3381, %v4754, 0.0
        %v5092 = vadd.f32 %v5090, %v5091
        %v5093 = vsel %vm3381, %v4755, 0.0
        %v5094 = vadd.f32 %v5092, %v5093
        %v5095 = vsel %vm3381, %v4756, 0.0
        %v5096 = vadd.f32 %v5094, %v5095
        %v5097 = vsel %vm3381, %v4757, 0.0
        %v5098 = vadd.f32 %v5096, %v5097
        %v5099 = vsel %vm3381, %v4758, 0.0
        %v5100 = vadd.f32 %v5098, %v5099
        %v5101 = vsel %vm3381, %v4759, 0.0
        %v5102 = vadd.f32 %v5100, %v5101
        %v5103 = vsel %vm3381, %v4760, 0.0
        %v5104 = vadd.f32 %v5102, %v5103
        %v5105 = vsel %vm3381, %v4761, 0.0
        %v5106 = vadd.f32 %v5104, %v5105
        %v5107 = vsel %vm3381, %v4762, 0.0
        %v5108 = vadd.f32 %v5106, %v5107
        %v5109 = vsel %vm3381, %v4763, 0.0
        %v5110 = vadd.f32 %v5108, %v5109
        %v5111 = vsel %vm3381, %v4764, 0.0
        %v5112 = vadd.f32 %v5110, %v5111
        %v5113 = vsel %vm3381, %v4765, 0.0
        %v5114 = vadd.f32 %v5112, %v5113
        %v5115 = vsel %vm3381, %v4766, 0.0
        %v5116 = vadd.f32 %v5114, %v5115
        %v5117 = vsel %vm3381, %v4767, 0.0
        %v5118 = vadd.f32 %v5116, %v5117
        %v5119 = vsel %vm3381, %v4768, 0.0
        %v5120 = vadd.f32 %v5118, %v5119
        %v5121 = vsel %vm3381, %v4769, 0.0
        %v5122 = vadd.f32 %v5120, %v5121
        %v5123 = vsel %vm3381, %v4770, 0.0
        %v5124 = vadd.f32 %v5122, %v5123
        %v5125 = vsel %vm3381, %v4771, 0.0
        %v5126 = vadd.f32 %v5124, %v5125
        %v5127 = vsel %vm3381, %v4772, 0.0
        %v5128 = vadd.f32 %v5126, %v5127
        %v5129 = vsel %vm3381, %v4773, 0.0
        %v5130 = vadd.f32 %v5128, %v5129
        %v5131 = vsel %vm3381, %v4774, 0.0
        %v5132 = vadd.f32 %v5130, %v5131
        %v5133 = vsel %vm3381, %v4775, 0.0
        %v5134 = vadd.f32 %v5132, %v5133
        %v5135 = vsel %vm3381, %v4776, 0.0
        %v5136 = vadd.f32 %v5134, %v5135
        %v5137 = vsel %vm3381, %v4777, 0.0
        %v5138 = vadd.f32 %v5136, %v5137
        %v5139 = vsel %vm3381, %v4778, 0.0
        %v5140 = vadd.f32 %v5138, %v5139
        %v5141 = vsel %vm3381, %v4779, 0.0
        %v5142 = vadd.f32 %v5140, %v5141
        %v5143 = vsel %vm3381, %v4780, 0.0
        %v5144 = vadd.f32 %v5142, %v5143
        %v5145 = vsel %vm3381, %v4781, 0.0
        %v5146 = vadd.f32 %v5144, %v5145
        %v5147 = vsel %vm3381, %v4782, 0.0
        %v5148 = vadd.f32 %v5146, %v5147
        %v5149 = vsel %vm3381, %v4783, 0.0
        %v5150 = vadd.f32 %v5148, %v5149
        %v5151 = vsel %vm3381, %v4784, 0.0
        %v5152 = vadd.f32 %v5150, %v5151
        %v5153 = vsel %vm3381, %v4785, 0.0
        %v5154 = vadd.f32 %v5152, %v5153
        %v5155 = vsel %vm3381, %v4786, 0.0
        %v5156 = vadd.f32 %v5154, %v5155
        %v5157 = vsel %vm3381, %v4787, 0.0
        %v5158 = vadd.f32 %v5156, %v5157
        %v5159 = vsel %vm3381, %v4788, 0.0
        %v5160 = vadd.f32 %v5158, %v5159
        %v5161 = vsel %vm3381, %v4789, 0.0
        %v5162 = vadd.f32 %v5160, %v5161
        %v5163 = vsel %vm3381, %v4790, 0.0
        %v5164 = vadd.f32 %v5162, %v5163
        %v5165 = vsel %vm3381, %v4791, 0.0
        %v5166 = vadd.f32 %v5164, %v5165
        %v5167 = vsel %vm3381, %v4792, 0.0
        %v5168 = vadd.f32 %v5166, %v5167
        %v5169 = vsel %vm3381, %v4793, 0.0
        %v5170 = vadd.f32 %v5168, %v5169
        %v5171 = vsel %vm3381, %v4794, 0.0
        %v5172 = vadd.f32 %v5170, %v5171
        %v5173 = vsel %vm3381, %v4795, 0.0
        %v5174 = vadd.f32 %v5172, %v5173
        %v5175 = vsel %vm3381, %v4796, 0.0
        %v5176 = vadd.f32 %v5174, %v5175
        %v5177 = vsel %vm3381, %v4797, 0.0
        %v5178 = vadd.f32 %v5176, %v5177
        %v5179 = vsel %vm3381, %v4798, 0.0
        %v5180 = vadd.f32 %v5178, %v5179
        %v5181 = vsel %vm3381, %v4799, 0.0
        %v5182 = vadd.f32 %v5180, %v5181
        %v5183 = vsel %vm3381, %v4800, 0.0
        %v5184 = vadd.f32 %v5182, %v5183
        %v5185 = vsel %vm3381, %v4801, 0.0
        %v5186 = vadd.f32 %v5184, %v5185
        %v5187 = vsel %vm3381, %v4802, 0.0
        %v5188 = vadd.f32 %v5186, %v5187
        %v5189 = vsel %vm3381, %v4803, 0.0
        %v5190 = vadd.f32 %v5188, %v5189
        %v5191 = vsel %vm3381, %v4804, 0.0
        %v5192 = vadd.f32 %v5190, %v5191
        %v5193 = vsel %vm3381, %v4805, 0.0
        %v5194 = vadd.f32 %v5192, %v5193
        %v5195 = vsel %vm3381, %v4806, 0.0
        %v5196 = vadd.f32 %v5194, %v5195
        %v5197 = vsel %vm3381, %v4807, 0.0
        %v5198 = vadd.f32 %v5196, %v5197
        %v5199 = vsel %vm3381, %v4808, 0.0
        %v5200 = vadd.f32 %v5198, %v5199
        %v5201 = vsel %vm3381, %v4809, 0.0
        %v5202 = vadd.f32 %v5200, %v5201
        %v5203 = vsel %vm3381, %v4810, 0.0
        %v5204 = vadd.f32 %v5202, %v5203
        %v5205 = vsel %vm3381, %v4811, 0.0
        %v5206 = vadd.f32 %v5204, %v5205
        %v5207 = vsel %vm3381, %v4812, 0.0
        %v5208 = vadd.f32 %v5206, %v5207
        %v5209 = vsel %vm3381, %v4813, 0.0
        %v5210 = vadd.f32 %v5208, %v5209
        %v5211 = vsel %vm3381, %v4814, 0.0
        %v5212 = vadd.f32 %v5210, %v5211
        %v5213 = vsel %vm3381, %v4815, 0.0
        %v5214 = vadd.f32 %v5212, %v5213
        %v5215 = vsel %vm3381, %v4816, 0.0
        %v5216 = vadd.f32 %v5214, %v5215
        %v5217 = vsel %vm3381, %v4817, 0.0
        %v5218 = vadd.f32 %v5216, %v5217
        %v5219 = vsel %vm3381, %v4818, 0.0
        %v5220 = vadd.f32 %v5218, %v5219
        %v5221 = vsel %vm3381, %v4819, 0.0
        %v5222 = vadd.f32 %v5220, %v5221
        %v5223 = vsel %vm3381, %v4820, 0.0
        %v5224 = vadd.f32 %v5222, %v5223
        %v5225 = vsel %vm3381, %v4821, 0.0
        %v5226 = vadd.f32 %v5224, %v5225
        %v5227 = vsel %vm3381, %v4822, 0.0
        %v5228 = vadd.f32 %v5226, %v5227
        %v5229 = vsel %vm3381, %v4823, 0.0
        %v5230 = vadd.f32 %v5228, %v5229
        %v5231 = vsel %vm3381, %v4824, 0.0
        %v5232 = vadd.f32 %v5230, %v5231
        %v5233 = vsel %vm3381, %v4825, 0.0
        %v5234 = vadd.f32 %v5232, %v5233
        %v5235 = vsel %vm3381, %v4826, 0.0
        %v5236 = vadd.f32 %v5234, %v5235
        %v5237 = vsel %vm3381, %v4827, 0.0
        %v5238 = vadd.f32 %v5236, %v5237
        %v5239 = vsel %vm3381, %v4828, 0.0
        %v5240 = vadd.f32 %v5238, %v5239
        %v5241 = vsel %vm3381, %v4829, 0.0
        %v5242 = vadd.f32 %v5240, %v5241
        %v5243 = vsel %vm3381, %v4830, 0.0
        %v5244 = vadd.f32 %v5242, %v5243
        %v5245 = vsel %vm3381, %v4831, 0.0
        %v5246 = vadd.f32 %v5244, %v5245
        %v5247 = vsel %vm3381, %v4832, 0.0
        %v5248 = vadd.f32 %v5246, %v5247
        %v5249 = vsel %vm3381, %v4833, 0.0
        %v5250 = vadd.f32 %v5248, %v5249
        %v5251 = vsel %vm3381, %v4834, 0.0
        %v5252 = vadd.f32 %v5250, %v5251
        %v5253 = vsel %vm3381, %v4835, 0.0
        %v5254 = vadd.f32 %v5252, %v5253
        %v5255 = vsel %vm3381, %v4836, 0.0
        %v5256 = vadd.f32 %v5254, %v5255
        %v5257 = vsel %vm3381, %v4837, 0.0
        %v5258 = vadd.f32 %v5256, %v5257
        %v5259 = vsel %vm3381, %v4838, 0.0
        %v5260 = vadd.f32 %v5258, %v5259
        %v5261 = vsel %vm3381, %v4839, 0.0
        %v5262 = vadd.f32 %v5260, %v5261
        %v5263 = vsel %vm3381, %v4840, 0.0
        %v5264 = vadd.f32 %v5262, %v5263
        %v5265 = vsel %vm3381, %v4841, 0.0
        %v5266 = vadd.f32 %v5264, %v5265
        %v5267 = vsel %vm3381, %v4842, 0.0
        %v5268 = vadd.f32 %v5266, %v5267
        %v5269 = vsel %vm3381, %v4843, 0.0
        %v5270 = vadd.f32 %v5268, %v5269
        %v5271 = vsel %vm3381, %v4844, 0.0
        %v5272 = vadd.f32 %v5270, %v5271
        %v5273 = vsel %vm3381, %v4845, 0.0
        %v5274 = vadd.f32 %v5272, %v5273
        %v5275 = vsel %vm3381, %v4846, 0.0
        %v5276 = vadd.f32 %v5274, %v5275
        %v5277 = vsel %vm3381, %v4847, 0.0
        %v5278 = vadd.f32 %v5276, %v5277
        %v5279 = vsel %vm3381, %v4848, 0.0
        %v5280 = vadd.f32 %v5278, %v5279
        %v5281 = vsel %vm3381, %v4849, 0.0
        %v5282 = vadd.f32 %v5280, %v5281
        %v5283 = vsel %vm3381, %v4850, 0.0
        %v5284 = vadd.f32 %v5282, %v5283
        %v5285 = vsel %vm3381, %v4851, 0.0
        %v5286 = vadd.f32 %v5284, %v5285
        %v5287 = vsel %vm3381, %v4852, 0.0
        %v5288 = vadd.f32 %v5286, %v5287
        %v5289 = vsel %vm3381, %v4853, 0.0
        %v5290 = vadd.f32 %v5288, %v5289
        %v5291 = vsel %vm3381, %v4854, 0.0
        %v5292 = vadd.f32 %v5290, %v5291
        %v5293 = vsel %vm3381, %v4855, 0.0
        %v5294 = vadd.f32 %v5292, %v5293
        %v5295 = vsel %vm3381, %v4856, 0.0
        %v5296 = vadd.f32 %v5294, %v5295
        %v5297 = vsel %vm3381, %v4857, 0.0
        %v5298 = vadd.f32 %v5296, %v5297
        %v5299 = vsel %vm3381, %v4858, 0.0
        %v5300 = vadd.f32 %v5298, %v5299
        %v5301 = vsel %vm3381, %v4859, 0.0
        %v5302 = vadd.f32 %v5300, %v5301
        %v5303 = vsel %vm3381, %v4860, 0.0
        %v5304 = vadd.f32 %v5302, %v5303
        %v5305 = vsel %vm3381, %v4861, 0.0
        %v5306 = vadd.f32 %v5304, %v5305
        %v5307 = vsel %vm3381, %v4862, 0.0
        %v5308 = vadd.f32 %v5306, %v5307
        %v5309 = vsel %vm3381, %v4863, 0.0
        %v5310 = vadd.f32 %v5308, %v5309
        %v5311 = vsel %vm3381, %v4864, 0.0
        %v5312 = vadd.f32 %v5310, %v5311
        %v5313 = vsel %vm3381, %v4865, 0.0
        %v5314 = vadd.f32 %v5312, %v5313
        %v5315 = vsel %vm3381, %v4866, 0.0
        %v5316 = vadd.f32 %v5314, %v5315
        %v5317 = vsel %vm3381, %v4867, 0.0
        %v5318 = vadd.f32 %v5316, %v5317
        %v5319 = vsel %vm3381, %v4868, 0.0
        %v5320 = vadd.f32 %v5318, %v5319
        %v5321 = vsel %vm3381, %v4869, 0.0
        %v5322 = vadd.f32 %v5320, %v5321
        %v5323 = vsel %vm3381, %v4870, 0.0
        %v5324 = vadd.f32 %v5322, %v5323
        %v5325 = vsel %vm3381, %v4871, 0.0
        %v5326 = vadd.f32 %v5324, %v5325
        %v5327 = vsel %vm3381, %v4872, 0.0
        %v5328 = vadd.f32 %v5326, %v5327
        %v5329 = vsel %vm3381, %v4873, 0.0
        %v5330 = vadd.f32 %v5328, %v5329
        %v5331 = vsel %vm3381, %v4874, 0.0
        %v5332 = vadd.f32 %v5330, %v5331
        %v5333 = vsel %vm3381, %v4875, 0.0
        %v5334 = vadd.f32 %v5332, %v5333
        %v5335 = vsel %vm3381, %v4876, 0.0
        %v5336 = vadd.f32 %v5334, %v5335
        %v5337 = vsel %vm3381, %v4877, 0.0
        %v5338 = vadd.f32 %v5336, %v5337
        %v5339 = vsel %vm3381, %v4878, 0.0
        %v5340 = vadd.f32 %v5338, %v5339
        %v5341 = vsel %vm3381, %v4879, 0.0
        %v5342 = vadd.f32 %v5340, %v5341
        %v5343 = vsel %vm3381, %v4880, 0.0
        %v5344 = vadd.f32 %v5342, %v5343
        %v5345 = vsel %vm3381, %v4881, 0.0
        %v5346 = vadd.f32 %v5344, %v5345
        %v5347 = vsel %vm3381, %v4882, 0.0
        %v5348 = vadd.f32 %v5346, %v5347
        %v5349 = vsel %vm3381, %v4883, 0.0
        %v5350 = vadd.f32 %v5348, %v5349
        %v5351 = vsel %vm3381, %v4884, 0.0
        %v5352 = vadd.f32 %v5350, %v5351
        %v5353 = vsel %vm3381, %v4885, 0.0
        %v5354 = vadd.f32 %v5352, %v5353
        %v5355 = vsel %vm3381, %v4886, 0.0
        %v5356 = vadd.f32 %v5354, %v5355
        %v5357 = vsel %vm3381, %v4887, 0.0
        %v5358 = vadd.f32 %v5356, %v5357
        %v5359 = vsel %vm3381, %v4888, 0.0
        %v5360 = vadd.f32 %v5358, %v5359
        %v5361 = vsel %vm3381, %v4889, 0.0
        %v5362 = vadd.f32 %v5360, %v5361
        %v5363 = vsel %vm3381, %v4890, 0.0
        %v5364 = vadd.f32 %v5362, %v5363
        %v5365 = vsel %vm3381, %v4891, 0.0
        %v5366 = vadd.f32 %v5364, %v5365
        %v5367 = vsel %vm3381, %v4892, 0.0
        %v5368 = vadd.f32 %v5366, %v5367
        %v5369 = vsel %vm3381, %v4893, 0.0
        %v5370 = vadd.f32 %v5368, %v5369
        %v5371 = vsel %vm3381, %v4894, 0.0
        %v5372 = vadd.f32 %v5370, %v5371
        %v5373 = vsel %vm3381, %v4895, 0.0
        %v5374 = vadd.f32 %v5372, %v5373
        %v5375 = vsel %vm3381, %v4896, 0.0
        %v5376 = vadd.f32 %v5374, %v5375
        %v5377 = vsel %vm3381, %v4897, 0.0
        %v5378 = vadd.f32 %v5376, %v5377
        %v5379 = vsel %vm3381, %v4898, 0.0
        %v5380 = vadd.f32 %v5378, %v5379
        %v5381 = vsel %vm3381, %v4899, 0.0
        %v5382 = vadd.f32 %v5380, %v5381
        %v5383 = vsel %vm3381, %v4900, 0.0
        %v5384 = vadd.f32 %v5382, %v5383
        %v5385 = vsel %vm3381, %v4901, 0.0
        %v5386 = vadd.f32 %v5384, %v5385
        %v5387 = vsel %vm3381, %v4902, 0.0
        %v5388 = vadd.f32 %v5386, %v5387
        %v5389 = vsel %vm3381, %v4903, 0.0
        %v5390 = vadd.f32 %v5388, %v5389
        %v5391 = vsel %vm3381, %v4904, 0.0
        %v5392 = vadd.f32 %v5390, %v5391
        %v5393 = vsel %vm3381, %v4905, 0.0
        %v5394 = vadd.f32 %v5392, %v5393
        %v5395 = vsel %vm3381, %v4906, 0.0
        %v5396 = vadd.f32 %v5394, %v5395
        %v5397 = vsel %vm3381, %v4907, 0.0
        %v5398 = vadd.f32 %v5396, %v5397
        %v5399 = vsel %vm3381, %v4908, 0.0
        %v5400 = vadd.f32 %v5398, %v5399
        %v5401 = vsel %vm3381, %v4909, 0.0
        %v5402 = vadd.f32 %v5400, %v5401
        %v5403 = vsel %vm3381, %v4910, 0.0
        %v5404 = vadd.f32 %v5402, %v5403
        %v5405 = vsel %vm3381, %v4911, 0.0
        %v5406 = vadd.f32 %v5404, %v5405
        %v5407 = vsel %vm3381, %v4912, 0.0
        %v5408 = vadd.f32 %v5406, %v5407
        %v5409 = vsel %vm3381, %v4913, 0.0
        %v5410 = vadd.f32 %v5408, %v5409
        %v5411 = vsel %vm3381, %v4914, 0.0
        %v5412 = vadd.f32 %v5410, %v5411
        %v5413 = vsel %vm3381, %v4915, 0.0
        %v5414 = vadd.f32 %v5412, %v5413
        %v5415 = vsel %vm3381, %v4916, 0.0
        %v5416 = vadd.f32 %v5414, %v5415
        %v5417 = vsel %vm3381, %v4917, 0.0
        %v5418 = vadd.f32 %v5416, %v5417
        %v5419 = vsel %vm3381, %v4918, 0.0
        %v5420 = vadd.f32 %v5418, %v5419
        %v5421 = vsel %vm3381, %v4919, 0.0
        %v5422 = vadd.f32 %v5420, %v5421
        %v5423 = vsel %vm3381, %v4920, 0.0
        %v5424 = vadd.f32 %v5422, %v5423
        %v5425 = vsel %vm3381, %v4921, 0.0
        %v5426 = vadd.f32 %v5424, %v5425
        %v5427 = vsel %vm3381, %v4922, 0.0
        %v5428 = vadd.f32 %v5426, %v5427
        %v5429 = vsel %vm3381, %v4923, 0.0
        %v5430 = vadd.f32 %v5428, %v5429
        %v5431 = vsel %vm3381, %v4924, 0.0
        %v5432 = vadd.f32 %v5430, %v5431
        %v5433 = vsel %vm3381, %v4925, 0.0
        %v5434 = vadd.f32 %v5432, %v5433
        %v5435 = vsel %vm3381, %v4926, 0.0
        %v5436 = vadd.f32 %v5434, %v5435
        %v5437 = vsel %vm3381, %v4927, 0.0
        %v5438 = vadd.f32 %v5436, %v5437
        %v5439 = vrot.slane %v5438, 4
        %v5440 = vadd.f32 %v5438, %v5439
        %v5441 = vrot.slane %v5440, 2
        %v5442 = vadd.f32 %v5440, %v5441
        %v5443 = vrot.slane %v5442, 1
        %v5444 = vadd.f32 %v5442, %v5443
        %v5445 = vmul.f32 %v5444, 0.00048828125
        %v5446 = vadd.f32 %v5445, 1e-05
        %v5447 = vrsqrt.pop %v5446
        %v5448 = vmul.f32 %v4416, %v5447
        %v5449 = vmul.f32 %v4417, %v5447
        %v5450 = vmul.f32 %v4418, %v5447
        %v5451 = vmul.f32 %v4419, %v5447
        %v5452 = vmul.f32 %v4420, %v5447
        %v5453 = vmul.f32 %v4421, %v5447
        %v5454 = vmul.f32 %v4422, %v5447
        %v5455 = vmul.f32 %v4423, %v5447
        %v5456 = vmul.f32 %v4424, %v5447
        %v5457 = vmul.f32 %v4425, %v5447
        %v5458 = vmul.f32 %v4426, %v5447
        %v5459 = vmul.f32 %v4427, %v5447
        %v5460 = vmul.f32 %v4428, %v5447
        %v5461 = vmul.f32 %v4429, %v5447
        %v5462 = vmul.f32 %v4430, %v5447
        %v5463 = vmul.f32 %v4431, %v5447
        %v5464 = vmul.f32 %v4432, %v5447
        %v5465 = vmul.f32 %v4433, %v5447
        %v5466 = vmul.f32 %v4434, %v5447
        %v5467 = vmul.f32 %v4435, %v5447
        %v5468 = vmul.f32 %v4436, %v5447
        %v5469 = vmul.f32 %v4437, %v5447
        %v5470 = vmul.f32 %v4438, %v5447
        %v5471 = vmul.f32 %v4439, %v5447
        %v5472 = vmul.f32 %v4440, %v5447
        %v5473 = vmul.f32 %v4441, %v5447
        %v5474 = vmul.f32 %v4442, %v5447
        %v5475 = vmul.f32 %v4443, %v5447
        %v5476 = vmul.f32 %v4444, %v5447
        %v5477 = vmul.f32 %v4445, %v5447
        %v5478 = vmul.f32 %v4446, %v5447
        %v5479 = vmul.f32 %v4447, %v5447
        %v5480 = vmul.f32 %v4448, %v5447
        %v5481 = vmul.f32 %v4449, %v5447
        %v5482 = vmul.f32 %v4450, %v5447
        %v5483 = vmul.f32 %v4451, %v5447
        %v5484 = vmul.f32 %v4452, %v5447
        %v5485 = vmul.f32 %v4453, %v5447
        %v5486 = vmul.f32 %v4454, %v5447
        %v5487 = vmul.f32 %v4455, %v5447
        %v5488 = vmul.f32 %v4456, %v5447
        %v5489 = vmul.f32 %v4457, %v5447
        %v5490 = vmul.f32 %v4458, %v5447
        %v5491 = vmul.f32 %v4459, %v5447
        %v5492 = vmul.f32 %v4460, %v5447
        %v5493 = vmul.f32 %v4461, %v5447
        %v5494 = vmul.f32 %v4462, %v5447
        %v5495 = vmul.f32 %v4463, %v5447
        %v5496 = vmul.f32 %v4464, %v5447
        %v5497 = vmul.f32 %v4465, %v5447
        %v5498 = vmul.f32 %v4466, %v5447
        %v5499 = vmul.f32 %v4467, %v5447
        %v5500 = vmul.f32 %v4468, %v5447
        %v5501 = vmul.f32 %v4469, %v5447
        %v5502 = vmul.f32 %v4470, %v5447
        %v5503 = vmul.f32 %v4471, %v5447
        %v5504 = vmul.f32 %v4472, %v5447
        %v5505 = vmul.f32 %v4473, %v5447
        %v5506 = vmul.f32 %v4474, %v5447
        %v5507 = vmul.f32 %v4475, %v5447
        %v5508 = vmul.f32 %v4476, %v5447
        %v5509 = vmul.f32 %v4477, %v5447
        %v5510 = vmul.f32 %v4478, %v5447
        %v5511 = vmul.f32 %v4479, %v5447
        %v5512 = vmul.f32 %v4480, %v5447
        %v5513 = vmul.f32 %v4481, %v5447
        %v5514 = vmul.f32 %v4482, %v5447
        %v5515 = vmul.f32 %v4483, %v5447
        %v5516 = vmul.f32 %v4484, %v5447
        %v5517 = vmul.f32 %v4485, %v5447
        %v5518 = vmul.f32 %v4486, %v5447
        %v5519 = vmul.f32 %v4487, %v5447
        %v5520 = vmul.f32 %v4488, %v5447
        %v5521 = vmul.f32 %v4489, %v5447
        %v5522 = vmul.f32 %v4490, %v5447
        %v5523 = vmul.f32 %v4491, %v5447
        %v5524 = vmul.f32 %v4492, %v5447
        %v5525 = vmul.f32 %v4493, %v5447
        %v5526 = vmul.f32 %v4494, %v5447
        %v5527 = vmul.f32 %v4495, %v5447
        %v5528 = vmul.f32 %v4496, %v5447
        %v5529 = vmul.f32 %v4497, %v5447
        %v5530 = vmul.f32 %v4498, %v5447
        %v5531 = vmul.f32 %v4499, %v5447
        %v5532 = vmul.f32 %v4500, %v5447
        %v5533 = vmul.f32 %v4501, %v5447
        %v5534 = vmul.f32 %v4502, %v5447
        %v5535 = vmul.f32 %v4503, %v5447
        %v5536 = vmul.f32 %v4504, %v5447
        %v5537 = vmul.f32 %v4505, %v5447
        %v5538 = vmul.f32 %v4506, %v5447
        %v5539 = vmul.f32 %v4507, %v5447
        %v5540 = vmul.f32 %v4508, %v5447
        %v5541 = vmul.f32 %v4509, %v5447
        %v5542 = vmul.f32 %v4510, %v5447
        %v5543 = vmul.f32 %v4511, %v5447
        %v5544 = vmul.f32 %v4512, %v5447
        %v5545 = vmul.f32 %v4513, %v5447
        %v5546 = vmul.f32 %v4514, %v5447
        %v5547 = vmul.f32 %v4515, %v5447
        %v5548 = vmul.f32 %v4516, %v5447
        %v5549 = vmul.f32 %v4517, %v5447
        %v5550 = vmul.f32 %v4518, %v5447
        %v5551 = vmul.f32 %v4519, %v5447
        %v5552 = vmul.f32 %v4520, %v5447
        %v5553 = vmul.f32 %v4521, %v5447
        %v5554 = vmul.f32 %v4522, %v5447
        %v5555 = vmul.f32 %v4523, %v5447
        %v5556 = vmul.f32 %v4524, %v5447
        %v5557 = vmul.f32 %v4525, %v5447
        %v5558 = vmul.f32 %v4526, %v5447
        %v5559 = vmul.f32 %v4527, %v5447
        %v5560 = vmul.f32 %v4528, %v5447
        %v5561 = vmul.f32 %v4529, %v5447
        %v5562 = vmul.f32 %v4530, %v5447
        %v5563 = vmul.f32 %v4531, %v5447
        %v5564 = vmul.f32 %v4532, %v5447
        %v5565 = vmul.f32 %v4533, %v5447
        %v5566 = vmul.f32 %v4534, %v5447
        %v5567 = vmul.f32 %v4535, %v5447
        %v5568 = vmul.f32 %v4536, %v5447
        %v5569 = vmul.f32 %v4537, %v5447
        %v5570 = vmul.f32 %v4538, %v5447
        %v5571 = vmul.f32 %v4539, %v5447
        %v5572 = vmul.f32 %v4540, %v5447
        %v5573 = vmul.f32 %v4541, %v5447
        %v5574 = vmul.f32 %v4542, %v5447
        %v5575 = vmul.f32 %v4543, %v5447
        %v5576 = vmul.f32 %v4544, %v5447
        %v5577 = vmul.f32 %v4545, %v5447
        %v5578 = vmul.f32 %v4546, %v5447
        %v5579 = vmul.f32 %v4547, %v5447
        %v5580 = vmul.f32 %v4548, %v5447
        %v5581 = vmul.f32 %v4549, %v5447
        %v5582 = vmul.f32 %v4550, %v5447
        %v5583 = vmul.f32 %v4551, %v5447
        %v5584 = vmul.f32 %v4552, %v5447
        %v5585 = vmul.f32 %v4553, %v5447
        %v5586 = vmul.f32 %v4554, %v5447
        %v5587 = vmul.f32 %v4555, %v5447
        %v5588 = vmul.f32 %v4556, %v5447
        %v5589 = vmul.f32 %v4557, %v5447
        %v5590 = vmul.f32 %v4558, %v5447
        %v5591 = vmul.f32 %v4559, %v5447
        %v5592 = vmul.f32 %v4560, %v5447
        %v5593 = vmul.f32 %v4561, %v5447
        %v5594 = vmul.f32 %v4562, %v5447
        %v5595 = vmul.f32 %v4563, %v5447
        %v5596 = vmul.f32 %v4564, %v5447
        %v5597 = vmul.f32 %v4565, %v5447
        %v5598 = vmul.f32 %v4566, %v5447
        %v5599 = vmul.f32 %v4567, %v5447
        %v5600 = vmul.f32 %v4568, %v5447
        %v5601 = vmul.f32 %v4569, %v5447
        %v5602 = vmul.f32 %v4570, %v5447
        %v5603 = vmul.f32 %v4571, %v5447
        %v5604 = vmul.f32 %v4572, %v5447
        %v5605 = vmul.f32 %v4573, %v5447
        %v5606 = vmul.f32 %v4574, %v5447
        %v5607 = vmul.f32 %v4575, %v5447
        %v5608 = vmul.f32 %v4576, %v5447
        %v5609 = vmul.f32 %v4577, %v5447
        %v5610 = vmul.f32 %v4578, %v5447
        %v5611 = vmul.f32 %v4579, %v5447
        %v5612 = vmul.f32 %v4580, %v5447
        %v5613 = vmul.f32 %v4581, %v5447
        %v5614 = vmul.f32 %v4582, %v5447
        %v5615 = vmul.f32 %v4583, %v5447
        %v5616 = vmul.f32 %v4584, %v5447
        %v5617 = vmul.f32 %v4585, %v5447
        %v5618 = vmul.f32 %v4586, %v5447
        %v5619 = vmul.f32 %v4587, %v5447
        %v5620 = vmul.f32 %v4588, %v5447
        %v5621 = vmul.f32 %v4589, %v5447
        %v5622 = vmul.f32 %v4590, %v5447
        %v5623 = vmul.f32 %v4591, %v5447
        %v5624 = vmul.f32 %v4592, %v5447
        %v5625 = vmul.f32 %v4593, %v5447
        %v5626 = vmul.f32 %v4594, %v5447
        %v5627 = vmul.f32 %v4595, %v5447
        %v5628 = vmul.f32 %v4596, %v5447
        %v5629 = vmul.f32 %v4597, %v5447
        %v5630 = vmul.f32 %v4598, %v5447
        %v5631 = vmul.f32 %v4599, %v5447
        %v5632 = vmul.f32 %v4600, %v5447
        %v5633 = vmul.f32 %v4601, %v5447
        %v5634 = vmul.f32 %v4602, %v5447
        %v5635 = vmul.f32 %v4603, %v5447
        %v5636 = vmul.f32 %v4604, %v5447
        %v5637 = vmul.f32 %v4605, %v5447
        %v5638 = vmul.f32 %v4606, %v5447
        %v5639 = vmul.f32 %v4607, %v5447
        %v5640 = vmul.f32 %v4608, %v5447
        %v5641 = vmul.f32 %v4609, %v5447
        %v5642 = vmul.f32 %v4610, %v5447
        %v5643 = vmul.f32 %v4611, %v5447
        %v5644 = vmul.f32 %v4612, %v5447
        %v5645 = vmul.f32 %v4613, %v5447
        %v5646 = vmul.f32 %v4614, %v5447
        %v5647 = vmul.f32 %v4615, %v5447
        %v5648 = vmul.f32 %v4616, %v5447
        %v5649 = vmul.f32 %v4617, %v5447
        %v5650 = vmul.f32 %v4618, %v5447
        %v5651 = vmul.f32 %v4619, %v5447
        %v5652 = vmul.f32 %v4620, %v5447
        %v5653 = vmul.f32 %v4621, %v5447
        %v5654 = vmul.f32 %v4622, %v5447
        %v5655 = vmul.f32 %v4623, %v5447
        %v5656 = vmul.f32 %v4624, %v5447
        %v5657 = vmul.f32 %v4625, %v5447
        %v5658 = vmul.f32 %v4626, %v5447
        %v5659 = vmul.f32 %v4627, %v5447
        %v5660 = vmul.f32 %v4628, %v5447
        %v5661 = vmul.f32 %v4629, %v5447
        %v5662 = vmul.f32 %v4630, %v5447
        %v5663 = vmul.f32 %v4631, %v5447
        %v5664 = vmul.f32 %v4632, %v5447
        %v5665 = vmul.f32 %v4633, %v5447
        %v5666 = vmul.f32 %v4634, %v5447
        %v5667 = vmul.f32 %v4635, %v5447
        %v5668 = vmul.f32 %v4636, %v5447
        %v5669 = vmul.f32 %v4637, %v5447
        %v5670 = vmul.f32 %v4638, %v5447
        %v5671 = vmul.f32 %v4639, %v5447
        %v5672 = vmul.f32 %v4640, %v5447
        %v5673 = vmul.f32 %v4641, %v5447
        %v5674 = vmul.f32 %v4642, %v5447
        %v5675 = vmul.f32 %v4643, %v5447
        %v5676 = vmul.f32 %v4644, %v5447
        %v5677 = vmul.f32 %v4645, %v5447
        %v5678 = vmul.f32 %v4646, %v5447
        %v5679 = vmul.f32 %v4647, %v5447
        %v5680 = vmul.f32 %v4648, %v5447
        %v5681 = vmul.f32 %v4649, %v5447
        %v5682 = vmul.f32 %v4650, %v5447
        %v5683 = vmul.f32 %v4651, %v5447
        %v5684 = vmul.f32 %v4652, %v5447
        %v5685 = vmul.f32 %v4653, %v5447
        %v5686 = vmul.f32 %v4654, %v5447
        %v5687 = vmul.f32 %v4655, %v5447
        %v5688 = vmul.f32 %v4656, %v5447
        %v5689 = vmul.f32 %v4657, %v5447
        %v5690 = vmul.f32 %v4658, %v5447
        %v5691 = vmul.f32 %v4659, %v5447
        %v5692 = vmul.f32 %v4660, %v5447
        %v5693 = vmul.f32 %v4661, %v5447
        %v5694 = vmul.f32 %v4662, %v5447
        %v5695 = vmul.f32 %v4663, %v5447
        %v5696 = vmul.f32 %v4664, %v5447
        %v5697 = vmul.f32 %v4665, %v5447
        %v5698 = vmul.f32 %v4666, %v5447
        %v5699 = vmul.f32 %v4667, %v5447
        %v5700 = vmul.f32 %v4668, %v5447
        %v5701 = vmul.f32 %v4669, %v5447
        %v5702 = vmul.f32 %v4670, %v5447
        %v5703 = vmul.f32 %v4671, %v5447
        %v5704 = vld [vmem:[%s256] sm:$0x1]
        %v5706 = vlaneseq
        %v5707 = vshrl.u32 %v5706, 7
        %v5708 = vsub.s32 0, %v5707
        %v5709 = vrot.slane %v5704, %v5708
        %v5711 = vmul.f32 %v5448, %v5709
        %v5712 = vmul.f32 %v5449, %v5709
        %v5713 = vmul.f32 %v5450, %v5709
        %v5714 = vmul.f32 %v5451, %v5709
        %v5715 = vmul.f32 %v5452, %v5709
        %v5716 = vmul.f32 %v5453, %v5709
        %v5717 = vmul.f32 %v5454, %v5709
        %v5718 = vmul.f32 %v5455, %v5709
        %v5719 = vmul.f32 %v5456, %v5709
        %v5720 = vmul.f32 %v5457, %v5709
        %v5721 = vmul.f32 %v5458, %v5709
        %v5722 = vmul.f32 %v5459, %v5709
        %v5723 = vmul.f32 %v5460, %v5709
        %v5724 = vmul.f32 %v5461, %v5709
        %v5725 = vmul.f32 %v5462, %v5709
        %v5726 = vmul.f32 %v5463, %v5709
        %v5727 = vmul.f32 %v5464, %v5709
        %v5728 = vmul.f32 %v5465, %v5709
        %v5729 = vmul.f32 %v5466, %v5709
        %v5730 = vmul.f32 %v5467, %v5709
        %v5731 = vmul.f32 %v5468, %v5709
        %v5732 = vmul.f32 %v5469, %v5709
        %v5733 = vmul.f32 %v5470, %v5709
        %v5734 = vmul.f32 %v5471, %v5709
        %v5735 = vmul.f32 %v5472, %v5709
        %v5736 = vmul.f32 %v5473, %v5709
        %v5737 = vmul.f32 %v5474, %v5709
        %v5738 = vmul.f32 %v5475, %v5709
        %v5739 = vmul.f32 %v5476, %v5709
        %v5740 = vmul.f32 %v5477, %v5709
        %v5741 = vmul.f32 %v5478, %v5709
        %v5742 = vmul.f32 %v5479, %v5709
        %v5743 = vmul.f32 %v5480, %v5709
        %v5744 = vmul.f32 %v5481, %v5709
        %v5745 = vmul.f32 %v5482, %v5709
        %v5746 = vmul.f32 %v5483, %v5709
        %v5747 = vmul.f32 %v5484, %v5709
        %v5748 = vmul.f32 %v5485, %v5709
        %v5749 = vmul.f32 %v5486, %v5709
        %v5750 = vmul.f32 %v5487, %v5709
        %v5751 = vmul.f32 %v5488, %v5709
        %v5752 = vmul.f32 %v5489, %v5709
        %v5753 = vmul.f32 %v5490, %v5709
        %v5754 = vmul.f32 %v5491, %v5709
        %v5755 = vmul.f32 %v5492, %v5709
        %v5756 = vmul.f32 %v5493, %v5709
        %v5757 = vmul.f32 %v5494, %v5709
        %v5758 = vmul.f32 %v5495, %v5709
        %v5759 = vmul.f32 %v5496, %v5709
        %v5760 = vmul.f32 %v5497, %v5709
        %v5761 = vmul.f32 %v5498, %v5709
        %v5762 = vmul.f32 %v5499, %v5709
        %v5763 = vmul.f32 %v5500, %v5709
        %v5764 = vmul.f32 %v5501, %v5709
        %v5765 = vmul.f32 %v5502, %v5709
        %v5766 = vmul.f32 %v5503, %v5709
        %v5767 = vmul.f32 %v5504, %v5709
        %v5768 = vmul.f32 %v5505, %v5709
        %v5769 = vmul.f32 %v5506, %v5709
        %v5770 = vmul.f32 %v5507, %v5709
        %v5771 = vmul.f32 %v5508, %v5709
        %v5772 = vmul.f32 %v5509, %v5709
        %v5773 = vmul.f32 %v5510, %v5709
        %v5774 = vmul.f32 %v5511, %v5709
        %v5775 = vmul.f32 %v5512, %v5709
        %v5776 = vmul.f32 %v5513, %v5709
        %v5777 = vmul.f32 %v5514, %v5709
        %v5778 = vmul.f32 %v5515, %v5709
        %v5779 = vmul.f32 %v5516, %v5709
        %v5780 = vmul.f32 %v5517, %v5709
        %v5781 = vmul.f32 %v5518, %v5709
        %v5782 = vmul.f32 %v5519, %v5709
        %v5783 = vmul.f32 %v5520, %v5709
        %v5784 = vmul.f32 %v5521, %v5709
        %v5785 = vmul.f32 %v5522, %v5709
        %v5786 = vmul.f32 %v5523, %v5709
        %v5787 = vmul.f32 %v5524, %v5709
        %v5788 = vmul.f32 %v5525, %v5709
        %v5789 = vmul.f32 %v5526, %v5709
        %v5790 = vmul.f32 %v5527, %v5709
        %v5791 = vmul.f32 %v5528, %v5709
        %v5792 = vmul.f32 %v5529, %v5709
        %v5793 = vmul.f32 %v5530, %v5709
        %v5794 = vmul.f32 %v5531, %v5709
        %v5795 = vmul.f32 %v5532, %v5709
        %v5796 = vmul.f32 %v5533, %v5709
        %v5797 = vmul.f32 %v5534, %v5709
        %v5798 = vmul.f32 %v5535, %v5709
        %v5799 = vmul.f32 %v5536, %v5709
        %v5800 = vmul.f32 %v5537, %v5709
        %v5801 = vmul.f32 %v5538, %v5709
        %v5802 = vmul.f32 %v5539, %v5709
        %v5803 = vmul.f32 %v5540, %v5709
        %v5804 = vmul.f32 %v5541, %v5709
        %v5805 = vmul.f32 %v5542, %v5709
        %v5806 = vmul.f32 %v5543, %v5709
        %v5807 = vmul.f32 %v5544, %v5709
        %v5808 = vmul.f32 %v5545, %v5709
        %v5809 = vmul.f32 %v5546, %v5709
        %v5810 = vmul.f32 %v5547, %v5709
        %v5811 = vmul.f32 %v5548, %v5709
        %v5812 = vmul.f32 %v5549, %v5709
        %v5813 = vmul.f32 %v5550, %v5709
        %v5814 = vmul.f32 %v5551, %v5709
        %v5815 = vmul.f32 %v5552, %v5709
        %v5816 = vmul.f32 %v5553, %v5709
        %v5817 = vmul.f32 %v5554, %v5709
        %v5818 = vmul.f32 %v5555, %v5709
        %v5819 = vmul.f32 %v5556, %v5709
        %v5820 = vmul.f32 %v5557, %v5709
        %v5821 = vmul.f32 %v5558, %v5709
        %v5822 = vmul.f32 %v5559, %v5709
        %v5823 = vmul.f32 %v5560, %v5709
        %v5824 = vmul.f32 %v5561, %v5709
        %v5825 = vmul.f32 %v5562, %v5709
        %v5826 = vmul.f32 %v5563, %v5709
        %v5827 = vmul.f32 %v5564, %v5709
        %v5828 = vmul.f32 %v5565, %v5709
        %v5829 = vmul.f32 %v5566, %v5709
        %v5830 = vmul.f32 %v5567, %v5709
        %v5831 = vmul.f32 %v5568, %v5709
        %v5832 = vmul.f32 %v5569, %v5709
        %v5833 = vmul.f32 %v5570, %v5709
        %v5834 = vmul.f32 %v5571, %v5709
        %v5835 = vmul.f32 %v5572, %v5709
        %v5836 = vmul.f32 %v5573, %v5709
        %v5837 = vmul.f32 %v5574, %v5709
        %v5838 = vmul.f32 %v5575, %v5709
        %v5839 = vmul.f32 %v5576, %v5709
        %v5840 = vmul.f32 %v5577, %v5709
        %v5841 = vmul.f32 %v5578, %v5709
        %v5842 = vmul.f32 %v5579, %v5709
        %v5843 = vmul.f32 %v5580, %v5709
        %v5844 = vmul.f32 %v5581, %v5709
        %v5845 = vmul.f32 %v5582, %v5709
        %v5846 = vmul.f32 %v5583, %v5709
        %v5847 = vmul.f32 %v5584, %v5709
        %v5848 = vmul.f32 %v5585, %v5709
        %v5849 = vmul.f32 %v5586, %v5709
        %v5850 = vmul.f32 %v5587, %v5709
        %v5851 = vmul.f32 %v5588, %v5709
        %v5852 = vmul.f32 %v5589, %v5709
        %v5853 = vmul.f32 %v5590, %v5709
        %v5854 = vmul.f32 %v5591, %v5709
        %v5855 = vmul.f32 %v5592, %v5709
        %v5856 = vmul.f32 %v5593, %v5709
        %v5857 = vmul.f32 %v5594, %v5709
        %v5858 = vmul.f32 %v5595, %v5709
        %v5859 = vmul.f32 %v5596, %v5709
        %v5860 = vmul.f32 %v5597, %v5709
        %v5861 = vmul.f32 %v5598, %v5709
        %v5862 = vmul.f32 %v5599, %v5709
        %v5863 = vmul.f32 %v5600, %v5709
        %v5864 = vmul.f32 %v5601, %v5709
        %v5865 = vmul.f32 %v5602, %v5709
        %v5866 = vmul.f32 %v5603, %v5709
        %v5867 = vmul.f32 %v5604, %v5709
        %v5868 = vmul.f32 %v5605, %v5709
        %v5869 = vmul.f32 %v5606, %v5709
        %v5870 = vmul.f32 %v5607, %v5709
        %v5871 = vmul.f32 %v5608, %v5709
        %v5872 = vmul.f32 %v5609, %v5709
        %v5873 = vmul.f32 %v5610, %v5709
        %v5874 = vmul.f32 %v5611, %v5709
        %v5875 = vmul.f32 %v5612, %v5709
        %v5876 = vmul.f32 %v5613, %v5709
        %v5877 = vmul.f32 %v5614, %v5709
        %v5878 = vmul.f32 %v5615, %v5709
        %v5879 = vmul.f32 %v5616, %v5709
        %v5880 = vmul.f32 %v5617, %v5709
        %v5881 = vmul.f32 %v5618, %v5709
        %v5882 = vmul.f32 %v5619, %v5709
        %v5883 = vmul.f32 %v5620, %v5709
        %v5884 = vmul.f32 %v5621, %v5709
        %v5885 = vmul.f32 %v5622, %v5709
        %v5886 = vmul.f32 %v5623, %v5709
        %v5887 = vmul.f32 %v5624, %v5709
        %v5888 = vmul.f32 %v5625, %v5709
        %v5889 = vmul.f32 %v5626, %v5709
        %v5890 = vmul.f32 %v5627, %v5709
        %v5891 = vmul.f32 %v5628, %v5709
        %v5892 = vmul.f32 %v5629, %v5709
        %v5893 = vmul.f32 %v5630, %v5709
        %v5894 = vmul.f32 %v5631, %v5709
        %v5895 = vmul.f32 %v5632, %v5709
        %v5896 = vmul.f32 %v5633, %v5709
        %v5897 = vmul.f32 %v5634, %v5709
        %v5898 = vmul.f32 %v5635, %v5709
        %v5899 = vmul.f32 %v5636, %v5709
        %v5900 = vmul.f32 %v5637, %v5709
        %v5901 = vmul.f32 %v5638, %v5709
        %v5902 = vmul.f32 %v5639, %v5709
        %v5903 = vmul.f32 %v5640, %v5709
        %v5904 = vmul.f32 %v5641, %v5709
        %v5905 = vmul.f32 %v5642, %v5709
        %v5906 = vmul.f32 %v5643, %v5709
        %v5907 = vmul.f32 %v5644, %v5709
        %v5908 = vmul.f32 %v5645, %v5709
        %v5909 = vmul.f32 %v5646, %v5709
        %v5910 = vmul.f32 %v5647, %v5709
        %v5911 = vmul.f32 %v5648, %v5709
        %v5912 = vmul.f32 %v5649, %v5709
        %v5913 = vmul.f32 %v5650, %v5709
        %v5914 = vmul.f32 %v5651, %v5709
        %v5915 = vmul.f32 %v5652, %v5709
        %v5916 = vmul.f32 %v5653, %v5709
        %v5917 = vmul.f32 %v5654, %v5709
        %v5918 = vmul.f32 %v5655, %v5709
        %v5919 = vmul.f32 %v5656, %v5709
        %v5920 = vmul.f32 %v5657, %v5709
        %v5921 = vmul.f32 %v5658, %v5709
        %v5922 = vmul.f32 %v5659, %v5709
        %v5923 = vmul.f32 %v5660, %v5709
        %v5924 = vmul.f32 %v5661, %v5709
        %v5925 = vmul.f32 %v5662, %v5709
        %v5926 = vmul.f32 %v5663, %v5709
        %v5927 = vmul.f32 %v5664, %v5709
        %v5928 = vmul.f32 %v5665, %v5709
        %v5929 = vmul.f32 %v5666, %v5709
        %v5930 = vmul.f32 %v5667, %v5709
        %v5931 = vmul.f32 %v5668, %v5709
        %v5932 = vmul.f32 %v5669, %v5709
        %v5933 = vmul.f32 %v5670, %v5709
        %v5934 = vmul.f32 %v5671, %v5709
        %v5935 = vmul.f32 %v5672, %v5709
        %v5936 = vmul.f32 %v5673, %v5709
        %v5937 = vmul.f32 %v5674, %v5709
        %v5938 = vmul.f32 %v5675, %v5709
        %v5939 = vmul.f32 %v5676, %v5709
        %v5940 = vmul.f32 %v5677, %v5709
        %v5941 = vmul.f32 %v5678, %v5709
        %v5942 = vmul.f32 %v5679, %v5709
        %v5943 = vmul.f32 %v5680, %v5709
        %v5944 = vmul.f32 %v5681, %v5709
        %v5945 = vmul.f32 %v5682, %v5709
        %v5946 = vmul.f32 %v5683, %v5709
        %v5947 = vmul.f32 %v5684, %v5709
        %v5948 = vmul.f32 %v5685, %v5709
        %v5949 = vmul.f32 %v5686, %v5709
        %v5950 = vmul.f32 %v5687, %v5709
        %v5951 = vmul.f32 %v5688, %v5709
        %v5952 = vmul.f32 %v5689, %v5709
        %v5953 = vmul.f32 %v5690, %v5709
        %v5954 = vmul.f32 %v5691, %v5709
        %v5955 = vmul.f32 %v5692, %v5709
        %v5956 = vmul.f32 %v5693, %v5709
        %v5957 = vmul.f32 %v5694, %v5709
        %v5958 = vmul.f32 %v5695, %v5709
        %v5959 = vmul.f32 %v5696, %v5709
        %v5960 = vmul.f32 %v5697, %v5709
        %v5961 = vmul.f32 %v5698, %v5709
        %v5962 = vmul.f32 %v5699, %v5709
        %v5963 = vmul.f32 %v5700, %v5709
        %v5964 = vmul.f32 %v5701, %v5709
        %v5965 = vmul.f32 %v5702, %v5709
        %v5966 = vmul.f32 %v5703, %v5709
        %v5967 = vld [vmem:[%s259] sm:$0x1]
        %v5969 = vlaneseq
        %v5970 = vshrl.u32 %v5969, 7
        %v5971 = vsub.s32 0, %v5970
        %v5972 = vrot.slane %v5967, %v5971
        %v5974 = vadd.f32 %v5711, %v5972
        %v5975 = vadd.f32 %v5712, %v5972
        %v5976 = vadd.f32 %v5713, %v5972
        %v5977 = vadd.f32 %v5714, %v5972
        %v5978 = vadd.f32 %v5715, %v5972
        %v5979 = vadd.f32 %v5716, %v5972
        %v5980 = vadd.f32 %v5717, %v5972
        %v5981 = vadd.f32 %v5718, %v5972
        %v5982 = vadd.f32 %v5719, %v5972
        %v5983 = vadd.f32 %v5720, %v5972
        %v5984 = vadd.f32 %v5721, %v5972
        %v5985 = vadd.f32 %v5722, %v5972
        %v5986 = vadd.f32 %v5723, %v5972
        %v5987 = vadd.f32 %v5724, %v5972
        %v5988 = vadd.f32 %v5725, %v5972
        %v5989 = vadd.f32 %v5726, %v5972
        %v5990 = vadd.f32 %v5727, %v5972
        %v5991 = vadd.f32 %v5728, %v5972
        %v5992 = vadd.f32 %v5729, %v5972
        %v5993 = vadd.f32 %v5730, %v5972
        %v5994 = vadd.f32 %v5731, %v5972
        %v5995 = vadd.f32 %v5732, %v5972
        %v5996 = vadd.f32 %v5733, %v5972
        %v5997 = vadd.f32 %v5734, %v5972
        %v5998 = vadd.f32 %v5735, %v5972
        %v5999 = vadd.f32 %v5736, %v5972
        %v6000 = vadd.f32 %v5737, %v5972
        %v6001 = vadd.f32 %v5738, %v5972
        %v6002 = vadd.f32 %v5739, %v5972
        %v6003 = vadd.f32 %v5740, %v5972
        %v6004 = vadd.f32 %v5741, %v5972
        %v6005 = vadd.f32 %v5742, %v5972
        %v6006 = vadd.f32 %v5743, %v5972
        %v6007 = vadd.f32 %v5744, %v5972
        %v6008 = vadd.f32 %v5745, %v5972
        %v6009 = vadd.f32 %v5746, %v5972
        %v6010 = vadd.f32 %v5747, %v5972
        %v6011 = vadd.f32 %v5748, %v5972
        %v6012 = vadd.f32 %v5749, %v5972
        %v6013 = vadd.f32 %v5750, %v5972
        %v6014 = vadd.f32 %v5751, %v5972
        %v6015 = vadd.f32 %v5752, %v5972
        %v6016 = vadd.f32 %v5753, %v5972
        %v6017 = vadd.f32 %v5754, %v5972
        %v6018 = vadd.f32 %v5755, %v5972
        %v6019 = vadd.f32 %v5756, %v5972
        %v6020 = vadd.f32 %v5757, %v5972
        %v6021 = vadd.f32 %v5758, %v5972
        %v6022 = vadd.f32 %v5759, %v5972
        %v6023 = vadd.f32 %v5760, %v5972
        %v6024 = vadd.f32 %v5761, %v5972
        %v6025 = vadd.f32 %v5762, %v5972
        %v6026 = vadd.f32 %v5763, %v5972
        %v6027 = vadd.f32 %v5764, %v5972
        %v6028 = vadd.f32 %v5765, %v5972
        %v6029 = vadd.f32 %v5766, %v5972
        %v6030 = vadd.f32 %v5767, %v5972
        %v6031 = vadd.f32 %v5768, %v5972
        %v6032 = vadd.f32 %v5769, %v5972
        %v6033 = vadd.f32 %v5770, %v5972
        %v6034 = vadd.f32 %v5771, %v5972
        %v6035 = vadd.f32 %v5772, %v5972
        %v6036 = vadd.f32 %v5773, %v5972
        %v6037 = vadd.f32 %v5774, %v5972
        %v6038 = vadd.f32 %v5775, %v5972
        %v6039 = vadd.f32 %v5776, %v5972
        %v6040 = vadd.f32 %v5777, %v5972
        %v6041 = vadd.f32 %v5778, %v5972
        %v6042 = vadd.f32 %v5779, %v5972
        %v6043 = vadd.f32 %v5780, %v5972
        %v6044 = vadd.f32 %v5781, %v5972
        %v6045 = vadd.f32 %v5782, %v5972
        %v6046 = vadd.f32 %v5783, %v5972
        %v6047 = vadd.f32 %v5784, %v5972
        %v6048 = vadd.f32 %v5785, %v5972
        %v6049 = vadd.f32 %v5786, %v5972
        %v6050 = vadd.f32 %v5787, %v5972
        %v6051 = vadd.f32 %v5788, %v5972
        %v6052 = vadd.f32 %v5789, %v5972
        %v6053 = vadd.f32 %v5790, %v5972
        %v6054 = vadd.f32 %v5791, %v5972
        %v6055 = vadd.f32 %v5792, %v5972
        %v6056 = vadd.f32 %v5793, %v5972
        %v6057 = vadd.f32 %v5794, %v5972
        %v6058 = vadd.f32 %v5795, %v5972
        %v6059 = vadd.f32 %v5796, %v5972
        %v6060 = vadd.f32 %v5797, %v5972
        %v6061 = vadd.f32 %v5798, %v5972
        %v6062 = vadd.f32 %v5799, %v5972
        %v6063 = vadd.f32 %v5800, %v5972
        %v6064 = vadd.f32 %v5801, %v5972
        %v6065 = vadd.f32 %v5802, %v5972
        %v6066 = vadd.f32 %v5803, %v5972
        %v6067 = vadd.f32 %v5804, %v5972
        %v6068 = vadd.f32 %v5805, %v5972
        %v6069 = vadd.f32 %v5806, %v5972
        %v6070 = vadd.f32 %v5807, %v5972
        %v6071 = vadd.f32 %v5808, %v5972
        %v6072 = vadd.f32 %v5809, %v5972
        %v6073 = vadd.f32 %v5810, %v5972
        %v6074 = vadd.f32 %v5811, %v5972
        %v6075 = vadd.f32 %v5812, %v5972
        %v6076 = vadd.f32 %v5813, %v5972
        %v6077 = vadd.f32 %v5814, %v5972
        %v6078 = vadd.f32 %v5815, %v5972
        %v6079 = vadd.f32 %v5816, %v5972
        %v6080 = vadd.f32 %v5817, %v5972
        %v6081 = vadd.f32 %v5818, %v5972
        %v6082 = vadd.f32 %v5819, %v5972
        %v6083 = vadd.f32 %v5820, %v5972
        %v6084 = vadd.f32 %v5821, %v5972
        %v6085 = vadd.f32 %v5822, %v5972
        %v6086 = vadd.f32 %v5823, %v5972
        %v6087 = vadd.f32 %v5824, %v5972
        %v6088 = vadd.f32 %v5825, %v5972
        %v6089 = vadd.f32 %v5826, %v5972
        %v6090 = vadd.f32 %v5827, %v5972
        %v6091 = vadd.f32 %v5828, %v5972
        %v6092 = vadd.f32 %v5829, %v5972
        %v6093 = vadd.f32 %v5830, %v5972
        %v6094 = vadd.f32 %v5831, %v5972
        %v6095 = vadd.f32 %v5832, %v5972
        %v6096 = vadd.f32 %v5833, %v5972
        %v6097 = vadd.f32 %v5834, %v5972
        %v6098 = vadd.f32 %v5835, %v5972
        %v6099 = vadd.f32 %v5836, %v5972
        %v6100 = vadd.f32 %v5837, %v5972
        %v6101 = vadd.f32 %v5838, %v5972
        %v6102 = vadd.f32 %v5839, %v5972
        %v6103 = vadd.f32 %v5840, %v5972
        %v6104 = vadd.f32 %v5841, %v5972
        %v6105 = vadd.f32 %v5842, %v5972
        %v6106 = vadd.f32 %v5843, %v5972
        %v6107 = vadd.f32 %v5844, %v5972
        %v6108 = vadd.f32 %v5845, %v5972
        %v6109 = vadd.f32 %v5846, %v5972
        %v6110 = vadd.f32 %v5847, %v5972
        %v6111 = vadd.f32 %v5848, %v5972
        %v6112 = vadd.f32 %v5849, %v5972
        %v6113 = vadd.f32 %v5850, %v5972
        %v6114 = vadd.f32 %v5851, %v5972
        %v6115 = vadd.f32 %v5852, %v5972
        %v6116 = vadd.f32 %v5853, %v5972
        %v6117 = vadd.f32 %v5854, %v5972
        %v6118 = vadd.f32 %v5855, %v5972
        %v6119 = vadd.f32 %v5856, %v5972
        %v6120 = vadd.f32 %v5857, %v5972
        %v6121 = vadd.f32 %v5858, %v5972
        %v6122 = vadd.f32 %v5859, %v5972
        %v6123 = vadd.f32 %v5860, %v5972
        %v6124 = vadd.f32 %v5861, %v5972
        %v6125 = vadd.f32 %v5862, %v5972
        %v6126 = vadd.f32 %v5863, %v5972
        %v6127 = vadd.f32 %v5864, %v5972
        %v6128 = vadd.f32 %v5865, %v5972
        %v6129 = vadd.f32 %v5866, %v5972
        %v6130 = vadd.f32 %v5867, %v5972
        %v6131 = vadd.f32 %v5868, %v5972
        %v6132 = vadd.f32 %v5869, %v5972
        %v6133 = vadd.f32 %v5870, %v5972
        %v6134 = vadd.f32 %v5871, %v5972
        %v6135 = vadd.f32 %v5872, %v5972
        %v6136 = vadd.f32 %v5873, %v5972
        %v6137 = vadd.f32 %v5874, %v5972
        %v6138 = vadd.f32 %v5875, %v5972
        %v6139 = vadd.f32 %v5876, %v5972
        %v6140 = vadd.f32 %v5877, %v5972
        %v6141 = vadd.f32 %v5878, %v5972
        %v6142 = vadd.f32 %v5879, %v5972
        %v6143 = vadd.f32 %v5880, %v5972
        %v6144 = vadd.f32 %v5881, %v5972
        %v6145 = vadd.f32 %v5882, %v5972
        %v6146 = vadd.f32 %v5883, %v5972
        %v6147 = vadd.f32 %v5884, %v5972
        %v6148 = vadd.f32 %v5885, %v5972
        %v6149 = vadd.f32 %v5886, %v5972
        %v6150 = vadd.f32 %v5887, %v5972
        %v6151 = vadd.f32 %v5888, %v5972
        %v6152 = vadd.f32 %v5889, %v5972
        %v6153 = vadd.f32 %v5890, %v5972
        %v6154 = vadd.f32 %v5891, %v5972
        %v6155 = vadd.f32 %v5892, %v5972
        %v6156 = vadd.f32 %v5893, %v5972
        %v6157 = vadd.f32 %v5894, %v5972
        %v6158 = vadd.f32 %v5895, %v5972
        %v6159 = vadd.f32 %v5896, %v5972
        %v6160 = vadd.f32 %v5897, %v5972
        %v6161 = vadd.f32 %v5898, %v5972
        %v6162 = vadd.f32 %v5899, %v5972
        %v6163 = vadd.f32 %v5900, %v5972
        %v6164 = vadd.f32 %v5901, %v5972
        %v6165 = vadd.f32 %v5902, %v5972
        %v6166 = vadd.f32 %v5903, %v5972
        %v6167 = vadd.f32 %v5904, %v5972
        %v6168 = vadd.f32 %v5905, %v5972
        %v6169 = vadd.f32 %v5906, %v5972
        %v6170 = vadd.f32 %v5907, %v5972
        %v6171 = vadd.f32 %v5908, %v5972
        %v6172 = vadd.f32 %v5909, %v5972
        %v6173 = vadd.f32 %v5910, %v5972
        %v6174 = vadd.f32 %v5911, %v5972
        %v6175 = vadd.f32 %v5912, %v5972
        %v6176 = vadd.f32 %v5913, %v5972
        %v6177 = vadd.f32 %v5914, %v5972
        %v6178 = vadd.f32 %v5915, %v5972
        %v6179 = vadd.f32 %v5916, %v5972
        %v6180 = vadd.f32 %v5917, %v5972
        %v6181 = vadd.f32 %v5918, %v5972
        %v6182 = vadd.f32 %v5919, %v5972
        %v6183 = vadd.f32 %v5920, %v5972
        %v6184 = vadd.f32 %v5921, %v5972
        %v6185 = vadd.f32 %v5922, %v5972
        %v6186 = vadd.f32 %v5923, %v5972
        %v6187 = vadd.f32 %v5924, %v5972
        %v6188 = vadd.f32 %v5925, %v5972
        %v6189 = vadd.f32 %v5926, %v5972
        %v6190 = vadd.f32 %v5927, %v5972
        %v6191 = vadd.f32 %v5928, %v5972
        %v6192 = vadd.f32 %v5929, %v5972
        %v6193 = vadd.f32 %v5930, %v5972
        %v6194 = vadd.f32 %v5931, %v5972
        %v6195 = vadd.f32 %v5932, %v5972
        %v6196 = vadd.f32 %v5933, %v5972
        %v6197 = vadd.f32 %v5934, %v5972
        %v6198 = vadd.f32 %v5935, %v5972
        %v6199 = vadd.f32 %v5936, %v5972
        %v6200 = vadd.f32 %v5937, %v5972
        %v6201 = vadd.f32 %v5938, %v5972
        %v6202 = vadd.f32 %v5939, %v5972
        %v6203 = vadd.f32 %v5940, %v5972
        %v6204 = vadd.f32 %v5941, %v5972
        %v6205 = vadd.f32 %v5942, %v5972
        %v6206 = vadd.f32 %v5943, %v5972
        %v6207 = vadd.f32 %v5944, %v5972
        %v6208 = vadd.f32 %v5945, %v5972
        %v6209 = vadd.f32 %v5946, %v5972
        %v6210 = vadd.f32 %v5947, %v5972
        %v6211 = vadd.f32 %v5948, %v5972
        %v6212 = vadd.f32 %v5949, %v5972
        %v6213 = vadd.f32 %v5950, %v5972
        %v6214 = vadd.f32 %v5951, %v5972
        %v6215 = vadd.f32 %v5952, %v5972
        %v6216 = vadd.f32 %v5953, %v5972
        %v6217 = vadd.f32 %v5954, %v5972
        %v6218 = vadd.f32 %v5955, %v5972
        %v6219 = vadd.f32 %v5956, %v5972
        %v6220 = vadd.f32 %v5957, %v5972
        %v6221 = vadd.f32 %v5958, %v5972
        %v6222 = vadd.f32 %v5959, %v5972
        %v6223 = vadd.f32 %v5960, %v5972
        %v6224 = vadd.f32 %v5961, %v5972
        %v6225 = vadd.f32 %v5962, %v5972
        %v6226 = vadd.f32 %v5963, %v5972
        %v6227 = vadd.f32 %v5964, %v5972
        %v6228 = vadd.f32 %v5965, %v5972
        %v6229 = vadd.f32 %v5966, %v5972
        %v6230 = vmax.f32 %v5974, 0.0
        %v6231 = vmax.f32 %v5975, 0.0
        %v6232 = vmax.f32 %v5976, 0.0
        %v6233 = vmax.f32 %v5977, 0.0
        %v6234 = vmax.f32 %v5978, 0.0
        %v6235 = vmax.f32 %v5979, 0.0
        %v6236 = vmax.f32 %v5980, 0.0
        %v6237 = vmax.f32 %v5981, 0.0
        %v6238 = vmax.f32 %v5982, 0.0
        %v6239 = vmax.f32 %v5983, 0.0
        %v6240 = vmax.f32 %v5984, 0.0
        %v6241 = vmax.f32 %v5985, 0.0
        %v6242 = vmax.f32 %v5986, 0.0
        %v6243 = vmax.f32 %v5987, 0.0
        %v6244 = vmax.f32 %v5988, 0.0
        %v6245 = vmax.f32 %v5989, 0.0
        %v6246 = vmax.f32 %v5990, 0.0
        %v6247 = vmax.f32 %v5991, 0.0
        %v6248 = vmax.f32 %v5992, 0.0
        %v6249 = vmax.f32 %v5993, 0.0
        %v6250 = vmax.f32 %v5994, 0.0
        %v6251 = vmax.f32 %v5995, 0.0
        %v6252 = vmax.f32 %v5996, 0.0
        %v6253 = vmax.f32 %v5997, 0.0
        %v6254 = vmax.f32 %v5998, 0.0
        %v6255 = vmax.f32 %v5999, 0.0
        %v6256 = vmax.f32 %v6000, 0.0
        %v6257 = vmax.f32 %v6001, 0.0
        %v6258 = vmax.f32 %v6002, 0.0
        %v6259 = vmax.f32 %v6003, 0.0
        %v6260 = vmax.f32 %v6004, 0.0
        %v6261 = vmax.f32 %v6005, 0.0
        %v6262 = vmax.f32 %v6006, 0.0
        %v6263 = vmax.f32 %v6007, 0.0
        %v6264 = vmax.f32 %v6008, 0.0
        %v6265 = vmax.f32 %v6009, 0.0
        %v6266 = vmax.f32 %v6010, 0.0
        %v6267 = vmax.f32 %v6011, 0.0
        %v6268 = vmax.f32 %v6012, 0.0
        %v6269 = vmax.f32 %v6013, 0.0
        %v6270 = vmax.f32 %v6014, 0.0
        %v6271 = vmax.f32 %v6015, 0.0
        %v6272 = vmax.f32 %v6016, 0.0
        %v6273 = vmax.f32 %v6017, 0.0
        %v6274 = vmax.f32 %v6018, 0.0
        %v6275 = vmax.f32 %v6019, 0.0
        %v6276 = vmax.f32 %v6020, 0.0
        %v6277 = vmax.f32 %v6021, 0.0
        %v6278 = vmax.f32 %v6022, 0.0
        %v6279 = vmax.f32 %v6023, 0.0
        %v6280 = vmax.f32 %v6024, 0.0
        %v6281 = vmax.f32 %v6025, 0.0
        %v6282 = vmax.f32 %v6026, 0.0
        %v6283 = vmax.f32 %v6027, 0.0
        %v6284 = vmax.f32 %v6028, 0.0
        %v6285 = vmax.f32 %v6029, 0.0
        %v6286 = vmax.f32 %v6030, 0.0
        %v6287 = vmax.f32 %v6031, 0.0
        %v6288 = vmax.f32 %v6032, 0.0
        %v6289 = vmax.f32 %v6033, 0.0
        %v6290 = vmax.f32 %v6034, 0.0
        %v6291 = vmax.f32 %v6035, 0.0
        %v6292 = vmax.f32 %v6036, 0.0
        %v6293 = vmax.f32 %v6037, 0.0
        %v6294 = vmax.f32 %v6038, 0.0
        %v6295 = vmax.f32 %v6039, 0.0
        %v6296 = vmax.f32 %v6040, 0.0
        %v6297 = vmax.f32 %v6041, 0.0
        %v6298 = vmax.f32 %v6042, 0.0
        %v6299 = vmax.f32 %v6043, 0.0
        %v6300 = vmax.f32 %v6044, 0.0
        %v6301 = vmax.f32 %v6045, 0.0
        %v6302 = vmax.f32 %v6046, 0.0
        %v6303 = vmax.f32 %v6047, 0.0
        %v6304 = vmax.f32 %v6048, 0.0
        %v6305 = vmax.f32 %v6049, 0.0
        %v6306 = vmax.f32 %v6050, 0.0
        %v6307 = vmax.f32 %v6051, 0.0
        %v6308 = vmax.f32 %v6052, 0.0
        %v6309 = vmax.f32 %v6053, 0.0
        %v6310 = vmax.f32 %v6054, 0.0
        %v6311 = vmax.f32 %v6055, 0.0
        %v6312 = vmax.f32 %v6056, 0.0
        %v6313 = vmax.f32 %v6057, 0.0
        %v6314 = vmax.f32 %v6058, 0.0
        %v6315 = vmax.f32 %v6059, 0.0
        %v6316 = vmax.f32 %v6060, 0.0
        %v6317 = vmax.f32 %v6061, 0.0
        %v6318 = vmax.f32 %v6062, 0.0
        %v6319 = vmax.f32 %v6063, 0.0
        %v6320 = vmax.f32 %v6064, 0.0
        %v6321 = vmax.f32 %v6065, 0.0
        %v6322 = vmax.f32 %v6066, 0.0
        %v6323 = vmax.f32 %v6067, 0.0
        %v6324 = vmax.f32 %v6068, 0.0
        %v6325 = vmax.f32 %v6069, 0.0
        %v6326 = vmax.f32 %v6070, 0.0
        %v6327 = vmax.f32 %v6071, 0.0
        %v6328 = vmax.f32 %v6072, 0.0
        %v6329 = vmax.f32 %v6073, 0.0
        %v6330 = vmax.f32 %v6074, 0.0
        %v6331 = vmax.f32 %v6075, 0.0
        %v6332 = vmax.f32 %v6076, 0.0
        %v6333 = vmax.f32 %v6077, 0.0
        %v6334 = vmax.f32 %v6078, 0.0
        %v6335 = vmax.f32 %v6079, 0.0
        %v6336 = vmax.f32 %v6080, 0.0
        %v6337 = vmax.f32 %v6081, 0.0
        %v6338 = vmax.f32 %v6082, 0.0
        %v6339 = vmax.f32 %v6083, 0.0
        %v6340 = vmax.f32 %v6084, 0.0
        %v6341 = vmax.f32 %v6085, 0.0
        %v6342 = vmax.f32 %v6086, 0.0
        %v6343 = vmax.f32 %v6087, 0.0
        %v6344 = vmax.f32 %v6088, 0.0
        %v6345 = vmax.f32 %v6089, 0.0
        %v6346 = vmax.f32 %v6090, 0.0
        %v6347 = vmax.f32 %v6091, 0.0
        %v6348 = vmax.f32 %v6092, 0.0
        %v6349 = vmax.f32 %v6093, 0.0
        %v6350 = vmax.f32 %v6094, 0.0
        %v6351 = vmax.f32 %v6095, 0.0
        %v6352 = vmax.f32 %v6096, 0.0
        %v6353 = vmax.f32 %v6097, 0.0
        %v6354 = vmax.f32 %v6098, 0.0
        %v6355 = vmax.f32 %v6099, 0.0
        %v6356 = vmax.f32 %v6100, 0.0
        %v6357 = vmax.f32 %v6101, 0.0
        %v6358 = vmax.f32 %v6102, 0.0
        %v6359 = vmax.f32 %v6103, 0.0
        %v6360 = vmax.f32 %v6104, 0.0
        %v6361 = vmax.f32 %v6105, 0.0
        %v6362 = vmax.f32 %v6106, 0.0
        %v6363 = vmax.f32 %v6107, 0.0
        %v6364 = vmax.f32 %v6108, 0.0
        %v6365 = vmax.f32 %v6109, 0.0
        %v6366 = vmax.f32 %v6110, 0.0
        %v6367 = vmax.f32 %v6111, 0.0
        %v6368 = vmax.f32 %v6112, 0.0
        %v6369 = vmax.f32 %v6113, 0.0
        %v6370 = vmax.f32 %v6114, 0.0
        %v6371 = vmax.f32 %v6115, 0.0
        %v6372 = vmax.f32 %v6116, 0.0
        %v6373 = vmax.f32 %v6117, 0.0
        %v6374 = vmax.f32 %v6118, 0.0
        %v6375 = vmax.f32 %v6119, 0.0
        %v6376 = vmax.f32 %v6120, 0.0
        %v6377 = vmax.f32 %v6121, 0.0
        %v6378 = vmax.f32 %v6122, 0.0
        %v6379 = vmax.f32 %v6123, 0.0
        %v6380 = vmax.f32 %v6124, 0.0
        %v6381 = vmax.f32 %v6125, 0.0
        %v6382 = vmax.f32 %v6126, 0.0
        %v6383 = vmax.f32 %v6127, 0.0
        %v6384 = vmax.f32 %v6128, 0.0
        %v6385 = vmax.f32 %v6129, 0.0
        %v6386 = vmax.f32 %v6130, 0.0
        %v6387 = vmax.f32 %v6131, 0.0
        %v6388 = vmax.f32 %v6132, 0.0
        %v6389 = vmax.f32 %v6133, 0.0
        %v6390 = vmax.f32 %v6134, 0.0
        %v6391 = vmax.f32 %v6135, 0.0
        %v6392 = vmax.f32 %v6136, 0.0
        %v6393 = vmax.f32 %v6137, 0.0
        %v6394 = vmax.f32 %v6138, 0.0
        %v6395 = vmax.f32 %v6139, 0.0
        %v6396 = vmax.f32 %v6140, 0.0
        %v6397 = vmax.f32 %v6141, 0.0
        %v6398 = vmax.f32 %v6142, 0.0
        %v6399 = vmax.f32 %v6143, 0.0
        %v6400 = vmax.f32 %v6144, 0.0
        %v6401 = vmax.f32 %v6145, 0.0
        %v6402 = vmax.f32 %v6146, 0.0
        %v6403 = vmax.f32 %v6147, 0.0
        %v6404 = vmax.f32 %v6148, 0.0
        %v6405 = vmax.f32 %v6149, 0.0
        %v6406 = vmax.f32 %v6150, 0.0
        %v6407 = vmax.f32 %v6151, 0.0
        %v6408 = vmax.f32 %v6152, 0.0
        %v6409 = vmax.f32 %v6153, 0.0
        %v6410 = vmax.f32 %v6154, 0.0
        %v6411 = vmax.f32 %v6155, 0.0
        %v6412 = vmax.f32 %v6156, 0.0
        %v6413 = vmax.f32 %v6157, 0.0
        %v6414 = vmax.f32 %v6158, 0.0
        %v6415 = vmax.f32 %v6159, 0.0
        %v6416 = vmax.f32 %v6160, 0.0
        %v6417 = vmax.f32 %v6161, 0.0
        %v6418 = vmax.f32 %v6162, 0.0
        %v6419 = vmax.f32 %v6163, 0.0
        %v6420 = vmax.f32 %v6164, 0.0
        %v6421 = vmax.f32 %v6165, 0.0
        %v6422 = vmax.f32 %v6166, 0.0
        %v6423 = vmax.f32 %v6167, 0.0
        %v6424 = vmax.f32 %v6168, 0.0
        %v6425 = vmax.f32 %v6169, 0.0
        %v6426 = vmax.f32 %v6170, 0.0
        %v6427 = vmax.f32 %v6171, 0.0
        %v6428 = vmax.f32 %v6172, 0.0
        %v6429 = vmax.f32 %v6173, 0.0
        %v6430 = vmax.f32 %v6174, 0.0
        %v6431 = vmax.f32 %v6175, 0.0
        %v6432 = vmax.f32 %v6176, 0.0
        %v6433 = vmax.f32 %v6177, 0.0
        %v6434 = vmax.f32 %v6178, 0.0
        %v6435 = vmax.f32 %v6179, 0.0
        %v6436 = vmax.f32 %v6180, 0.0
        %v6437 = vmax.f32 %v6181, 0.0
        %v6438 = vmax.f32 %v6182, 0.0
        %v6439 = vmax.f32 %v6183, 0.0
        %v6440 = vmax.f32 %v6184, 0.0
        %v6441 = vmax.f32 %v6185, 0.0
        %v6442 = vmax.f32 %v6186, 0.0
        %v6443 = vmax.f32 %v6187, 0.0
        %v6444 = vmax.f32 %v6188, 0.0
        %v6445 = vmax.f32 %v6189, 0.0
        %v6446 = vmax.f32 %v6190, 0.0
        %v6447 = vmax.f32 %v6191, 0.0
        %v6448 = vmax.f32 %v6192, 0.0
        %v6449 = vmax.f32 %v6193, 0.0
        %v6450 = vmax.f32 %v6194, 0.0
        %v6451 = vmax.f32 %v6195, 0.0
        %v6452 = vmax.f32 %v6196, 0.0
        %v6453 = vmax.f32 %v6197, 0.0
        %v6454 = vmax.f32 %v6198, 0.0
        %v6455 = vmax.f32 %v6199, 0.0
        %v6456 = vmax.f32 %v6200, 0.0
        %v6457 = vmax.f32 %v6201, 0.0
        %v6458 = vmax.f32 %v6202, 0.0
        %v6459 = vmax.f32 %v6203, 0.0
        %v6460 = vmax.f32 %v6204, 0.0
        %v6461 = vmax.f32 %v6205, 0.0
        %v6462 = vmax.f32 %v6206, 0.0
        %v6463 = vmax.f32 %v6207, 0.0
        %v6464 = vmax.f32 %v6208, 0.0
        %v6465 = vmax.f32 %v6209, 0.0
        %v6466 = vmax.f32 %v6210, 0.0
        %v6467 = vmax.f32 %v6211, 0.0
        %v6468 = vmax.f32 %v6212, 0.0
        %v6469 = vmax.f32 %v6213, 0.0
        %v6470 = vmax.f32 %v6214, 0.0
        %v6471 = vmax.f32 %v6215, 0.0
        %v6472 = vmax.f32 %v6216, 0.0
        %v6473 = vmax.f32 %v6217, 0.0
        %v6474 = vmax.f32 %v6218, 0.0
        %v6475 = vmax.f32 %v6219, 0.0
        %v6476 = vmax.f32 %v6220, 0.0
        %v6477 = vmax.f32 %v6221, 0.0
        %v6478 = vmax.f32 %v6222, 0.0
        %v6479 = vmax.f32 %v6223, 0.0
        %v6480 = vmax.f32 %v6224, 0.0
        %v6481 = vmax.f32 %v6225, 0.0
        %v6482 = vmax.f32 %v6226, 0.0
        %v6483 = vmax.f32 %v6227, 0.0
        %v6484 = vmax.f32 %v6228, 0.0
        %v6485 = vmax.f32 %v6229, 0.0
        %v6486 = vpack.c.bf16 %v6231, %v6230
        %v6487 = vpack.c.bf16 %v6233, %v6232
        %v6488 = vpack.c.bf16 %v6235, %v6234
        %v6489 = vpack.c.bf16 %v6237, %v6236
        %v6490 = vpack.c.bf16 %v6239, %v6238
        %v6491 = vpack.c.bf16 %v6241, %v6240
        %v6492 = vpack.c.bf16 %v6243, %v6242
        %v6493 = vpack.c.bf16 %v6245, %v6244
        %v6494 = vpack.c.bf16 %v6247, %v6246
        %v6495 = vpack.c.bf16 %v6249, %v6248
        %v6496 = vpack.c.bf16 %v6251, %v6250
        %v6497 = vpack.c.bf16 %v6253, %v6252
        %v6498 = vpack.c.bf16 %v6255, %v6254
        %v6499 = vpack.c.bf16 %v6257, %v6256
        %v6500 = vpack.c.bf16 %v6259, %v6258
        %v6501 = vpack.c.bf16 %v6261, %v6260
        %v6502 = vpack.c.bf16 %v6263, %v6262
        %v6503 = vpack.c.bf16 %v6265, %v6264
        %v6504 = vpack.c.bf16 %v6267, %v6266
        %v6505 = vpack.c.bf16 %v6269, %v6268
        %v6506 = vpack.c.bf16 %v6271, %v6270
        %v6507 = vpack.c.bf16 %v6273, %v6272
        %v6508 = vpack.c.bf16 %v6275, %v6274
        %v6509 = vpack.c.bf16 %v6277, %v6276
        %v6510 = vpack.c.bf16 %v6279, %v6278
        %v6511 = vpack.c.bf16 %v6281, %v6280
        %v6512 = vpack.c.bf16 %v6283, %v6282
        %v6513 = vpack.c.bf16 %v6285, %v6284
        %v6514 = vpack.c.bf16 %v6287, %v6286
        %v6515 = vpack.c.bf16 %v6289, %v6288
        %v6516 = vpack.c.bf16 %v6291, %v6290
        %v6517 = vpack.c.bf16 %v6293, %v6292
        %v6518 = vpack.c.bf16 %v6295, %v6294
        %v6519 = vpack.c.bf16 %v6297, %v6296
        %v6520 = vpack.c.bf16 %v6299, %v6298
        %v6521 = vpack.c.bf16 %v6301, %v6300
        %v6522 = vpack.c.bf16 %v6303, %v6302
        %v6523 = vpack.c.bf16 %v6305, %v6304
        %v6524 = vpack.c.bf16 %v6307, %v6306
        %v6525 = vpack.c.bf16 %v6309, %v6308
        %v6526 = vpack.c.bf16 %v6311, %v6310
        %v6527 = vpack.c.bf16 %v6313, %v6312
        %v6528 = vpack.c.bf16 %v6315, %v6314
        %v6529 = vpack.c.bf16 %v6317, %v6316
        %v6530 = vpack.c.bf16 %v6319, %v6318
        %v6531 = vpack.c.bf16 %v6321, %v6320
        %v6532 = vpack.c.bf16 %v6323, %v6322
        %v6533 = vpack.c.bf16 %v6325, %v6324
        %v6534 = vpack.c.bf16 %v6327, %v6326
        %v6535 = vpack.c.bf16 %v6329, %v6328
        %v6536 = vpack.c.bf16 %v6331, %v6330
        %v6537 = vpack.c.bf16 %v6333, %v6332
        %v6538 = vpack.c.bf16 %v6335, %v6334
        %v6539 = vpack.c.bf16 %v6337, %v6336
        %v6540 = vpack.c.bf16 %v6339, %v6338
        %v6541 = vpack.c.bf16 %v6341, %v6340
        %v6542 = vpack.c.bf16 %v6343, %v6342
        %v6543 = vpack.c.bf16 %v6345, %v6344
        %v6544 = vpack.c.bf16 %v6347, %v6346
        %v6545 = vpack.c.bf16 %v6349, %v6348
        %v6546 = vpack.c.bf16 %v6351, %v6350
        %v6547 = vpack.c.bf16 %v6353, %v6352
        %v6548 = vpack.c.bf16 %v6355, %v6354
        %v6549 = vpack.c.bf16 %v6357, %v6356
        %v6550 = vpack.c.bf16 %v6359, %v6358
        %v6551 = vpack.c.bf16 %v6361, %v6360
        %v6552 = vpack.c.bf16 %v6363, %v6362
        %v6553 = vpack.c.bf16 %v6365, %v6364
        %v6554 = vpack.c.bf16 %v6367, %v6366
        %v6555 = vpack.c.bf16 %v6369, %v6368
        %v6556 = vpack.c.bf16 %v6371, %v6370
        %v6557 = vpack.c.bf16 %v6373, %v6372
        %v6558 = vpack.c.bf16 %v6375, %v6374
        %v6559 = vpack.c.bf16 %v6377, %v6376
        %v6560 = vpack.c.bf16 %v6379, %v6378
        %v6561 = vpack.c.bf16 %v6381, %v6380
        %v6562 = vpack.c.bf16 %v6383, %v6382
        %v6563 = vpack.c.bf16 %v6385, %v6384
        %v6564 = vpack.c.bf16 %v6387, %v6386
        %v6565 = vpack.c.bf16 %v6389, %v6388
        %v6566 = vpack.c.bf16 %v6391, %v6390
        %v6567 = vpack.c.bf16 %v6393, %v6392
        %v6568 = vpack.c.bf16 %v6395, %v6394
        %v6569 = vpack.c.bf16 %v6397, %v6396
        %v6570 = vpack.c.bf16 %v6399, %v6398
        %v6571 = vpack.c.bf16 %v6401, %v6400
        %v6572 = vpack.c.bf16 %v6403, %v6402
        %v6573 = vpack.c.bf16 %v6405, %v6404
        %v6574 = vpack.c.bf16 %v6407, %v6406
        %v6575 = vpack.c.bf16 %v6409, %v6408
        %v6576 = vpack.c.bf16 %v6411, %v6410
        %v6577 = vpack.c.bf16 %v6413, %v6412
        %v6578 = vpack.c.bf16 %v6415, %v6414
        %v6579 = vpack.c.bf16 %v6417, %v6416
        %v6580 = vpack.c.bf16 %v6419, %v6418
        %v6581 = vpack.c.bf16 %v6421, %v6420
        %v6582 = vpack.c.bf16 %v6423, %v6422
        %v6583 = vpack.c.bf16 %v6425, %v6424
        %v6584 = vpack.c.bf16 %v6427, %v6426
        %v6585 = vpack.c.bf16 %v6429, %v6428
        %v6586 = vpack.c.bf16 %v6431, %v6430
        %v6587 = vpack.c.bf16 %v6433, %v6432
        %v6588 = vpack.c.bf16 %v6435, %v6434
        %v6589 = vpack.c.bf16 %v6437, %v6436
        %v6590 = vpack.c.bf16 %v6439, %v6438
        %v6591 = vpack.c.bf16 %v6441, %v6440
        %v6592 = vpack.c.bf16 %v6443, %v6442
        %v6593 = vpack.c.bf16 %v6445, %v6444
        %v6594 = vpack.c.bf16 %v6447, %v6446
        %v6595 = vpack.c.bf16 %v6449, %v6448
        %v6596 = vpack.c.bf16 %v6451, %v6450
        %v6597 = vpack.c.bf16 %v6453, %v6452
        %v6598 = vpack.c.bf16 %v6455, %v6454
        %v6599 = vpack.c.bf16 %v6457, %v6456
        %v6600 = vpack.c.bf16 %v6459, %v6458
        %v6601 = vpack.c.bf16 %v6461, %v6460
        %v6602 = vpack.c.bf16 %v6463, %v6462
        %v6603 = vpack.c.bf16 %v6465, %v6464
        %v6604 = vpack.c.bf16 %v6467, %v6466
        %v6605 = vpack.c.bf16 %v6469, %v6468
        %v6606 = vpack.c.bf16 %v6471, %v6470
        %v6607 = vpack.c.bf16 %v6473, %v6472
        %v6608 = vpack.c.bf16 %v6475, %v6474
        %v6609 = vpack.c.bf16 %v6477, %v6476
        %v6610 = vpack.c.bf16 %v6479, %v6478
        %v6611 = vpack.c.bf16 %v6481, %v6480
        %v6612 = vpack.c.bf16 %v6483, %v6482
        %v6613 = vpack.c.bf16 %v6485, %v6484
        %v6742 = vunpack.c.l.b16 %v6486
        %v6743 = vunpack.c.h.b16 %v6486
        %v6744 = vunpack.c.l.b16 %v6487
        %v6745 = vunpack.c.h.b16 %v6487
        %v6746 = vunpack.c.l.b16 %v6488
        %v6747 = vunpack.c.h.b16 %v6488
        %v6748 = vunpack.c.l.b16 %v6489
        %v6749 = vunpack.c.h.b16 %v6489
        %v6750 = vunpack.c.l.b16 %v6490
        %v6751 = vunpack.c.h.b16 %v6490
        %v6752 = vunpack.c.l.b16 %v6491
        %v6753 = vunpack.c.h.b16 %v6491
        %v6754 = vunpack.c.l.b16 %v6492
        %v6755 = vunpack.c.h.b16 %v6492
        %v6756 = vunpack.c.l.b16 %v6493
        %v6757 = vunpack.c.h.b16 %v6493
        %v6758 = vunpack.c.l.b16 %v6494
        %v6759 = vunpack.c.h.b16 %v6494
        %v6760 = vunpack.c.l.b16 %v6495
        %v6761 = vunpack.c.h.b16 %v6495
        %v6762 = vunpack.c.l.b16 %v6496
        %v6763 = vunpack.c.h.b16 %v6496
        %v6764 = vunpack.c.l.b16 %v6497
        %v6765 = vunpack.c.h.b16 %v6497
        %v6766 = vunpack.c.l.b16 %v6498
        %v6767 = vunpack.c.h.b16 %v6498
        %v6768 = vunpack.c.l.b16 %v6499
        %v6769 = vunpack.c.h.b16 %v6499
        %v6770 = vunpack.c.l.b16 %v6500
        %v6771 = vunpack.c.h.b16 %v6500
        %v6772 = vunpack.c.l.b16 %v6501
        %v6773 = vunpack.c.h.b16 %v6501
        %v6774 = vunpack.c.l.b16 %v6502
        %v6775 = vunpack.c.h.b16 %v6502
        %v6776 = vunpack.c.l.b16 %v6503
        %v6777 = vunpack.c.h.b16 %v6503
        %v6778 = vunpack.c.l.b16 %v6504
        %v6779 = vunpack.c.h.b16 %v6504
        %v6780 = vunpack.c.l.b16 %v6505
        %v6781 = vunpack.c.h.b16 %v6505
        %v6782 = vunpack.c.l.b16 %v6506
        %v6783 = vunpack.c.h.b16 %v6506
        %v6784 = vunpack.c.l.b16 %v6507
        %v6785 = vunpack.c.h.b16 %v6507
        %v6786 = vunpack.c.l.b16 %v6508
        %v6787 = vunpack.c.h.b16 %v6508
        %v6788 = vunpack.c.l.b16 %v6509
        %v6789 = vunpack.c.h.b16 %v6509
        %v6790 = vunpack.c.l.b16 %v6510
        %v6791 = vunpack.c.h.b16 %v6510
        %v6792 = vunpack.c.l.b16 %v6511
        %v6793 = vunpack.c.h.b16 %v6511
        %v6794 = vunpack.c.l.b16 %v6512
        %v6795 = vunpack.c.h.b16 %v6512
        %v6796 = vunpack.c.l.b16 %v6513
        %v6797 = vunpack.c.h.b16 %v6513
        %v6798 = vunpack.c.l.b16 %v6514
        %v6799 = vunpack.c.h.b16 %v6514
        %v6800 = vunpack.c.l.b16 %v6515
        %v6801 = vunpack.c.h.b16 %v6515
        %v6802 = vunpack.c.l.b16 %v6516
        %v6803 = vunpack.c.h.b16 %v6516
        %v6804 = vunpack.c.l.b16 %v6517
        %v6805 = vunpack.c.h.b16 %v6517
        %v6806 = vunpack.c.l.b16 %v6518
        %v6807 = vunpack.c.h.b16 %v6518
        %v6808 = vunpack.c.l.b16 %v6519
        %v6809 = vunpack.c.h.b16 %v6519
        %v6810 = vunpack.c.l.b16 %v6520
        %v6811 = vunpack.c.h.b16 %v6520
        %v6812 = vunpack.c.l.b16 %v6521
        %v6813 = vunpack.c.h.b16 %v6521
        %v6814 = vunpack.c.l.b16 %v6522
        %v6815 = vunpack.c.h.b16 %v6522
        %v6816 = vunpack.c.l.b16 %v6523
        %v6817 = vunpack.c.h.b16 %v6523
        %v6818 = vunpack.c.l.b16 %v6524
        %v6819 = vunpack.c.h.b16 %v6524
        %v6820 = vunpack.c.l.b16 %v6525
        %v6821 = vunpack.c.h.b16 %v6525
        %v6822 = vunpack.c.l.b16 %v6526
        %v6823 = vunpack.c.h.b16 %v6526
        %v6824 = vunpack.c.l.b16 %v6527
        %v6825 = vunpack.c.h.b16 %v6527
        %v6826 = vunpack.c.l.b16 %v6528
        %v6827 = vunpack.c.h.b16 %v6528
        %v6828 = vunpack.c.l.b16 %v6529
        %v6829 = vunpack.c.h.b16 %v6529
        %v6830 = vunpack.c.l.b16 %v6530
        %v6831 = vunpack.c.h.b16 %v6530
        %v6832 = vunpack.c.l.b16 %v6531
        %v6833 = vunpack.c.h.b16 %v6531
        %v6834 = vunpack.c.l.b16 %v6532
        %v6835 = vunpack.c.h.b16 %v6532
        %v6836 = vunpack.c.l.b16 %v6533
        %v6837 = vunpack.c.h.b16 %v6533
        %v6838 = vunpack.c.l.b16 %v6534
        %v6839 = vunpack.c.h.b16 %v6534
        %v6840 = vunpack.c.l.b16 %v6535
        %v6841 = vunpack.c.h.b16 %v6535
        %v6842 = vunpack.c.l.b16 %v6536
        %v6843 = vunpack.c.h.b16 %v6536
        %v6844 = vunpack.c.l.b16 %v6537
        %v6845 = vunpack.c.h.b16 %v6537
        %v6846 = vunpack.c.l.b16 %v6538
        %v6847 = vunpack.c.h.b16 %v6538
        %v6848 = vunpack.c.l.b16 %v6539
        %v6849 = vunpack.c.h.b16 %v6539
        %v6850 = vunpack.c.l.b16 %v6540
        %v6851 = vunpack.c.h.b16 %v6540
        %v6852 = vunpack.c.l.b16 %v6541
        %v6853 = vunpack.c.h.b16 %v6541
        %v6854 = vunpack.c.l.b16 %v6542
        %v6855 = vunpack.c.h.b16 %v6542
        %v6856 = vunpack.c.l.b16 %v6543
        %v6857 = vunpack.c.h.b16 %v6543
        %v6858 = vunpack.c.l.b16 %v6544
        %v6859 = vunpack.c.h.b16 %v6544
        %v6860 = vunpack.c.l.b16 %v6545
        %v6861 = vunpack.c.h.b16 %v6545
        %v6862 = vunpack.c.l.b16 %v6546
        %v6863 = vunpack.c.h.b16 %v6546
        %v6864 = vunpack.c.l.b16 %v6547
        %v6865 = vunpack.c.h.b16 %v6547
        %v6866 = vunpack.c.l.b16 %v6548
        %v6867 = vunpack.c.h.b16 %v6548
        %v6868 = vunpack.c.l.b16 %v6549
        %v6869 = vunpack.c.h.b16 %v6549
        %v6870 = vunpack.c.l.b16 %v6550
        %v6871 = vunpack.c.h.b16 %v6550
        %v6872 = vunpack.c.l.b16 %v6551
        %v6873 = vunpack.c.h.b16 %v6551
        %v6874 = vunpack.c.l.b16 %v6552
        %v6875 = vunpack.c.h.b16 %v6552
        %v6876 = vunpack.c.l.b16 %v6553
        %v6877 = vunpack.c.h.b16 %v6553
        %v6878 = vunpack.c.l.b16 %v6554
        %v6879 = vunpack.c.h.b16 %v6554
        %v6880 = vunpack.c.l.b16 %v6555
        %v6881 = vunpack.c.h.b16 %v6555
        %v6882 = vunpack.c.l.b16 %v6556
        %v6883 = vunpack.c.h.b16 %v6556
        %v6884 = vunpack.c.l.b16 %v6557
        %v6885 = vunpack.c.h.b16 %v6557
        %v6886 = vunpack.c.l.b16 %v6558
        %v6887 = vunpack.c.h.b16 %v6558
        %v6888 = vunpack.c.l.b16 %v6559
        %v6889 = vunpack.c.h.b16 %v6559
        %v6890 = vunpack.c.l.b16 %v6560
        %v6891 = vunpack.c.h.b16 %v6560
        %v6892 = vunpack.c.l.b16 %v6561
        %v6893 = vunpack.c.h.b16 %v6561
        %v6894 = vunpack.c.l.b16 %v6562
        %v6895 = vunpack.c.h.b16 %v6562
        %v6896 = vunpack.c.l.b16 %v6563
        %v6897 = vunpack.c.h.b16 %v6563
        %v6898 = vunpack.c.l.b16 %v6564
        %v6899 = vunpack.c.h.b16 %v6564
        %v6900 = vunpack.c.l.b16 %v6565
        %v6901 = vunpack.c.h.b16 %v6565
        %v6902 = vunpack.c.l.b16 %v6566
        %v6903 = vunpack.c.h.b16 %v6566
        %v6904 = vunpack.c.l.b16 %v6567
        %v6905 = vunpack.c.h.b16 %v6567
        %v6906 = vunpack.c.l.b16 %v6568
        %v6907 = vunpack.c.h.b16 %v6568
        %v6908 = vunpack.c.l.b16 %v6569
        %v6909 = vunpack.c.h.b16 %v6569
        %v6910 = vunpack.c.l.b16 %v6570
        %v6911 = vunpack.c.h.b16 %v6570
        %v6912 = vunpack.c.l.b16 %v6571
        %v6913 = vunpack.c.h.b16 %v6571
        %v6914 = vunpack.c.l.b16 %v6572
        %v6915 = vunpack.c.h.b16 %v6572
        %v6916 = vunpack.c.l.b16 %v6573
        %v6917 = vunpack.c.h.b16 %v6573
        %v6918 = vunpack.c.l.b16 %v6574
        %v6919 = vunpack.c.h.b16 %v6574
        %v6920 = vunpack.c.l.b16 %v6575
        %v6921 = vunpack.c.h.b16 %v6575
        %v6922 = vunpack.c.l.b16 %v6576
        %v6923 = vunpack.c.h.b16 %v6576
        %v6924 = vunpack.c.l.b16 %v6577
        %v6925 = vunpack.c.h.b16 %v6577
        %v6926 = vunpack.c.l.b16 %v6578
        %v6927 = vunpack.c.h.b16 %v6578
        %v6928 = vunpack.c.l.b16 %v6579
        %v6929 = vunpack.c.h.b16 %v6579
        %v6930 = vunpack.c.l.b16 %v6580
        %v6931 = vunpack.c.h.b16 %v6580
        %v6932 = vunpack.c.l.b16 %v6581
        %v6933 = vunpack.c.h.b16 %v6581
        %v6934 = vunpack.c.l.b16 %v6582
        %v6935 = vunpack.c.h.b16 %v6582
        %v6936 = vunpack.c.l.b16 %v6583
        %v6937 = vunpack.c.h.b16 %v6583
        %v6938 = vunpack.c.l.b16 %v6584
        %v6939 = vunpack.c.h.b16 %v6584
        %v6940 = vunpack.c.l.b16 %v6585
        %v6941 = vunpack.c.h.b16 %v6585
        %v6942 = vunpack.c.l.b16 %v6586
        %v6943 = vunpack.c.h.b16 %v6586
        %v6944 = vunpack.c.l.b16 %v6587
        %v6945 = vunpack.c.h.b16 %v6587
        %v6946 = vunpack.c.l.b16 %v6588
        %v6947 = vunpack.c.h.b16 %v6588
        %v6948 = vunpack.c.l.b16 %v6589
        %v6949 = vunpack.c.h.b16 %v6589
        %v6950 = vunpack.c.l.b16 %v6590
        %v6951 = vunpack.c.h.b16 %v6590
        %v6952 = vunpack.c.l.b16 %v6591
        %v6953 = vunpack.c.h.b16 %v6591
        %v6954 = vunpack.c.l.b16 %v6592
        %v6955 = vunpack.c.h.b16 %v6592
        %v6956 = vunpack.c.l.b16 %v6593
        %v6957 = vunpack.c.h.b16 %v6593
        %v6958 = vunpack.c.l.b16 %v6594
        %v6959 = vunpack.c.h.b16 %v6594
        %v6960 = vunpack.c.l.b16 %v6595
        %v6961 = vunpack.c.h.b16 %v6595
        %v6962 = vunpack.c.l.b16 %v6596
        %v6963 = vunpack.c.h.b16 %v6596
        %v6964 = vunpack.c.l.b16 %v6597
        %v6965 = vunpack.c.h.b16 %v6597
        %v6966 = vunpack.c.l.b16 %v6598
        %v6967 = vunpack.c.h.b16 %v6598
        %v6968 = vunpack.c.l.b16 %v6599
        %v6969 = vunpack.c.h.b16 %v6599
        %v6970 = vunpack.c.l.b16 %v6600
        %v6971 = vunpack.c.h.b16 %v6600
        %v6972 = vunpack.c.l.b16 %v6601
        %v6973 = vunpack.c.h.b16 %v6601
        %v6974 = vunpack.c.l.b16 %v6602
        %v6975 = vunpack.c.h.b16 %v6602
        %v6976 = vunpack.c.l.b16 %v6603
        %v6977 = vunpack.c.h.b16 %v6603
        %v6978 = vunpack.c.l.b16 %v6604
        %v6979 = vunpack.c.h.b16 %v6604
        %v6980 = vunpack.c.l.b16 %v6605
        %v6981 = vunpack.c.h.b16 %v6605
        %v6982 = vunpack.c.l.b16 %v6606
        %v6983 = vunpack.c.h.b16 %v6606
        %v6984 = vunpack.c.l.b16 %v6607
        %v6985 = vunpack.c.h.b16 %v6607
        %v6986 = vunpack.c.l.b16 %v6608
        %v6987 = vunpack.c.h.b16 %v6608
        %v6988 = vunpack.c.l.b16 %v6609
        %v6989 = vunpack.c.h.b16 %v6609
        %v6990 = vunpack.c.l.b16 %v6610
        %v6991 = vunpack.c.h.b16 %v6610
        %v6992 = vunpack.c.l.b16 %v6611
        %v6993 = vunpack.c.h.b16 %v6611
        %v6994 = vunpack.c.l.b16 %v6612
        %v6995 = vunpack.c.h.b16 %v6612
        %v6996 = vunpack.c.l.b16 %v6613
        %v6997 = vunpack.c.h.b16 %v6613
        %v6998 = vpack.c.b16 %v6742, %v6742
        %v6999 = vpack.c.b16 %v6743, %v6743
        %v7000 = vpack.c.b16 %v6744, %v6744
        %v7001 = vpack.c.b16 %v6745, %v6745
        %v7002 = vpack.c.b16 %v6746, %v6746
        %v7003 = vpack.c.b16 %v6747, %v6747
        %v7004 = vpack.c.b16 %v6748, %v6748
        %v7005 = vpack.c.b16 %v6749, %v6749
        %v7006 = vpack.c.b16 %v6750, %v6750
        %v7007 = vpack.c.b16 %v6751, %v6751
        %v7008 = vpack.c.b16 %v6752, %v6752
        %v7009 = vpack.c.b16 %v6753, %v6753
        %v7010 = vpack.c.b16 %v6754, %v6754
        %v7011 = vpack.c.b16 %v6755, %v6755
        %v7012 = vpack.c.b16 %v6756, %v6756
        %v7013 = vpack.c.b16 %v6757, %v6757
        %v7014 = vpack.c.b16 %v6758, %v6758
        %v7015 = vpack.c.b16 %v6759, %v6759
        %v7016 = vpack.c.b16 %v6760, %v6760
        %v7017 = vpack.c.b16 %v6761, %v6761
        %v7018 = vpack.c.b16 %v6762, %v6762
        %v7019 = vpack.c.b16 %v6763, %v6763
        %v7020 = vpack.c.b16 %v6764, %v6764
        %v7021 = vpack.c.b16 %v6765, %v6765
        %v7022 = vpack.c.b16 %v6766, %v6766
        %v7023 = vpack.c.b16 %v6767, %v6767
        %v7024 = vpack.c.b16 %v6768, %v6768
        %v7025 = vpack.c.b16 %v6769, %v6769
        %v7026 = vpack.c.b16 %v6770, %v6770
        %v7027 = vpack.c.b16 %v6771, %v6771
        %v7028 = vpack.c.b16 %v6772, %v6772
        %v7029 = vpack.c.b16 %v6773, %v6773
        %v7030 = vpack.c.b16 %v6774, %v6774
        %v7031 = vpack.c.b16 %v6775, %v6775
        %v7032 = vpack.c.b16 %v6776, %v6776
        %v7033 = vpack.c.b16 %v6777, %v6777
        %v7034 = vpack.c.b16 %v6778, %v6778
        %v7035 = vpack.c.b16 %v6779, %v6779
        %v7036 = vpack.c.b16 %v6780, %v6780
        %v7037 = vpack.c.b16 %v6781, %v6781
        %v7038 = vpack.c.b16 %v6782, %v6782
        %v7039 = vpack.c.b16 %v6783, %v6783
        %v7040 = vpack.c.b16 %v6784, %v6784
        %v7041 = vpack.c.b16 %v6785, %v6785
        %v7042 = vpack.c.b16 %v6786, %v6786
        %v7043 = vpack.c.b16 %v6787, %v6787
        %v7044 = vpack.c.b16 %v6788, %v6788
        %v7045 = vpack.c.b16 %v6789, %v6789
        %v7046 = vpack.c.b16 %v6790, %v6790
        %v7047 = vpack.c.b16 %v6791, %v6791
        %v7048 = vpack.c.b16 %v6792, %v6792
        %v7049 = vpack.c.b16 %v6793, %v6793
        %v7050 = vpack.c.b16 %v6794, %v6794
        %v7051 = vpack.c.b16 %v6795, %v6795
        %v7052 = vpack.c.b16 %v6796, %v6796
        %v7053 = vpack.c.b16 %v6797, %v6797
        %v7054 = vpack.c.b16 %v6798, %v6798
        %v7055 = vpack.c.b16 %v6799, %v6799
        %v7056 = vpack.c.b16 %v6800, %v6800
        %v7057 = vpack.c.b16 %v6801, %v6801
        %v7058 = vpack.c.b16 %v6802, %v6802
        %v7059 = vpack.c.b16 %v6803, %v6803
        %v7060 = vpack.c.b16 %v6804, %v6804
        %v7061 = vpack.c.b16 %v6805, %v6805
        %v7062 = vpack.c.b16 %v6806, %v6806
        %v7063 = vpack.c.b16 %v6807, %v6807
        %v7064 = vpack.c.b16 %v6808, %v6808
        %v7065 = vpack.c.b16 %v6809, %v6809
        %v7066 = vpack.c.b16 %v6810, %v6810
        %v7067 = vpack.c.b16 %v6811, %v6811
        %v7068 = vpack.c.b16 %v6812, %v6812
        %v7069 = vpack.c.b16 %v6813, %v6813
        %v7070 = vpack.c.b16 %v6814, %v6814
        %v7071 = vpack.c.b16 %v6815, %v6815
        %v7072 = vpack.c.b16 %v6816, %v6816
        %v7073 = vpack.c.b16 %v6817, %v6817
        %v7074 = vpack.c.b16 %v6818, %v6818
        %v7075 = vpack.c.b16 %v6819, %v6819
        %v7076 = vpack.c.b16 %v6820, %v6820
        %v7077 = vpack.c.b16 %v6821, %v6821
        %v7078 = vpack.c.b16 %v6822, %v6822
        %v7079 = vpack.c.b16 %v6823, %v6823
        %v7080 = vpack.c.b16 %v6824, %v6824
        %v7081 = vpack.c.b16 %v6825, %v6825
        %v7082 = vpack.c.b16 %v6826, %v6826
        %v7083 = vpack.c.b16 %v6827, %v6827
        %v7084 = vpack.c.b16 %v6828, %v6828
        %v7085 = vpack.c.b16 %v6829, %v6829
        %v7086 = vpack.c.b16 %v6830, %v6830
        %v7087 = vpack.c.b16 %v6831, %v6831
        %v7088 = vpack.c.b16 %v6832, %v6832
        %v7089 = vpack.c.b16 %v6833, %v6833
        %v7090 = vpack.c.b16 %v6834, %v6834
        %v7091 = vpack.c.b16 %v6835, %v6835
        %v7092 = vpack.c.b16 %v6836, %v6836
        %v7093 = vpack.c.b16 %v6837, %v6837
        %v7094 = vpack.c.b16 %v6838, %v6838
        %v7095 = vpack.c.b16 %v6839, %v6839
        %v7096 = vpack.c.b16 %v6840, %v6840
        %v7097 = vpack.c.b16 %v6841, %v6841
        %v7098 = vpack.c.b16 %v6842, %v6842
        %v7099 = vpack.c.b16 %v6843, %v6843
        %v7100 = vpack.c.b16 %v6844, %v6844
        %v7101 = vpack.c.b16 %v6845, %v6845
        %v7102 = vpack.c.b16 %v6846, %v6846
        %v7103 = vpack.c.b16 %v6847, %v6847
        %v7104 = vpack.c.b16 %v6848, %v6848
        %v7105 = vpack.c.b16 %v6849, %v6849
        %v7106 = vpack.c.b16 %v6850, %v6850
        %v7107 = vpack.c.b16 %v6851, %v6851
        %v7108 = vpack.c.b16 %v6852, %v6852
        %v7109 = vpack.c.b16 %v6853, %v6853
        %v7110 = vpack.c.b16 %v6854, %v6854
        %v7111 = vpack.c.b16 %v6855, %v6855
        %v7112 = vpack.c.b16 %v6856, %v6856
        %v7113 = vpack.c.b16 %v6857, %v6857
        %v7114 = vpack.c.b16 %v6858, %v6858
        %v7115 = vpack.c.b16 %v6859, %v6859
        %v7116 = vpack.c.b16 %v6860, %v6860
        %v7117 = vpack.c.b16 %v6861, %v6861
        %v7118 = vpack.c.b16 %v6862, %v6862
        %v7119 = vpack.c.b16 %v6863, %v6863
        %v7120 = vpack.c.b16 %v6864, %v6864
        %v7121 = vpack.c.b16 %v6865, %v6865
        %v7122 = vpack.c.b16 %v6866, %v6866
        %v7123 = vpack.c.b16 %v6867, %v6867
        %v7124 = vpack.c.b16 %v6868, %v6868
        %v7125 = vpack.c.b16 %v6869, %v6869
        %v7126 = vpack.c.b16 %v6870, %v6870
        %v7127 = vpack.c.b16 %v6871, %v6871
        %v7128 = vpack.c.b16 %v6872, %v6872
        %v7129 = vpack.c.b16 %v6873, %v6873
        %v7130 = vpack.c.b16 %v6874, %v6874
        %v7131 = vpack.c.b16 %v6875, %v6875
        %v7132 = vpack.c.b16 %v6876, %v6876
        %v7133 = vpack.c.b16 %v6877, %v6877
        %v7134 = vpack.c.b16 %v6878, %v6878
        %v7135 = vpack.c.b16 %v6879, %v6879
        %v7136 = vpack.c.b16 %v6880, %v6880
        %v7137 = vpack.c.b16 %v6881, %v6881
        %v7138 = vpack.c.b16 %v6882, %v6882
        %v7139 = vpack.c.b16 %v6883, %v6883
        %v7140 = vpack.c.b16 %v6884, %v6884
        %v7141 = vpack.c.b16 %v6885, %v6885
        %v7142 = vpack.c.b16 %v6886, %v6886
        %v7143 = vpack.c.b16 %v6887, %v6887
        %v7144 = vpack.c.b16 %v6888, %v6888
        %v7145 = vpack.c.b16 %v6889, %v6889
        %v7146 = vpack.c.b16 %v6890, %v6890
        %v7147 = vpack.c.b16 %v6891, %v6891
        %v7148 = vpack.c.b16 %v6892, %v6892
        %v7149 = vpack.c.b16 %v6893, %v6893
        %v7150 = vpack.c.b16 %v6894, %v6894
        %v7151 = vpack.c.b16 %v6895, %v6895
        %v7152 = vpack.c.b16 %v6896, %v6896
        %v7153 = vpack.c.b16 %v6897, %v6897
        %v7154 = vpack.c.b16 %v6898, %v6898
        %v7155 = vpack.c.b16 %v6899, %v6899
        %v7156 = vpack.c.b16 %v6900, %v6900
        %v7157 = vpack.c.b16 %v6901, %v6901
        %v7158 = vpack.c.b16 %v6902, %v6902
        %v7159 = vpack.c.b16 %v6903, %v6903
        %v7160 = vpack.c.b16 %v6904, %v6904
        %v7161 = vpack.c.b16 %v6905, %v6905
        %v7162 = vpack.c.b16 %v6906, %v6906
        %v7163 = vpack.c.b16 %v6907, %v6907
        %v7164 = vpack.c.b16 %v6908, %v6908
        %v7165 = vpack.c.b16 %v6909, %v6909
        %v7166 = vpack.c.b16 %v6910, %v6910
        %v7167 = vpack.c.b16 %v6911, %v6911
        %v7168 = vpack.c.b16 %v6912, %v6912
        %v7169 = vpack.c.b16 %v6913, %v6913
        %v7170 = vpack.c.b16 %v6914, %v6914
        %v7171 = vpack.c.b16 %v6915, %v6915
        %v7172 = vpack.c.b16 %v6916, %v6916
        %v7173 = vpack.c.b16 %v6917, %v6917
        %v7174 = vpack.c.b16 %v6918, %v6918
        %v7175 = vpack.c.b16 %v6919, %v6919
        %v7176 = vpack.c.b16 %v6920, %v6920
        %v7177 = vpack.c.b16 %v6921, %v6921
        %v7178 = vpack.c.b16 %v6922, %v6922
        %v7179 = vpack.c.b16 %v6923, %v6923
        %v7180 = vpack.c.b16 %v6924, %v6924
        %v7181 = vpack.c.b16 %v6925, %v6925
        %v7182 = vpack.c.b16 %v6926, %v6926
        %v7183 = vpack.c.b16 %v6927, %v6927
        %v7184 = vpack.c.b16 %v6928, %v6928
        %v7185 = vpack.c.b16 %v6929, %v6929
        %v7186 = vpack.c.b16 %v6930, %v6930
        %v7187 = vpack.c.b16 %v6931, %v6931
        %v7188 = vpack.c.b16 %v6932, %v6932
        %v7189 = vpack.c.b16 %v6933, %v6933
        %v7190 = vpack.c.b16 %v6934, %v6934
        %v7191 = vpack.c.b16 %v6935, %v6935
        %v7192 = vpack.c.b16 %v6936, %v6936
        %v7193 = vpack.c.b16 %v6937, %v6937
        %v7194 = vpack.c.b16 %v6938, %v6938
        %v7195 = vpack.c.b16 %v6939, %v6939
        %v7196 = vpack.c.b16 %v6940, %v6940
        %v7197 = vpack.c.b16 %v6941, %v6941
        %v7198 = vpack.c.b16 %v6942, %v6942
        %v7199 = vpack.c.b16 %v6943, %v6943
        %v7200 = vpack.c.b16 %v6944, %v6944
        %v7201 = vpack.c.b16 %v6945, %v6945
        %v7202 = vpack.c.b16 %v6946, %v6946
        %v7203 = vpack.c.b16 %v6947, %v6947
        %v7204 = vpack.c.b16 %v6948, %v6948
        %v7205 = vpack.c.b16 %v6949, %v6949
        %v7206 = vpack.c.b16 %v6950, %v6950
        %v7207 = vpack.c.b16 %v6951, %v6951
        %v7208 = vpack.c.b16 %v6952, %v6952
        %v7209 = vpack.c.b16 %v6953, %v6953
        %v7210 = vpack.c.b16 %v6954, %v6954
        %v7211 = vpack.c.b16 %v6955, %v6955
        %v7212 = vpack.c.b16 %v6956, %v6956
        %v7213 = vpack.c.b16 %v6957, %v6957
        %v7214 = vpack.c.b16 %v6958, %v6958
        %v7215 = vpack.c.b16 %v6959, %v6959
        %v7216 = vpack.c.b16 %v6960, %v6960
        %v7217 = vpack.c.b16 %v6961, %v6961
        %v7218 = vpack.c.b16 %v6962, %v6962
        %v7219 = vpack.c.b16 %v6963, %v6963
        %v7220 = vpack.c.b16 %v6964, %v6964
        %v7221 = vpack.c.b16 %v6965, %v6965
        %v7222 = vpack.c.b16 %v6966, %v6966
        %v7223 = vpack.c.b16 %v6967, %v6967
        %v7224 = vpack.c.b16 %v6968, %v6968
        %v7225 = vpack.c.b16 %v6969, %v6969
        %v7226 = vpack.c.b16 %v6970, %v6970
        %v7227 = vpack.c.b16 %v6971, %v6971
        %v7228 = vpack.c.b16 %v6972, %v6972
        %v7229 = vpack.c.b16 %v6973, %v6973
        %v7230 = vpack.c.b16 %v6974, %v6974
        %v7231 = vpack.c.b16 %v6975, %v6975
        %v7232 = vpack.c.b16 %v6976, %v6976
        %v7233 = vpack.c.b16 %v6977, %v6977
        %v7234 = vpack.c.b16 %v6978, %v6978
        %v7235 = vpack.c.b16 %v6979, %v6979
        %v7236 = vpack.c.b16 %v6980, %v6980
        %v7237 = vpack.c.b16 %v6981, %v6981
        %v7238 = vpack.c.b16 %v6982, %v6982
        %v7239 = vpack.c.b16 %v6983, %v6983
        %v7240 = vpack.c.b16 %v6984, %v6984
        %v7241 = vpack.c.b16 %v6985, %v6985
        %v7242 = vpack.c.b16 %v6986, %v6986
        %v7243 = vpack.c.b16 %v6987, %v6987
        %v7244 = vpack.c.b16 %v6988, %v6988
        %v7245 = vpack.c.b16 %v6989, %v6989
        %v7246 = vpack.c.b16 %v6990, %v6990
        %v7247 = vpack.c.b16 %v6991, %v6991
        %v7248 = vpack.c.b16 %v6992, %v6992
        %v7249 = vpack.c.b16 %v6993, %v6993
        %v7250 = vpack.c.b16 %v6994, %v6994
        %v7251 = vpack.c.b16 %v6995, %v6995
        %v7252 = vpack.c.b16 %v6996, %v6996
        %v7253 = vpack.c.b16 %v6997, %v6997
        %vm7510 = vcmask 519168
        %7511 = vst.msk [vmem:[%s263] sm:$0xf] %vm7510, %v6998
        %7512 = vst.msk [vmem:[%s263 + $0x4] sm:$0xf] %vm7510, %v6999
        %7513 = vst.msk [vmem:[%s263 + $0x8] sm:$0xf] %vm7510, %v7000
        %7514 = vst.msk [vmem:[%s263 + $0xc] sm:$0xf] %vm7510, %v7001
        %7515 = vst.msk [vmem:[%s263 + $0x10] sm:$0xf] %vm7510, %v7002
        %7516 = vst.msk [vmem:[%s263 + $0x14] sm:$0xf] %vm7510, %v7003
        %7517 = vst.msk [vmem:[%s263 + $0x18] sm:$0xf] %vm7510, %v7004
        %7518 = vst.msk [vmem:[%s263 + $0x1c] sm:$0xf] %vm7510, %v7005
        %7519 = vst.msk [vmem:[%s263 + $0x20] sm:$0xf] %vm7510, %v7006
        %7520 = vst.msk [vmem:[%s263 + $0x24] sm:$0xf] %vm7510, %v7007
        %7521 = vst.msk [vmem:[%s263 + $0x28] sm:$0xf] %vm7510, %v7008
        %7522 = vst.msk [vmem:[%s263 + $0x2c] sm:$0xf] %vm7510, %v7009
        %7523 = vst.msk [vmem:[%s263 + $0x30] sm:$0xf] %vm7510, %v7010
        %7524 = vst.msk [vmem:[%s263 + $0x34] sm:$0xf] %vm7510, %v7011
        %7525 = vst.msk [vmem:[%s263 + $0x38] sm:$0xf] %vm7510, %v7012
        %7526 = vst.msk [vmem:[%s263 + $0x3c] sm:$0xf] %vm7510, %v7013
        %7527 = vst.msk [vmem:[%s263 + $0x40] sm:$0xf] %vm7510, %v7014
        %7528 = vst.msk [vmem:[%s263 + $0x44] sm:$0xf] %vm7510, %v7015
        %7529 = vst.msk [vmem:[%s263 + $0x48] sm:$0xf] %vm7510, %v7016
        %7530 = vst.msk [vmem:[%s263 + $0x4c] sm:$0xf] %vm7510, %v7017
        %7531 = vst.msk [vmem:[%s263 + $0x50] sm:$0xf] %vm7510, %v7018
        %7532 = vst.msk [vmem:[%s263 + $0x54] sm:$0xf] %vm7510, %v7019
        %7533 = vst.msk [vmem:[%s263 + $0x58] sm:$0xf] %vm7510, %v7020
        %7534 = vst.msk [vmem:[%s263 + $0x5c] sm:$0xf] %vm7510, %v7021
        %7535 = vst.msk [vmem:[%s263 + $0x60] sm:$0xf] %vm7510, %v7022
        %7536 = vst.msk [vmem:[%s263 + $0x64] sm:$0xf] %vm7510, %v7023
        %7537 = vst.msk [vmem:[%s263 + $0x68] sm:$0xf] %vm7510, %v7024
        %7538 = vst.msk [vmem:[%s263 + $0x6c] sm:$0xf] %vm7510, %v7025
        %7539 = vst.msk [vmem:[%s263 + $0x70] sm:$0xf] %vm7510, %v7026
        %7540 = vst.msk [vmem:[%s263 + $0x74] sm:$0xf] %vm7510, %v7027
        %7541 = vst.msk [vmem:[%s263 + $0x78] sm:$0xf] %vm7510, %v7028
        %7542 = vst.msk [vmem:[%s263 + $0x7c] sm:$0xf] %vm7510, %v7029
        %7543 = vst.msk [vmem:[%s263 + $0x80] sm:$0xf] %vm7510, %v7030
        %7544 = vst.msk [vmem:[%s263 + $0x84] sm:$0xf] %vm7510, %v7031
        %7545 = vst.msk [vmem:[%s263 + $0x88] sm:$0xf] %vm7510, %v7032
        %7546 = vst.msk [vmem:[%s263 + $0x8c] sm:$0xf] %vm7510, %v7033
        %7547 = vst.msk [vmem:[%s263 + $0x90] sm:$0xf] %vm7510, %v7034
        %7548 = vst.msk [vmem:[%s263 + $0x94] sm:$0xf] %vm7510, %v7035
        %7549 = vst.msk [vmem:[%s263 + $0x98] sm:$0xf] %vm7510, %v7036
        %7550 = vst.msk [vmem:[%s263 + $0x9c] sm:$0xf] %vm7510, %v7037
        %7551 = vst.msk [vmem:[%s263 + $0xa0] sm:$0xf] %vm7510, %v7038
        %7552 = vst.msk [vmem:[%s263 + $0xa4] sm:$0xf] %vm7510, %v7039
        %7553 = vst.msk [vmem:[%s263 + $0xa8] sm:$0xf] %vm7510, %v7040
        %7554 = vst.msk [vmem:[%s263 + $0xac] sm:$0xf] %vm7510, %v7041
        %7555 = vst.msk [vmem:[%s263 + $0xb0] sm:$0xf] %vm7510, %v7042
        %7556 = vst.msk [vmem:[%s263 + $0xb4] sm:$0xf] %vm7510, %v7043
        %7557 = vst.msk [vmem:[%s263 + $0xb8] sm:$0xf] %vm7510, %v7044
        %7558 = vst.msk [vmem:[%s263 + $0xbc] sm:$0xf] %vm7510, %v7045
        %7559 = vst.msk [vmem:[%s263 + $0xc0] sm:$0xf] %vm7510, %v7046
        %7560 = vst.msk [vmem:[%s263 + $0xc4] sm:$0xf] %vm7510, %v7047
        %7561 = vst.msk [vmem:[%s263 + $0xc8] sm:$0xf] %vm7510, %v7048
        %7562 = vst.msk [vmem:[%s263 + $0xcc] sm:$0xf] %vm7510, %v7049
        %7563 = vst.msk [vmem:[%s263 + $0xd0] sm:$0xf] %vm7510, %v7050
        %7564 = vst.msk [vmem:[%s263 + $0xd4] sm:$0xf] %vm7510, %v7051
        %7565 = vst.msk [vmem:[%s263 + $0xd8] sm:$0xf] %vm7510, %v7052
        %7566 = vst.msk [vmem:[%s263 + $0xdc] sm:$0xf] %vm7510, %v7053
        %7567 = vst.msk [vmem:[%s263 + $0xe0] sm:$0xf] %vm7510, %v7054
        %7568 = vst.msk [vmem:[%s263 + $0xe4] sm:$0xf] %vm7510, %v7055
        %7569 = vst.msk [vmem:[%s263 + $0xe8] sm:$0xf] %vm7510, %v7056
        %7570 = vst.msk [vmem:[%s263 + $0xec] sm:$0xf] %vm7510, %v7057
        %7571 = vst.msk [vmem:[%s263 + $0xf0] sm:$0xf] %vm7510, %v7058
        %7572 = vst.msk [vmem:[%s263 + $0xf4] sm:$0xf] %vm7510, %v7059
        %7573 = vst.msk [vmem:[%s263 + $0xf8] sm:$0xf] %vm7510, %v7060
        %7574 = vst.msk [vmem:[%s263 + $0xfc] sm:$0xf] %vm7510, %v7061
        %7575 = vst.msk [vmem:[%s263 + $0x100] sm:$0xf] %vm7510, %v7062
        %7576 = vst.msk [vmem:[%s263 + $0x104] sm:$0xf] %vm7510, %v7063
        %7577 = vst.msk [vmem:[%s263 + $0x108] sm:$0xf] %vm7510, %v7064
        %7578 = vst.msk [vmem:[%s263 + $0x10c] sm:$0xf] %vm7510, %v7065
        %7579 = vst.msk [vmem:[%s263 + $0x110] sm:$0xf] %vm7510, %v7066
        %7580 = vst.msk [vmem:[%s263 + $0x114] sm:$0xf] %vm7510, %v7067
        %7581 = vst.msk [vmem:[%s263 + $0x118] sm:$0xf] %vm7510, %v7068
        %7582 = vst.msk [vmem:[%s263 + $0x11c] sm:$0xf] %vm7510, %v7069
        %7583 = vst.msk [vmem:[%s263 + $0x120] sm:$0xf] %vm7510, %v7070
        %7584 = vst.msk [vmem:[%s263 + $0x124] sm:$0xf] %vm7510, %v7071
        %7585 = vst.msk [vmem:[%s263 + $0x128] sm:$0xf] %vm7510, %v7072
        %7586 = vst.msk [vmem:[%s263 + $0x12c] sm:$0xf] %vm7510, %v7073
        %7587 = vst.msk [vmem:[%s263 + $0x130] sm:$0xf] %vm7510, %v7074
        %7588 = vst.msk [vmem:[%s263 + $0x134] sm:$0xf] %vm7510, %v7075
        %7589 = vst.msk [vmem:[%s263 + $0x138] sm:$0xf] %vm7510, %v7076
        %7590 = vst.msk [vmem:[%s263 + $0x13c] sm:$0xf] %vm7510, %v7077
        %7591 = vst.msk [vmem:[%s263 + $0x140] sm:$0xf] %vm7510, %v7078
        %7592 = vst.msk [vmem:[%s263 + $0x144] sm:$0xf] %vm7510, %v7079
        %7593 = vst.msk [vmem:[%s263 + $0x148] sm:$0xf] %vm7510, %v7080
        %7594 = vst.msk [vmem:[%s263 + $0x14c] sm:$0xf] %vm7510, %v7081
        %7595 = vst.msk [vmem:[%s263 + $0x150] sm:$0xf] %vm7510, %v7082
        %7596 = vst.msk [vmem:[%s263 + $0x154] sm:$0xf] %vm7510, %v7083
        %7597 = vst.msk [vmem:[%s263 + $0x158] sm:$0xf] %vm7510, %v7084
        %7598 = vst.msk [vmem:[%s263 + $0x15c] sm:$0xf] %vm7510, %v7085
        %7599 = vst.msk [vmem:[%s263 + $0x160] sm:$0xf] %vm7510, %v7086
        %7600 = vst.msk [vmem:[%s263 + $0x164] sm:$0xf] %vm7510, %v7087
        %7601 = vst.msk [vmem:[%s263 + $0x168] sm:$0xf] %vm7510, %v7088
        %7602 = vst.msk [vmem:[%s263 + $0x16c] sm:$0xf] %vm7510, %v7089
        %7603 = vst.msk [vmem:[%s263 + $0x170] sm:$0xf] %vm7510, %v7090
        %7604 = vst.msk [vmem:[%s263 + $0x174] sm:$0xf] %vm7510, %v7091
        %7605 = vst.msk [vmem:[%s263 + $0x178] sm:$0xf] %vm7510, %v7092
        %7606 = vst.msk [vmem:[%s263 + $0x17c] sm:$0xf] %vm7510, %v7093
        %7607 = vst.msk [vmem:[%s263 + $0x180] sm:$0xf] %vm7510, %v7094
        %7608 = vst.msk [vmem:[%s263 + $0x184] sm:$0xf] %vm7510, %v7095
        %7609 = vst.msk [vmem:[%s263 + $0x188] sm:$0xf] %vm7510, %v7096
        %7610 = vst.msk [vmem:[%s263 + $0x18c] sm:$0xf] %vm7510, %v7097
        %7611 = vst.msk [vmem:[%s263 + $0x190] sm:$0xf] %vm7510, %v7098
        %7612 = vst.msk [vmem:[%s263 + $0x194] sm:$0xf] %vm7510, %v7099
        %7613 = vst.msk [vmem:[%s263 + $0x198] sm:$0xf] %vm7510, %v7100
        %7614 = vst.msk [vmem:[%s263 + $0x19c] sm:$0xf] %vm7510, %v7101
        %7615 = vst.msk [vmem:[%s263 + $0x1a0] sm:$0xf] %vm7510, %v7102
        %7616 = vst.msk [vmem:[%s263 + $0x1a4] sm:$0xf] %vm7510, %v7103
        %7617 = vst.msk [vmem:[%s263 + $0x1a8] sm:$0xf] %vm7510, %v7104
        %7618 = vst.msk [vmem:[%s263 + $0x1ac] sm:$0xf] %vm7510, %v7105
        %7619 = vst.msk [vmem:[%s263 + $0x1b0] sm:$0xf] %vm7510, %v7106
        %7620 = vst.msk [vmem:[%s263 + $0x1b4] sm:$0xf] %vm7510, %v7107
        %7621 = vst.msk [vmem:[%s263 + $0x1b8] sm:$0xf] %vm7510, %v7108
        %7622 = vst.msk [vmem:[%s263 + $0x1bc] sm:$0xf] %vm7510, %v7109
        %7623 = vst.msk [vmem:[%s263 + $0x1c0] sm:$0xf] %vm7510, %v7110
        %7624 = vst.msk [vmem:[%s263 + $0x1c4] sm:$0xf] %vm7510, %v7111
        %7625 = vst.msk [vmem:[%s263 + $0x1c8] sm:$0xf] %vm7510, %v7112
        %7626 = vst.msk [vmem:[%s263 + $0x1cc] sm:$0xf] %vm7510, %v7113
        %7627 = vst.msk [vmem:[%s263 + $0x1d0] sm:$0xf] %vm7510, %v7114
        %7628 = vst.msk [vmem:[%s263 + $0x1d4] sm:$0xf] %vm7510, %v7115
        %7629 = vst.msk [vmem:[%s263 + $0x1d8] sm:$0xf] %vm7510, %v7116
        %7630 = vst.msk [vmem:[%s263 + $0x1dc] sm:$0xf] %vm7510, %v7117
        %7631 = vst.msk [vmem:[%s263 + $0x1e0] sm:$0xf] %vm7510, %v7118
        %7632 = vst.msk [vmem:[%s263 + $0x1e4] sm:$0xf] %vm7510, %v7119
        %7633 = vst.msk [vmem:[%s263 + $0x1e8] sm:$0xf] %vm7510, %v7120
        %7634 = vst.msk [vmem:[%s263 + $0x1ec] sm:$0xf] %vm7510, %v7121
        %7635 = vst.msk [vmem:[%s263 + $0x1f0] sm:$0xf] %vm7510, %v7122
        %7636 = vst.msk [vmem:[%s263 + $0x1f4] sm:$0xf] %vm7510, %v7123
        %7637 = vst.msk [vmem:[%s263 + $0x1f8] sm:$0xf] %vm7510, %v7124
        %7638 = vst.msk [vmem:[%s263 + $0x1fc] sm:$0xf] %vm7510, %v7125
        %7639 = vst.msk [vmem:[%s263 + $0x200] sm:$0xf] %vm7510, %v7126
        %7640 = vst.msk [vmem:[%s263 + $0x204] sm:$0xf] %vm7510, %v7127
        %7641 = vst.msk [vmem:[%s263 + $0x208] sm:$0xf] %vm7510, %v7128
        %7642 = vst.msk [vmem:[%s263 + $0x20c] sm:$0xf] %vm7510, %v7129
        %7643 = vst.msk [vmem:[%s263 + $0x210] sm:$0xf] %vm7510, %v7130
        %7644 = vst.msk [vmem:[%s263 + $0x214] sm:$0xf] %vm7510, %v7131
        %7645 = vst.msk [vmem:[%s263 + $0x218] sm:$0xf] %vm7510, %v7132
        %7646 = vst.msk [vmem:[%s263 + $0x21c] sm:$0xf] %vm7510, %v7133
        %7647 = vst.msk [vmem:[%s263 + $0x220] sm:$0xf] %vm7510, %v7134
        %7648 = vst.msk [vmem:[%s263 + $0x224] sm:$0xf] %vm7510, %v7135
        %7649 = vst.msk [vmem:[%s263 + $0x228] sm:$0xf] %vm7510, %v7136
        %7650 = vst.msk [vmem:[%s263 + $0x22c] sm:$0xf] %vm7510, %v7137
        %7651 = vst.msk [vmem:[%s263 + $0x230] sm:$0xf] %vm7510, %v7138
        %7652 = vst.msk [vmem:[%s263 + $0x234] sm:$0xf] %vm7510, %v7139
        %7653 = vst.msk [vmem:[%s263 + $0x238] sm:$0xf] %vm7510, %v7140
        %7654 = vst.msk [vmem:[%s263 + $0x23c] sm:$0xf] %vm7510, %v7141
        %7655 = vst.msk [vmem:[%s263 + $0x240] sm:$0xf] %vm7510, %v7142
        %7656 = vst.msk [vmem:[%s263 + $0x244] sm:$0xf] %vm7510, %v7143
        %7657 = vst.msk [vmem:[%s263 + $0x248] sm:$0xf] %vm7510, %v7144
        %7658 = vst.msk [vmem:[%s263 + $0x24c] sm:$0xf] %vm7510, %v7145
        %7659 = vst.msk [vmem:[%s263 + $0x250] sm:$0xf] %vm7510, %v7146
        %7660 = vst.msk [vmem:[%s263 + $0x254] sm:$0xf] %vm7510, %v7147
        %7661 = vst.msk [vmem:[%s263 + $0x258] sm:$0xf] %vm7510, %v7148
        %7662 = vst.msk [vmem:[%s263 + $0x25c] sm:$0xf] %vm7510, %v7149
        %7663 = vst.msk [vmem:[%s263 + $0x260] sm:$0xf] %vm7510, %v7150
        %7664 = vst.msk [vmem:[%s263 + $0x264] sm:$0xf] %vm7510, %v7151
        %7665 = vst.msk [vmem:[%s263 + $0x268] sm:$0xf] %vm7510, %v7152
        %7666 = vst.msk [vmem:[%s263 + $0x26c] sm:$0xf] %vm7510, %v7153
        %7667 = vst.msk [vmem:[%s263 + $0x270] sm:$0xf] %vm7510, %v7154
        %7668 = vst.msk [vmem:[%s263 + $0x274] sm:$0xf] %vm7510, %v7155
        %7669 = vst.msk [vmem:[%s263 + $0x278] sm:$0xf] %vm7510, %v7156
        %7670 = vst.msk [vmem:[%s263 + $0x27c] sm:$0xf] %vm7510, %v7157
        %7671 = vst.msk [vmem:[%s263 + $0x280] sm:$0xf] %vm7510, %v7158
        %7672 = vst.msk [vmem:[%s263 + $0x284] sm:$0xf] %vm7510, %v7159
        %7673 = vst.msk [vmem:[%s263 + $0x288] sm:$0xf] %vm7510, %v7160
        %7674 = vst.msk [vmem:[%s263 + $0x28c] sm:$0xf] %vm7510, %v7161
        %7675 = vst.msk [vmem:[%s263 + $0x290] sm:$0xf] %vm7510, %v7162
        %7676 = vst.msk [vmem:[%s263 + $0x294] sm:$0xf] %vm7510, %v7163
        %7677 = vst.msk [vmem:[%s263 + $0x298] sm:$0xf] %vm7510, %v7164
        %7678 = vst.msk [vmem:[%s263 + $0x29c] sm:$0xf] %vm7510, %v7165
        %7679 = vst.msk [vmem:[%s263 + $0x2a0] sm:$0xf] %vm7510, %v7166
        %7680 = vst.msk [vmem:[%s263 + $0x2a4] sm:$0xf] %vm7510, %v7167
        %7681 = vst.msk [vmem:[%s263 + $0x2a8] sm:$0xf] %vm7510, %v7168
        %7682 = vst.msk [vmem:[%s263 + $0x2ac] sm:$0xf] %vm7510, %v7169
        %7683 = vst.msk [vmem:[%s263 + $0x2b0] sm:$0xf] %vm7510, %v7170
        %7684 = vst.msk [vmem:[%s263 + $0x2b4] sm:$0xf] %vm7510, %v7171
        %7685 = vst.msk [vmem:[%s263 + $0x2b8] sm:$0xf] %vm7510, %v7172
        %7686 = vst.msk [vmem:[%s263 + $0x2bc] sm:$0xf] %vm7510, %v7173
        %7687 = vst.msk [vmem:[%s263 + $0x2c0] sm:$0xf] %vm7510, %v7174
        %7688 = vst.msk [vmem:[%s263 + $0x2c4] sm:$0xf] %vm7510, %v7175
        %7689 = vst.msk [vmem:[%s263 + $0x2c8] sm:$0xf] %vm7510, %v7176
        %7690 = vst.msk [vmem:[%s263 + $0x2cc] sm:$0xf] %vm7510, %v7177
        %7691 = vst.msk [vmem:[%s263 + $0x2d0] sm:$0xf] %vm7510, %v7178
        %7692 = vst.msk [vmem:[%s263 + $0x2d4] sm:$0xf] %vm7510, %v7179
        %7693 = vst.msk [vmem:[%s263 + $0x2d8] sm:$0xf] %vm7510, %v7180
        %7694 = vst.msk [vmem:[%s263 + $0x2dc] sm:$0xf] %vm7510, %v7181
        %7695 = vst.msk [vmem:[%s263 + $0x2e0] sm:$0xf] %vm7510, %v7182
        %7696 = vst.msk [vmem:[%s263 + $0x2e4] sm:$0xf] %vm7510, %v7183
        %7697 = vst.msk [vmem:[%s263 + $0x2e8] sm:$0xf] %vm7510, %v7184
        %7698 = vst.msk [vmem:[%s263 + $0x2ec] sm:$0xf] %vm7510, %v7185
        %7699 = vst.msk [vmem:[%s263 + $0x2f0] sm:$0xf] %vm7510, %v7186
        %7700 = vst.msk [vmem:[%s263 + $0x2f4] sm:$0xf] %vm7510, %v7187
        %7701 = vst.msk [vmem:[%s263 + $0x2f8] sm:$0xf] %vm7510, %v7188
        %7702 = vst.msk [vmem:[%s263 + $0x2fc] sm:$0xf] %vm7510, %v7189
        %7703 = vst.msk [vmem:[%s263 + $0x300] sm:$0xf] %vm7510, %v7190
        %7704 = vst.msk [vmem:[%s263 + $0x304] sm:$0xf] %vm7510, %v7191
        %7705 = vst.msk [vmem:[%s263 + $0x308] sm:$0xf] %vm7510, %v7192
        %7706 = vst.msk [vmem:[%s263 + $0x30c] sm:$0xf] %vm7510, %v7193
        %7707 = vst.msk [vmem:[%s263 + $0x310] sm:$0xf] %vm7510, %v7194
        %7708 = vst.msk [vmem:[%s263 + $0x314] sm:$0xf] %vm7510, %v7195
        %7709 = vst.msk [vmem:[%s263 + $0x318] sm:$0xf] %vm7510, %v7196
        %7710 = vst.msk [vmem:[%s263 + $0x31c] sm:$0xf] %vm7510, %v7197
        %7711 = vst.msk [vmem:[%s263 + $0x320] sm:$0xf] %vm7510, %v7198
        %7712 = vst.msk [vmem:[%s263 + $0x324] sm:$0xf] %vm7510, %v7199
        %7713 = vst.msk [vmem:[%s263 + $0x328] sm:$0xf] %vm7510, %v7200
        %7714 = vst.msk [vmem:[%s263 + $0x32c] sm:$0xf] %vm7510, %v7201
        %7715 = vst.msk [vmem:[%s263 + $0x330] sm:$0xf] %vm7510, %v7202
        %7716 = vst.msk [vmem:[%s263 + $0x334] sm:$0xf] %vm7510, %v7203
        %7717 = vst.msk [vmem:[%s263 + $0x338] sm:$0xf] %vm7510, %v7204
        %7718 = vst.msk [vmem:[%s263 + $0x33c] sm:$0xf] %vm7510, %v7205
        %7719 = vst.msk [vmem:[%s263 + $0x340] sm:$0xf] %vm7510, %v7206
        %7720 = vst.msk [vmem:[%s263 + $0x344] sm:$0xf] %vm7510, %v7207
        %7721 = vst.msk [vmem:[%s263 + $0x348] sm:$0xf] %vm7510, %v7208
        %7722 = vst.msk [vmem:[%s263 + $0x34c] sm:$0xf] %vm7510, %v7209
        %7723 = vst.msk [vmem:[%s263 + $0x350] sm:$0xf] %vm7510, %v7210
        %7724 = vst.msk [vmem:[%s263 + $0x354] sm:$0xf] %vm7510, %v7211
        %7725 = vst.msk [vmem:[%s263 + $0x358] sm:$0xf] %vm7510, %v7212
        %7726 = vst.msk [vmem:[%s263 + $0x35c] sm:$0xf] %vm7510, %v7213
        %7727 = vst.msk [vmem:[%s263 + $0x360] sm:$0xf] %vm7510, %v7214
        %7728 = vst.msk [vmem:[%s263 + $0x364] sm:$0xf] %vm7510, %v7215
        %7729 = vst.msk [vmem:[%s263 + $0x368] sm:$0xf] %vm7510, %v7216
        %7730 = vst.msk [vmem:[%s263 + $0x36c] sm:$0xf] %vm7510, %v7217
        %7731 = vst.msk [vmem:[%s263 + $0x370] sm:$0xf] %vm7510, %v7218
        %7732 = vst.msk [vmem:[%s263 + $0x374] sm:$0xf] %vm7510, %v7219
        %7733 = vst.msk [vmem:[%s263 + $0x378] sm:$0xf] %vm7510, %v7220
        %7734 = vst.msk [vmem:[%s263 + $0x37c] sm:$0xf] %vm7510, %v7221
        %7735 = vst.msk [vmem:[%s263 + $0x380] sm:$0xf] %vm7510, %v7222
        %7736 = vst.msk [vmem:[%s263 + $0x384] sm:$0xf] %vm7510, %v7223
        %7737 = vst.msk [vmem:[%s263 + $0x388] sm:$0xf] %vm7510, %v7224
        %7738 = vst.msk [vmem:[%s263 + $0x38c] sm:$0xf] %vm7510, %v7225
        %7739 = vst.msk [vmem:[%s263 + $0x390] sm:$0xf] %vm7510, %v7226
        %7740 = vst.msk [vmem:[%s263 + $0x394] sm:$0xf] %vm7510, %v7227
        %7741 = vst.msk [vmem:[%s263 + $0x398] sm:$0xf] %vm7510, %v7228
        %7742 = vst.msk [vmem:[%s263 + $0x39c] sm:$0xf] %vm7510, %v7229
        %7743 = vst.msk [vmem:[%s263 + $0x3a0] sm:$0xf] %vm7510, %v7230
        %7744 = vst.msk [vmem:[%s263 + $0x3a4] sm:$0xf] %vm7510, %v7231
        %7745 = vst.msk [vmem:[%s263 + $0x3a8] sm:$0xf] %vm7510, %v7232
        %7746 = vst.msk [vmem:[%s263 + $0x3ac] sm:$0xf] %vm7510, %v7233
        %7747 = vst.msk [vmem:[%s263 + $0x3b0] sm:$0xf] %vm7510, %v7234
        %7748 = vst.msk [vmem:[%s263 + $0x3b4] sm:$0xf] %vm7510, %v7235
        %7749 = vst.msk [vmem:[%s263 + $0x3b8] sm:$0xf] %vm7510, %v7236
        %7750 = vst.msk [vmem:[%s263 + $0x3bc] sm:$0xf] %vm7510, %v7237
        %7751 = vst.msk [vmem:[%s263 + $0x3c0] sm:$0xf] %vm7510, %v7238
        %7752 = vst.msk [vmem:[%s263 + $0x3c4] sm:$0xf] %vm7510, %v7239
        %7753 = vst.msk [vmem:[%s263 + $0x3c8] sm:$0xf] %vm7510, %v7240
        %7754 = vst.msk [vmem:[%s263 + $0x3cc] sm:$0xf] %vm7510, %v7241
        %7755 = vst.msk [vmem:[%s263 + $0x3d0] sm:$0xf] %vm7510, %v7242
        %7756 = vst.msk [vmem:[%s263 + $0x3d4] sm:$0xf] %vm7510, %v7243
        %7757 = vst.msk [vmem:[%s263 + $0x3d8] sm:$0xf] %vm7510, %v7244
        %7758 = vst.msk [vmem:[%s263 + $0x3dc] sm:$0xf] %vm7510, %v7245
        %7759 = vst.msk [vmem:[%s263 + $0x3e0] sm:$0xf] %vm7510, %v7246
        %7760 = vst.msk [vmem:[%s263 + $0x3e4] sm:$0xf] %vm7510, %v7247
        %7761 = vst.msk [vmem:[%s263 + $0x3e8] sm:$0xf] %vm7510, %v7248
        %7762 = vst.msk [vmem:[%s263 + $0x3ec] sm:$0xf] %vm7510, %v7249
        %7763 = vst.msk [vmem:[%s263 + $0x3f0] sm:$0xf] %vm7510, %v7250
        %7764 = vst.msk [vmem:[%s263 + $0x3f4] sm:$0xf] %vm7510, %v7251
        %7765 = vst.msk [vmem:[%s263 + $0x3f8] sm:$0xf] %vm7510, %v7252
        %7766 = vst.msk [vmem:[%s263 + $0x3fc] sm:$0xf] %vm7510, %v7253
      $region44: #{tpu_custom_call.1} parent=35 // pred_fallthru
        _
      %p7767 = scmp.lt.s32.totalorder %s19, 0
      %s7768 = scalar_select %p7767, %s19, 0
      %s7769 = smul.addr %s7768, 4
      %s7770 = scalar_lea.vmem %s4, %s7769
      // Predicated region
      $region45: #{tpu_custom_call.1} parent=35 // pred_check
        %p7771 = pneg %p151
      $region46: #{tpu_custom_call.1} parent=35 // pred_check_branch
        %7773 = sbr.rel (%p7771) target = $region48
      $region47: #{tpu_custom_call.1} parent=35 // pred_region
        _
      $region48: #{tpu_custom_call.1} parent=35 // pred_fallthru
        _
      // Predicated region
      $region49: #{tpu_custom_call.1} parent=35 // pred_check
        %p7774 = pneg %p151
      $region50: #{tpu_custom_call.1} parent=35 // pred_check_branch
        %7776 = sbr.rel (%p7774) target = $region52
      $region51: #{tpu_custom_call.1} parent=35 // pred_region
        %p7777 = scmp.lt.s32.totalorder %s19, 0
        %s7778 = scalar_select %p7777, %s19, 0
        %s7779 = smul.addr %s7778, 4
        %s7780 = scalar_lea.vmem %s4, %s7779
      $region52: #{tpu_custom_call.1} parent=35 // pred_fallthru
        _
    $region36: #{tpu_custom_call.1} parent=5 // pred_fallthru
      _
    %p7781 = scmp.le.s32.totalorder 2, %s10
    // Predicated region
    $region53: #{tpu_custom_call.1} parent=5 // pred_check
      %p7782 = pneg %p7781
    $region54: #{tpu_custom_call.1} parent=5 // pred_check_branch
      %7784 = sbr.rel (%p7782) target = $region56
    $region55: #{tpu_custom_call.1} parent=5 // pred_region
      %s7785 = ssub.s32 %s10, 2
    $region56: #{tpu_custom_call.1} parent=5 // pred_fallthru
      _
  $region6: #{tpu_custom_call.1} parent=0 // loop_footer
    %s14 = sadd.s32 1, %s10
  $region7: #{tpu_custom_call.1} parent=0 // loop_footer_branch
    %9 = sbr.rel target = $region3
  $region8: #{tpu_custom_call.1} parent=0 // loop_exit
    _

</llo_original>
